<compile_context>
chip_gen: v7x
topology: tpu7x:2x2x1
jax: 0.10.0
libtpu: 0.0.40
codegen_flags: <defaults>
</compile_context>

<pallas_src>
import math
import functools

import jax
import jax.numpy as jnp
from jax.experimental import pallas as pl
from jax.experimental.pallas import tpu as pltpu

hidden_channels = [64, 64, 64]

_CPARAMS = pltpu.CompilerParams(dimension_semantics=("arbitrary",))


def _spec(shape):
    # full-array block (block_shape == array shape), single grid step
    return pl.BlockSpec(shape, lambda i: (0,) * len(shape))


def _gelu_tanh(x):
    # TODO(synk): exact erf-GELU has no guaranteed Mosaic lowering; tanh-approx GELU (<1e-3 abs err)
    #             is used so the whole preprocess MLP can be fused into one kernel.
    c = math.sqrt(2.0 / math.pi)
    return 0.5 * x * (1.0 + jnp.tanh(c * (x + 0.044715 * x * x * x)))


# ----------------------------- Pallas kernels -----------------------------

def _preprocess_kernel(x_ref, w1_ref, b1_ref, w2_ref, b2_ref, o_ref):
    # Linear(in, 2h) -> GELU -> Linear(2h, h) -> GELU, fully fused.
    h = jnp.dot(x_ref[...], w1_ref[...], preferred_element_type=jnp.float32) + b1_ref[...]
    h = _gelu_tanh(h)
    h = jnp.dot(h, w2_ref[...], preferred_element_type=jnp.float32) + b2_ref[...]
    o_ref[...] = _gelu_tanh(h)


def pallas_preprocess(x, w1, b1, w2, b2):
    n = x.shape[0]
    cout = w2.shape[1]
    args = (x, w1, b1, w2, b2)
    return pl.pallas_call(
        _preprocess_kernel,
        grid=(1,),
        in_specs=[_spec(a.shape) for a in args],
        out_specs=_spec((n, cout)),
        out_shape=jax.ShapeDtypeStruct((n, cout), jnp.float32),
        compiler_params=_CPARAMS,
    )(*args)


def _gps_layer_kernel(num_heads, neg_slope,
                      x_ref, adj_ref,
                      w_lr_ref, b_lr_ref, att_ref, gat_bias_ref, bn1s_ref, bn1b_ref,
                      w_qkv_ref, b_qkv_ref, w_o_ref, b_o_ref, bn2s_ref, bn2b_ref,
                      w1_ref, b1_ref, w2_ref, b2_ref, bn3s_ref, bn3b_ref,
                      o_ref):
    """One full GPSConv layer (+ the outer F.relu) in a single kernel."""
    x = x_ref[...]                     # [N, C]
    adj = adj_ref[...]                 # [N, N]  adj[i, j] = 1 iff edge j -> i (incl. self loop)
    c = x_ref.shape[1]

    # ---- local message passing: GATv2Conv (heads=1) over dense adjacency ----
    lr = jnp.dot(x, w_lr_ref[...], preferred_element_type=jnp.float32) + b_lr_ref[...]  # [N, 2C]
    xl = lr[:, :c]                     # lin_l(x): source / message features
    xr = lr[:, c:]                     # lin_r(x): target features
    s = xl[None, :, :] + xr[:, None, :]                    # [N(i), N(j), C]
    s = jnp.where(s > 0, s, neg_slope * s)                 # LeakyReLU(0.2)
    e = jnp.sum(s * att_ref[...][:, None, :], axis=-1)     # [N, N] attention logits
    e = jnp.where(adj > 0, e, -1e30)
    e = e - jnp.max(e, axis=1, keepdims=True)
    p = jnp.exp(e)
    p = jnp.where(adj > 0, p, 0.0)
    alpha = p * pl.reciprocal(jnp.sum(p, axis=1, keepdims=True), approx=True)
    h_local = jnp.dot(alpha, xl, preferred_element_type=jnp.float32) + gat_bias_ref[...]
    h1 = (h_local + x) * bn1s_ref[...] + bn1b_ref[...]     # residual + BatchNorm1 (eval affine)

    # ---- global attention: 4-head MHA over all nodes (single graph, no padding mask) ----
    hd = c // num_heads
    qkv = jnp.dot(x, w_qkv_ref[...], preferred_element_type=jnp.float32) + b_qkv_ref[...]  # [N, 3C]
    q = qkv[:, :c] * (1.0 / math.sqrt(hd))                 # scale hoisted once for all heads
    a = jnp.zeros_like(x)                                  # [N, C] accumulator (lane-dense)
    for h in range(num_heads):
        qh = q[:, h * hd:(h + 1) * hd]
        kh = qkv[:, c + h * hd: c + (h + 1) * hd]
        vh = qkv[:, 2 * c + h * hd: 2 * c + (h + 1) * hd]
        sc = jax.lax.dot_general(qh, kh, (((1,), (1,)), ((), ())),
                                 preferred_element_type=jnp.float32)      # [N, N]
        sc = sc - jnp.max(sc, axis=1, keepdims=True)
        ph = jnp.exp(sc)
        ph = ph * pl.reciprocal(jnp.sum(ph, axis=1, keepdims=True), approx=True)
        oh = jnp.dot(ph, vh, preferred_element_type=jnp.float32)          # [N, hd]
        # fold the out-projection per head: concat(heads) @ Wo == sum_h head_h @ Wo[h*hd:(h+1)*hd]
        a = a + jnp.dot(oh, w_o_ref[h * hd:(h + 1) * hd, :],
                        preferred_element_type=jnp.float32)               # [N, C]
    a = a + b_o_ref[...]
    h2 = (a + x) * bn2s_ref[...] + bn2b_ref[...]           # residual + BatchNorm2 (eval affine)

    # ---- combine + MLP + BatchNorm3 + outer ReLU ----
    out = h1 + h2
    z = jnp.maximum(jnp.dot(out, w1_ref[...], preferred_element_type=jnp.float32) + b1_ref[...], 0.0)
    z = jnp.dot(z, w2_ref[...], preferred_element_type=jnp.float32) + b2_ref[...]
    y = (out + z) * bn3s_ref[...] + bn3b_ref[...]
    o_ref[...] = jnp.maximum(y, 0.0)                       # F.relu from GPSConvNet.forward


def pallas_gps_layer(x, adj, lp, num_heads=4, neg_slope=0.2):
    n, c = x.shape
    args = (x, adj,
            lp["gat_w_lr"], lp["gat_b_lr"], lp["gat_att"], lp["gat_bias"],
            lp["bn1_scale"], lp["bn1_shift"],
            lp["w_qkv"], lp["b_qkv"], lp["w_o"], lp["b_o"],
            lp["bn2_scale"], lp["bn2_shift"],
            lp["mlp_w1"], lp["mlp_b1"], lp["mlp_w2"], lp["mlp_b2"],
            lp["bn3_scale"], lp["bn3_shift"])
    return pl.pallas_call(
        functools.partial(_gps_layer_kernel, num_heads, neg_slope),
        grid=(1,),
        in_specs=[_spec(a.shape) for a in args],
        out_specs=_spec((n, c)),
        out_shape=jax.ShapeDtypeStruct((n, c), jnp.float32),
        compiler_params=_CPARAMS,
    )(*args)


def _final_kernel(neg_slope, x_ref, adj_ref, w_lr_ref, b_lr_ref, att_ref, bias_ref, o_ref):
    # final GATv2Conv(h -> out_channels, heads=1) fused with log_softmax over classes.
    x = x_ref[...]
    adj = adj_ref[...]
    co = att_ref.shape[1]
    lr = jnp.dot(x, w_lr_ref[...], preferred_element_type=jnp.float32) + b_lr_ref[...]
    xl = lr[:, :co]
    xr = lr[:, co:]
    s = xl[None, :, :] + xr[:, None, :]
    s = jnp.where(s > 0, s, neg_slope * s)
    e = jnp.sum(s * att_ref[...][:, None, :], axis=-1)
    e = jnp.where(adj > 0, e, -1e30)
    e = e - jnp.max(e, axis=1, keepdims=True)
    p = jnp.exp(e)
    p = jnp.where(adj > 0, p, 0.0)
    alpha = p * pl.reciprocal(jnp.sum(p, axis=1, keepdims=True), approx=True)
    y = jnp.dot(alpha, xl, preferred_element_type=jnp.float32) + bias_ref[...]
    y = y - jnp.max(y, axis=1, keepdims=True)
    o_ref[...] = y - jnp.log(jnp.sum(jnp.exp(y), axis=1, keepdims=True))


def pallas_final_gat_logsoftmax(x, adj, w_lr, b_lr, att, bias, neg_slope=0.2):
    n = x.shape[0]
    co = att.shape[1]
    args = (x, adj, w_lr, b_lr, att, bias)
    return pl.pallas_call(
        functools.partial(_final_kernel, neg_slope),
        grid=(1,),
        in_specs=[_spec(a.shape) for a in args],
        out_specs=_spec((n, co)),
        out_shape=jax.ShapeDtypeStruct((n, co), jnp.float32),
        compiler_params=_CPARAMS,
    )(*args)


# ----------------------------- parameters (glue) -----------------------------

def _dense(key, cin, cout):
    kw, kb = jax.random.split(key)
    scale = 1.0 / math.sqrt(cin)
    w = scale * jax.random.normal(kw, (cin, cout), jnp.float32)
    b = 0.1 * scale * jax.random.normal(kb, (cout,), jnp.float32)
    return w, b


def _bn_affine(key, c, eps=1e-5):
    # eval-mode BatchNorm1d with running stats is exactly an affine map: y = x*scale + shift
    k1, k2, k3, k4 = jax.random.split(key, 4)
    gamma = 1.0 + 0.1 * jax.random.normal(k1, (c,), jnp.float32)
    beta = 0.1 * jax.random.normal(k2, (c,), jnp.float32)
    mean = 0.1 * jax.random.normal(k3, (c,), jnp.float32)
    var = 0.5 + jax.random.uniform(k4, (c,), jnp.float32)
    scale = gamma * jax.lax.rsqrt(var + eps)
    shift = beta - mean * scale
    return scale.reshape(1, c), shift.reshape(1, c)


def init_params(key, in_channels, hidden, out_channels):
    h0 = hidden[0]
    keys = jax.random.split(key, 3 + len(hidden))
    p = {}
    # preprocess: Linear(in, 2h) -> GELU -> Linear(2h, h) -> GELU
    p["pre_w1"], b1 = _dense(keys[0], in_channels, 2 * h0)
    p["pre_b1"] = b1.reshape(1, 2 * h0)
    p["pre_w2"], b2 = _dense(keys[1], 2 * h0, h0)
    p["pre_b2"] = b2.reshape(1, h0)

    layers = []
    for li, hc in enumerate(hidden):
        k = jax.random.split(keys[2 + li], 13)
        lp = {}
        # GATv2Conv(hc, hc, heads=1): lin_l | lin_r packed along output lanes
        wl, bl = _dense(k[0], hc, hc)
        wr, br = _dense(k[1], hc, hc)
        lp["gat_w_lr"] = jnp.concatenate([wl, wr], axis=1)              # [hc, 2hc]
        lp["gat_b_lr"] = jnp.concatenate([bl, br]).reshape(1, 2 * hc)
        lp["gat_att"] = ((1.0 / math.sqrt(hc)) *
                         jax.random.normal(k[2], (hc,), jnp.float32)).reshape(1, hc)
        lp["gat_bias"] = (0.02 * jax.random.normal(k[3], (hc,), jnp.float32)).reshape(1, hc)
        lp["bn1_scale"], lp["bn1_shift"] = _bn_affine(k[4], hc)
        # MultiheadAttention(hc, 4 heads): Wq | Wk | Wv packed along output lanes, plus out_proj
        wq, bq = _dense(k[5], hc, hc)
        wk, bk = _dense(k[6], hc, hc)
        wv, bv = _dense(k[7], hc, hc)
        lp["w_qkv"] = jnp.concatenate([wq, wk, wv], axis=1)             # [hc, 3hc]
        lp["b_qkv"] = jnp.concatenate([bq, bk, bv]).reshape(1, 3 * hc)
        lp["w_o"], bo = _dense(k[8], hc, hc)
        lp["b_o"] = bo.reshape(1, hc)
        lp["bn2_scale"], lp["bn2_shift"] = _bn_affine(k[9], hc)
        # GPSConv MLP: Linear(hc, 2hc) -> ReLU -> Dropout -> Linear(2hc, hc) -> Dropout
        lp["mlp_w1"], mb1 = _dense(k[10], hc, 2 * hc)
        lp["mlp_b1"] = mb1.reshape(1, 2 * hc)
        lp["mlp_w2"], mb2 = _dense(k[11], 2 * hc, hc)
        lp["mlp_b2"] = mb2.reshape(1, hc)
        lp["bn3_scale"], lp["bn3_shift"] = _bn_affine(k[12], hc)
        layers.append(lp)
    p["gps_layers"] = layers

    # final GATv2Conv(h, out_channels, heads=1)
    hc = hidden[-1]
    kf = jax.random.split(keys[-1], 4)
    wl, bl = _dense(kf[0], hc, out_channels)
    wr, br = _dense(kf[1], hc, out_channels)
    p["fin_w_lr"] = jnp.concatenate([wl, wr], axis=1)                   # [hc, 2*out]
    p["fin_b_lr"] = jnp.concatenate([bl, br]).reshape(1, 2 * out_channels)
    p["fin_att"] = ((1.0 / math.sqrt(out_channels)) *
                    jax.random.normal(kf[2], (out_channels,), jnp.float32)).reshape(1, out_channels)
    p["fin_bias"] = (0.02 * jax.random.normal(kf[3], (out_channels,), jnp.float32)
                     ).reshape(1, out_channels)
    return p


@jax.jit
def gps_conv_net_forward(params, x, adj):
    x = pallas_preprocess(x, params["pre_w1"], params["pre_b1"], params["pre_w2"], params["pre_b2"])
    for lp in params["gps_layers"]:
        x = pallas_gps_layer(x, adj, lp)
        # F.dropout(p=0.6, training=False) -> identity in eval mode
    return pallas_final_gat_logsoftmax(x, adj, params["fin_w_lr"], params["fin_b_lr"],
                                       params["fin_att"], params["fin_bias"])


if __name__ == "__main__":
    key = jax.random.PRNGKey(0)
    N, E = 32, 96
    in_channels, out_channels = 16, 8

    k_x, k_src, k_dst, k_p = jax.random.split(key, 4)
    x = jax.random.normal(k_x, (N, in_channels), jnp.float32)
    src = jax.random.randint(k_src, (E,), 0, N)          # edge_index[0] (source j)
    dst = jax.random.randint(k_dst, (E,), 0, N)          # edge_index[1] (target i)

    # densify edge_index into adj[i, j] (message j -> i) and add self loops (GATv2 default)
    adj = jnp.zeros((N, N), jnp.float32).at[dst, src].set(1.0)
    adj = jnp.maximum(adj, jnp.eye(N, dtype=jnp.float32))

    params = init_params(k_p, in_channels, hidden_channels, out_channels)

    out = gps_conv_net_forward(params, x, adj)
    out = jax.block_until_ready(out)

    assert out.shape == (N, out_channels)
    assert bool(jnp.all(jnp.isfinite(out)))
    # rows of log_softmax should sum to 1 in probability space
    assert bool(jnp.allclose(jnp.sum(jnp.exp(out), axis=1), 1.0, atol=1e-4))
    print("KERNEL_OK")
</pallas_src>

<mosaic_0001>
module attributes {stable_mosaic.version = 11 : i64} {
  func.func @_preprocess_kernel(%arg0: i32, %arg1: memref<32x16xf32, #tpu.memory_space<vmem>>, %arg2: memref<16x128xf32, #tpu.memory_space<vmem>>, %arg3: memref<1x128xf32, #tpu.memory_space<vmem>>, %arg4: memref<128x64xf32, #tpu.memory_space<vmem>>, %arg5: memref<1x64xf32, #tpu.memory_space<vmem>>, %arg6: memref<32x64xf32, #tpu.memory_space<vmem>>) attributes {dimension_semantics = [#tpu.dimension_semantics<arbitrary>], iteration_bounds = array<i64: 1>, scalar_prefetch = 0 : i64, scratch_operands = 0 : i64, tpu.core_type = #tpu.core_type<tc>, window_params = [{pipeline_mode = #tpu.pipeline_mode<synchronous>, transform_indices = @transform_0, window_bounds = array<i64: 32, 16>}, {pipeline_mode = #tpu.pipeline_mode<synchronous>, transform_indices = @transform_1, window_bounds = array<i64: 16, 128>}, {pipeline_mode = #tpu.pipeline_mode<synchronous>, transform_indices = @transform_2, window_bounds = array<i64: 1, 128>}, {pipeline_mode = #tpu.pipeline_mode<synchronous>, transform_indices = @transform_3, window_bounds = array<i64: 128, 64>}, {pipeline_mode = #tpu.pipeline_mode<synchronous>, transform_indices = @transform_4, window_bounds = array<i64: 1, 64>}, {pipeline_mode = #tpu.pipeline_mode<synchronous>, transform_indices = @transform_5, window_bounds = array<i64: 32, 64>}]} {
    %c0 = arith.constant 0 : index
    %c0_0 = arith.constant 0 : index
    %0 = vector.load %arg1[%c0, %c0_0] : memref<32x16xf32, #tpu.memory_space<vmem>>, vector<32x16xf32>
    %c0_1 = arith.constant 0 : index
    %c0_2 = arith.constant 0 : index
    %1 = vector.load %arg2[%c0_1, %c0_2] : memref<16x128xf32, #tpu.memory_space<vmem>>, vector<16x128xf32>
    %cst = arith.constant dense<0.000000e+00> : vector<32x128xf32>
    %2 = tpu.matmul %0, %1, %cst {dimension_numbers = #tpu.dot_dimension_numbers<[1], [0], [0], [1], [0, 0, 1, 1], [], []>} : vector<32x16xf32>, vector<16x128xf32>, vector<32x128xf32> -> vector<32x128xf32>
    %c0_3 = arith.constant 0 : index
    %c0_4 = arith.constant 0 : index
    %3 = vector.load %arg3[%c0_3, %c0_4] : memref<1x128xf32, #tpu.memory_space<vmem>>, vector<1x128xf32>
    %4 = vector.broadcast %3 : vector<1x128xf32> to vector<32x128xf32>
    %5 = arith.addf %2, %4 : vector<32x128xf32>
    %cst_5 = arith.constant 5.000000e-01 : f32
    %6 = vector.broadcast %cst_5 : f32 to vector<32x128xf32>
    %7 = arith.mulf %6, %5 : vector<32x128xf32>
    %cst_6 = arith.constant 4.471500e-02 : f32
    %8 = vector.broadcast %cst_6 : f32 to vector<32x128xf32>
    %9 = arith.mulf %8, %5 : vector<32x128xf32>
    %10 = arith.mulf %9, %5 : vector<32x128xf32>
    %11 = arith.mulf %10, %5 : vector<32x128xf32>
    %12 = arith.addf %5, %11 : vector<32x128xf32>
    %cst_7 = arith.constant 0.797884583 : f32
    %13 = vector.broadcast %cst_7 : f32 to vector<32x128xf32>
    %14 = arith.mulf %13, %12 : vector<32x128xf32>
    %15 = math.tanh %14 : vector<32x128xf32>
    %cst_8 = arith.constant 1.000000e+00 : f32
    %16 = vector.broadcast %cst_8 : f32 to vector<32x128xf32>
    %17 = arith.addf %16, %15 : vector<32x128xf32>
    %18 = arith.mulf %7, %17 : vector<32x128xf32>
    %c0_9 = arith.constant 0 : index
    %c0_10 = arith.constant 0 : index
    %19 = vector.load %arg4[%c0_9, %c0_10] : memref<128x64xf32, #tpu.memory_space<vmem>>, vector<128x64xf32>
    %cst_11 = arith.constant dense<0.000000e+00> : vector<32x64xf32>
    %20 = tpu.matmul %18, %19, %cst_11 {dimension_numbers = #tpu.dot_dimension_numbers<[1], [0], [0], [1], [0, 0, 1, 1], [], []>} : vector<32x128xf32>, vector<128x64xf32>, vector<32x64xf32> -> vector<32x64xf32>
    %c0_12 = arith.constant 0 : index
    %c0_13 = arith.constant 0 : index
    %21 = vector.load %arg5[%c0_12, %c0_13] : memref<1x64xf32, #tpu.memory_space<vmem>>, vector<1x64xf32>
    %22 = vector.broadcast %21 : vector<1x64xf32> to vector<32x64xf32>
    %23 = arith.addf %20, %22 : vector<32x64xf32>
    %cst_14 = arith.constant 5.000000e-01 : f32
    %24 = vector.broadcast %cst_14 : f32 to vector<32x64xf32>
    %25 = arith.mulf %24, %23 : vector<32x64xf32>
    %cst_15 = arith.constant 4.471500e-02 : f32
    %26 = vector.broadcast %cst_15 : f32 to vector<32x64xf32>
    %27 = arith.mulf %26, %23 : vector<32x64xf32>
    %28 = arith.mulf %27, %23 : vector<32x64xf32>
    %29 = arith.mulf %28, %23 : vector<32x64xf32>
    %30 = arith.addf %23, %29 : vector<32x64xf32>
    %cst_16 = arith.constant 0.797884583 : f32
    %31 = vector.broadcast %cst_16 : f32 to vector<32x64xf32>
    %32 = arith.mulf %31, %30 : vector<32x64xf32>
    %33 = math.tanh %32 : vector<32x64xf32>
    %cst_17 = arith.constant 1.000000e+00 : f32
    %34 = vector.broadcast %cst_17 : f32 to vector<32x64xf32>
    %35 = arith.addf %34, %33 : vector<32x64xf32>
    %36 = arith.mulf %25, %35 : vector<32x64xf32>
    %c0_18 = arith.constant 0 : index
    %c0_19 = arith.constant 0 : index
    %37 = vector.load %arg6[%c0_18, %c0_19] : memref<32x64xf32, #tpu.memory_space<vmem>>, vector<32x64xf32>
    tpu.vector_store %arg6[%c0_18, %c0_19], %36 {strides = array<i32>} : memref<32x64xf32, #tpu.memory_space<vmem>>, vector<32x64xf32>,
    return
  }
  func.func @transform_0(%arg0: i32) -> (i32, i32) {
    %c0_i32 = arith.constant 0 : i32
    %c0_i32_0 = arith.constant 0 : i32
    %c0_i32_1 = arith.constant 0 : i32
    return %c0_i32, %c0_i32_0 : i32, i32
  }
  func.func @transform_1(%arg0: i32) -> (i32, i32) {
    %c0_i32 = arith.constant 0 : i32
    %c0_i32_0 = arith.constant 0 : i32
    %c0_i32_1 = arith.constant 0 : i32
    return %c0_i32, %c0_i32_0 : i32, i32
  }
  func.func @transform_2(%arg0: i32) -> (i32, i32) {
    %c0_i32 = arith.constant 0 : i32
    %c0_i32_0 = arith.constant 0 : i32
    %c0_i32_1 = arith.constant 0 : i32
    return %c0_i32, %c0_i32_0 : i32, i32
  }
  func.func @transform_3(%arg0: i32) -> (i32, i32) {
    %c0_i32 = arith.constant 0 : i32
    %c0_i32_0 = arith.constant 0 : i32
    %c0_i32_1 = arith.constant 0 : i32
    return %c0_i32, %c0_i32_0 : i32, i32
  }
  func.func @transform_4(%arg0: i32) -> (i32, i32) {
    %c0_i32 = arith.constant 0 : i32
    %c0_i32_0 = arith.constant 0 : i32
    %c0_i32_1 = arith.constant 0 : i32
    return %c0_i32, %c0_i32_0 : i32, i32
  }
  func.func @transform_5(%arg0: i32) -> (i32, i32) {
    %c0_i32 = arith.constant 0 : i32
    %c0_i32_0 = arith.constant 0 : i32
    %c0_i32_1 = arith.constant 0 : i32
    return %c0_i32, %c0_i32_0 : i32, i32
  }
}

module attributes {stable_mosaic.version = 11 : i64} {
  func.func @_gps_layer_kernel(%arg0: i32, %arg1: memref<32x64xf32, #tpu.memory_space<vmem>>, %arg2: memref<32x32xf32, #tpu.memory_space<vmem>>, %arg3: memref<64x128xf32, #tpu.memory_space<vmem>>, %arg4: memref<1x128xf32, #tpu.memory_space<vmem>>, %arg5: memref<1x64xf32, #tpu.memory_space<vmem>>, %arg6: memref<1x64xf32, #tpu.memory_space<vmem>>, %arg7: memref<1x64xf32, #tpu.memory_space<vmem>>, %arg8: memref<1x64xf32, #tpu.memory_space<vmem>>, %arg9: memref<64x192xf32, #tpu.memory_space<vmem>>, %arg10: memref<1x192xf32, #tpu.memory_space<vmem>>, %arg11: memref<64x64xf32, #tpu.memory_space<vmem>>, %arg12: memref<1x64xf32, #tpu.memory_space<vmem>>, %arg13: memref<1x64xf32, #tpu.memory_space<vmem>>, %arg14: memref<1x64xf32, #tpu.memory_space<vmem>>, %arg15: memref<64x128xf32, #tpu.memory_space<vmem>>, %arg16: memref<1x128xf32, #tpu.memory_space<vmem>>, %arg17: memref<128x64xf32, #tpu.memory_space<vmem>>, %arg18: memref<1x64xf32, #tpu.memory_space<vmem>>, %arg19: memref<1x64xf32, #tpu.memory_space<vmem>>, %arg20: memref<1x64xf32, #tpu.memory_space<vmem>>, %arg21: memref<32x64xf32, #tpu.memory_space<vmem>>) attributes {dimension_semantics = [#tpu.dimension_semantics<arbitrary>], iteration_bounds = array<i64: 1>, scalar_prefetch = 0 : i64, scratch_operands = 0 : i64, tpu.core_type = #tpu.core_type<tc>, window_params = [{pipeline_mode = #tpu.pipeline_mode<synchronous>, transform_indices = @transform_0, window_bounds = array<i64: 32, 64>}, {pipeline_mode = #tpu.pipeline_mode<synchronous>, transform_indices = @transform_1, window_bounds = array<i64: 32, 32>}, {pipeline_mode = #tpu.pipeline_mode<synchronous>, transform_indices = @transform_2, window_bounds = array<i64: 64, 128>}, {pipeline_mode = #tpu.pipeline_mode<synchronous>, transform_indices = @transform_3, window_bounds = array<i64: 1, 128>}, {pipeline_mode = #tpu.pipeline_mode<synchronous>, transform_indices = @transform_4, window_bounds = array<i64: 1, 64>}, {pipeline_mode = #tpu.pipeline_mode<synchronous>, transform_indices = @transform_5, window_bounds = array<i64: 1, 64>}, {pipeline_mode = #tpu.pipeline_mode<synchronous>, transform_indices = @transform_6, window_bounds = array<i64: 1, 64>}, {pipeline_mode = #tpu.pipeline_mode<synchronous>, transform_indices = @transform_7, window_bounds = array<i64: 1, 64>}, {pipeline_mode = #tpu.pipeline_mode<synchronous>, transform_indices = @transform_8, window_bounds = array<i64: 64, 192>}, {pipeline_mode = #tpu.pipeline_mode<synchronous>, transform_indices = @transform_9, window_bounds = array<i64: 1, 192>}, {pipeline_mode = #tpu.pipeline_mode<synchronous>, transform_indices = @transform_10, window_bounds = array<i64: 64, 64>}, {pipeline_mode = #tpu.pipeline_mode<synchronous>, transform_indices = @transform_11, window_bounds = array<i64: 1, 64>}, {pipeline_mode = #tpu.pipeline_mode<synchronous>, transform_indices = @transform_12, window_bounds = array<i64: 1, 64>}, {pipeline_mode = #tpu.pipeline_mode<synchronous>, transform_indices = @transform_13, window_bounds = array<i64: 1, 64>}, {pipeline_mode = #tpu.pipeline_mode<synchronous>, transform_indices = @transform_14, window_bounds = array<i64: 64, 128>}, {pipeline_mode = #tpu.pipeline_mode<synchronous>, transform_indices = @transform_15, window_bounds = array<i64: 1, 128>}, {pipeline_mode = #tpu.pipeline_mode<synchronous>, transform_indices = @transform_16, window_bounds = array<i64: 128, 64>}, {pipeline_mode = #tpu.pipeline_mode<synchronous>, transform_indices = @transform_17, window_bounds = array<i64: 1, 64>}, {pipeline_mode = #tpu.pipeline_mode<synchronous>, transform_indices = @transform_18, window_bounds = array<i64: 1, 64>}, {pipeline_mode = #tpu.pipeline_mode<synchronous>, transform_indices = @transform_19, window_bounds = array<i64: 1, 64>}, {pipeline_mode = #tpu.pipeline_mode<synchronous>, transform_indices = @transform_20, window_bounds = array<i64: 32, 64>}]} {
    %c0 = arith.constant 0 : index
    %c0_0 = arith.constant 0 : index
    %0 = vector.load %arg1[%c0, %c0_0] : memref<32x64xf32, #tpu.memory_space<vmem>>, vector<32x64xf32>
    %c0_1 = arith.constant 0 : index
    %c0_2 = arith.constant 0 : index
    %1 = vector.load %arg2[%c0_1, %c0_2] : memref<32x32xf32, #tpu.memory_space<vmem>>, vector<32x32xf32>
    %c0_3 = arith.constant 0 : index
    %c0_4 = arith.constant 0 : index
    %2 = vector.load %arg3[%c0_3, %c0_4] : memref<64x128xf32, #tpu.memory_space<vmem>>, vector<64x128xf32>
    %cst = arith.constant dense<0.000000e+00> : vector<32x128xf32>
    %3 = tpu.matmul %0, %2, %cst {dimension_numbers = #tpu.dot_dimension_numbers<[1], [0], [0], [1], [0, 0, 1, 1], [], []>} : vector<32x64xf32>, vector<64x128xf32>, vector<32x128xf32> -> vector<32x128xf32>
    %c0_5 = arith.constant 0 : index
    %c0_6 = arith.constant 0 : index
    %4 = vector.load %arg4[%c0_5, %c0_6] : memref<1x128xf32, #tpu.memory_space<vmem>>, vector<1x128xf32>
    %5 = vector.broadcast %4 : vector<1x128xf32> to vector<32x128xf32>
    %6 = arith.addf %3, %5 : vector<32x128xf32>
    %7 = vector.extract_strided_slice %6 {offsets = [0, 0], sizes = [32, 64], strides = [1, 1]} : vector<32x128xf32> to vector<32x64xf32>
    %8 = vector.extract_strided_slice %6 {offsets = [0, 64], sizes = [32, 64], strides = [1, 1]} : vector<32x128xf32> to vector<32x64xf32>
    %9 = vector.shape_cast %7 : vector<32x64xf32> to vector<1x32x64xf32>
    %10 = vector.shape_cast %8 : vector<32x64xf32> to vector<32x1x64xf32>
    %11 = vector.broadcast %9 : vector<1x32x64xf32> to vector<32x32x64xf32>
    %12 = vector.broadcast %10 : vector<32x1x64xf32> to vector<32x32x64xf32>
    %13 = arith.addf %11, %12 : vector<32x32x64xf32>
    %cst_7 = arith.constant 0.000000e+00 : f32
    %14 = vector.broadcast %cst_7 : f32 to vector<32x32x64xf32>
    %15 = arith.cmpf ogt, %13, %14 : vector<32x32x64xf32>
    %cst_8 = arith.constant 2.000000e-01 : f32
    %16 = vector.broadcast %cst_8 : f32 to vector<32x32x64xf32>
    %17 = arith.mulf %16, %13 : vector<32x32x64xf32>
    %18 = arith.select %15, %13, %17 : vector<32x32x64xi1>, vector<32x32x64xf32>
    %c0_9 = arith.constant 0 : index
    %c0_10 = arith.constant 0 : index
    %19 = vector.load %arg5[%c0_9, %c0_10] : memref<1x64xf32, #tpu.memory_space<vmem>>, vector<1x64xf32>
    %20 = vector.shape_cast %19 : vector<1x64xf32> to vector<1x1x64xf32>
    %21 = vector.broadcast %20 : vector<1x1x64xf32> to vector<32x32x64xf32>
    %22 = arith.mulf %18, %21 : vector<32x32x64xf32>
    %cst_11 = arith.constant dense<0.000000e+00> : vector<32x32xf32>
    %23 = vector.multi_reduction <add>, %22, %cst_11 [2] : vector<32x32x64xf32> to vector<32x32xf32>
    %cst_12 = arith.constant 0.000000e+00 : f32
    %24 = vector.broadcast %cst_12 : f32 to vector<32x32xf32>
    %25 = arith.cmpf ogt, %1, %24 : vector<32x32xf32>
    %cst_13 = arith.constant -1.000000e+30 : f32
    %26 = vector.broadcast %cst_13 : f32 to vector<32x32xf32>
    %27 = arith.select %25, %23, %26 : vector<32x32xi1>, vector<32x32xf32>
    %cst_14 = arith.constant dense<0xFF800000> : vector<32xf32>
    %28 = vector.multi_reduction <maximumf>, %27, %cst_14 [1] : vector<32x32xf32> to vector<32xf32>
    %29 = vector.shape_cast %28 : vector<32xf32> to vector<32x1xf32>
    %30 = vector.broadcast %29 : vector<32x1xf32> to vector<32x32xf32>
    %31 = arith.subf %27, %30 : vector<32x32xf32>
    %32 = math.exp %31 : vector<32x32xf32>
    %cst_15 = arith.constant 0.000000e+00 : f32
    %33 = vector.broadcast %cst_15 : f32 to vector<32x32xf32>
    %34 = arith.cmpf ogt, %1, %33 : vector<32x32xf32>
    %cst_16 = arith.constant 0.000000e+00 : f32
    %35 = vector.broadcast %cst_16 : f32 to vector<32x32xf32>
    %36 = arith.select %34, %32, %35 : vector<32x32xi1>, vector<32x32xf32>
    %cst_17 = arith.constant dense<0.000000e+00> : vector<32xf32>
    %37 = vector.multi_reduction <add>, %36, %cst_17 [1] : vector<32x32xf32> to vector<32xf32>
    %38 = vector.shape_cast %37 : vector<32xf32> to vector<32x1xf32>
    %39 = tpu.reciprocal %38 {approx = true} : vector<32x1xf32> -> vector<32x1xf32>
    %40 = vector.broadcast %39 : vector<32x1xf32> to vector<32x32xf32>
    %41 = arith.mulf %36, %40 : vector<32x32xf32>
    %cst_18 = arith.constant dense<0.000000e+00> : vector<32x64xf32>
    %42 = tpu.matmul %41, %7, %cst_18 {dimension_numbers = #tpu.dot_dimension_numbers<[1], [0], [0], [1], [0, 0, 1, 1], [], []>} : vector<32x32xf32>, vector<32x64xf32>, vector<32x64xf32> -> vector<32x64xf32>
    %c0_19 = arith.constant 0 : index
    %c0_20 = arith.constant 0 : index
    %43 = vector.load %arg6[%c0_19, %c0_20] : memref<1x64xf32, #tpu.memory_space<vmem>>, vector<1x64xf32>
    %44 = vector.broadcast %43 : vector<1x64xf32> to vector<32x64xf32>
    %45 = arith.addf %42, %44 : vector<32x64xf32>
    %46 = arith.addf %45, %0 : vector<32x64xf32>
    %c0_21 = arith.constant 0 : index
    %c0_22 = arith.constant 0 : index
    %47 = vector.load %arg7[%c0_21, %c0_22] : memref<1x64xf32, #tpu.memory_space<vmem>>, vector<1x64xf32>
    %48 = vector.broadcast %47 : vector<1x64xf32> to vector<32x64xf32>
    %49 = arith.mulf %46, %48 : vector<32x64xf32>
    %c0_23 = arith.constant 0 : index
    %c0_24 = arith.constant 0 : index
    %50 = vector.load %arg8[%c0_23, %c0_24] : memref<1x64xf32, #tpu.memory_space<vmem>>, vector<1x64xf32>
    %51 = vector.broadcast %50 : vector<1x64xf32> to vector<32x64xf32>
    %52 = arith.addf %49, %51 : vector<32x64xf32>
    %c0_25 = arith.constant 0 : index
    %c0_26 = arith.constant 0 : index
    %53 = vector.load %arg9[%c0_25, %c0_26] : memref<64x192xf32, #tpu.memory_space<vmem>>, vector<64x192xf32>
    %cst_27 = arith.constant dense<0.000000e+00> : vector<32x192xf32>
    %54 = tpu.matmul %0, %53, %cst_27 {dimension_numbers = #tpu.dot_dimension_numbers<[1], [0], [0], [1], [0, 0, 1, 1], [], []>} : vector<32x64xf32>, vector<64x192xf32>, vector<32x192xf32> -> vector<32x192xf32>
    %c0_28 = arith.constant 0 : index
    %c0_29 = arith.constant 0 : index
    %55 = vector.load %arg10[%c0_28, %c0_29] : memref<1x192xf32, #tpu.memory_space<vmem>>, vector<1x192xf32>
    %56 = vector.broadcast %55 : vector<1x192xf32> to vector<32x192xf32>
    %57 = arith.addf %54, %56 : vector<32x192xf32>
    %58 = vector.extract_strided_slice %57 {offsets = [0, 0], sizes = [32, 64], strides = [1, 1]} : vector<32x192xf32> to vector<32x64xf32>
    %cst_30 = arith.constant 2.500000e-01 : f32
    %59 = vector.broadcast %cst_30 : f32 to vector<32x64xf32>
    %60 = arith.mulf %58, %59 : vector<32x64xf32>
    %cst_31 = arith.constant 0.000000e+00 : f32
    %61 = vector.broadcast %cst_31 : f32 to vector<32x64xf32>
    %62 = vector.extract_strided_slice %60 {offsets = [0, 0], sizes = [32, 16], strides = [1, 1]} : vector<32x64xf32> to vector<32x16xf32>
    %63 = vector.extract_strided_slice %57 {offsets = [0, 64], sizes = [32, 16], strides = [1, 1]} : vector<32x192xf32> to vector<32x16xf32>
    %64 = vector.extract_strided_slice %57 {offsets = [0, 128], sizes = [32, 16], strides = [1, 1]} : vector<32x192xf32> to vector<32x16xf32>
    %cst_32 = arith.constant dense<0.000000e+00> : vector<32x32xf32>
    %65 = tpu.matmul %62, %63, %cst_32 {dimension_numbers = #tpu.dot_dimension_numbers<[1], [1], [0], [0], [0, 0, 1, 0], [], []>} : vector<32x16xf32>, vector<32x16xf32>, vector<32x32xf32> -> vector<32x32xf32>
    %cst_33 = arith.constant dense<0xFF800000> : vector<32xf32>
    %66 = vector.multi_reduction <maximumf>, %65, %cst_33 [1] : vector<32x32xf32> to vector<32xf32>
    %67 = vector.shape_cast %66 : vector<32xf32> to vector<32x1xf32>
    %68 = vector.broadcast %67 : vector<32x1xf32> to vector<32x32xf32>
    %69 = arith.subf %65, %68 : vector<32x32xf32>
    %70 = math.exp %69 : vector<32x32xf32>
    %cst_34 = arith.constant dense<0.000000e+00> : vector<32xf32>
    %71 = vector.multi_reduction <add>, %70, %cst_34 [1] : vector<32x32xf32> to vector<32xf32>
    %72 = vector.shape_cast %71 : vector<32xf32> to vector<32x1xf32>
    %73 = tpu.reciprocal %72 {approx = true} : vector<32x1xf32> -> vector<32x1xf32>
    %74 = vector.broadcast %73 : vector<32x1xf32> to vector<32x32xf32>
    %75 = arith.mulf %70, %74 : vector<32x32xf32>
    %cst_35 = arith.constant dense<0.000000e+00> : vector<32x16xf32>
    %76 = tpu.matmul %75, %64, %cst_35 {dimension_numbers = #tpu.dot_dimension_numbers<[1], [0], [0], [1], [0, 0, 1, 1], [], []>} : vector<32x32xf32>, vector<32x16xf32>, vector<32x16xf32> -> vector<32x16xf32>
    %c0_36 = arith.constant 0 : index
    %c0_37 = arith.constant 0 : index
    %77 = vector.load %arg11[%c0_36, %c0_37] : memref<64x64xf32, #tpu.memory_space<vmem>>, vector<16x64xf32>
    %cst_38 = arith.constant dense<0.000000e+00> : vector<32x64xf32>
    %78 = tpu.matmul %76, %77, %cst_38 {dimension_numbers = #tpu.dot_dimension_numbers<[1], [0], [0], [1], [0, 0, 1, 1], [], []>} : vector<32x16xf32>, vector<16x64xf32>, vector<32x64xf32> -> vector<32x64xf32>
    %79 = arith.addf %61, %78 : vector<32x64xf32>
    %80 = vector.extract_strided_slice %60 {offsets = [0, 16], sizes = [32, 16], strides = [1, 1]} : vector<32x64xf32> to vector<32x16xf32>
    %81 = vector.extract_strided_slice %57 {offsets = [0, 80], sizes = [32, 16], strides = [1, 1]} : vector<32x192xf32> to vector<32x16xf32>
    %82 = vector.extract_strided_slice %57 {offsets = [0, 144], sizes = [32, 16], strides = [1, 1]} : vector<32x192xf32> to vector<32x16xf32>
    %cst_39 = arith.constant dense<0.000000e+00> : vector<32x32xf32>
    %83 = tpu.matmul %80, %81, %cst_39 {dimension_numbers = #tpu.dot_dimension_numbers<[1], [1], [0], [0], [0, 0, 1, 0], [], []>} : vector<32x16xf32>, vector<32x16xf32>, vector<32x32xf32> -> vector<32x32xf32>
    %cst_40 = arith.constant dense<0xFF800000> : vector<32xf32>
    %84 = vector.multi_reduction <maximumf>, %83, %cst_40 [1] : vector<32x32xf32> to vector<32xf32>
    %85 = vector.shape_cast %84 : vector<32xf32> to vector<32x1xf32>
    %86 = vector.broadcast %85 : vector<32x1xf32> to vector<32x32xf32>
    %87 = arith.subf %83, %86 : vector<32x32xf32>
    %88 = math.exp %87 : vector<32x32xf32>
    %cst_41 = arith.constant dense<0.000000e+00> : vector<32xf32>
    %89 = vector.multi_reduction <add>, %88, %cst_41 [1] : vector<32x32xf32> to vector<32xf32>
    %90 = vector.shape_cast %89 : vector<32xf32> to vector<32x1xf32>
    %91 = tpu.reciprocal %90 {approx = true} : vector<32x1xf32> -> vector<32x1xf32>
    %92 = vector.broadcast %91 : vector<32x1xf32> to vector<32x32xf32>
    %93 = arith.mulf %88, %92 : vector<32x32xf32>
    %cst_42 = arith.constant dense<0.000000e+00> : vector<32x16xf32>
    %94 = tpu.matmul %93, %82, %cst_42 {dimension_numbers = #tpu.dot_dimension_numbers<[1], [0], [0], [1], [0, 0, 1, 1], [], []>} : vector<32x32xf32>, vector<32x16xf32>, vector<32x16xf32> -> vector<32x16xf32>
    %c16 = arith.constant 16 : index
    %c0_43 = arith.constant 0 : index
    %95 = vector.load %arg11[%c16, %c0_43] : memref<64x64xf32, #tpu.memory_space<vmem>>, vector<16x64xf32>
    %cst_44 = arith.constant dense<0.000000e+00> : vector<32x64xf32>
    %96 = tpu.matmul %94, %95, %cst_44 {dimension_numbers = #tpu.dot_dimension_numbers<[1], [0], [0], [1], [0, 0, 1, 1], [], []>} : vector<32x16xf32>, vector<16x64xf32>, vector<32x64xf32> -> vector<32x64xf32>
    %97 = arith.addf %79, %96 : vector<32x64xf32>
    %98 = vector.extract_strided_slice %60 {offsets = [0, 32], sizes = [32, 16], strides = [1, 1]} : vector<32x64xf32> to vector<32x16xf32>
    %99 = vector.extract_strided_slice %57 {offsets = [0, 96], sizes = [32, 16], strides = [1, 1]} : vector<32x192xf32> to vector<32x16xf32>
    %100 = vector.extract_strided_slice %57 {offsets = [0, 160], sizes = [32, 16], strides = [1, 1]} : vector<32x192xf32> to vector<32x16xf32>
    %cst_45 = arith.constant dense<0.000000e+00> : vector<32x32xf32>
    %101 = tpu.matmul %98, %99, %cst_45 {dimension_numbers = #tpu.dot_dimension_numbers<[1], [1], [0], [0], [0, 0, 1, 0], [], []>} : vector<32x16xf32>, vector<32x16xf32>, vector<32x32xf32> -> vector<32x32xf32>
    %cst_46 = arith.constant dense<0xFF800000> : vector<32xf32>
    %102 = vector.multi_reduction <maximumf>, %101, %cst_46 [1] : vector<32x32xf32> to vector<32xf32>
    %103 = vector.shape_cast %102 : vector<32xf32> to vector<32x1xf32>
    %104 = vector.broadcast %103 : vector<32x1xf32> to vector<32x32xf32>
    %105 = arith.subf %101, %104 : vector<32x32xf32>
    %106 = math.exp %105 : vector<32x32xf32>
    %cst_47 = arith.constant dense<0.000000e+00> : vector<32xf32>
    %107 = vector.multi_reduction <add>, %106, %cst_47 [1] : vector<32x32xf32> to vector<32xf32>
    %108 = vector.shape_cast %107 : vector<32xf32> to vector<32x1xf32>
    %109 = tpu.reciprocal %108 {approx = true} : vector<32x1xf32> -> vector<32x1xf32>
    %110 = vector.broadcast %109 : vector<32x1xf32> to vector<32x32xf32>
    %111 = arith.mulf %106, %110 : vector<32x32xf32>
    %cst_48 = arith.constant dense<0.000000e+00> : vector<32x16xf32>
    %112 = tpu.matmul %111, %100, %cst_48 {dimension_numbers = #tpu.dot_dimension_numbers<[1], [0], [0], [1], [0, 0, 1, 1], [], []>} : vector<32x32xf32>, vector<32x16xf32>, vector<32x16xf32> -> vector<32x16xf32>
    %c32 = arith.constant 32 : index
    %c0_49 = arith.constant 0 : index
    %113 = vector.load %arg11[%c32, %c0_49] : memref<64x64xf32, #tpu.memory_space<vmem>>, vector<16x64xf32>
    %cst_50 = arith.constant dense<0.000000e+00> : vector<32x64xf32>
    %114 = tpu.matmul %112, %113, %cst_50 {dimension_numbers = #tpu.dot_dimension_numbers<[1], [0], [0], [1], [0, 0, 1, 1], [], []>} : vector<32x16xf32>, vector<16x64xf32>, vector<32x64xf32> -> vector<32x64xf32>
    %115 = arith.addf %97, %114 : vector<32x64xf32>
    %116 = vector.extract_strided_slice %60 {offsets = [0, 48], sizes = [32, 16], strides = [1, 1]} : vector<32x64xf32> to vector<32x16xf32>
    %117 = vector.extract_strided_slice %57 {offsets = [0, 112], sizes = [32, 16], strides = [1, 1]} : vector<32x192xf32> to vector<32x16xf32>
    %118 = vector.extract_strided_slice %57 {offsets = [0, 176], sizes = [32, 16], strides = [1, 1]} : vector<32x192xf32> to vector<32x16xf32>
    %cst_51 = arith.constant dense<0.000000e+00> : vector<32x32xf32>
    %119 = tpu.matmul %116, %117, %cst_51 {dimension_numbers = #tpu.dot_dimension_numbers<[1], [1], [0], [0], [0, 0, 1, 0], [], []>} : vector<32x16xf32>, vector<32x16xf32>, vector<32x32xf32> -> vector<32x32xf32>
    %cst_52 = arith.constant dense<0xFF800000> : vector<32xf32>
    %120 = vector.multi_reduction <maximumf>, %119, %cst_52 [1] : vector<32x32xf32> to vector<32xf32>
    %121 = vector.shape_cast %120 : vector<32xf32> to vector<32x1xf32>
    %122 = vector.broadcast %121 : vector<32x1xf32> to vector<32x32xf32>
    %123 = arith.subf %119, %122 : vector<32x32xf32>
    %124 = math.exp %123 : vector<32x32xf32>
    %cst_53 = arith.constant dense<0.000000e+00> : vector<32xf32>
    %125 = vector.multi_reduction <add>, %124, %cst_53 [1] : vector<32x32xf32> to vector<32xf32>
    %126 = vector.shape_cast %125 : vector<32xf32> to vector<32x1xf32>
    %127 = tpu.reciprocal %126 {approx = true} : vector<32x1xf32> -> vector<32x1xf32>
    %128 = vector.broadcast %127 : vector<32x1xf32> to vector<32x32xf32>
    %129 = arith.mulf %124, %128 : vector<32x32xf32>
    %cst_54 = arith.constant dense<0.000000e+00> : vector<32x16xf32>
    %130 = tpu.matmul %129, %118, %cst_54 {dimension_numbers = #tpu.dot_dimension_numbers<[1], [0], [0], [1], [0, 0, 1, 1], [], []>} : vector<32x32xf32>, vector<32x16xf32>, vector<32x16xf32> -> vector<32x16xf32>
    %c48 = arith.constant 48 : index
    %c0_55 = arith.constant 0 : index
    %131 = vector.load %arg11[%c48, %c0_55] : memref<64x64xf32, #tpu.memory_space<vmem>>, vector<16x64xf32>
    %cst_56 = arith.constant dense<0.000000e+00> : vector<32x64xf32>
    %132 = tpu.matmul %130, %131, %cst_56 {dimension_numbers = #tpu.dot_dimension_numbers<[1], [0], [0], [1], [0, 0, 1, 1], [], []>} : vector<32x16xf32>, vector<16x64xf32>, vector<32x64xf32> -> vector<32x64xf32>
    %133 = arith.addf %115, %132 : vector<32x64xf32>
    %c0_57 = arith.constant 0 : index
    %c0_58 = arith.constant 0 : index
    %134 = vector.load %arg12[%c0_57, %c0_58] : memref<1x64xf32, #tpu.memory_space<vmem>>, vector<1x64xf32>
    %135 = vector.broadcast %134 : vector<1x64xf32> to vector<32x64xf32>
    %136 = arith.addf %133, %135 : vector<32x64xf32>
    %137 = arith.addf %136, %0 : vector<32x64xf32>
    %c0_59 = arith.constant 0 : index
    %c0_60 = arith.constant 0 : index
    %138 = vector.load %arg13[%c0_59, %c0_60] : memref<1x64xf32, #tpu.memory_space<vmem>>, vector<1x64xf32>
    %139 = vector.broadcast %138 : vector<1x64xf32> to vector<32x64xf32>
    %140 = arith.mulf %137, %139 : vector<32x64xf32>
    %c0_61 = arith.constant 0 : index
    %c0_62 = arith.constant 0 : index
    %141 = vector.load %arg14[%c0_61, %c0_62] : memref<1x64xf32, #tpu.memory_space<vmem>>, vector<1x64xf32>
    %142 = vector.broadcast %141 : vector<1x64xf32> to vector<32x64xf32>
    %143 = arith.addf %140, %142 : vector<32x64xf32>
    %144 = arith.addf %52, %143 : vector<32x64xf32>
    %c0_63 = arith.constant 0 : index
    %c0_64 = arith.constant 0 : index
    %145 = vector.load %arg15[%c0_63, %c0_64] : memref<64x128xf32, #tpu.memory_space<vmem>>, vector<64x128xf32>
    %cst_65 = arith.constant dense<0.000000e+00> : vector<32x128xf32>
    %146 = tpu.matmul %144, %145, %cst_65 {dimension_numbers = #tpu.dot_dimension_numbers<[1], [0], [0], [1], [0, 0, 1, 1], [], []>} : vector<32x64xf32>, vector<64x128xf32>, vector<32x128xf32> -> vector<32x128xf32>
    %c0_66 = arith.constant 0 : index
    %c0_67 = arith.constant 0 : index
    %147 = vector.load %arg16[%c0_66, %c0_67] : memref<1x128xf32, #tpu.memory_space<vmem>>, vector<1x128xf32>
    %148 = vector.broadcast %147 : vector<1x128xf32> to vector<32x128xf32>
    %149 = arith.addf %146, %148 : vector<32x128xf32>
    %cst_68 = arith.constant 0.000000e+00 : f32
    %150 = vector.broadcast %cst_68 : f32 to vector<32x128xf32>
    %151 = arith.maximumf %149, %150 : vector<32x128xf32>
    %c0_69 = arith.constant 0 : index
    %c0_70 = arith.constant 0 : index
    %152 = vector.load %arg17[%c0_69, %c0_70] : memref<128x64xf32, #tpu.memory_space<vmem>>, vector<128x64xf32>
    %cst_71 = arith.constant dense<0.000000e+00> : vector<32x64xf32>
    %153 = tpu.matmul %151, %152, %cst_71 {dimension_numbers = #tpu.dot_dimension_numbers<[1], [0], [0], [1], [0, 0, 1, 1], [], []>} : vector<32x128xf32>, vector<128x64xf32>, vector<32x64xf32> -> vector<32x64xf32>
    %c0_72 = arith.constant 0 : index
    %c0_73 = arith.constant 0 : index
    %154 = vector.load %arg18[%c0_72, %c0_73] : memref<1x64xf32, #tpu.memory_space<vmem>>, vector<1x64xf32>
    %155 = vector.broadcast %154 : vector<1x64xf32> to vector<32x64xf32>
    %156 = arith.addf %153, %155 : vector<32x64xf32>
    %157 = arith.addf %144, %156 : vector<32x64xf32>
    %c0_74 = arith.constant 0 : index
    %c0_75 = arith.constant 0 : index
    %158 = vector.load %arg19[%c0_74, %c0_75] : memref<1x64xf32, #tpu.memory_space<vmem>>, vector<1x64xf32>
    %159 = vector.broadcast %158 : vector<1x64xf32> to vector<32x64xf32>
    %160 = arith.mulf %157, %159 : vector<32x64xf32>
    %c0_76 = arith.constant 0 : index
    %c0_77 = arith.constant 0 : index
    %161 = vector.load %arg20[%c0_76, %c0_77] : memref<1x64xf32, #tpu.memory_space<vmem>>, vector<1x64xf32>
    %162 = vector.broadcast %161 : vector<1x64xf32> to vector<32x64xf32>
    %163 = arith.addf %160, %162 : vector<32x64xf32>
    %cst_78 = arith.constant 0.000000e+00 : f32
    %164 = vector.broadcast %cst_78 : f32 to vector<32x64xf32>
    %165 = arith.maximumf %163, %164 : vector<32x64xf32>
    %c0_79 = arith.constant 0 : index
    %c0_80 = arith.constant 0 : index
    %166 = vector.load %arg21[%c0_79, %c0_80] : memref<32x64xf32, #tpu.memory_space<vmem>>, vector<32x64xf32>
    tpu.vector_store %arg21[%c0_79, %c0_80], %165 {strides = array<i32>} : memref<32x64xf32, #tpu.memory_space<vmem>>, vector<32x64xf32>,
    return
  }
  func.func @transform_0(%arg0: i32) -> (i32, i32) {
    %c0_i32 = arith.constant 0 : i32
    %c0_i32_0 = arith.constant 0 : i32
    %c0_i32_1 = arith.constant 0 : i32
    return %c0_i32, %c0_i32_0 : i32, i32
  }
  func.func @transform_1(%arg0: i32) -> (i32, i32) {
    %c0_i32 = arith.constant 0 : i32
    %c0_i32_0 = arith.constant 0 : i32
    %c0_i32_1 = arith.constant 0 : i32
    return %c0_i32, %c0_i32_0 : i32, i32
  }
  func.func @transform_2(%arg0: i32) -> (i32, i32) {
    %c0_i32 = arith.constant 0 : i32
    %c0_i32_0 = arith.constant 0 : i32
    %c0_i32_1 = arith.constant 0 : i32
    return %c0_i32, %c0_i32_0 : i32, i32
  }
  func.func @transform_3(%arg0: i32) -> (i32, i32) {
    %c0_i32 = arith.constant 0 : i32
    %c0_i32_0 = arith.constant 0 : i32
    %c0_i32_1 = arith.constant 0 : i32
    return %c0_i32, %c0_i32_0 : i32, i32
  }
  func.func @transform_4(%arg0: i32) -> (i32, i32) {
    %c0_i32 = arith.constant 0 : i32
    %c0_i32_0 = arith.constant 0 : i32
    %c0_i32_1 = arith.constant 0 : i32
    return %c0_i32, %c0_i32_0 : i32, i32
  }
  func.func @transform_5(%arg0: i32) -> (i32, i32) {
    %c0_i32 = arith.constant 0 : i32
    %c0_i32_0 = arith.constant 0 : i32
    %c0_i32_1 = arith.constant 0 : i32
    return %c0_i32, %c0_i32_0 : i32, i32
  }
  func.func @transform_6(%arg0: i32) -> (i32, i32) {
    %c0_i32 = arith.constant 0 : i32
    %c0_i32_0 = arith.constant 0 : i32
    %c0_i32_1 = arith.constant 0 : i32
    return %c0_i32, %c0_i32_0 : i32, i32
  }
  func.func @transform_7(%arg0: i32) -> (i32, i32) {
    %c0_i32 = arith.constant 0 : i32
    %c0_i32_0 = arith.constant 0 : i32
    %c0_i32_1 = arith.constant 0 : i32
    return %c0_i32, %c0_i32_0 : i32, i32
  }
  func.func @transform_8(%arg0: i32) -> (i32, i32) {
    %c0_i32 = arith.constant 0 : i32
    %c0_i32_0 = arith.constant 0 : i32
    %c0_i32_1 = arith.constant 0 : i32
    return %c0_i32, %c0_i32_0 : i32, i32
  }
  func.func @transform_9(%arg0: i32) -> (i32, i32) {
    %c0_i32 = arith.constant 0 : i32
    %c0_i32_0 = arith.constant 0 : i32
    %c0_i32_1 = arith.constant 0 : i32
    return %c0_i32, %c0_i32_0 : i32, i32
  }
  func.func @transform_10(%arg0: i32) -> (i32, i32) {
    %c0_i32 = arith.constant 0 : i32
    %c0_i32_0 = arith.constant 0 : i32
    %c0_i32_1 = arith.constant 0 : i32
    return %c0_i32, %c0_i32_0 : i32, i32
  }
  func.func @transform_11(%arg0: i32) -> (i32, i32) {
    %c0_i32 = arith.constant 0 : i32
    %c0_i32_0 = arith.constant 0 : i32
    %c0_i32_1 = arith.constant 0 : i32
    return %c0_i32, %c0_i32_0 : i32, i32
  }
  func.func @transform_12(%arg0: i32) -> (i32, i32) {
    %c0_i32 = arith.constant 0 : i32
    %c0_i32_0 = arith.constant 0 : i32
    %c0_i32_1 = arith.constant 0 : i32
    return %c0_i32, %c0_i32_0 : i32, i32
  }
  func.func @transform_13(%arg0: i32) -> (i32, i32) {
    %c0_i32 = arith.constant 0 : i32
    %c0_i32_0 = arith.constant 0 : i32
    %c0_i32_1 = arith.constant 0 : i32
    return %c0_i32, %c0_i32_0 : i32, i32
  }
  func.func @transform_14(%arg0: i32) -> (i32, i32) {
    %c0_i32 = arith.constant 0 : i32
    %c0_i32_0 = arith.constant 0 : i32
    %c0_i32_1 = arith.constant 0 : i32
    return %c0_i32, %c0_i32_0 : i32, i32
  }
  func.func @transform_15(%arg0: i32) -> (i32, i32) {
    %c0_i32 = arith.constant 0 : i32
    %c0_i32_0 = arith.constant 0 : i32
    %c0_i32_1 = arith.constant 0 : i32
    return %c0_i32, %c0_i32_0 : i32, i32
  }
  func.func @transform_16(%arg0: i32) -> (i32, i32) {
    %c0_i32 = arith.constant 0 : i32
    %c0_i32_0 = arith.constant 0 : i32
    %c0_i32_1 = arith.constant 0 : i32
    return %c0_i32, %c0_i32_0 : i32, i32
  }
  func.func @transform_17(%arg0: i32) -> (i32, i32) {
    %c0_i32 = arith.constant 0 : i32
    %c0_i32_0 = arith.constant 0 : i32
    %c0_i32_1 = arith.constant 0 : i32
    return %c0_i32, %c0_i32_0 : i32, i32
  }
  func.func @transform_18(%arg0: i32) -> (i32, i32) {
    %c0_i32 = arith.constant 0 : i32
    %c0_i32_0 = arith.constant 0 : i32
    %c0_i32_1 = arith.constant 0 : i32
    return %c0_i32, %c0_i32_0 : i32, i32
  }
  func.func @transform_19(%arg0: i32) -> (i32, i32) {
    %c0_i32 = arith.constant 0 : i32
    %c0_i32_0 = arith.constant 0 : i32
    %c0_i32_1 = arith.constant 0 : i32
    return %c0_i32, %c0_i32_0 : i32, i32
  }
  func.func @transform_20(%arg0: i32) -> (i32, i32) {
    %c0_i32 = arith.constant 0 : i32
    %c0_i32_0 = arith.constant 0 : i32
    %c0_i32_1 = arith.constant 0 : i32
    return %c0_i32, %c0_i32_0 : i32, i32
  }
}

module attributes {stable_mosaic.version = 11 : i64} {
  func.func @_gps_layer_kernel(%arg0: i32, %arg1: memref<32x64xf32, #tpu.memory_space<vmem>>, %arg2: memref<32x32xf32, #tpu.memory_space<vmem>>, %arg3: memref<64x128xf32, #tpu.memory_space<vmem>>, %arg4: memref<1x128xf32, #tpu.memory_space<vmem>>, %arg5: memref<1x64xf32, #tpu.memory_space<vmem>>, %arg6: memref<1x64xf32, #tpu.memory_space<vmem>>, %arg7: memref<1x64xf32, #tpu.memory_space<vmem>>, %arg8: memref<1x64xf32, #tpu.memory_space<vmem>>, %arg9: memref<64x192xf32, #tpu.memory_space<vmem>>, %arg10: memref<1x192xf32, #tpu.memory_space<vmem>>, %arg11: memref<64x64xf32, #tpu.memory_space<vmem>>, %arg12: memref<1x64xf32, #tpu.memory_space<vmem>>, %arg13: memref<1x64xf32, #tpu.memory_space<vmem>>, %arg14: memref<1x64xf32, #tpu.memory_space<vmem>>, %arg15: memref<64x128xf32, #tpu.memory_space<vmem>>, %arg16: memref<1x128xf32, #tpu.memory_space<vmem>>, %arg17: memref<128x64xf32, #tpu.memory_space<vmem>>, %arg18: memref<1x64xf32, #tpu.memory_space<vmem>>, %arg19: memref<1x64xf32, #tpu.memory_space<vmem>>, %arg20: memref<1x64xf32, #tpu.memory_space<vmem>>, %arg21: memref<32x64xf32, #tpu.memory_space<vmem>>) attributes {dimension_semantics = [#tpu.dimension_semantics<arbitrary>], iteration_bounds = array<i64: 1>, scalar_prefetch = 0 : i64, scratch_operands = 0 : i64, tpu.core_type = #tpu.core_type<tc>, window_params = [{pipeline_mode = #tpu.pipeline_mode<synchronous>, transform_indices = @transform_0, window_bounds = array<i64: 32, 64>}, {pipeline_mode = #tpu.pipeline_mode<synchronous>, transform_indices = @transform_1, window_bounds = array<i64: 32, 32>}, {pipeline_mode = #tpu.pipeline_mode<synchronous>, transform_indices = @transform_2, window_bounds = array<i64: 64, 128>}, {pipeline_mode = #tpu.pipeline_mode<synchronous>, transform_indices = @transform_3, window_bounds = array<i64: 1, 128>}, {pipeline_mode = #tpu.pipeline_mode<synchronous>, transform_indices = @transform_4, window_bounds = array<i64: 1, 64>}, {pipeline_mode = #tpu.pipeline_mode<synchronous>, transform_indices = @transform_5, window_bounds = array<i64: 1, 64>}, {pipeline_mode = #tpu.pipeline_mode<synchronous>, transform_indices = @transform_6, window_bounds = array<i64: 1, 64>}, {pipeline_mode = #tpu.pipeline_mode<synchronous>, transform_indices = @transform_7, window_bounds = array<i64: 1, 64>}, {pipeline_mode = #tpu.pipeline_mode<synchronous>, transform_indices = @transform_8, window_bounds = array<i64: 64, 192>}, {pipeline_mode = #tpu.pipeline_mode<synchronous>, transform_indices = @transform_9, window_bounds = array<i64: 1, 192>}, {pipeline_mode = #tpu.pipeline_mode<synchronous>, transform_indices = @transform_10, window_bounds = array<i64: 64, 64>}, {pipeline_mode = #tpu.pipeline_mode<synchronous>, transform_indices = @transform_11, window_bounds = array<i64: 1, 64>}, {pipeline_mode = #tpu.pipeline_mode<synchronous>, transform_indices = @transform_12, window_bounds = array<i64: 1, 64>}, {pipeline_mode = #tpu.pipeline_mode<synchronous>, transform_indices = @transform_13, window_bounds = array<i64: 1, 64>}, {pipeline_mode = #tpu.pipeline_mode<synchronous>, transform_indices = @transform_14, window_bounds = array<i64: 64, 128>}, {pipeline_mode = #tpu.pipeline_mode<synchronous>, transform_indices = @transform_15, window_bounds = array<i64: 1, 128>}, {pipeline_mode = #tpu.pipeline_mode<synchronous>, transform_indices = @transform_16, window_bounds = array<i64: 128, 64>}, {pipeline_mode = #tpu.pipeline_mode<synchronous>, transform_indices = @transform_17, window_bounds = array<i64: 1, 64>}, {pipeline_mode = #tpu.pipeline_mode<synchronous>, transform_indices = @transform_18, window_bounds = array<i64: 1, 64>}, {pipeline_mode = #tpu.pipeline_mode<synchronous>, transform_indices = @transform_19, window_bounds = array<i64: 1, 64>}, {pipeline_mode = #tpu.pipeline_mode<synchronous>, transform_indices = @transform_20, window_bounds = array<i64: 32, 64>}]} {
    %c0 = arith.constant 0 : index
    %c0_0 = arith.constant 0 : index
    %0 = vector.load %arg1[%c0, %c0_0] : memref<32x64xf32, #tpu.memory_space<vmem>>, vector<32x64xf32>
    %c0_1 = arith.constant 0 : index
    %c0_2 = arith.constant 0 : index
    %1 = vector.load %arg2[%c0_1, %c0_2] : memref<32x32xf32, #tpu.memory_space<vmem>>, vector<32x32xf32>
    %c0_3 = arith.constant 0 : index
    %c0_4 = arith.constant 0 : index
    %2 = vector.load %arg3[%c0_3, %c0_4] : memref<64x128xf32, #tpu.memory_space<vmem>>, vector<64x128xf32>
    %cst = arith.constant dense<0.000000e+00> : vector<32x128xf32>
    %3 = tpu.matmul %0, %2, %cst {dimension_numbers = #tpu.dot_dimension_numbers<[1], [0], [0], [1], [0, 0, 1, 1], [], []>} : vector<32x64xf32>, vector<64x128xf32>, vector<32x128xf32> -> vector<32x128xf32>
    %c0_5 = arith.constant 0 : index
    %c0_6 = arith.constant 0 : index
    %4 = vector.load %arg4[%c0_5, %c0_6] : memref<1x128xf32, #tpu.memory_space<vmem>>, vector<1x128xf32>
    %5 = vector.broadcast %4 : vector<1x128xf32> to vector<32x128xf32>
    %6 = arith.addf %3, %5 : vector<32x128xf32>
    %7 = vector.extract_strided_slice %6 {offsets = [0, 0], sizes = [32, 64], strides = [1, 1]} : vector<32x128xf32> to vector<32x64xf32>
    %8 = vector.extract_strided_slice %6 {offsets = [0, 64], sizes = [32, 64], strides = [1, 1]} : vector<32x128xf32> to vector<32x64xf32>
    %9 = vector.shape_cast %7 : vector<32x64xf32> to vector<1x32x64xf32>
    %10 = vector.shape_cast %8 : vector<32x64xf32> to vector<32x1x64xf32>
    %11 = vector.broadcast %9 : vector<1x32x64xf32> to vector<32x32x64xf32>
    %12 = vector.broadcast %10 : vector<32x1x64xf32> to vector<32x32x64xf32>
    %13 = arith.addf %11, %12 : vector<32x32x64xf32>
    %cst_7 = arith.constant 0.000000e+00 : f32
    %14 = vector.broadcast %cst_7 : f32 to vector<32x32x64xf32>
    %15 = arith.cmpf ogt, %13, %14 : vector<32x32x64xf32>
    %cst_8 = arith.constant 2.000000e-01 : f32
    %16 = vector.broadcast %cst_8 : f32 to vector<32x32x64xf32>
    %17 = arith.mulf %16, %13 : vector<32x32x64xf32>
    %18 = arith.select %15, %13, %17 : vector<32x32x64xi1>, vector<32x32x64xf32>
    %c0_9 = arith.constant 0 : index
    %c0_10 = arith.constant 0 : index
    %19 = vector.load %arg5[%c0_9, %c0_10] : memref<1x64xf32, #tpu.memory_space<vmem>>, vector<1x64xf32>
    %20 = vector.shape_cast %19 : vector<1x64xf32> to vector<1x1x64xf32>
    %21 = vector.broadcast %20 : vector<1x1x64xf32> to vector<32x32x64xf32>
    %22 = arith.mulf %18, %21 : vector<32x32x64xf32>
    %cst_11 = arith.constant dense<0.000000e+00> : vector<32x32xf32>
    %23 = vector.multi_reduction <add>, %22, %cst_11 [2] : vector<32x32x64xf32> to vector<32x32xf32>
    %cst_12 = arith.constant 0.000000e+00 : f32
    %24 = vector.broadcast %cst_12 : f32 to vector<32x32xf32>
    %25 = arith.cmpf ogt, %1, %24 : vector<32x32xf32>
    %cst_13 = arith.constant -1.000000e+30 : f32
    %26 = vector.broadcast %cst_13 : f32 to vector<32x32xf32>
    %27 = arith.select %25, %23, %26 : vector<32x32xi1>, vector<32x32xf32>
    %cst_14 = arith.constant dense<0xFF800000> : vector<32xf32>
    %28 = vector.multi_reduction <maximumf>, %27, %cst_14 [1] : vector<32x32xf32> to vector<32xf32>
    %29 = vector.shape_cast %28 : vector<32xf32> to vector<32x1xf32>
    %30 = vector.broadcast %29 : vector<32x1xf32> to vector<32x32xf32>
    %31 = arith.subf %27, %30 : vector<32x32xf32>
    %32 = math.exp %31 : vector<32x32xf32>
    %cst_15 = arith.constant 0.000000e+00 : f32
    %33 = vector.broadcast %cst_15 : f32 to vector<32x32xf32>
    %34 = arith.cmpf ogt, %1, %33 : vector<32x32xf32>
    %cst_16 = arith.constant 0.000000e+00 : f32
    %35 = vector.broadcast %cst_16 : f32 to vector<32x32xf32>
    %36 = arith.select %34, %32, %35 : vector<32x32xi1>, vector<32x32xf32>
    %cst_17 = arith.constant dense<0.000000e+00> : vector<32xf32>
    %37 = vector.multi_reduction <add>, %36, %cst_17 [1] : vector<32x32xf32> to vector<32xf32>
    %38 = vector.shape_cast %37 : vector<32xf32> to vector<32x1xf32>
    %39 = tpu.reciprocal %38 {approx = true} : vector<32x1xf32> -> vector<32x1xf32>
    %40 = vector.broadcast %39 : vector<32x1xf32> to vector<32x32xf32>
    %41 = arith.mulf %36, %40 : vector<32x32xf32>
    %cst_18 = arith.constant dense<0.000000e+00> : vector<32x64xf32>
    %42 = tpu.matmul %41, %7, %cst_18 {dimension_numbers = #tpu.dot_dimension_numbers<[1], [0], [0], [1], [0, 0, 1, 1], [], []>} : vector<32x32xf32>, vector<32x64xf32>, vector<32x64xf32> -> vector<32x64xf32>
    %c0_19 = arith.constant 0 : index
    %c0_20 = arith.constant 0 : index
    %43 = vector.load %arg6[%c0_19, %c0_20] : memref<1x64xf32, #tpu.memory_space<vmem>>, vector<1x64xf32>
    %44 = vector.broadcast %43 : vector<1x64xf32> to vector<32x64xf32>
    %45 = arith.addf %42, %44 : vector<32x64xf32>
    %46 = arith.addf %45, %0 : vector<32x64xf32>
    %c0_21 = arith.constant 0 : index
    %c0_22 = arith.constant 0 : index
    %47 = vector.load %arg7[%c0_21, %c0_22] : memref<1x64xf32, #tpu.memory_space<vmem>>, vector<1x64xf32>
    %48 = vector.broadcast %47 : vector<1x64xf32> to vector<32x64xf32>
    %49 = arith.mulf %46, %48 : vector<32x64xf32>
    %c0_23 = arith.constant 0 : index
    %c0_24 = arith.constant 0 : index
    %50 = vector.load %arg8[%c0_23, %c0_24] : memref<1x64xf32, #tpu.memory_space<vmem>>, vector<1x64xf32>
    %51 = vector.broadcast %50 : vector<1x64xf32> to vector<32x64xf32>
    %52 = arith.addf %49, %51 : vector<32x64xf32>
    %c0_25 = arith.constant 0 : index
    %c0_26 = arith.constant 0 : index
    %53 = vector.load %arg9[%c0_25, %c0_26] : memref<64x192xf32, #tpu.memory_space<vmem>>, vector<64x192xf32>
    %cst_27 = arith.constant dense<0.000000e+00> : vector<32x192xf32>
    %54 = tpu.matmul %0, %53, %cst_27 {dimension_numbers = #tpu.dot_dimension_numbers<[1], [0], [0], [1], [0, 0, 1, 1], [], []>} : vector<32x64xf32>, vector<64x192xf32>, vector<32x192xf32> -> vector<32x192xf32>
    %c0_28 = arith.constant 0 : index
    %c0_29 = arith.constant 0 : index
    %55 = vector.load %arg10[%c0_28, %c0_29] : memref<1x192xf32, #tpu.memory_space<vmem>>, vector<1x192xf32>
    %56 = vector.broadcast %55 : vector<1x192xf32> to vector<32x192xf32>
    %57 = arith.addf %54, %56 : vector<32x192xf32>
    %58 = vector.extract_strided_slice %57 {offsets = [0, 0], sizes = [32, 64], strides = [1, 1]} : vector<32x192xf32> to vector<32x64xf32>
    %cst_30 = arith.constant 2.500000e-01 : f32
    %59 = vector.broadcast %cst_30 : f32 to vector<32x64xf32>
    %60 = arith.mulf %58, %59 : vector<32x64xf32>
    %cst_31 = arith.constant 0.000000e+00 : f32
    %61 = vector.broadcast %cst_31 : f32 to vector<32x64xf32>
    %62 = vector.extract_strided_slice %60 {offsets = [0, 0], sizes = [32, 16], strides = [1, 1]} : vector<32x64xf32> to vector<32x16xf32>
    %63 = vector.extract_strided_slice %57 {offsets = [0, 64], sizes = [32, 16], strides = [1, 1]} : vector<32x192xf32> to vector<32x16xf32>
    %64 = vector.extract_strided_slice %57 {offsets = [0, 128], sizes = [32, 16], strides = [1, 1]} : vector<32x192xf32> to vector<32x16xf32>
    %cst_32 = arith.constant dense<0.000000e+00> : vector<32x32xf32>
    %65 = tpu.matmul %62, %63, %cst_32 {dimension_numbers = #tpu.dot_dimension_numbers<[1], [1], [0], [0], [0, 0, 1, 0], [], []>} : vector<32x16xf32>, vector<32x16xf32>, vector<32x32xf32> -> vector<32x32xf32>
    %cst_33 = arith.constant dense<0xFF800000> : vector<32xf32>
    %66 = vector.multi_reduction <maximumf>, %65, %cst_33 [1] : vector<32x32xf32> to vector<32xf32>
    %67 = vector.shape_cast %66 : vector<32xf32> to vector<32x1xf32>
    %68 = vector.broadcast %67 : vector<32x1xf32> to vector<32x32xf32>
    %69 = arith.subf %65, %68 : vector<32x32xf32>
    %70 = math.exp %69 : vector<32x32xf32>
    %cst_34 = arith.constant dense<0.000000e+00> : vector<32xf32>
    %71 = vector.multi_reduction <add>, %70, %cst_34 [1] : vector<32x32xf32> to vector<32xf32>
    %72 = vector.shape_cast %71 : vector<32xf32> to vector<32x1xf32>
    %73 = tpu.reciprocal %72 {approx = true} : vector<32x1xf32> -> vector<32x1xf32>
    %74 = vector.broadcast %73 : vector<32x1xf32> to vector<32x32xf32>
    %75 = arith.mulf %70, %74 : vector<32x32xf32>
    %cst_35 = arith.constant dense<0.000000e+00> : vector<32x16xf32>
    %76 = tpu.matmul %75, %64, %cst_35 {dimension_numbers = #tpu.dot_dimension_numbers<[1], [0], [0], [1], [0, 0, 1, 1], [], []>} : vector<32x32xf32>, vector<32x16xf32>, vector<32x16xf32> -> vector<32x16xf32>
    %c0_36 = arith.constant 0 : index
    %c0_37 = arith.constant 0 : index
    %77 = vector.load %arg11[%c0_36, %c0_37] : memref<64x64xf32, #tpu.memory_space<vmem>>, vector<16x64xf32>
    %cst_38 = arith.constant dense<0.000000e+00> : vector<32x64xf32>
    %78 = tpu.matmul %76, %77, %cst_38 {dimension_numbers = #tpu.dot_dimension_numbers<[1], [0], [0], [1], [0, 0, 1, 1], [], []>} : vector<32x16xf32>, vector<16x64xf32>, vector<32x64xf32> -> vector<32x64xf32>
    %79 = arith.addf %61, %78 : vector<32x64xf32>
    %80 = vector.extract_strided_slice %60 {offsets = [0, 16], sizes = [32, 16], strides = [1, 1]} : vector<32x64xf32> to vector<32x16xf32>
    %81 = vector.extract_strided_slice %57 {offsets = [0, 80], sizes = [32, 16], strides = [1, 1]} : vector<32x192xf32> to vector<32x16xf32>
    %82 = vector.extract_strided_slice %57 {offsets = [0, 144], sizes = [32, 16], strides = [1, 1]} : vector<32x192xf32> to vector<32x16xf32>
    %cst_39 = arith.constant dense<0.000000e+00> : vector<32x32xf32>
    %83 = tpu.matmul %80, %81, %cst_39 {dimension_numbers = #tpu.dot_dimension_numbers<[1], [1], [0], [0], [0, 0, 1, 0], [], []>} : vector<32x16xf32>, vector<32x16xf32>, vector<32x32xf32> -> vector<32x32xf32>
    %cst_40 = arith.constant dense<0xFF800000> : vector<32xf32>
    %84 = vector.multi_reduction <maximumf>, %83, %cst_40 [1] : vector<32x32xf32> to vector<32xf32>
    %85 = vector.shape_cast %84 : vector<32xf32> to vector<32x1xf32>
    %86 = vector.broadcast %85 : vector<32x1xf32> to vector<32x32xf32>
    %87 = arith.subf %83, %86 : vector<32x32xf32>
    %88 = math.exp %87 : vector<32x32xf32>
    %cst_41 = arith.constant dense<0.000000e+00> : vector<32xf32>
    %89 = vector.multi_reduction <add>, %88, %cst_41 [1] : vector<32x32xf32> to vector<32xf32>
    %90 = vector.shape_cast %89 : vector<32xf32> to vector<32x1xf32>
    %91 = tpu.reciprocal %90 {approx = true} : vector<32x1xf32> -> vector<32x1xf32>
    %92 = vector.broadcast %91 : vector<32x1xf32> to vector<32x32xf32>
    %93 = arith.mulf %88, %92 : vector<32x32xf32>
    %cst_42 = arith.constant dense<0.000000e+00> : vector<32x16xf32>
    %94 = tpu.matmul %93, %82, %cst_42 {dimension_numbers = #tpu.dot_dimension_numbers<[1], [0], [0], [1], [0, 0, 1, 1], [], []>} : vector<32x32xf32>, vector<32x16xf32>, vector<32x16xf32> -> vector<32x16xf32>
    %c16 = arith.constant 16 : index
    %c0_43 = arith.constant 0 : index
    %95 = vector.load %arg11[%c16, %c0_43] : memref<64x64xf32, #tpu.memory_space<vmem>>, vector<16x64xf32>
    %cst_44 = arith.constant dense<0.000000e+00> : vector<32x64xf32>
    %96 = tpu.matmul %94, %95, %cst_44 {dimension_numbers = #tpu.dot_dimension_numbers<[1], [0], [0], [1], [0, 0, 1, 1], [], []>} : vector<32x16xf32>, vector<16x64xf32>, vector<32x64xf32> -> vector<32x64xf32>
    %97 = arith.addf %79, %96 : vector<32x64xf32>
    %98 = vector.extract_strided_slice %60 {offsets = [0, 32], sizes = [32, 16], strides = [1, 1]} : vector<32x64xf32> to vector<32x16xf32>
    %99 = vector.extract_strided_slice %57 {offsets = [0, 96], sizes = [32, 16], strides = [1, 1]} : vector<32x192xf32> to vector<32x16xf32>
    %100 = vector.extract_strided_slice %57 {offsets = [0, 160], sizes = [32, 16], strides = [1, 1]} : vector<32x192xf32> to vector<32x16xf32>
    %cst_45 = arith.constant dense<0.000000e+00> : vector<32x32xf32>
    %101 = tpu.matmul %98, %99, %cst_45 {dimension_numbers = #tpu.dot_dimension_numbers<[1], [1], [0], [0], [0, 0, 1, 0], [], []>} : vector<32x16xf32>, vector<32x16xf32>, vector<32x32xf32> -> vector<32x32xf32>
    %cst_46 = arith.constant dense<0xFF800000> : vector<32xf32>
    %102 = vector.multi_reduction <maximumf>, %101, %cst_46 [1] : vector<32x32xf32> to vector<32xf32>
    %103 = vector.shape_cast %102 : vector<32xf32> to vector<32x1xf32>
    %104 = vector.broadcast %103 : vector<32x1xf32> to vector<32x32xf32>
    %105 = arith.subf %101, %104 : vector<32x32xf32>
    %106 = math.exp %105 : vector<32x32xf32>
    %cst_47 = arith.constant dense<0.000000e+00> : vector<32xf32>
    %107 = vector.multi_reduction <add>, %106, %cst_47 [1] : vector<32x32xf32> to vector<32xf32>
    %108 = vector.shape_cast %107 : vector<32xf32> to vector<32x1xf32>
    %109 = tpu.reciprocal %108 {approx = true} : vector<32x1xf32> -> vector<32x1xf32>
    %110 = vector.broadcast %109 : vector<32x1xf32> to vector<32x32xf32>
    %111 = arith.mulf %106, %110 : vector<32x32xf32>
    %cst_48 = arith.constant dense<0.000000e+00> : vector<32x16xf32>
    %112 = tpu.matmul %111, %100, %cst_48 {dimension_numbers = #tpu.dot_dimension_numbers<[1], [0], [0], [1], [0, 0, 1, 1], [], []>} : vector<32x32xf32>, vector<32x16xf32>, vector<32x16xf32> -> vector<32x16xf32>
    %c32 = arith.constant 32 : index
    %c0_49 = arith.constant 0 : index
    %113 = vector.load %arg11[%c32, %c0_49] : memref<64x64xf32, #tpu.memory_space<vmem>>, vector<16x64xf32>
    %cst_50 = arith.constant dense<0.000000e+00> : vector<32x64xf32>
    %114 = tpu.matmul %112, %113, %cst_50 {dimension_numbers = #tpu.dot_dimension_numbers<[1], [0], [0], [1], [0, 0, 1, 1], [], []>} : vector<32x16xf32>, vector<16x64xf32>, vector<32x64xf32> -> vector<32x64xf32>
    %115 = arith.addf %97, %114 : vector<32x64xf32>
    %116 = vector.extract_strided_slice %60 {offsets = [0, 48], sizes = [32, 16], strides = [1, 1]} : vector<32x64xf32> to vector<32x16xf32>
    %117 = vector.extract_strided_slice %57 {offsets = [0, 112], sizes = [32, 16], strides = [1, 1]} : vector<32x192xf32> to vector<32x16xf32>
    %118 = vector.extract_strided_slice %57 {offsets = [0, 176], sizes = [32, 16], strides = [1, 1]} : vector<32x192xf32> to vector<32x16xf32>
    %cst_51 = arith.constant dense<0.000000e+00> : vector<32x32xf32>
    %119 = tpu.matmul %116, %117, %cst_51 {dimension_numbers = #tpu.dot_dimension_numbers<[1], [1], [0], [0], [0, 0, 1, 0], [], []>} : vector<32x16xf32>, vector<32x16xf32>, vector<32x32xf32> -> vector<32x32xf32>
    %cst_52 = arith.constant dense<0xFF800000> : vector<32xf32>
    %120 = vector.multi_reduction <maximumf>, %119, %cst_52 [1] : vector<32x32xf32> to vector<32xf32>
    %121 = vector.shape_cast %120 : vector<32xf32> to vector<32x1xf32>
    %122 = vector.broadcast %121 : vector<32x1xf32> to vector<32x32xf32>
    %123 = arith.subf %119, %122 : vector<32x32xf32>
    %124 = math.exp %123 : vector<32x32xf32>
    %cst_53 = arith.constant dense<0.000000e+00> : vector<32xf32>
    %125 = vector.multi_reduction <add>, %124, %cst_53 [1] : vector<32x32xf32> to vector<32xf32>
    %126 = vector.shape_cast %125 : vector<32xf32> to vector<32x1xf32>
    %127 = tpu.reciprocal %126 {approx = true} : vector<32x1xf32> -> vector<32x1xf32>
    %128 = vector.broadcast %127 : vector<32x1xf32> to vector<32x32xf32>
    %129 = arith.mulf %124, %128 : vector<32x32xf32>
    %cst_54 = arith.constant dense<0.000000e+00> : vector<32x16xf32>
    %130 = tpu.matmul %129, %118, %cst_54 {dimension_numbers = #tpu.dot_dimension_numbers<[1], [0], [0], [1], [0, 0, 1, 1], [], []>} : vector<32x32xf32>, vector<32x16xf32>, vector<32x16xf32> -> vector<32x16xf32>
    %c48 = arith.constant 48 : index
    %c0_55 = arith.constant 0 : index
    %131 = vector.load %arg11[%c48, %c0_55] : memref<64x64xf32, #tpu.memory_space<vmem>>, vector<16x64xf32>
    %cst_56 = arith.constant dense<0.000000e+00> : vector<32x64xf32>
    %132 = tpu.matmul %130, %131, %cst_56 {dimension_numbers = #tpu.dot_dimension_numbers<[1], [0], [0], [1], [0, 0, 1, 1], [], []>} : vector<32x16xf32>, vector<16x64xf32>, vector<32x64xf32> -> vector<32x64xf32>
    %133 = arith.addf %115, %132 : vector<32x64xf32>
    %c0_57 = arith.constant 0 : index
    %c0_58 = arith.constant 0 : index
    %134 = vector.load %arg12[%c0_57, %c0_58] : memref<1x64xf32, #tpu.memory_space<vmem>>, vector<1x64xf32>
    %135 = vector.broadcast %134 : vector<1x64xf32> to vector<32x64xf32>
    %136 = arith.addf %133, %135 : vector<32x64xf32>
    %137 = arith.addf %136, %0 : vector<32x64xf32>
    %c0_59 = arith.constant 0 : index
    %c0_60 = arith.constant 0 : index
    %138 = vector.load %arg13[%c0_59, %c0_60] : memref<1x64xf32, #tpu.memory_space<vmem>>, vector<1x64xf32>
    %139 = vector.broadcast %138 : vector<1x64xf32> to vector<32x64xf32>
    %140 = arith.mulf %137, %139 : vector<32x64xf32>
    %c0_61 = arith.constant 0 : index
    %c0_62 = arith.constant 0 : index
    %141 = vector.load %arg14[%c0_61, %c0_62] : memref<1x64xf32, #tpu.memory_space<vmem>>, vector<1x64xf32>
    %142 = vector.broadcast %141 : vector<1x64xf32> to vector<32x64xf32>
    %143 = arith.addf %140, %142 : vector<32x64xf32>
    %144 = arith.addf %52, %143 : vector<32x64xf32>
    %c0_63 = arith.constant 0 : index
    %c0_64 = arith.constant 0 : index
    %145 = vector.load %arg15[%c0_63, %c0_64] : memref<64x128xf32, #tpu.memory_space<vmem>>, vector<64x128xf32>
    %cst_65 = arith.constant dense<0.000000e+00> : vector<32x128xf32>
    %146 = tpu.matmul %144, %145, %cst_65 {dimension_numbers = #tpu.dot_dimension_numbers<[1], [0], [0], [1], [0, 0, 1, 1], [], []>} : vector<32x64xf32>, vector<64x128xf32>, vector<32x128xf32> -> vector<32x128xf32>
    %c0_66 = arith.constant 0 : index
    %c0_67 = arith.constant 0 : index
    %147 = vector.load %arg16[%c0_66, %c0_67] : memref<1x128xf32, #tpu.memory_space<vmem>>, vector<1x128xf32>
    %148 = vector.broadcast %147 : vector<1x128xf32> to vector<32x128xf32>
    %149 = arith.addf %146, %148 : vector<32x128xf32>
    %cst_68 = arith.constant 0.000000e+00 : f32
    %150 = vector.broadcast %cst_68 : f32 to vector<32x128xf32>
    %151 = arith.maximumf %149, %150 : vector<32x128xf32>
    %c0_69 = arith.constant 0 : index
    %c0_70 = arith.constant 0 : index
    %152 = vector.load %arg17[%c0_69, %c0_70] : memref<128x64xf32, #tpu.memory_space<vmem>>, vector<128x64xf32>
    %cst_71 = arith.constant dense<0.000000e+00> : vector<32x64xf32>
    %153 = tpu.matmul %151, %152, %cst_71 {dimension_numbers = #tpu.dot_dimension_numbers<[1], [0], [0], [1], [0, 0, 1, 1], [], []>} : vector<32x128xf32>, vector<128x64xf32>, vector<32x64xf32> -> vector<32x64xf32>
    %c0_72 = arith.constant 0 : index
    %c0_73 = arith.constant 0 : index
    %154 = vector.load %arg18[%c0_72, %c0_73] : memref<1x64xf32, #tpu.memory_space<vmem>>, vector<1x64xf32>
    %155 = vector.broadcast %154 : vector<1x64xf32> to vector<32x64xf32>
    %156 = arith.addf %153, %155 : vector<32x64xf32>
    %157 = arith.addf %144, %156 : vector<32x64xf32>
    %c0_74 = arith.constant 0 : index
    %c0_75 = arith.constant 0 : index
    %158 = vector.load %arg19[%c0_74, %c0_75] : memref<1x64xf32, #tpu.memory_space<vmem>>, vector<1x64xf32>
    %159 = vector.broadcast %158 : vector<1x64xf32> to vector<32x64xf32>
    %160 = arith.mulf %157, %159 : vector<32x64xf32>
    %c0_76 = arith.constant 0 : index
    %c0_77 = arith.constant 0 : index
    %161 = vector.load %arg20[%c0_76, %c0_77] : memref<1x64xf32, #tpu.memory_space<vmem>>, vector<1x64xf32>
    %162 = vector.broadcast %161 : vector<1x64xf32> to vector<32x64xf32>
    %163 = arith.addf %160, %162 : vector<32x64xf32>
    %cst_78 = arith.constant 0.000000e+00 : f32
    %164 = vector.broadcast %cst_78 : f32 to vector<32x64xf32>
    %165 = arith.maximumf %163, %164 : vector<32x64xf32>
    %c0_79 = arith.constant 0 : index
    %c0_80 = arith.constant 0 : index
    %166 = vector.load %arg21[%c0_79, %c0_80] : memref<32x64xf32, #tpu.memory_space<vmem>>, vector<32x64xf32>
    tpu.vector_store %arg21[%c0_79, %c0_80], %165 {strides = array<i32>} : memref<32x64xf32, #tpu.memory_space<vmem>>, vector<32x64xf32>,
    return
  }
  func.func @transform_0(%arg0: i32) -> (i32, i32) {
    %c0_i32 = arith.constant 0 : i32
    %c0_i32_0 = arith.constant 0 : i32
    %c0_i32_1 = arith.constant 0 : i32
    return %c0_i32, %c0_i32_0 : i32, i32
  }
  func.func @transform_1(%arg0: i32) -> (i32, i32) {
    %c0_i32 = arith.constant 0 : i32
    %c0_i32_0 = arith.constant 0 : i32
    %c0_i32_1 = arith.constant 0 : i32
    return %c0_i32, %c0_i32_0 : i32, i32
  }
  func.func @transform_2(%arg0: i32) -> (i32, i32) {
    %c0_i32 = arith.constant 0 : i32
    %c0_i32_0 = arith.constant 0 : i32
    %c0_i32_1 = arith.constant 0 : i32
    return %c0_i32, %c0_i32_0 : i32, i32
  }
  func.func @transform_3(%arg0: i32) -> (i32, i32) {
    %c0_i32 = arith.constant 0 : i32
    %c0_i32_0 = arith.constant 0 : i32
    %c0_i32_1 = arith.constant 0 : i32
    return %c0_i32, %c0_i32_0 : i32, i32
  }
  func.func @transform_4(%arg0: i32) -> (i32, i32) {
    %c0_i32 = arith.constant 0 : i32
    %c0_i32_0 = arith.constant 0 : i32
    %c0_i32_1 = arith.constant 0 : i32
    return %c0_i32, %c0_i32_0 : i32, i32
  }
  func.func @transform_5(%arg0: i32) -> (i32, i32) {
    %c0_i32 = arith.constant 0 : i32
    %c0_i32_0 = arith.constant 0 : i32
    %c0_i32_1 = arith.constant 0 : i32
    return %c0_i32, %c0_i32_0 : i32, i32
  }
  func.func @transform_6(%arg0: i32) -> (i32, i32) {
    %c0_i32 = arith.constant 0 : i32
    %c0_i32_0 = arith.constant 0 : i32
    %c0_i32_1 = arith.constant 0 : i32
    return %c0_i32, %c0_i32_0 : i32, i32
  }
  func.func @transform_7(%arg0: i32) -> (i32, i32) {
    %c0_i32 = arith.constant 0 : i32
    %c0_i32_0 = arith.constant 0 : i32
    %c0_i32_1 = arith.constant 0 : i32
    return %c0_i32, %c0_i32_0 : i32, i32
  }
  func.func @transform_8(%arg0: i32) -> (i32, i32) {
    %c0_i32 = arith.constant 0 : i32
    %c0_i32_0 = arith.constant 0 : i32
    %c0_i32_1 = arith.constant 0 : i32
    return %c0_i32, %c0_i32_0 : i32, i32
  }
  func.func @transform_9(%arg0: i32) -> (i32, i32) {
    %c0_i32 = arith.constant 0 : i32
    %c0_i32_0 = arith.constant 0 : i32
    %c0_i32_1 = arith.constant 0 : i32
    return %c0_i32, %c0_i32_0 : i32, i32
  }
  func.func @transform_10(%arg0: i32) -> (i32, i32) {
    %c0_i32 = arith.constant 0 : i32
    %c0_i32_0 = arith.constant 0 : i32
    %c0_i32_1 = arith.constant 0 : i32
    return %c0_i32, %c0_i32_0 : i32, i32
  }
  func.func @transform_11(%arg0: i32) -> (i32, i32) {
    %c0_i32 = arith.constant 0 : i32
    %c0_i32_0 = arith.constant 0 : i32
    %c0_i32_1 = arith.constant 0 : i32
    return %c0_i32, %c0_i32_0 : i32, i32
  }
  func.func @transform_12(%arg0: i32) -> (i32, i32) {
    %c0_i32 = arith.constant 0 : i32
    %c0_i32_0 = arith.constant 0 : i32
    %c0_i32_1 = arith.constant 0 : i32
    return %c0_i32, %c0_i32_0 : i32, i32
  }
  func.func @transform_13(%arg0: i32) -> (i32, i32) {
    %c0_i32 = arith.constant 0 : i32
    %c0_i32_0 = arith.constant 0 : i32
    %c0_i32_1 = arith.constant 0 : i32
    return %c0_i32, %c0_i32_0 : i32, i32
  }
  func.func @transform_14(%arg0: i32) -> (i32, i32) {
    %c0_i32 = arith.constant 0 : i32
    %c0_i32_0 = arith.constant 0 : i32
    %c0_i32_1 = arith.constant 0 : i32
    return %c0_i32, %c0_i32_0 : i32, i32
  }
  func.func @transform_15(%arg0: i32) -> (i32, i32) {
    %c0_i32 = arith.constant 0 : i32
    %c0_i32_0 = arith.constant 0 : i32
    %c0_i32_1 = arith.constant 0 : i32
    return %c0_i32, %c0_i32_0 : i32, i32
  }
  func.func @transform_16(%arg0: i32) -> (i32, i32) {
    %c0_i32 = arith.constant 0 : i32
    %c0_i32_0 = arith.constant 0 : i32
    %c0_i32_1 = arith.constant 0 : i32
    return %c0_i32, %c0_i32_0 : i32, i32
  }
  func.func @transform_17(%arg0: i32) -> (i32, i32) {
    %c0_i32 = arith.constant 0 : i32
    %c0_i32_0 = arith.constant 0 : i32
    %c0_i32_1 = arith.constant 0 : i32
    return %c0_i32, %c0_i32_0 : i32, i32
  }
  func.func @transform_18(%arg0: i32) -> (i32, i32) {
    %c0_i32 = arith.constant 0 : i32
    %c0_i32_0 = arith.constant 0 : i32
    %c0_i32_1 = arith.constant 0 : i32
    return %c0_i32, %c0_i32_0 : i32, i32
  }
  func.func @transform_19(%arg0: i32) -> (i32, i32) {
    %c0_i32 = arith.constant 0 : i32
    %c0_i32_0 = arith.constant 0 : i32
    %c0_i32_1 = arith.constant 0 : i32
    return %c0_i32, %c0_i32_0 : i32, i32
  }
  func.func @transform_20(%arg0: i32) -> (i32, i32) {
    %c0_i32 = arith.constant 0 : i32
    %c0_i32_0 = arith.constant 0 : i32
    %c0_i32_1 = arith.constant 0 : i32
    return %c0_i32, %c0_i32_0 : i32, i32
  }
}

module attributes {stable_mosaic.version = 11 : i64} {
  func.func @_final_kernel(%arg0: i32, %arg1: memref<32x64xf32, #tpu.memory_space<vmem>>, %arg2: memref<32x32xf32, #tpu.memory_space<vmem>>, %arg3: memref<64x16xf32, #tpu.memory_space<vmem>>, %arg4: memref<1x16xf32, #tpu.memory_space<vmem>>, %arg5: memref<1x8xf32, #tpu.memory_space<vmem>>, %arg6: memref<1x8xf32, #tpu.memory_space<vmem>>, %arg7: memref<32x8xf32, #tpu.memory_space<vmem>>) attributes {dimension_semantics = [#tpu.dimension_semantics<arbitrary>], iteration_bounds = array<i64: 1>, scalar_prefetch = 0 : i64, scratch_operands = 0 : i64, tpu.core_type = #tpu.core_type<tc>, window_params = [{pipeline_mode = #tpu.pipeline_mode<synchronous>, transform_indices = @transform_0, window_bounds = array<i64: 32, 64>}, {pipeline_mode = #tpu.pipeline_mode<synchronous>, transform_indices = @transform_1, window_bounds = array<i64: 32, 32>}, {pipeline_mode = #tpu.pipeline_mode<synchronous>, transform_indices = @transform_2, window_bounds = array<i64: 64, 16>}, {pipeline_mode = #tpu.pipeline_mode<synchronous>, transform_indices = @transform_3, window_bounds = array<i64: 1, 16>}, {pipeline_mode = #tpu.pipeline_mode<synchronous>, transform_indices = @transform_4, window_bounds = array<i64: 1, 8>}, {pipeline_mode = #tpu.pipeline_mode<synchronous>, transform_indices = @transform_5, window_bounds = array<i64: 1, 8>}, {pipeline_mode = #tpu.pipeline_mode<synchronous>, transform_indices = @transform_6, window_bounds = array<i64: 32, 8>}]} {
    %c0 = arith.constant 0 : index
    %c0_0 = arith.constant 0 : index
    %0 = vector.load %arg1[%c0, %c0_0] : memref<32x64xf32, #tpu.memory_space<vmem>>, vector<32x64xf32>
    %c0_1 = arith.constant 0 : index
    %c0_2 = arith.constant 0 : index
    %1 = vector.load %arg2[%c0_1, %c0_2] : memref<32x32xf32, #tpu.memory_space<vmem>>, vector<32x32xf32>
    %c0_3 = arith.constant 0 : index
    %c0_4 = arith.constant 0 : index
    %2 = vector.load %arg3[%c0_3, %c0_4] : memref<64x16xf32, #tpu.memory_space<vmem>>, vector<64x16xf32>
    %cst = arith.constant dense<0.000000e+00> : vector<32x16xf32>
    %3 = tpu.matmul %0, %2, %cst {dimension_numbers = #tpu.dot_dimension_numbers<[1], [0], [0], [1], [0, 0, 1, 1], [], []>} : vector<32x64xf32>, vector<64x16xf32>, vector<32x16xf32> -> vector<32x16xf32>
    %c0_5 = arith.constant 0 : index
    %c0_6 = arith.constant 0 : index
    %4 = vector.load %arg4[%c0_5, %c0_6] : memref<1x16xf32, #tpu.memory_space<vmem>>, vector<1x16xf32>
    %5 = vector.broadcast %4 : vector<1x16xf32> to vector<32x16xf32>
    %6 = arith.addf %3, %5 : vector<32x16xf32>
    %7 = vector.extract_strided_slice %6 {offsets = [0, 0], sizes = [32, 8], strides = [1, 1]} : vector<32x16xf32> to vector<32x8xf32>
    %8 = vector.extract_strided_slice %6 {offsets = [0, 8], sizes = [32, 8], strides = [1, 1]} : vector<32x16xf32> to vector<32x8xf32>
    %9 = vector.shape_cast %7 : vector<32x8xf32> to vector<1x32x8xf32>
    %10 = vector.shape_cast %8 : vector<32x8xf32> to vector<32x1x8xf32>
    %11 = vector.broadcast %9 : vector<1x32x8xf32> to vector<32x32x8xf32>
    %12 = vector.broadcast %10 : vector<32x1x8xf32> to vector<32x32x8xf32>
    %13 = arith.addf %11, %12 : vector<32x32x8xf32>
    %cst_7 = arith.constant 0.000000e+00 : f32
    %14 = vector.broadcast %cst_7 : f32 to vector<32x32x8xf32>
    %15 = arith.cmpf ogt, %13, %14 : vector<32x32x8xf32>
    %cst_8 = arith.constant 2.000000e-01 : f32
    %16 = vector.broadcast %cst_8 : f32 to vector<32x32x8xf32>
    %17 = arith.mulf %16, %13 : vector<32x32x8xf32>
    %18 = arith.select %15, %13, %17 : vector<32x32x8xi1>, vector<32x32x8xf32>
    %c0_9 = arith.constant 0 : index
    %c0_10 = arith.constant 0 : index
    %19 = vector.load %arg5[%c0_9, %c0_10] : memref<1x8xf32, #tpu.memory_space<vmem>>, vector<1x8xf32>
    %20 = vector.shape_cast %19 : vector<1x8xf32> to vector<1x1x8xf32>
    %21 = vector.broadcast %20 : vector<1x1x8xf32> to vector<32x32x8xf32>
    %22 = arith.mulf %18, %21 : vector<32x32x8xf32>
    %cst_11 = arith.constant dense<0.000000e+00> : vector<32x32xf32>
    %23 = vector.multi_reduction <add>, %22, %cst_11 [2] : vector<32x32x8xf32> to vector<32x32xf32>
    %cst_12 = arith.constant 0.000000e+00 : f32
    %24 = vector.broadcast %cst_12 : f32 to vector<32x32xf32>
    %25 = arith.cmpf ogt, %1, %24 : vector<32x32xf32>
    %cst_13 = arith.constant -1.000000e+30 : f32
    %26 = vector.broadcast %cst_13 : f32 to vector<32x32xf32>
    %27 = arith.select %25, %23, %26 : vector<32x32xi1>, vector<32x32xf32>
    %cst_14 = arith.constant dense<0xFF800000> : vector<32xf32>
    %28 = vector.multi_reduction <maximumf>, %27, %cst_14 [1] : vector<32x32xf32> to vector<32xf32>
    %29 = vector.shape_cast %28 : vector<32xf32> to vector<32x1xf32>
    %30 = vector.broadcast %29 : vector<32x1xf32> to vector<32x32xf32>
    %31 = arith.subf %27, %30 : vector<32x32xf32>
    %32 = math.exp %31 : vector<32x32xf32>
    %cst_15 = arith.constant 0.000000e+00 : f32
    %33 = vector.broadcast %cst_15 : f32 to vector<32x32xf32>
    %34 = arith.cmpf ogt, %1, %33 : vector<32x32xf32>
    %cst_16 = arith.constant 0.000000e+00 : f32
    %35 = vector.broadcast %cst_16 : f32 to vector<32x32xf32>
    %36 = arith.select %34, %32, %35 : vector<32x32xi1>, vector<32x32xf32>
    %cst_17 = arith.constant dense<0.000000e+00> : vector<32xf32>
    %37 = vector.multi_reduction <add>, %36, %cst_17 [1] : vector<32x32xf32> to vector<32xf32>
    %38 = vector.shape_cast %37 : vector<32xf32> to vector<32x1xf32>
    %39 = tpu.reciprocal %38 {approx = true} : vector<32x1xf32> -> vector<32x1xf32>
    %40 = vector.broadcast %39 : vector<32x1xf32> to vector<32x32xf32>
    %41 = arith.mulf %36, %40 : vector<32x32xf32>
    %cst_18 = arith.constant dense<0.000000e+00> : vector<32x8xf32>
    %42 = tpu.matmul %41, %7, %cst_18 {dimension_numbers = #tpu.dot_dimension_numbers<[1], [0], [0], [1], [0, 0, 1, 1], [], []>} : vector<32x32xf32>, vector<32x8xf32>, vector<32x8xf32> -> vector<32x8xf32>
    %c0_19 = arith.constant 0 : index
    %c0_20 = arith.constant 0 : index
    %43 = vector.load %arg6[%c0_19, %c0_20] : memref<1x8xf32, #tpu.memory_space<vmem>>, vector<1x8xf32>
    %44 = vector.broadcast %43 : vector<1x8xf32> to vector<32x8xf32>
    %45 = arith.addf %42, %44 : vector<32x8xf32>
    %cst_21 = arith.constant dense<0xFF800000> : vector<32xf32>
    %46 = vector.multi_reduction <maximumf>, %45, %cst_21 [1] : vector<32x8xf32> to vector<32xf32>
    %47 = vector.shape_cast %46 : vector<32xf32> to vector<32x1xf32>
    %48 = vector.broadcast %47 : vector<32x1xf32> to vector<32x8xf32>
    %49 = arith.subf %45, %48 : vector<32x8xf32>
    %50 = math.exp %49 : vector<32x8xf32>
    %cst_22 = arith.constant dense<0.000000e+00> : vector<32xf32>
    %51 = vector.multi_reduction <add>, %50, %cst_22 [1] : vector<32x8xf32> to vector<32xf32>
    %52 = vector.shape_cast %51 : vector<32xf32> to vector<32x1xf32>
    %53 = math.log %52 : vector<32x1xf32>
    %54 = vector.broadcast %53 : vector<32x1xf32> to vector<32x8xf32>
    %55 = arith.subf %49, %54 : vector<32x8xf32>
    %c0_23 = arith.constant 0 : index
    %c0_24 = arith.constant 0 : index
    %56 = vector.load %arg7[%c0_23, %c0_24] : memref<32x8xf32, #tpu.memory_space<vmem>>, vector<32x8xf32>
    tpu.vector_store %arg7[%c0_23, %c0_24], %55 {strides = array<i32>} : memref<32x8xf32, #tpu.memory_space<vmem>>, vector<32x8xf32>,
    return
  }
  func.func @transform_0(%arg0: i32) -> (i32, i32) {
    %c0_i32 = arith.constant 0 : i32
    %c0_i32_0 = arith.constant 0 : i32
    %c0_i32_1 = arith.constant 0 : i32
    return %c0_i32, %c0_i32_0 : i32, i32
  }
  func.func @transform_1(%arg0: i32) -> (i32, i32) {
    %c0_i32 = arith.constant 0 : i32
    %c0_i32_0 = arith.constant 0 : i32
    %c0_i32_1 = arith.constant 0 : i32
    return %c0_i32, %c0_i32_0 : i32, i32
  }
  func.func @transform_2(%arg0: i32) -> (i32, i32) {
    %c0_i32 = arith.constant 0 : i32
    %c0_i32_0 = arith.constant 0 : i32
    %c0_i32_1 = arith.constant 0 : i32
    return %c0_i32, %c0_i32_0 : i32, i32
  }
  func.func @transform_3(%arg0: i32) -> (i32, i32) {
    %c0_i32 = arith.constant 0 : i32
    %c0_i32_0 = arith.constant 0 : i32
    %c0_i32_1 = arith.constant 0 : i32
    return %c0_i32, %c0_i32_0 : i32, i32
  }
  func.func @transform_4(%arg0: i32) -> (i32, i32) {
    %c0_i32 = arith.constant 0 : i32
    %c0_i32_0 = arith.constant 0 : i32
    %c0_i32_1 = arith.constant 0 : i32
    return %c0_i32, %c0_i32_0 : i32, i32
  }
  func.func @transform_5(%arg0: i32) -> (i32, i32) {
    %c0_i32 = arith.constant 0 : i32
    %c0_i32_0 = arith.constant 0 : i32
    %c0_i32_1 = arith.constant 0 : i32
    return %c0_i32, %c0_i32_0 : i32, i32
  }
  func.func @transform_6(%arg0: i32) -> (i32, i32) {
    %c0_i32 = arith.constant 0 : i32
    %c0_i32_0 = arith.constant 0 : i32
    %c0_i32_1 = arith.constant 0 : i32
    return %c0_i32, %c0_i32_0 : i32, i32
  }
}

</mosaic_0001>

<llo_original>
// kernel: gps_conv_net_forward.5
$region0: #{gps_conv_net_forward.5}
  #allocation0 [shape = 'u32[]', space=smem, size = 0x4, offset = 0x4, fixed_abs, tag = 'smem constant byte address 0x4 - core index']
  #allocation1 [shape = 'u32[144,128]{1,0:T(1,128)}', space=vmem, size = 0x12000, scoped, tag = 'internal scratch']
  %s0 = inlined_call_operand.vmem [shape: f32[32,16], index: 0, kind: input, shape index: {}]
  %s1 = inlined_call_operand.vmem [shape: f32[16,128], index: 1, kind: input, shape index: {}]
  %s2 = inlined_call_operand.vmem [shape: f32[1,128], index: 2, kind: input, shape index: {}]
  %s3 = inlined_call_operand.vmem [shape: f32[128,64], index: 3, kind: input, shape index: {}]
  %s4 = inlined_call_operand.vmem [shape: f32[1,64], index: 4, kind: input, shape index: {}]
  %s5 = inlined_call_operand.vmem [shape: f32[32,64], index: 5, kind: output, shape index: {}]
  %s6 = sld [smem:[#allocation0]]
  $region30: #{gps_conv_net_forward.5} parent=0
    _
  %s8 = ssub.s32 1, %s6
  %s9 = scalar_select 0, %s8, %s6
  // Predicated region
  $region2: #{gps_conv_net_forward.5} parent=0 // pred_check
    _
  $region3: #{gps_conv_net_forward.5} parent=0 // pred_check_branch
    %11 = sbr.rel (0) target = $region5
  $region4: #{gps_conv_net_forward.5} parent=0 // pred_region
    _
  $region5: #{gps_conv_net_forward.5} parent=0 // pred_fallthru
    _
  // Predicated region
  $region6: #{gps_conv_net_forward.5} parent=0 // pred_check
    _
  $region7: #{gps_conv_net_forward.5} parent=0 // pred_check_branch
    %13 = sbr.rel (0) target = $region9
  $region8: #{gps_conv_net_forward.5} parent=0 // pred_region
    _
  $region9: #{gps_conv_net_forward.5} parent=0 // pred_fallthru
    _
  // Predicated region
  $region10: #{gps_conv_net_forward.5} parent=0 // pred_check
    _
  $region11: #{gps_conv_net_forward.5} parent=0 // pred_check_branch
    %15 = sbr.rel (0) target = $region13
  $region12: #{gps_conv_net_forward.5} parent=0 // pred_region
    _
  $region13: #{gps_conv_net_forward.5} parent=0 // pred_fallthru
    _
  // Predicated region
  $region14: #{gps_conv_net_forward.5} parent=0 // pred_check
    _
  $region15: #{gps_conv_net_forward.5} parent=0 // pred_check_branch
    %17 = sbr.rel (0) target = $region17
  $region16: #{gps_conv_net_forward.5} parent=0 // pred_region
    _
  $region17: #{gps_conv_net_forward.5} parent=0 // pred_fallthru
    _
  // Predicated region
  $region18: #{gps_conv_net_forward.5} parent=0 // pred_check
    _
  $region19: #{gps_conv_net_forward.5} parent=0 // pred_check_branch
    %19 = sbr.rel (0) target = $region21
  $region20: #{gps_conv_net_forward.5} parent=0 // pred_region
    _
  $region21: #{gps_conv_net_forward.5} parent=0 // pred_fallthru
    _
  %v20 = vld [vmem:[%s0] sm:$0xff]
  %v21 = vld [vmem:[%s0 + $0x8] sm:$0xff]
  %v22 = vld [vmem:[%s0 + $0x10] sm:$0xff]
  %v23 = vld [vmem:[%s0 + $0x18] sm:$0xff]
  %v24 = vld [vmem:[%s1] sm:$0xff]
  %v25 = vld [vmem:[%s1 + $0x8] sm:$0xff]
  %v26 = vld [vmem:[%s2] sm:$0x1]
  %v28 = vlaneseq
  %v29 = vshrl.u32 %v28, 7
  %v30 = vsub.s32 0, %v29
  %v31 = vrot.slane %v26, %v30
  %vm33 = vcmask 130048
  %v35 = vsel %vm33, %v20, 0
  %v38 = vsel %vm33, %v21, 0
  %v41 = vsel %vm33, %v22, 0
  %v44 = vsel %vm33, %v23, 0
  %46 = vmatprep.subr.mxu0 0.0
  %47 = vmatpush1.msra.mxu0 %v24
  %48 = vmatprep.subr.mxu0 0.0
  %49 = vmatpush1.msra.mxu0 %v25
  %50 = vmatprep.subr.mxu0 0.0
  %51 = vmatpush1.msra.mxu0 0.0
  %52 = vmatprep.subr.mxu0 0.0
  %53 = vmatpush1.msra.mxu0 0.0
  %54 = vmatprep.subr.mxu0 0.0
  %55 = vmatpush1.msra.mxu0 0.0
  %56 = vmatprep.subr.mxu0 0.0
  %57 = vmatpush1.msra.mxu0 0.0
  %58 = vmatprep.subr.mxu0 0.0
  %59 = vmatpush1.msra.mxu0 0.0
  %60 = vmatprep.subr.mxu0 0.0
  %61 = vmatpush1.msra.mxu0 0.0
  %62 = vmatprep.subr.mxu0 0.0
  %63 = vmatpush1.msra.mxu0 0.0
  %64 = vmatprep.subr.mxu0 0.0
  %65 = vmatpush1.msra.mxu0 0.0
  %66 = vmatprep.subr.mxu0 0.0
  %67 = vmatpush1.msra.mxu0 0.0
  %68 = vmatprep.subr.mxu0 0.0
  %69 = vmatpush1.msra.mxu0 0.0
  %70 = vmatprep.subr.mxu0 0.0
  %71 = vmatpush1.msra.mxu0 0.0
  %72 = vmatprep.subr.mxu0 0.0
  %73 = vmatpush1.msra.mxu0 0.0
  %74 = vmatprep.subr.mxu0 0.0
  %75 = vmatpush1.msra.mxu0 0.0
  %76 = vmatprep.subr.mxu0 0.0
  %77 = vmatpush1.msra.mxu0 0.0
  %78 = vmatprep.subr.mxu0 0.0
  %79 = vmatpush1.msra.mxu0 0.0
  %80 = vmatprep.subr.mxu0 0.0
  %81 = vmatpush1.msra.mxu0 0.0
  %82 = vmatprep.subr.mxu0 0.0
  %83 = vmatpush1.msra.mxu0 0.0
  %84 = vmatprep.subr.mxu0 0.0
  %85 = vmatpush1.msra.mxu0 0.0
  %86 = vmatprep.subr.mxu0 0.0
  %87 = vmatpush1.msra.mxu0 0.0
  %88 = vmatprep.subr.mxu0 0.0
  %89 = vmatpush1.msra.mxu0 0.0
  %90 = vmatprep.subr.mxu0 0.0
  %91 = vmatpush1.msra.mxu0 0.0
  %92 = vmatprep.subr.mxu0 0.0
  %93 = vmatpush1.msra.mxu0 0.0
  %94 = vmatprep.subr.mxu0 0.0
  %95 = vmatpush1.msra.mxu0 0.0
  %96 = vmatprep.subr.mxu0 0.0
  %97 = vmatpush1.msra.mxu0 0.0
  %98 = vmatprep.subr.mxu0 0.0
  %99 = vmatpush1.msra.mxu0 0.0
  %100 = vmatprep.subr.mxu0 0.0
  %101 = vmatpush1.msra.mxu0 0.0
  %102 = vmatprep.subr.mxu0 0.0
  %103 = vmatpush1.msra.mxu0 0.0
  %104 = vmatprep.subr.mxu0 0.0
  %105 = vmatpush1.msra.mxu0 0.0
  %106 = vmatprep.subr.mxu0 0.0
  %107 = vmatpush1.msra.mxu0 0.0
  %108 = vmatprep.subr.mxu0 0.0
  %109 = vmatpush1.msra.mxu0 0.0
  %110 = vmatprep.mubr.f32.mxu0 0.0
  %111 = vmatmul.mubr.f32.gmra.mrb[0].mxu0 %v35
  %v112 = vpop.f32.mrb[0].mxu0
  %v113 = vadd.f32 %v31, %v112
  %v114 = vpop.f32.mrb[0].mxu0
  %115 = vmatprep.mubr.f32.mxu0 0.0
  %116 = vmatmul.mubr.f32.gmra.mrb[0].mxu0 %v38
  %v117 = vpop.f32.mrb[0].mxu0
  %v118 = vadd.f32 %v31, %v117
  %v119 = vpop.f32.mrb[0].mxu0
  %120 = vmatprep.mubr.f32.mxu0 0.0
  %121 = vmatmul.mubr.f32.gmra.mrb[0].mxu0 %v41
  %v122 = vpop.f32.mrb[0].mxu0
  %v123 = vadd.f32 %v31, %v122
  %v124 = vpop.f32.mrb[0].mxu0
  %125 = vmatprep.mubr.f32.mxu0 0.0
  %126 = vmatmul.mubr.f32.gmra.mrb[0].mxu0 %v44
  %v127 = vpop.f32.mrb[0].mxu0
  %v128 = vadd.f32 %v31, %v127
  %v129 = vpop.f32.mrb[0].mxu0
  %130 = vdwg.mxu0
  %v131 = vmul.f32 %v113, 0.5
  %v132 = vmul.f32 %v118, 0.5
  %v133 = vmul.f32 %v123, 0.5
  %v134 = vmul.f32 %v128, 0.5
  %v135 = vmul.f32 %v113, 0.044715
  %v136 = vmul.f32 %v118, 0.044715
  %v137 = vmul.f32 %v123, 0.044715
  %v138 = vmul.f32 %v128, 0.044715
  %v139 = vmul.f32 %v135, %v113
  %v140 = vmul.f32 %v136, %v118
  %v141 = vmul.f32 %v137, %v123
  %v142 = vmul.f32 %v138, %v128
  %v143 = vmul.f32 %v139, %v113
  %v144 = vmul.f32 %v140, %v118
  %v145 = vmul.f32 %v141, %v123
  %v146 = vmul.f32 %v142, %v128
  %v147 = vadd.f32 %v113, %v143
  %v148 = vadd.f32 %v118, %v144
  %v149 = vadd.f32 %v123, %v145
  %v150 = vadd.f32 %v128, %v146
  %v151 = vmul.f32 %v147, 0.7978846
  %v152 = vmul.f32 %v148, 0.7978846
  %v153 = vmul.f32 %v149, 0.7978846
  %v154 = vmul.f32 %v150, 0.7978846
  %v155 = vtanh.pop %v151
  %v156 = vtanh.pop %v152
  %v157 = vtanh.pop %v153
  %v158 = vtanh.pop %v154
  %v159 = vadd.f32 %v155, 1.0
  %v160 = vadd.f32 %v156, 1.0
  %v161 = vadd.f32 %v157, 1.0
  %v162 = vadd.f32 %v158, 1.0
  %v163 = vmul.f32 %v131, %v159
  %v164 = vmul.f32 %v132, %v160
  %v165 = vmul.f32 %v133, %v161
  %v166 = vmul.f32 %v134, %v162
  %v167 = vld [vmem:[%s3] sm:$0xff]
  %v168 = vld [vmem:[%s3 + $0x8] sm:$0xff]
  %v169 = vld [vmem:[%s3 + $0x10] sm:$0xff]
  %v170 = vld [vmem:[%s3 + $0x18] sm:$0xff]
  %v171 = vld [vmem:[%s3 + $0x20] sm:$0xff]
  %v172 = vld [vmem:[%s3 + $0x28] sm:$0xff]
  %v173 = vld [vmem:[%s3 + $0x30] sm:$0xff]
  %v174 = vld [vmem:[%s3 + $0x38] sm:$0xff]
  %v175 = vld [vmem:[%s3 + $0x40] sm:$0xff]
  %v176 = vld [vmem:[%s3 + $0x48] sm:$0xff]
  %v177 = vld [vmem:[%s3 + $0x50] sm:$0xff]
  %v178 = vld [vmem:[%s3 + $0x58] sm:$0xff]
  %v179 = vld [vmem:[%s3 + $0x60] sm:$0xff]
  %v180 = vld [vmem:[%s3 + $0x68] sm:$0xff]
  %v181 = vld [vmem:[%s3 + $0x70] sm:$0xff]
  %v182 = vld [vmem:[%s3 + $0x78] sm:$0xff]
  %v183 = vld [vmem:[%s4] sm:$0x1]
  %v185 = vlaneseq
  %v186 = vshrl.u32 %v185, 7
  %v187 = vsub.s32 0, %v186
  %v188 = vrot.slane %v183, %v187
  %190 = vmatprep.subr.mxu0 0.0
  %191 = vmatpush1.msra.mxu0 %v167
  %192 = vmatprep.subr.mxu0 0.0
  %193 = vmatpush1.msra.mxu0 %v168
  %194 = vmatprep.subr.mxu0 0.0
  %195 = vmatpush1.msra.mxu0 %v169
  %196 = vmatprep.subr.mxu0 0.0
  %197 = vmatpush1.msra.mxu0 %v170
  %198 = vmatprep.subr.mxu0 0.0
  %199 = vmatpush1.msra.mxu0 %v171
  %200 = vmatprep.subr.mxu0 0.0
  %201 = vmatpush1.msra.mxu0 %v172
  %202 = vmatprep.subr.mxu0 0.0
  %203 = vmatpush1.msra.mxu0 %v173
  %204 = vmatprep.subr.mxu0 0.0
  %205 = vmatpush1.msra.mxu0 %v174
  %206 = vmatprep.subr.mxu0 0.0
  %207 = vmatpush1.msra.mxu0 %v175
  %208 = vmatprep.subr.mxu0 0.0
  %209 = vmatpush1.msra.mxu0 %v176
  %210 = vmatprep.subr.mxu0 0.0
  %211 = vmatpush1.msra.mxu0 %v177
  %212 = vmatprep.subr.mxu0 0.0
  %213 = vmatpush1.msra.mxu0 %v178
  %214 = vmatprep.subr.mxu0 0.0
  %215 = vmatpush1.msra.mxu0 %v179
  %216 = vmatprep.subr.mxu0 0.0
  %217 = vmatpush1.msra.mxu0 %v180
  %218 = vmatprep.subr.mxu0 0.0
  %219 = vmatpush1.msra.mxu0 %v181
  %220 = vmatprep.subr.mxu0 0.0
  %221 = vmatpush1.msra.mxu0 %v182
  %222 = vmatprep.subr.mxu0 0.0
  %223 = vmatpush1.msra.mxu0 0.0
  %224 = vmatprep.subr.mxu0 0.0
  %225 = vmatpush1.msra.mxu0 0.0
  %226 = vmatprep.subr.mxu0 0.0
  %227 = vmatpush1.msra.mxu0 0.0
  %228 = vmatprep.subr.mxu0 0.0
  %229 = vmatpush1.msra.mxu0 0.0
  %230 = vmatprep.subr.mxu0 0.0
  %231 = vmatpush1.msra.mxu0 0.0
  %232 = vmatprep.subr.mxu0 0.0
  %233 = vmatpush1.msra.mxu0 0.0
  %234 = vmatprep.subr.mxu0 0.0
  %235 = vmatpush1.msra.mxu0 0.0
  %236 = vmatprep.subr.mxu0 0.0
  %237 = vmatpush1.msra.mxu0 0.0
  %238 = vmatprep.subr.mxu0 0.0
  %239 = vmatpush1.msra.mxu0 0.0
  %240 = vmatprep.subr.mxu0 0.0
  %241 = vmatpush1.msra.mxu0 0.0
  %242 = vmatprep.subr.mxu0 0.0
  %243 = vmatpush1.msra.mxu0 0.0
  %244 = vmatprep.subr.mxu0 0.0
  %245 = vmatpush1.msra.mxu0 0.0
  %246 = vmatprep.subr.mxu0 0.0
  %247 = vmatpush1.msra.mxu0 0.0
  %248 = vmatprep.subr.mxu0 0.0
  %249 = vmatpush1.msra.mxu0 0.0
  %250 = vmatprep.subr.mxu0 0.0
  %251 = vmatpush1.msra.mxu0 0.0
  %252 = vmatprep.subr.mxu0 0.0
  %253 = vmatpush1.msra.mxu0 0.0
  %254 = vmatprep.mubr.f32.mxu0 0.0
  %255 = vmatmul.mubr.f32.gmra.mrb[0].mxu0 %v163
  %v256 = vpop.f32.mrb[0].mxu0
  %v257 = vadd.f32 %v188, %v256
  %v258 = vpop.f32.mrb[0].mxu0
  %259 = vmatprep.mubr.f32.mxu0 0.0
  %260 = vmatmul.mubr.f32.gmra.mrb[0].mxu0 %v164
  %v261 = vpop.f32.mrb[0].mxu0
  %v262 = vadd.f32 %v188, %v261
  %v263 = vpop.f32.mrb[0].mxu0
  %264 = vmatprep.mubr.f32.mxu0 0.0
  %265 = vmatmul.mubr.f32.gmra.mrb[0].mxu0 %v165
  %v266 = vpop.f32.mrb[0].mxu0
  %v267 = vadd.f32 %v188, %v266
  %v268 = vpop.f32.mrb[0].mxu0
  %269 = vmatprep.mubr.f32.mxu0 0.0
  %270 = vmatmul.mubr.f32.gmra.mrb[0].mxu0 %v166
  %v271 = vpop.f32.mrb[0].mxu0
  %v272 = vadd.f32 %v188, %v271
  %v273 = vpop.f32.mrb[0].mxu0
  %274 = vdwg.mxu0
  %v275 = vmul.f32 %v257, 0.5
  %v276 = vmul.f32 %v262, 0.5
  %v277 = vmul.f32 %v267, 0.5
  %v278 = vmul.f32 %v272, 0.5
  %v279 = vmul.f32 %v257, 0.044715
  %v280 = vmul.f32 %v262, 0.044715
  %v281 = vmul.f32 %v267, 0.044715
  %v282 = vmul.f32 %v272, 0.044715
  %v283 = vmul.f32 %v279, %v257
  %v284 = vmul.f32 %v280, %v262
  %v285 = vmul.f32 %v281, %v267
  %v286 = vmul.f32 %v282, %v272
  %v287 = vmul.f32 %v283, %v257
  %v288 = vmul.f32 %v284, %v262
  %v289 = vmul.f32 %v285, %v267
  %v290 = vmul.f32 %v286, %v272
  %v291 = vadd.f32 %v257, %v287
  %v292 = vadd.f32 %v262, %v288
  %v293 = vadd.f32 %v267, %v289
  %v294 = vadd.f32 %v272, %v290
  %v295 = vmul.f32 %v291, 0.7978846
  %v296 = vmul.f32 %v292, 0.7978846
  %v297 = vmul.f32 %v293, 0.7978846
  %v298 = vmul.f32 %v294, 0.7978846
  %v299 = vtanh.pop %v295
  %v300 = vtanh.pop %v296
  %v301 = vtanh.pop %v297
  %v302 = vtanh.pop %v298
  %v303 = vadd.f32 %v299, 1.0
  %v304 = vadd.f32 %v300, 1.0
  %v305 = vadd.f32 %v301, 1.0
  %v306 = vadd.f32 %v302, 1.0
  %v307 = vmul.f32 %v275, %v303
  %v308 = vmul.f32 %v276, %v304
  %v309 = vmul.f32 %v277, %v305
  %v310 = vmul.f32 %v278, %v306
  %vm311 = vcmask 523264
  %312 = vst.msk [vmem:[%s5] sm:$0xff] %vm311, %v307
  %313 = vst.msk [vmem:[%s5 + $0x8] sm:$0xff] %vm311, %v308
  %314 = vst.msk [vmem:[%s5 + $0x10] sm:$0xff] %vm311, %v309
  %315 = vst.msk [vmem:[%s5 + $0x18] sm:$0xff] %vm311, %v310
  // Predicated region
  $region22: #{gps_conv_net_forward.5} parent=0 // pred_check
    _
  $region23: #{gps_conv_net_forward.5} parent=0 // pred_check_branch
    %317 = sbr.rel (0) target = $region25
  $region24: #{gps_conv_net_forward.5} parent=0 // pred_region
    _
  $region25: #{gps_conv_net_forward.5} parent=0 // pred_fallthru
    _
  // Predicated region
  $region26: #{gps_conv_net_forward.5} parent=0 // pred_check
    _
  $region27: #{gps_conv_net_forward.5} parent=0 // pred_check_branch
    %319 = sbr.rel (0) target = $region29
  $region28: #{gps_conv_net_forward.5} parent=0 // pred_region
    _
  $region29: #{gps_conv_net_forward.5} parent=0 // pred_fallthru
    _

// kernel: gps_conv_net_forward.9
$region0: #{gps_conv_net_forward.9}
  #allocation0 [shape = 'u32[]', space=smem, size = 0x4, offset = 0x4, fixed_abs, tag = 'smem constant byte address 0x4 - core index']
  #allocation1 [shape = 'u32[144,128]{1,0:T(1,128)}', space=vmem, size = 0x12000, scoped, tag = 'internal scratch']
  %s0 = inlined_call_operand.vmem [shape: f32[32,64], index: 0, kind: input, shape index: {}]
  %s1 = inlined_call_operand.vmem [shape: f32[32,32], index: 1, kind: input, shape index: {}]
  %s2 = inlined_call_operand.vmem [shape: f32[64,16], index: 2, kind: input, shape index: {}]
  %s3 = inlined_call_operand.vmem [shape: f32[1,16], index: 3, kind: input, shape index: {}]
  %s4 = inlined_call_operand.vmem [shape: f32[1,8], index: 4, kind: input, shape index: {}]
  %s5 = inlined_call_operand.vmem [shape: f32[1,8], index: 5, kind: input, shape index: {}]
  %s6 = inlined_call_operand.vmem [shape: f32[32,8], index: 6, kind: output, shape index: {}]
  %s7 = sld [smem:[#allocation0]]
  $region34: #{gps_conv_net_forward.9} parent=0
    _
  %s9 = ssub.s32 1, %s7
  %s10 = scalar_select 0, %s9, %s7
  // Predicated region
  $region2: #{gps_conv_net_forward.9} parent=0 // pred_check
    _
  $region3: #{gps_conv_net_forward.9} parent=0 // pred_check_branch
    %12 = sbr.rel (0) target = $region5
  $region4: #{gps_conv_net_forward.9} parent=0 // pred_region
    _
  $region5: #{gps_conv_net_forward.9} parent=0 // pred_fallthru
    _
  // Predicated region
  $region6: #{gps_conv_net_forward.9} parent=0 // pred_check
    _
  $region7: #{gps_conv_net_forward.9} parent=0 // pred_check_branch
    %14 = sbr.rel (0) target = $region9
  $region8: #{gps_conv_net_forward.9} parent=0 // pred_region
    _
  $region9: #{gps_conv_net_forward.9} parent=0 // pred_fallthru
    _
  // Predicated region
  $region10: #{gps_conv_net_forward.9} parent=0 // pred_check
    _
  $region11: #{gps_conv_net_forward.9} parent=0 // pred_check_branch
    %16 = sbr.rel (0) target = $region13
  $region12: #{gps_conv_net_forward.9} parent=0 // pred_region
    _
  $region13: #{gps_conv_net_forward.9} parent=0 // pred_fallthru
    _
  // Predicated region
  $region14: #{gps_conv_net_forward.9} parent=0 // pred_check
    _
  $region15: #{gps_conv_net_forward.9} parent=0 // pred_check_branch
    %18 = sbr.rel (0) target = $region17
  $region16: #{gps_conv_net_forward.9} parent=0 // pred_region
    _
  $region17: #{gps_conv_net_forward.9} parent=0 // pred_fallthru
    _
  // Predicated region
  $region18: #{gps_conv_net_forward.9} parent=0 // pred_check
    _
  $region19: #{gps_conv_net_forward.9} parent=0 // pred_check_branch
    %20 = sbr.rel (0) target = $region21
  $region20: #{gps_conv_net_forward.9} parent=0 // pred_region
    _
  $region21: #{gps_conv_net_forward.9} parent=0 // pred_fallthru
    _
  // Predicated region
  $region22: #{gps_conv_net_forward.9} parent=0 // pred_check
    _
  $region23: #{gps_conv_net_forward.9} parent=0 // pred_check_branch
    %22 = sbr.rel (0) target = $region25
  $region24: #{gps_conv_net_forward.9} parent=0 // pred_region
    _
  $region25: #{gps_conv_net_forward.9} parent=0 // pred_fallthru
    _
  %v23 = vld [vmem:[%s0] sm:$0xff]
  %v24 = vld [vmem:[%s0 + $0x8] sm:$0xff]
  %v25 = vld [vmem:[%s0 + $0x10] sm:$0xff]
  %v26 = vld [vmem:[%s0 + $0x18] sm:$0xff]
  %v27 = vld [vmem:[%s1] sm:$0xff]
  %v28 = vld [vmem:[%s1 + $0x8] sm:$0xff]
  %v29 = vld [vmem:[%s1 + $0x10] sm:$0xff]
  %v30 = vld [vmem:[%s1 + $0x18] sm:$0xff]
  %v31 = vld [vmem:[%s2] sm:$0xff]
  %v32 = vld [vmem:[%s2 + $0x8] sm:$0xff]
  %v33 = vld [vmem:[%s2 + $0x10] sm:$0xff]
  %v34 = vld [vmem:[%s2 + $0x18] sm:$0xff]
  %v35 = vld [vmem:[%s2 + $0x20] sm:$0xff]
  %v36 = vld [vmem:[%s2 + $0x28] sm:$0xff]
  %v37 = vld [vmem:[%s2 + $0x30] sm:$0xff]
  %v38 = vld [vmem:[%s2 + $0x38] sm:$0xff]
  %v39 = vld [vmem:[%s3] sm:$0x1]
  %v41 = vlaneseq
  %v42 = vshrl.u32 %v41, 7
  %v43 = vsub.s32 0, %v42
  %v44 = vrot.slane %v39, %v43
  %vm46 = vcmask 523264
  %v48 = vsel %vm46, %v23, 0
  %v51 = vsel %vm46, %v24, 0
  %v54 = vsel %vm46, %v25, 0
  %v57 = vsel %vm46, %v26, 0
  %59 = vmatprep.subr.mxu0 0.0
  %60 = vmatpush1.msra.mxu0 %v31
  %61 = vmatprep.subr.mxu0 0.0
  %62 = vmatpush1.msra.mxu0 %v32
  %63 = vmatprep.subr.mxu0 0.0
  %64 = vmatpush1.msra.mxu0 %v33
  %65 = vmatprep.subr.mxu0 0.0
  %66 = vmatpush1.msra.mxu0 %v34
  %67 = vmatprep.subr.mxu0 0.0
  %68 = vmatpush1.msra.mxu0 %v35
  %69 = vmatprep.subr.mxu0 0.0
  %70 = vmatpush1.msra.mxu0 %v36
  %71 = vmatprep.subr.mxu0 0.0
  %72 = vmatpush1.msra.mxu0 %v37
  %73 = vmatprep.subr.mxu0 0.0
  %74 = vmatpush1.msra.mxu0 %v38
  %75 = vmatprep.subr.mxu0 0.0
  %76 = vmatpush1.msra.mxu0 0.0
  %77 = vmatprep.subr.mxu0 0.0
  %78 = vmatpush1.msra.mxu0 0.0
  %79 = vmatprep.subr.mxu0 0.0
  %80 = vmatpush1.msra.mxu0 0.0
  %81 = vmatprep.subr.mxu0 0.0
  %82 = vmatpush1.msra.mxu0 0.0
  %83 = vmatprep.subr.mxu0 0.0
  %84 = vmatpush1.msra.mxu0 0.0
  %85 = vmatprep.subr.mxu0 0.0
  %86 = vmatpush1.msra.mxu0 0.0
  %87 = vmatprep.subr.mxu0 0.0
  %88 = vmatpush1.msra.mxu0 0.0
  %89 = vmatprep.subr.mxu0 0.0
  %90 = vmatpush1.msra.mxu0 0.0
  %91 = vmatprep.subr.mxu0 0.0
  %92 = vmatpush1.msra.mxu0 0.0
  %93 = vmatprep.subr.mxu0 0.0
  %94 = vmatpush1.msra.mxu0 0.0
  %95 = vmatprep.subr.mxu0 0.0
  %96 = vmatpush1.msra.mxu0 0.0
  %97 = vmatprep.subr.mxu0 0.0
  %98 = vmatpush1.msra.mxu0 0.0
  %99 = vmatprep.subr.mxu0 0.0
  %100 = vmatpush1.msra.mxu0 0.0
  %101 = vmatprep.subr.mxu0 0.0
  %102 = vmatpush1.msra.mxu0 0.0
  %103 = vmatprep.subr.mxu0 0.0
  %104 = vmatpush1.msra.mxu0 0.0
  %105 = vmatprep.subr.mxu0 0.0
  %106 = vmatpush1.msra.mxu0 0.0
  %107 = vmatprep.subr.mxu0 0.0
  %108 = vmatpush1.msra.mxu0 0.0
  %109 = vmatprep.subr.mxu0 0.0
  %110 = vmatpush1.msra.mxu0 0.0
  %111 = vmatprep.subr.mxu0 0.0
  %112 = vmatpush1.msra.mxu0 0.0
  %113 = vmatprep.subr.mxu0 0.0
  %114 = vmatpush1.msra.mxu0 0.0
  %115 = vmatprep.subr.mxu0 0.0
  %116 = vmatpush1.msra.mxu0 0.0
  %117 = vmatprep.subr.mxu0 0.0
  %118 = vmatpush1.msra.mxu0 0.0
  %119 = vmatprep.subr.mxu0 0.0
  %120 = vmatpush1.msra.mxu0 0.0
  %121 = vmatprep.subr.mxu0 0.0
  %122 = vmatpush1.msra.mxu0 0.0
  %123 = vmatprep.mubr.f32.mxu0 0.0
  %124 = vmatmul.mubr.f32.gmra.mrb[0].mxu0 %v48
  %v125 = vpop.f32.mrb[0].mxu0
  %v126 = vadd.f32 %v44, %v125
  %v127 = vpop.f32.mrb[0].mxu0
  %128 = vmatprep.mubr.f32.mxu0 0.0
  %129 = vmatmul.mubr.f32.gmra.mrb[0].mxu0 %v51
  %v130 = vpop.f32.mrb[0].mxu0
  %v131 = vadd.f32 %v44, %v130
  %v132 = vpop.f32.mrb[0].mxu0
  %133 = vmatprep.mubr.f32.mxu0 0.0
  %134 = vmatmul.mubr.f32.gmra.mrb[0].mxu0 %v54
  %v135 = vpop.f32.mrb[0].mxu0
  %v136 = vadd.f32 %v44, %v135
  %v137 = vpop.f32.mrb[0].mxu0
  %138 = vmatprep.mubr.f32.mxu0 0.0
  %139 = vmatmul.mubr.f32.gmra.mrb[0].mxu0 %v57
  %v140 = vpop.f32.mrb[0].mxu0
  %v141 = vadd.f32 %v44, %v140
  %v142 = vpop.f32.mrb[0].mxu0
  %143 = vdwg.mxu0
  %v148 = vcombine.high %v126, %v126
  %v150 = vunpack.c.l.s4 1966171168
  %v151 = vunpack.c.0.s8 %v150
  %v152 = vlaneseq
  %v153 = vshrl.u32 %v152, 7
  %v154 = vsub.s32 %v151, %v153
  %v155 = vrot.slane %v126, %v154
  %v157 = vunpack.c.l.s4 1966171168
  %v158 = vunpack.c.0.s8 %v157
  %v159 = vlaneseq
  %v160 = vshrl.u32 %v159, 7
  %v161 = vsub.s32 %v158, %v160
  %v162 = vrot.slane %v148, %v161
  %v163 = vcombine.high %v155, %v155
  %v164 = vcombine.high %v162, %v162
  %v166 = vunpack.c.l.s4 1966171168
  %v167 = vunpack.c.0.s8 %v166
  %v168 = vlaneseq
  %v169 = vshrl.u32 %v168, 7
  %v170 = vsub.s32 %v167, %v169
  %v171 = vrot.slane %v155, %v170
  %v173 = vunpack.c.l.s4 1966171168
  %v174 = vunpack.c.0.s8 %v173
  %v175 = vlaneseq
  %v176 = vshrl.u32 %v175, 7
  %v177 = vsub.s32 %v174, %v176
  %v178 = vrot.slane %v162, %v177
  %v180 = vunpack.c.l.s4 1966171168
  %v181 = vunpack.c.0.s8 %v180
  %v182 = vlaneseq
  %v183 = vshrl.u32 %v182, 7
  %v184 = vsub.s32 %v181, %v183
  %v185 = vrot.slane %v163, %v184
  %v187 = vunpack.c.l.s4 1966171168
  %v188 = vunpack.c.0.s8 %v187
  %v189 = vlaneseq
  %v190 = vshrl.u32 %v189, 7
  %v191 = vsub.s32 %v188, %v190
  %v192 = vrot.slane %v164, %v191
  %v193 = vcombine.high %v171, %v171
  %v194 = vcombine.high %v178, %v178
  %v195 = vcombine.high %v185, %v185
  %v196 = vcombine.high %v192, %v192
  %v197 = vcombine.high %v131, %v131
  %v199 = vunpack.c.l.s4 1966171168
  %v200 = vunpack.c.0.s8 %v199
  %v201 = vlaneseq
  %v202 = vshrl.u32 %v201, 7
  %v203 = vsub.s32 %v200, %v202
  %v204 = vrot.slane %v131, %v203
  %v206 = vunpack.c.l.s4 1966171168
  %v207 = vunpack.c.0.s8 %v206
  %v208 = vlaneseq
  %v209 = vshrl.u32 %v208, 7
  %v210 = vsub.s32 %v207, %v209
  %v211 = vrot.slane %v197, %v210
  %v212 = vcombine.high %v204, %v204
  %v213 = vcombine.high %v211, %v211
  %v215 = vunpack.c.l.s4 1966171168
  %v216 = vunpack.c.0.s8 %v215
  %v217 = vlaneseq
  %v218 = vshrl.u32 %v217, 7
  %v219 = vsub.s32 %v216, %v218
  %v220 = vrot.slane %v204, %v219
  %v222 = vunpack.c.l.s4 1966171168
  %v223 = vunpack.c.0.s8 %v222
  %v224 = vlaneseq
  %v225 = vshrl.u32 %v224, 7
  %v226 = vsub.s32 %v223, %v225
  %v227 = vrot.slane %v211, %v226
  %v229 = vunpack.c.l.s4 1966171168
  %v230 = vunpack.c.0.s8 %v229
  %v231 = vlaneseq
  %v232 = vshrl.u32 %v231, 7
  %v233 = vsub.s32 %v230, %v232
  %v234 = vrot.slane %v212, %v233
  %v236 = vunpack.c.l.s4 1966171168
  %v237 = vunpack.c.0.s8 %v236
  %v238 = vlaneseq
  %v239 = vshrl.u32 %v238, 7
  %v240 = vsub.s32 %v237, %v239
  %v241 = vrot.slane %v213, %v240
  %v242 = vcombine.high %v220, %v220
  %v243 = vcombine.high %v227, %v227
  %v244 = vcombine.high %v234, %v234
  %v245 = vcombine.high %v241, %v241
  %v246 = vcombine.high %v136, %v136
  %v248 = vunpack.c.l.s4 1966171168
  %v249 = vunpack.c.0.s8 %v248
  %v250 = vlaneseq
  %v251 = vshrl.u32 %v250, 7
  %v252 = vsub.s32 %v249, %v251
  %v253 = vrot.slane %v136, %v252
  %v255 = vunpack.c.l.s4 1966171168
  %v256 = vunpack.c.0.s8 %v255
  %v257 = vlaneseq
  %v258 = vshrl.u32 %v257, 7
  %v259 = vsub.s32 %v256, %v258
  %v260 = vrot.slane %v246, %v259
  %v261 = vcombine.high %v253, %v253
  %v262 = vcombine.high %v260, %v260
  %v264 = vunpack.c.l.s4 1966171168
  %v265 = vunpack.c.0.s8 %v264
  %v266 = vlaneseq
  %v267 = vshrl.u32 %v266, 7
  %v268 = vsub.s32 %v265, %v267
  %v269 = vrot.slane %v253, %v268
  %v271 = vunpack.c.l.s4 1966171168
  %v272 = vunpack.c.0.s8 %v271
  %v273 = vlaneseq
  %v274 = vshrl.u32 %v273, 7
  %v275 = vsub.s32 %v272, %v274
  %v276 = vrot.slane %v260, %v275
  %v278 = vunpack.c.l.s4 1966171168
  %v279 = vunpack.c.0.s8 %v278
  %v280 = vlaneseq
  %v281 = vshrl.u32 %v280, 7
  %v282 = vsub.s32 %v279, %v281
  %v283 = vrot.slane %v261, %v282
  %v285 = vunpack.c.l.s4 1966171168
  %v286 = vunpack.c.0.s8 %v285
  %v287 = vlaneseq
  %v288 = vshrl.u32 %v287, 7
  %v289 = vsub.s32 %v286, %v288
  %v290 = vrot.slane %v262, %v289
  %v291 = vcombine.high %v269, %v269
  %v292 = vcombine.high %v276, %v276
  %v293 = vcombine.high %v283, %v283
  %v294 = vcombine.high %v290, %v290
  %v295 = vcombine.high %v141, %v141
  %v297 = vunpack.c.l.s4 1966171168
  %v298 = vunpack.c.0.s8 %v297
  %v299 = vlaneseq
  %v300 = vshrl.u32 %v299, 7
  %v301 = vsub.s32 %v298, %v300
  %v302 = vrot.slane %v141, %v301
  %v304 = vunpack.c.l.s4 1966171168
  %v305 = vunpack.c.0.s8 %v304
  %v306 = vlaneseq
  %v307 = vshrl.u32 %v306, 7
  %v308 = vsub.s32 %v305, %v307
  %v309 = vrot.slane %v295, %v308
  %v310 = vcombine.high %v302, %v302
  %v311 = vcombine.high %v309, %v309
  %v313 = vunpack.c.l.s4 1966171168
  %v314 = vunpack.c.0.s8 %v313
  %v315 = vlaneseq
  %v316 = vshrl.u32 %v315, 7
  %v317 = vsub.s32 %v314, %v316
  %v318 = vrot.slane %v302, %v317
  %v320 = vunpack.c.l.s4 1966171168
  %v321 = vunpack.c.0.s8 %v320
  %v322 = vlaneseq
  %v323 = vshrl.u32 %v322, 7
  %v324 = vsub.s32 %v321, %v323
  %v325 = vrot.slane %v309, %v324
  %v327 = vunpack.c.l.s4 1966171168
  %v328 = vunpack.c.0.s8 %v327
  %v329 = vlaneseq
  %v330 = vshrl.u32 %v329, 7
  %v331 = vsub.s32 %v328, %v330
  %v332 = vrot.slane %v310, %v331
  %v334 = vunpack.c.l.s4 1966171168
  %v335 = vunpack.c.0.s8 %v334
  %v336 = vlaneseq
  %v337 = vshrl.u32 %v336, 7
  %v338 = vsub.s32 %v335, %v337
  %v339 = vrot.slane %v311, %v338
  %v340 = vcombine.high %v318, %v318
  %v341 = vcombine.high %v325, %v325
  %v342 = vcombine.high %v332, %v332
  %v343 = vcombine.high %v339, %v339
  %v344 = vlaneseq
  %v345 = vshrl.u32 %v344, 7
  %v346 = vsub.s32 0, %v345
  %v347 = vrot.slane %v171, %v346
  %v348 = vlaneseq
  %v349 = vshrl.u32 %v348, 7
  %v350 = vsub.s32 0, %v349
  %v351 = vrot.slane %v185, %v350
  %v352 = vlaneseq
  %v353 = vshrl.u32 %v352, 7
  %v354 = vsub.s32 0, %v353
  %v355 = vrot.slane %v193, %v354
  %v356 = vlaneseq
  %v357 = vshrl.u32 %v356, 7
  %v358 = vsub.s32 0, %v357
  %v359 = vrot.slane %v195, %v358
  %v360 = vlaneseq
  %v361 = vshrl.u32 %v360, 7
  %v362 = vsub.s32 0, %v361
  %v363 = vrot.slane %v178, %v362
  %v364 = vlaneseq
  %v365 = vshrl.u32 %v364, 7
  %v366 = vsub.s32 0, %v365
  %v367 = vrot.slane %v192, %v366
  %v368 = vlaneseq
  %v369 = vshrl.u32 %v368, 7
  %v370 = vsub.s32 0, %v369
  %v371 = vrot.slane %v194, %v370
  %v372 = vlaneseq
  %v373 = vshrl.u32 %v372, 7
  %v374 = vsub.s32 0, %v373
  %v375 = vrot.slane %v196, %v374
  %v376 = vlaneseq
  %v377 = vshrl.u32 %v376, 7
  %v378 = vsub.s32 0, %v377
  %v379 = vrot.slane %v220, %v378
  %v380 = vlaneseq
  %v381 = vshrl.u32 %v380, 7
  %v382 = vsub.s32 0, %v381
  %v383 = vrot.slane %v234, %v382
  %v384 = vlaneseq
  %v385 = vshrl.u32 %v384, 7
  %v386 = vsub.s32 0, %v385
  %v387 = vrot.slane %v242, %v386
  %v388 = vlaneseq
  %v389 = vshrl.u32 %v388, 7
  %v390 = vsub.s32 0, %v389
  %v391 = vrot.slane %v244, %v390
  %v392 = vlaneseq
  %v393 = vshrl.u32 %v392, 7
  %v394 = vsub.s32 0, %v393
  %v395 = vrot.slane %v227, %v394
  %v396 = vlaneseq
  %v397 = vshrl.u32 %v396, 7
  %v398 = vsub.s32 0, %v397
  %v399 = vrot.slane %v241, %v398
  %v400 = vlaneseq
  %v401 = vshrl.u32 %v400, 7
  %v402 = vsub.s32 0, %v401
  %v403 = vrot.slane %v243, %v402
  %v404 = vlaneseq
  %v405 = vshrl.u32 %v404, 7
  %v406 = vsub.s32 0, %v405
  %v407 = vrot.slane %v245, %v406
  %v408 = vlaneseq
  %v409 = vshrl.u32 %v408, 7
  %v410 = vsub.s32 0, %v409
  %v411 = vrot.slane %v269, %v410
  %v412 = vlaneseq
  %v413 = vshrl.u32 %v412, 7
  %v414 = vsub.s32 0, %v413
  %v415 = vrot.slane %v283, %v414
  %v416 = vlaneseq
  %v417 = vshrl.u32 %v416, 7
  %v418 = vsub.s32 0, %v417
  %v419 = vrot.slane %v291, %v418
  %v420 = vlaneseq
  %v421 = vshrl.u32 %v420, 7
  %v422 = vsub.s32 0, %v421
  %v423 = vrot.slane %v293, %v422
  %v424 = vlaneseq
  %v425 = vshrl.u32 %v424, 7
  %v426 = vsub.s32 0, %v425
  %v427 = vrot.slane %v276, %v426
  %v428 = vlaneseq
  %v429 = vshrl.u32 %v428, 7
  %v430 = vsub.s32 0, %v429
  %v431 = vrot.slane %v290, %v430
  %v432 = vlaneseq
  %v433 = vshrl.u32 %v432, 7
  %v434 = vsub.s32 0, %v433
  %v435 = vrot.slane %v292, %v434
  %v436 = vlaneseq
  %v437 = vshrl.u32 %v436, 7
  %v438 = vsub.s32 0, %v437
  %v439 = vrot.slane %v294, %v438
  %v440 = vlaneseq
  %v441 = vshrl.u32 %v440, 7
  %v442 = vsub.s32 0, %v441
  %v443 = vrot.slane %v318, %v442
  %v444 = vlaneseq
  %v445 = vshrl.u32 %v444, 7
  %v446 = vsub.s32 0, %v445
  %v447 = vrot.slane %v332, %v446
  %v448 = vlaneseq
  %v449 = vshrl.u32 %v448, 7
  %v450 = vsub.s32 0, %v449
  %v451 = vrot.slane %v340, %v450
  %v452 = vlaneseq
  %v453 = vshrl.u32 %v452, 7
  %v454 = vsub.s32 0, %v453
  %v455 = vrot.slane %v342, %v454
  %v456 = vlaneseq
  %v457 = vshrl.u32 %v456, 7
  %v458 = vsub.s32 0, %v457
  %v459 = vrot.slane %v325, %v458
  %v460 = vlaneseq
  %v461 = vshrl.u32 %v460, 7
  %v462 = vsub.s32 0, %v461
  %v463 = vrot.slane %v339, %v462
  %v464 = vlaneseq
  %v465 = vshrl.u32 %v464, 7
  %v466 = vsub.s32 0, %v465
  %v467 = vrot.slane %v341, %v466
  %v468 = vlaneseq
  %v469 = vshrl.u32 %v468, 7
  %v470 = vsub.s32 0, %v469
  %v471 = vrot.slane %v343, %v470
  %472 = vrot.lane.b32.xlu0 %v347, 120
  %v473 = vpop.permute.xlu0 %472
  %474 = vrot.lane.b32.xlu0 %v351, 120
  %v475 = vpop.permute.xlu0 %474
  %476 = vrot.lane.b32.xlu0 %v355, 120
  %v477 = vpop.permute.xlu0 %476
  %478 = vrot.lane.b32.xlu0 %v359, 120
  %v479 = vpop.permute.xlu0 %478
  %480 = vrot.lane.b32.xlu0 %v363, 120
  %v481 = vpop.permute.xlu0 %480
  %482 = vrot.lane.b32.xlu0 %v367, 120
  %v483 = vpop.permute.xlu0 %482
  %484 = vrot.lane.b32.xlu0 %v371, 120
  %v485 = vpop.permute.xlu0 %484
  %486 = vrot.lane.b32.xlu0 %v375, 120
  %v487 = vpop.permute.xlu0 %486
  %488 = vrot.lane.b32.xlu0 %v379, 120
  %v489 = vpop.permute.xlu0 %488
  %490 = vrot.lane.b32.xlu0 %v383, 120
  %v491 = vpop.permute.xlu0 %490
  %492 = vrot.lane.b32.xlu0 %v387, 120
  %v493 = vpop.permute.xlu0 %492
  %494 = vrot.lane.b32.xlu0 %v391, 120
  %v495 = vpop.permute.xlu0 %494
  %496 = vrot.lane.b32.xlu0 %v395, 120
  %v497 = vpop.permute.xlu0 %496
  %498 = vrot.lane.b32.xlu0 %v399, 120
  %v499 = vpop.permute.xlu0 %498
  %500 = vrot.lane.b32.xlu0 %v403, 120
  %v501 = vpop.permute.xlu0 %500
  %502 = vrot.lane.b32.xlu0 %v407, 120
  %v503 = vpop.permute.xlu0 %502
  %504 = vrot.lane.b32.xlu0 %v411, 120
  %v505 = vpop.permute.xlu0 %504
  %506 = vrot.lane.b32.xlu0 %v415, 120
  %v507 = vpop.permute.xlu0 %506
  %508 = vrot.lane.b32.xlu0 %v419, 120
  %v509 = vpop.permute.xlu0 %508
  %510 = vrot.lane.b32.xlu0 %v423, 120
  %v511 = vpop.permute.xlu0 %510
  %512 = vrot.lane.b32.xlu0 %v427, 120
  %v513 = vpop.permute.xlu0 %512
  %514 = vrot.lane.b32.xlu0 %v431, 120
  %v515 = vpop.permute.xlu0 %514
  %516 = vrot.lane.b32.xlu0 %v435, 120
  %v517 = vpop.permute.xlu0 %516
  %518 = vrot.lane.b32.xlu0 %v439, 120
  %v519 = vpop.permute.xlu0 %518
  %520 = vrot.lane.b32.xlu0 %v443, 120
  %v521 = vpop.permute.xlu0 %520
  %522 = vrot.lane.b32.xlu0 %v447, 120
  %v523 = vpop.permute.xlu0 %522
  %524 = vrot.lane.b32.xlu0 %v451, 120
  %v525 = vpop.permute.xlu0 %524
  %526 = vrot.lane.b32.xlu0 %v455, 120
  %v527 = vpop.permute.xlu0 %526
  %528 = vrot.lane.b32.xlu0 %v459, 120
  %v529 = vpop.permute.xlu0 %528
  %530 = vrot.lane.b32.xlu0 %v463, 120
  %v531 = vpop.permute.xlu0 %530
  %532 = vrot.lane.b32.xlu0 %v467, 120
  %v533 = vpop.permute.xlu0 %532
  %534 = vrot.lane.b32.xlu0 %v471, 120
  %v535 = vpop.permute.xlu0 %534
  %v568 = vadd.f32 %v126, %v473
  %v569 = vadd.f32 %v131, %v473
  %v570 = vadd.f32 %v136, %v473
  %v571 = vadd.f32 %v141, %v473
  %v572 = vadd.f32 %v126, %v475
  %v573 = vadd.f32 %v131, %v475
  %v574 = vadd.f32 %v136, %v475
  %v575 = vadd.f32 %v141, %v475
  %v576 = vadd.f32 %v126, %v477
  %v577 = vadd.f32 %v131, %v477
  %v578 = vadd.f32 %v136, %v477
  %v579 = vadd.f32 %v141, %v477
  %v580 = vadd.f32 %v126, %v479
  %v581 = vadd.f32 %v131, %v479
  %v582 = vadd.f32 %v136, %v479
  %v583 = vadd.f32 %v141, %v479
  %v584 = vadd.f32 %v126, %v481
  %v585 = vadd.f32 %v131, %v481
  %v586 = vadd.f32 %v136, %v481
  %v587 = vadd.f32 %v141, %v481
  %v588 = vadd.f32 %v126, %v483
  %v589 = vadd.f32 %v131, %v483
  %v590 = vadd.f32 %v136, %v483
  %v591 = vadd.f32 %v141, %v483
  %v592 = vadd.f32 %v126, %v485
  %v593 = vadd.f32 %v131, %v485
  %v594 = vadd.f32 %v136, %v485
  %v595 = vadd.f32 %v141, %v485
  %v596 = vadd.f32 %v126, %v487
  %v597 = vadd.f32 %v131, %v487
  %v598 = vadd.f32 %v136, %v487
  %v599 = vadd.f32 %v141, %v487
  %v600 = vadd.f32 %v126, %v489
  %v601 = vadd.f32 %v131, %v489
  %v602 = vadd.f32 %v136, %v489
  %v603 = vadd.f32 %v141, %v489
  %v604 = vadd.f32 %v126, %v491
  %v605 = vadd.f32 %v131, %v491
  %v606 = vadd.f32 %v136, %v491
  %v607 = vadd.f32 %v141, %v491
  %v608 = vadd.f32 %v126, %v493
  %v609 = vadd.f32 %v131, %v493
  %v610 = vadd.f32 %v136, %v493
  %v611 = vadd.f32 %v141, %v493
  %v612 = vadd.f32 %v126, %v495
  %v613 = vadd.f32 %v131, %v495
  %v614 = vadd.f32 %v136, %v495
  %v615 = vadd.f32 %v141, %v495
  %v616 = vadd.f32 %v126, %v497
  %v617 = vadd.f32 %v131, %v497
  %v618 = vadd.f32 %v136, %v497
  %v619 = vadd.f32 %v141, %v497
  %v620 = vadd.f32 %v126, %v499
  %v621 = vadd.f32 %v131, %v499
  %v622 = vadd.f32 %v136, %v499
  %v623 = vadd.f32 %v141, %v499
  %v624 = vadd.f32 %v126, %v501
  %v625 = vadd.f32 %v131, %v501
  %v626 = vadd.f32 %v136, %v501
  %v627 = vadd.f32 %v141, %v501
  %v628 = vadd.f32 %v126, %v503
  %v629 = vadd.f32 %v131, %v503
  %v630 = vadd.f32 %v136, %v503
  %v631 = vadd.f32 %v141, %v503
  %v632 = vadd.f32 %v126, %v505
  %v633 = vadd.f32 %v131, %v505
  %v634 = vadd.f32 %v136, %v505
  %v635 = vadd.f32 %v141, %v505
  %v636 = vadd.f32 %v126, %v507
  %v637 = vadd.f32 %v131, %v507
  %v638 = vadd.f32 %v136, %v507
  %v639 = vadd.f32 %v141, %v507
  %v640 = vadd.f32 %v126, %v509
  %v641 = vadd.f32 %v131, %v509
  %v642 = vadd.f32 %v136, %v509
  %v643 = vadd.f32 %v141, %v509
  %v644 = vadd.f32 %v126, %v511
  %v645 = vadd.f32 %v131, %v511
  %v646 = vadd.f32 %v136, %v511
  %v647 = vadd.f32 %v141, %v511
  %v648 = vadd.f32 %v126, %v513
  %v649 = vadd.f32 %v131, %v513
  %v650 = vadd.f32 %v136, %v513
  %v651 = vadd.f32 %v141, %v513
  %v652 = vadd.f32 %v126, %v515
  %v653 = vadd.f32 %v131, %v515
  %v654 = vadd.f32 %v136, %v515
  %v655 = vadd.f32 %v141, %v515
  %v656 = vadd.f32 %v126, %v517
  %v657 = vadd.f32 %v131, %v517
  %v658 = vadd.f32 %v136, %v517
  %v659 = vadd.f32 %v141, %v517
  %v660 = vadd.f32 %v126, %v519
  %v661 = vadd.f32 %v131, %v519
  %v662 = vadd.f32 %v136, %v519
  %v663 = vadd.f32 %v141, %v519
  %v664 = vadd.f32 %v126, %v521
  %v665 = vadd.f32 %v131, %v521
  %v666 = vadd.f32 %v136, %v521
  %v667 = vadd.f32 %v141, %v521
  %v668 = vadd.f32 %v126, %v523
  %v669 = vadd.f32 %v131, %v523
  %v670 = vadd.f32 %v136, %v523
  %v671 = vadd.f32 %v141, %v523
  %v672 = vadd.f32 %v126, %v525
  %v673 = vadd.f32 %v131, %v525
  %v674 = vadd.f32 %v136, %v525
  %v675 = vadd.f32 %v141, %v525
  %v676 = vadd.f32 %v126, %v527
  %v677 = vadd.f32 %v131, %v527
  %v678 = vadd.f32 %v136, %v527
  %v679 = vadd.f32 %v141, %v527
  %v680 = vadd.f32 %v126, %v529
  %v681 = vadd.f32 %v131, %v529
  %v682 = vadd.f32 %v136, %v529
  %v683 = vadd.f32 %v141, %v529
  %v684 = vadd.f32 %v126, %v531
  %v685 = vadd.f32 %v131, %v531
  %v686 = vadd.f32 %v136, %v531
  %v687 = vadd.f32 %v141, %v531
  %v688 = vadd.f32 %v126, %v533
  %v689 = vadd.f32 %v131, %v533
  %v690 = vadd.f32 %v136, %v533
  %v691 = vadd.f32 %v141, %v533
  %v692 = vadd.f32 %v126, %v535
  %v693 = vadd.f32 %v131, %v535
  %v694 = vadd.f32 %v136, %v535
  %v695 = vadd.f32 %v141, %v535
  %vm696 = vcmp.gt.f32.partialorder %v568, 0.0
  %vm697 = vcmp.gt.f32.partialorder %v569, 0.0
  %vm698 = vcmp.gt.f32.partialorder %v570, 0.0
  %vm699 = vcmp.gt.f32.partialorder %v571, 0.0
  %vm700 = vcmp.gt.f32.partialorder %v572, 0.0
  %vm701 = vcmp.gt.f32.partialorder %v573, 0.0
  %vm702 = vcmp.gt.f32.partialorder %v574, 0.0
  %vm703 = vcmp.gt.f32.partialorder %v575, 0.0
  %vm704 = vcmp.gt.f32.partialorder %v576, 0.0
  %vm705 = vcmp.gt.f32.partialorder %v577, 0.0
  %vm706 = vcmp.gt.f32.partialorder %v578, 0.0
  %vm707 = vcmp.gt.f32.partialorder %v579, 0.0
  %vm708 = vcmp.gt.f32.partialorder %v580, 0.0
  %vm709 = vcmp.gt.f32.partialorder %v581, 0.0
  %vm710 = vcmp.gt.f32.partialorder %v582, 0.0
  %vm711 = vcmp.gt.f32.partialorder %v583, 0.0
  %vm712 = vcmp.gt.f32.partialorder %v584, 0.0
  %vm713 = vcmp.gt.f32.partialorder %v585, 0.0
  %vm714 = vcmp.gt.f32.partialorder %v586, 0.0
  %vm715 = vcmp.gt.f32.partialorder %v587, 0.0
  %vm716 = vcmp.gt.f32.partialorder %v588, 0.0
  %vm717 = vcmp.gt.f32.partialorder %v589, 0.0
  %vm718 = vcmp.gt.f32.partialorder %v590, 0.0
  %vm719 = vcmp.gt.f32.partialorder %v591, 0.0
  %vm720 = vcmp.gt.f32.partialorder %v592, 0.0
  %vm721 = vcmp.gt.f32.partialorder %v593, 0.0
  %vm722 = vcmp.gt.f32.partialorder %v594, 0.0
  %vm723 = vcmp.gt.f32.partialorder %v595, 0.0
  %vm724 = vcmp.gt.f32.partialorder %v596, 0.0
  %vm725 = vcmp.gt.f32.partialorder %v597, 0.0
  %vm726 = vcmp.gt.f32.partialorder %v598, 0.0
  %vm727 = vcmp.gt.f32.partialorder %v599, 0.0
  %vm728 = vcmp.gt.f32.partialorder %v600, 0.0
  %vm729 = vcmp.gt.f32.partialorder %v601, 0.0
  %vm730 = vcmp.gt.f32.partialorder %v602, 0.0
  %vm731 = vcmp.gt.f32.partialorder %v603, 0.0
  %vm732 = vcmp.gt.f32.partialorder %v604, 0.0
  %vm733 = vcmp.gt.f32.partialorder %v605, 0.0
  %vm734 = vcmp.gt.f32.partialorder %v606, 0.0
  %vm735 = vcmp.gt.f32.partialorder %v607, 0.0
  %vm736 = vcmp.gt.f32.partialorder %v608, 0.0
  %vm737 = vcmp.gt.f32.partialorder %v609, 0.0
  %vm738 = vcmp.gt.f32.partialorder %v610, 0.0
  %vm739 = vcmp.gt.f32.partialorder %v611, 0.0
  %vm740 = vcmp.gt.f32.partialorder %v612, 0.0
  %vm741 = vcmp.gt.f32.partialorder %v613, 0.0
  %vm742 = vcmp.gt.f32.partialorder %v614, 0.0
  %vm743 = vcmp.gt.f32.partialorder %v615, 0.0
  %vm744 = vcmp.gt.f32.partialorder %v616, 0.0
  %vm745 = vcmp.gt.f32.partialorder %v617, 0.0
  %vm746 = vcmp.gt.f32.partialorder %v618, 0.0
  %vm747 = vcmp.gt.f32.partialorder %v619, 0.0
  %vm748 = vcmp.gt.f32.partialorder %v620, 0.0
  %vm749 = vcmp.gt.f32.partialorder %v621, 0.0
  %vm750 = vcmp.gt.f32.partialorder %v622, 0.0
  %vm751 = vcmp.gt.f32.partialorder %v623, 0.0
  %vm752 = vcmp.gt.f32.partialorder %v624, 0.0
  %vm753 = vcmp.gt.f32.partialorder %v625, 0.0
  %vm754 = vcmp.gt.f32.partialorder %v626, 0.0
  %vm755 = vcmp.gt.f32.partialorder %v627, 0.0
  %vm756 = vcmp.gt.f32.partialorder %v628, 0.0
  %vm757 = vcmp.gt.f32.partialorder %v629, 0.0
  %vm758 = vcmp.gt.f32.partialorder %v630, 0.0
  %vm759 = vcmp.gt.f32.partialorder %v631, 0.0
  %vm760 = vcmp.gt.f32.partialorder %v632, 0.0
  %vm761 = vcmp.gt.f32.partialorder %v633, 0.0
  %vm762 = vcmp.gt.f32.partialorder %v634, 0.0
  %vm763 = vcmp.gt.f32.partialorder %v635, 0.0
  %vm764 = vcmp.gt.f32.partialorder %v636, 0.0
  %vm765 = vcmp.gt.f32.partialorder %v637, 0.0
  %vm766 = vcmp.gt.f32.partialorder %v638, 0.0
  %vm767 = vcmp.gt.f32.partialorder %v639, 0.0
  %vm768 = vcmp.gt.f32.partialorder %v640, 0.0
  %vm769 = vcmp.gt.f32.partialorder %v641, 0.0
  %vm770 = vcmp.gt.f32.partialorder %v642, 0.0
  %vm771 = vcmp.gt.f32.partialorder %v643, 0.0
  %vm772 = vcmp.gt.f32.partialorder %v644, 0.0
  %vm773 = vcmp.gt.f32.partialorder %v645, 0.0
  %vm774 = vcmp.gt.f32.partialorder %v646, 0.0
  %vm775 = vcmp.gt.f32.partialorder %v647, 0.0
  %vm776 = vcmp.gt.f32.partialorder %v648, 0.0
  %vm777 = vcmp.gt.f32.partialorder %v649, 0.0
  %vm778 = vcmp.gt.f32.partialorder %v650, 0.0
  %vm779 = vcmp.gt.f32.partialorder %v651, 0.0
  %vm780 = vcmp.gt.f32.partialorder %v652, 0.0
  %vm781 = vcmp.gt.f32.partialorder %v653, 0.0
  %vm782 = vcmp.gt.f32.partialorder %v654, 0.0
  %vm783 = vcmp.gt.f32.partialorder %v655, 0.0
  %vm784 = vcmp.gt.f32.partialorder %v656, 0.0
  %vm785 = vcmp.gt.f32.partialorder %v657, 0.0
  %vm786 = vcmp.gt.f32.partialorder %v658, 0.0
  %vm787 = vcmp.gt.f32.partialorder %v659, 0.0
  %vm788 = vcmp.gt.f32.partialorder %v660, 0.0
  %vm789 = vcmp.gt.f32.partialorder %v661, 0.0
  %vm790 = vcmp.gt.f32.partialorder %v662, 0.0
  %vm791 = vcmp.gt.f32.partialorder %v663, 0.0
  %vm792 = vcmp.gt.f32.partialorder %v664, 0.0
  %vm793 = vcmp.gt.f32.partialorder %v665, 0.0
  %vm794 = vcmp.gt.f32.partialorder %v666, 0.0
  %vm795 = vcmp.gt.f32.partialorder %v667, 0.0
  %vm796 = vcmp.gt.f32.partialorder %v668, 0.0
  %vm797 = vcmp.gt.f32.partialorder %v669, 0.0
  %vm798 = vcmp.gt.f32.partialorder %v670, 0.0
  %vm799 = vcmp.gt.f32.partialorder %v671, 0.0
  %vm800 = vcmp.gt.f32.partialorder %v672, 0.0
  %vm801 = vcmp.gt.f32.partialorder %v673, 0.0
  %vm802 = vcmp.gt.f32.partialorder %v674, 0.0
  %vm803 = vcmp.gt.f32.partialorder %v675, 0.0
  %vm804 = vcmp.gt.f32.partialorder %v676, 0.0
  %vm805 = vcmp.gt.f32.partialorder %v677, 0.0
  %vm806 = vcmp.gt.f32.partialorder %v678, 0.0
  %vm807 = vcmp.gt.f32.partialorder %v679, 0.0
  %vm808 = vcmp.gt.f32.partialorder %v680, 0.0
  %vm809 = vcmp.gt.f32.partialorder %v681, 0.0
  %vm810 = vcmp.gt.f32.partialorder %v682, 0.0
  %vm811 = vcmp.gt.f32.partialorder %v683, 0.0
  %vm812 = vcmp.gt.f32.partialorder %v684, 0.0
  %vm813 = vcmp.gt.f32.partialorder %v685, 0.0
  %vm814 = vcmp.gt.f32.partialorder %v686, 0.0
  %vm815 = vcmp.gt.f32.partialorder %v687, 0.0
  %vm816 = vcmp.gt.f32.partialorder %v688, 0.0
  %vm817 = vcmp.gt.f32.partialorder %v689, 0.0
  %vm818 = vcmp.gt.f32.partialorder %v690, 0.0
  %vm819 = vcmp.gt.f32.partialorder %v691, 0.0
  %vm820 = vcmp.gt.f32.partialorder %v692, 0.0
  %vm821 = vcmp.gt.f32.partialorder %v693, 0.0
  %vm822 = vcmp.gt.f32.partialorder %v694, 0.0
  %vm823 = vcmp.gt.f32.partialorder %v695, 0.0
  %v824 = vmul.f32 %v568, 0.2
  %v825 = vmul.f32 %v569, 0.2
  %v826 = vmul.f32 %v570, 0.2
  %v827 = vmul.f32 %v571, 0.2
  %v828 = vmul.f32 %v572, 0.2
  %v829 = vmul.f32 %v573, 0.2
  %v830 = vmul.f32 %v574, 0.2
  %v831 = vmul.f32 %v575, 0.2
  %v832 = vmul.f32 %v576, 0.2
  %v833 = vmul.f32 %v577, 0.2
  %v834 = vmul.f32 %v578, 0.2
  %v835 = vmul.f32 %v579, 0.2
  %v836 = vmul.f32 %v580, 0.2
  %v837 = vmul.f32 %v581, 0.2
  %v838 = vmul.f32 %v582, 0.2
  %v839 = vmul.f32 %v583, 0.2
  %v840 = vmul.f32 %v584, 0.2
  %v841 = vmul.f32 %v585, 0.2
  %v842 = vmul.f32 %v586, 0.2
  %v843 = vmul.f32 %v587, 0.2
  %v844 = vmul.f32 %v588, 0.2
  %v845 = vmul.f32 %v589, 0.2
  %v846 = vmul.f32 %v590, 0.2
  %v847 = vmul.f32 %v591, 0.2
  %v848 = vmul.f32 %v592, 0.2
  %v849 = vmul.f32 %v593, 0.2
  %v850 = vmul.f32 %v594, 0.2
  %v851 = vmul.f32 %v595, 0.2
  %v852 = vmul.f32 %v596, 0.2
  %v853 = vmul.f32 %v597, 0.2
  %v854 = vmul.f32 %v598, 0.2
  %v855 = vmul.f32 %v599, 0.2
  %v856 = vmul.f32 %v600, 0.2
  %v857 = vmul.f32 %v601, 0.2
  %v858 = vmul.f32 %v602, 0.2
  %v859 = vmul.f32 %v603, 0.2
  %v860 = vmul.f32 %v604, 0.2
  %v861 = vmul.f32 %v605, 0.2
  %v862 = vmul.f32 %v606, 0.2
  %v863 = vmul.f32 %v607, 0.2
  %v864 = vmul.f32 %v608, 0.2
  %v865 = vmul.f32 %v609, 0.2
  %v866 = vmul.f32 %v610, 0.2
  %v867 = vmul.f32 %v611, 0.2
  %v868 = vmul.f32 %v612, 0.2
  %v869 = vmul.f32 %v613, 0.2
  %v870 = vmul.f32 %v614, 0.2
  %v871 = vmul.f32 %v615, 0.2
  %v872 = vmul.f32 %v616, 0.2
  %v873 = vmul.f32 %v617, 0.2
  %v874 = vmul.f32 %v618, 0.2
  %v875 = vmul.f32 %v619, 0.2
  %v876 = vmul.f32 %v620, 0.2
  %v877 = vmul.f32 %v621, 0.2
  %v878 = vmul.f32 %v622, 0.2
  %v879 = vmul.f32 %v623, 0.2
  %v880 = vmul.f32 %v624, 0.2
  %v881 = vmul.f32 %v625, 0.2
  %v882 = vmul.f32 %v626, 0.2
  %v883 = vmul.f32 %v627, 0.2
  %v884 = vmul.f32 %v628, 0.2
  %v885 = vmul.f32 %v629, 0.2
  %v886 = vmul.f32 %v630, 0.2
  %v887 = vmul.f32 %v631, 0.2
  %v888 = vmul.f32 %v632, 0.2
  %v889 = vmul.f32 %v633, 0.2
  %v890 = vmul.f32 %v634, 0.2
  %v891 = vmul.f32 %v635, 0.2
  %v892 = vmul.f32 %v636, 0.2
  %v893 = vmul.f32 %v637, 0.2
  %v894 = vmul.f32 %v638, 0.2
  %v895 = vmul.f32 %v639, 0.2
  %v896 = vmul.f32 %v640, 0.2
  %v897 = vmul.f32 %v641, 0.2
  %v898 = vmul.f32 %v642, 0.2
  %v899 = vmul.f32 %v643, 0.2
  %v900 = vmul.f32 %v644, 0.2
  %v901 = vmul.f32 %v645, 0.2
  %v902 = vmul.f32 %v646, 0.2
  %v903 = vmul.f32 %v647, 0.2
  %v904 = vmul.f32 %v648, 0.2
  %v905 = vmul.f32 %v649, 0.2
  %v906 = vmul.f32 %v650, 0.2
  %v907 = vmul.f32 %v651, 0.2
  %v908 = vmul.f32 %v652, 0.2
  %v909 = vmul.f32 %v653, 0.2
  %v910 = vmul.f32 %v654, 0.2
  %v911 = vmul.f32 %v655, 0.2
  %v912 = vmul.f32 %v656, 0.2
  %v913 = vmul.f32 %v657, 0.2
  %v914 = vmul.f32 %v658, 0.2
  %v915 = vmul.f32 %v659, 0.2
  %v916 = vmul.f32 %v660, 0.2
  %v917 = vmul.f32 %v661, 0.2
  %v918 = vmul.f32 %v662, 0.2
  %v919 = vmul.f32 %v663, 0.2
  %v920 = vmul.f32 %v664, 0.2
  %v921 = vmul.f32 %v665, 0.2
  %v922 = vmul.f32 %v666, 0.2
  %v923 = vmul.f32 %v667, 0.2
  %v924 = vmul.f32 %v668, 0.2
  %v925 = vmul.f32 %v669, 0.2
  %v926 = vmul.f32 %v670, 0.2
  %v927 = vmul.f32 %v671, 0.2
  %v928 = vmul.f32 %v672, 0.2
  %v929 = vmul.f32 %v673, 0.2
  %v930 = vmul.f32 %v674, 0.2
  %v931 = vmul.f32 %v675, 0.2
  %v932 = vmul.f32 %v676, 0.2
  %v933 = vmul.f32 %v677, 0.2
  %v934 = vmul.f32 %v678, 0.2
  %v935 = vmul.f32 %v679, 0.2
  %v936 = vmul.f32 %v680, 0.2
  %v937 = vmul.f32 %v681, 0.2
  %v938 = vmul.f32 %v682, 0.2
  %v939 = vmul.f32 %v683, 0.2
  %v940 = vmul.f32 %v684, 0.2
  %v941 = vmul.f32 %v685, 0.2
  %v942 = vmul.f32 %v686, 0.2
  %v943 = vmul.f32 %v687, 0.2
  %v944 = vmul.f32 %v688, 0.2
  %v945 = vmul.f32 %v689, 0.2
  %v946 = vmul.f32 %v690, 0.2
  %v947 = vmul.f32 %v691, 0.2
  %v948 = vmul.f32 %v692, 0.2
  %v949 = vmul.f32 %v693, 0.2
  %v950 = vmul.f32 %v694, 0.2
  %v951 = vmul.f32 %v695, 0.2
  %v952 = vsel %vm696, %v568, %v824
  %v953 = vsel %vm697, %v569, %v825
  %v954 = vsel %vm698, %v570, %v826
  %v955 = vsel %vm699, %v571, %v827
  %v956 = vsel %vm700, %v572, %v828
  %v957 = vsel %vm701, %v573, %v829
  %v958 = vsel %vm702, %v574, %v830
  %v959 = vsel %vm703, %v575, %v831
  %v960 = vsel %vm704, %v576, %v832
  %v961 = vsel %vm705, %v577, %v833
  %v962 = vsel %vm706, %v578, %v834
  %v963 = vsel %vm707, %v579, %v835
  %v964 = vsel %vm708, %v580, %v836
  %v965 = vsel %vm709, %v581, %v837
  %v966 = vsel %vm710, %v582, %v838
  %v967 = vsel %vm711, %v583, %v839
  %v968 = vsel %vm712, %v584, %v840
  %v969 = vsel %vm713, %v585, %v841
  %v970 = vsel %vm714, %v586, %v842
  %v971 = vsel %vm715, %v587, %v843
  %v972 = vsel %vm716, %v588, %v844
  %v973 = vsel %vm717, %v589, %v845
  %v974 = vsel %vm718, %v590, %v846
  %v975 = vsel %vm719, %v591, %v847
  %v976 = vsel %vm720, %v592, %v848
  %v977 = vsel %vm721, %v593, %v849
  %v978 = vsel %vm722, %v594, %v850
  %v979 = vsel %vm723, %v595, %v851
  %v980 = vsel %vm724, %v596, %v852
  %v981 = vsel %vm725, %v597, %v853
  %v982 = vsel %vm726, %v598, %v854
  %v983 = vsel %vm727, %v599, %v855
  %v984 = vsel %vm728, %v600, %v856
  %v985 = vsel %vm729, %v601, %v857
  %v986 = vsel %vm730, %v602, %v858
  %v987 = vsel %vm731, %v603, %v859
  %v988 = vsel %vm732, %v604, %v860
  %v989 = vsel %vm733, %v605, %v861
  %v990 = vsel %vm734, %v606, %v862
  %v991 = vsel %vm735, %v607, %v863
  %v992 = vsel %vm736, %v608, %v864
  %v993 = vsel %vm737, %v609, %v865
  %v994 = vsel %vm738, %v610, %v866
  %v995 = vsel %vm739, %v611, %v867
  %v996 = vsel %vm740, %v612, %v868
  %v997 = vsel %vm741, %v613, %v869
  %v998 = vsel %vm742, %v614, %v870
  %v999 = vsel %vm743, %v615, %v871
  %v1000 = vsel %vm744, %v616, %v872
  %v1001 = vsel %vm745, %v617, %v873
  %v1002 = vsel %vm746, %v618, %v874
  %v1003 = vsel %vm747, %v619, %v875
  %v1004 = vsel %vm748, %v620, %v876
  %v1005 = vsel %vm749, %v621, %v877
  %v1006 = vsel %vm750, %v622, %v878
  %v1007 = vsel %vm751, %v623, %v879
  %v1008 = vsel %vm752, %v624, %v880
  %v1009 = vsel %vm753, %v625, %v881
  %v1010 = vsel %vm754, %v626, %v882
  %v1011 = vsel %vm755, %v627, %v883
  %v1012 = vsel %vm756, %v628, %v884
  %v1013 = vsel %vm757, %v629, %v885
  %v1014 = vsel %vm758, %v630, %v886
  %v1015 = vsel %vm759, %v631, %v887
  %v1016 = vsel %vm760, %v632, %v888
  %v1017 = vsel %vm761, %v633, %v889
  %v1018 = vsel %vm762, %v634, %v890
  %v1019 = vsel %vm763, %v635, %v891
  %v1020 = vsel %vm764, %v636, %v892
  %v1021 = vsel %vm765, %v637, %v893
  %v1022 = vsel %vm766, %v638, %v894
  %v1023 = vsel %vm767, %v639, %v895
  %v1024 = vsel %vm768, %v640, %v896
  %v1025 = vsel %vm769, %v641, %v897
  %v1026 = vsel %vm770, %v642, %v898
  %v1027 = vsel %vm771, %v643, %v899
  %v1028 = vsel %vm772, %v644, %v900
  %v1029 = vsel %vm773, %v645, %v901
  %v1030 = vsel %vm774, %v646, %v902
  %v1031 = vsel %vm775, %v647, %v903
  %v1032 = vsel %vm776, %v648, %v904
  %v1033 = vsel %vm777, %v649, %v905
  %v1034 = vsel %vm778, %v650, %v906
  %v1035 = vsel %vm779, %v651, %v907
  %v1036 = vsel %vm780, %v652, %v908
  %v1037 = vsel %vm781, %v653, %v909
  %v1038 = vsel %vm782, %v654, %v910
  %v1039 = vsel %vm783, %v655, %v911
  %v1040 = vsel %vm784, %v656, %v912
  %v1041 = vsel %vm785, %v657, %v913
  %v1042 = vsel %vm786, %v658, %v914
  %v1043 = vsel %vm787, %v659, %v915
  %v1044 = vsel %vm788, %v660, %v916
  %v1045 = vsel %vm789, %v661, %v917
  %v1046 = vsel %vm790, %v662, %v918
  %v1047 = vsel %vm791, %v663, %v919
  %v1048 = vsel %vm792, %v664, %v920
  %v1049 = vsel %vm793, %v665, %v921
  %v1050 = vsel %vm794, %v666, %v922
  %v1051 = vsel %vm795, %v667, %v923
  %v1052 = vsel %vm796, %v668, %v924
  %v1053 = vsel %vm797, %v669, %v925
  %v1054 = vsel %vm798, %v670, %v926
  %v1055 = vsel %vm799, %v671, %v927
  %v1056 = vsel %vm800, %v672, %v928
  %v1057 = vsel %vm801, %v673, %v929
  %v1058 = vsel %vm802, %v674, %v930
  %v1059 = vsel %vm803, %v675, %v931
  %v1060 = vsel %vm804, %v676, %v932
  %v1061 = vsel %vm805, %v677, %v933
  %v1062 = vsel %vm806, %v678, %v934
  %v1063 = vsel %vm807, %v679, %v935
  %v1064 = vsel %vm808, %v680, %v936
  %v1065 = vsel %vm809, %v681, %v937
  %v1066 = vsel %vm810, %v682, %v938
  %v1067 = vsel %vm811, %v683, %v939
  %v1068 = vsel %vm812, %v684, %v940
  %v1069 = vsel %vm813, %v685, %v941
  %v1070 = vsel %vm814, %v686, %v942
  %v1071 = vsel %vm815, %v687, %v943
  %v1072 = vsel %vm816, %v688, %v944
  %v1073 = vsel %vm817, %v689, %v945
  %v1074 = vsel %vm818, %v690, %v946
  %v1075 = vsel %vm819, %v691, %v947
  %v1076 = vsel %vm820, %v692, %v948
  %v1077 = vsel %vm821, %v693, %v949
  %v1078 = vsel %vm822, %v694, %v950
  %v1079 = vsel %vm823, %v695, %v951
  %v1080 = vld [vmem:[%s4] sm:$0x1]
  %v1082 = vlaneseq
  %v1083 = vshrl.u32 %v1082, 7
  %v1084 = vsub.s32 0, %v1083
  %v1085 = vrot.slane %v1080, %v1084
  %v1087 = vmul.f32 %v952, %v1085
  %v1088 = vmul.f32 %v953, %v1085
  %v1089 = vmul.f32 %v954, %v1085
  %v1090 = vmul.f32 %v955, %v1085
  %v1091 = vmul.f32 %v956, %v1085
  %v1092 = vmul.f32 %v957, %v1085
  %v1093 = vmul.f32 %v958, %v1085
  %v1094 = vmul.f32 %v959, %v1085
  %v1095 = vmul.f32 %v960, %v1085
  %v1096 = vmul.f32 %v961, %v1085
  %v1097 = vmul.f32 %v962, %v1085
  %v1098 = vmul.f32 %v963, %v1085
  %v1099 = vmul.f32 %v964, %v1085
  %v1100 = vmul.f32 %v965, %v1085
  %v1101 = vmul.f32 %v966, %v1085
  %v1102 = vmul.f32 %v967, %v1085
  %v1103 = vmul.f32 %v968, %v1085
  %v1104 = vmul.f32 %v969, %v1085
  %v1105 = vmul.f32 %v970, %v1085
  %v1106 = vmul.f32 %v971, %v1085
  %v1107 = vmul.f32 %v972, %v1085
  %v1108 = vmul.f32 %v973, %v1085
  %v1109 = vmul.f32 %v974, %v1085
  %v1110 = vmul.f32 %v975, %v1085
  %v1111 = vmul.f32 %v976, %v1085
  %v1112 = vmul.f32 %v977, %v1085
  %v1113 = vmul.f32 %v978, %v1085
  %v1114 = vmul.f32 %v979, %v1085
  %v1115 = vmul.f32 %v980, %v1085
  %v1116 = vmul.f32 %v981, %v1085
  %v1117 = vmul.f32 %v982, %v1085
  %v1118 = vmul.f32 %v983, %v1085
  %v1119 = vmul.f32 %v984, %v1085
  %v1120 = vmul.f32 %v985, %v1085
  %v1121 = vmul.f32 %v986, %v1085
  %v1122 = vmul.f32 %v987, %v1085
  %v1123 = vmul.f32 %v988, %v1085
  %v1124 = vmul.f32 %v989, %v1085
  %v1125 = vmul.f32 %v990, %v1085
  %v1126 = vmul.f32 %v991, %v1085
  %v1127 = vmul.f32 %v992, %v1085
  %v1128 = vmul.f32 %v993, %v1085
  %v1129 = vmul.f32 %v994, %v1085
  %v1130 = vmul.f32 %v995, %v1085
  %v1131 = vmul.f32 %v996, %v1085
  %v1132 = vmul.f32 %v997, %v1085
  %v1133 = vmul.f32 %v998, %v1085
  %v1134 = vmul.f32 %v999, %v1085
  %v1135 = vmul.f32 %v1000, %v1085
  %v1136 = vmul.f32 %v1001, %v1085
  %v1137 = vmul.f32 %v1002, %v1085
  %v1138 = vmul.f32 %v1003, %v1085
  %v1139 = vmul.f32 %v1004, %v1085
  %v1140 = vmul.f32 %v1005, %v1085
  %v1141 = vmul.f32 %v1006, %v1085
  %v1142 = vmul.f32 %v1007, %v1085
  %v1143 = vmul.f32 %v1008, %v1085
  %v1144 = vmul.f32 %v1009, %v1085
  %v1145 = vmul.f32 %v1010, %v1085
  %v1146 = vmul.f32 %v1011, %v1085
  %v1147 = vmul.f32 %v1012, %v1085
  %v1148 = vmul.f32 %v1013, %v1085
  %v1149 = vmul.f32 %v1014, %v1085
  %v1150 = vmul.f32 %v1015, %v1085
  %v1151 = vmul.f32 %v1016, %v1085
  %v1152 = vmul.f32 %v1017, %v1085
  %v1153 = vmul.f32 %v1018, %v1085
  %v1154 = vmul.f32 %v1019, %v1085
  %v1155 = vmul.f32 %v1020, %v1085
  %v1156 = vmul.f32 %v1021, %v1085
  %v1157 = vmul.f32 %v1022, %v1085
  %v1158 = vmul.f32 %v1023, %v1085
  %v1159 = vmul.f32 %v1024, %v1085
  %v1160 = vmul.f32 %v1025, %v1085
  %v1161 = vmul.f32 %v1026, %v1085
  %v1162 = vmul.f32 %v1027, %v1085
  %v1163 = vmul.f32 %v1028, %v1085
  %v1164 = vmul.f32 %v1029, %v1085
  %v1165 = vmul.f32 %v1030, %v1085
  %v1166 = vmul.f32 %v1031, %v1085
  %v1167 = vmul.f32 %v1032, %v1085
  %v1168 = vmul.f32 %v1033, %v1085
  %v1169 = vmul.f32 %v1034, %v1085
  %v1170 = vmul.f32 %v1035, %v1085
  %v1171 = vmul.f32 %v1036, %v1085
  %v1172 = vmul.f32 %v1037, %v1085
  %v1173 = vmul.f32 %v1038, %v1085
  %v1174 = vmul.f32 %v1039, %v1085
  %v1175 = vmul.f32 %v1040, %v1085
  %v1176 = vmul.f32 %v1041, %v1085
  %v1177 = vmul.f32 %v1042, %v1085
  %v1178 = vmul.f32 %v1043, %v1085
  %v1179 = vmul.f32 %v1044, %v1085
  %v1180 = vmul.f32 %v1045, %v1085
  %v1181 = vmul.f32 %v1046, %v1085
  %v1182 = vmul.f32 %v1047, %v1085
  %v1183 = vmul.f32 %v1048, %v1085
  %v1184 = vmul.f32 %v1049, %v1085
  %v1185 = vmul.f32 %v1050, %v1085
  %v1186 = vmul.f32 %v1051, %v1085
  %v1187 = vmul.f32 %v1052, %v1085
  %v1188 = vmul.f32 %v1053, %v1085
  %v1189 = vmul.f32 %v1054, %v1085
  %v1190 = vmul.f32 %v1055, %v1085
  %v1191 = vmul.f32 %v1056, %v1085
  %v1192 = vmul.f32 %v1057, %v1085
  %v1193 = vmul.f32 %v1058, %v1085
  %v1194 = vmul.f32 %v1059, %v1085
  %v1195 = vmul.f32 %v1060, %v1085
  %v1196 = vmul.f32 %v1061, %v1085
  %v1197 = vmul.f32 %v1062, %v1085
  %v1198 = vmul.f32 %v1063, %v1085
  %v1199 = vmul.f32 %v1064, %v1085
  %v1200 = vmul.f32 %v1065, %v1085
  %v1201 = vmul.f32 %v1066, %v1085
  %v1202 = vmul.f32 %v1067, %v1085
  %v1203 = vmul.f32 %v1068, %v1085
  %v1204 = vmul.f32 %v1069, %v1085
  %v1205 = vmul.f32 %v1070, %v1085
  %v1206 = vmul.f32 %v1071, %v1085
  %v1207 = vmul.f32 %v1072, %v1085
  %v1208 = vmul.f32 %v1073, %v1085
  %v1209 = vmul.f32 %v1074, %v1085
  %v1210 = vmul.f32 %v1075, %v1085
  %v1211 = vmul.f32 %v1076, %v1085
  %v1212 = vmul.f32 %v1077, %v1085
  %v1213 = vmul.f32 %v1078, %v1085
  %v1214 = vmul.f32 %v1079, %v1085
  %vm1215 = vcmask 64512
  %v1216 = vsel %vm1215, %v1087, 0.0
  %1217 = vadd.xlane.f32.xlu0 %v1216
  %v1218 = vpop.xlane.xlu0 %1217
  %v1219 = vsel %vm1215, %v1088, 0.0
  %1220 = vadd.xlane.f32.xlu0 %v1219
  %v1221 = vpop.xlane.xlu0 %1220
  %v1222 = vsel %vm1215, %v1089, 0.0
  %1223 = vadd.xlane.f32.xlu0 %v1222
  %v1224 = vpop.xlane.xlu0 %1223
  %v1225 = vsel %vm1215, %v1090, 0.0
  %1226 = vadd.xlane.f32.xlu0 %v1225
  %v1227 = vpop.xlane.xlu0 %1226
  %v1228 = vsel %vm1215, %v1091, 0.0
  %1229 = vadd.xlane.f32.xlu0 %v1228
  %v1230 = vpop.xlane.xlu0 %1229
  %v1231 = vsel %vm1215, %v1092, 0.0
  %1232 = vadd.xlane.f32.xlu0 %v1231
  %v1233 = vpop.xlane.xlu0 %1232
  %v1234 = vsel %vm1215, %v1093, 0.0
  %1235 = vadd.xlane.f32.xlu0 %v1234
  %v1236 = vpop.xlane.xlu0 %1235
  %v1237 = vsel %vm1215, %v1094, 0.0
  %1238 = vadd.xlane.f32.xlu0 %v1237
  %v1239 = vpop.xlane.xlu0 %1238
  %v1240 = vsel %vm1215, %v1095, 0.0
  %1241 = vadd.xlane.f32.xlu0 %v1240
  %v1242 = vpop.xlane.xlu0 %1241
  %v1243 = vsel %vm1215, %v1096, 0.0
  %1244 = vadd.xlane.f32.xlu0 %v1243
  %v1245 = vpop.xlane.xlu0 %1244
  %v1246 = vsel %vm1215, %v1097, 0.0
  %1247 = vadd.xlane.f32.xlu0 %v1246
  %v1248 = vpop.xlane.xlu0 %1247
  %v1249 = vsel %vm1215, %v1098, 0.0
  %1250 = vadd.xlane.f32.xlu0 %v1249
  %v1251 = vpop.xlane.xlu0 %1250
  %v1252 = vsel %vm1215, %v1099, 0.0
  %1253 = vadd.xlane.f32.xlu0 %v1252
  %v1254 = vpop.xlane.xlu0 %1253
  %v1255 = vsel %vm1215, %v1100, 0.0
  %1256 = vadd.xlane.f32.xlu0 %v1255
  %v1257 = vpop.xlane.xlu0 %1256
  %v1258 = vsel %vm1215, %v1101, 0.0
  %1259 = vadd.xlane.f32.xlu0 %v1258
  %v1260 = vpop.xlane.xlu0 %1259
  %v1261 = vsel %vm1215, %v1102, 0.0
  %1262 = vadd.xlane.f32.xlu0 %v1261
  %v1263 = vpop.xlane.xlu0 %1262
  %v1264 = vsel %vm1215, %v1103, 0.0
  %1265 = vadd.xlane.f32.xlu0 %v1264
  %v1266 = vpop.xlane.xlu0 %1265
  %v1267 = vsel %vm1215, %v1104, 0.0
  %1268 = vadd.xlane.f32.xlu0 %v1267
  %v1269 = vpop.xlane.xlu0 %1268
  %v1270 = vsel %vm1215, %v1105, 0.0
  %1271 = vadd.xlane.f32.xlu0 %v1270
  %v1272 = vpop.xlane.xlu0 %1271
  %v1273 = vsel %vm1215, %v1106, 0.0
  %1274 = vadd.xlane.f32.xlu0 %v1273
  %v1275 = vpop.xlane.xlu0 %1274
  %v1276 = vsel %vm1215, %v1107, 0.0
  %1277 = vadd.xlane.f32.xlu0 %v1276
  %v1278 = vpop.xlane.xlu0 %1277
  %v1279 = vsel %vm1215, %v1108, 0.0
  %1280 = vadd.xlane.f32.xlu0 %v1279
  %v1281 = vpop.xlane.xlu0 %1280
  %v1282 = vsel %vm1215, %v1109, 0.0
  %1283 = vadd.xlane.f32.xlu0 %v1282
  %v1284 = vpop.xlane.xlu0 %1283
  %v1285 = vsel %vm1215, %v1110, 0.0
  %1286 = vadd.xlane.f32.xlu0 %v1285
  %v1287 = vpop.xlane.xlu0 %1286
  %v1288 = vsel %vm1215, %v1111, 0.0
  %1289 = vadd.xlane.f32.xlu0 %v1288
  %v1290 = vpop.xlane.xlu0 %1289
  %v1291 = vsel %vm1215, %v1112, 0.0
  %1292 = vadd.xlane.f32.xlu0 %v1291
  %v1293 = vpop.xlane.xlu0 %1292
  %v1294 = vsel %vm1215, %v1113, 0.0
  %1295 = vadd.xlane.f32.xlu0 %v1294
  %v1296 = vpop.xlane.xlu0 %1295
  %v1297 = vsel %vm1215, %v1114, 0.0
  %1298 = vadd.xlane.f32.xlu0 %v1297
  %v1299 = vpop.xlane.xlu0 %1298
  %v1300 = vsel %vm1215, %v1115, 0.0
  %1301 = vadd.xlane.f32.xlu0 %v1300
  %v1302 = vpop.xlane.xlu0 %1301
  %v1303 = vsel %vm1215, %v1116, 0.0
  %1304 = vadd.xlane.f32.xlu0 %v1303
  %v1305 = vpop.xlane.xlu0 %1304
  %v1306 = vsel %vm1215, %v1117, 0.0
  %1307 = vadd.xlane.f32.xlu0 %v1306
  %v1308 = vpop.xlane.xlu0 %1307
  %v1309 = vsel %vm1215, %v1118, 0.0
  %1310 = vadd.xlane.f32.xlu0 %v1309
  %v1311 = vpop.xlane.xlu0 %1310
  %v1312 = vsel %vm1215, %v1119, 0.0
  %1313 = vadd.xlane.f32.xlu0 %v1312
  %v1314 = vpop.xlane.xlu0 %1313
  %v1315 = vsel %vm1215, %v1120, 0.0
  %1316 = vadd.xlane.f32.xlu0 %v1315
  %v1317 = vpop.xlane.xlu0 %1316
  %v1318 = vsel %vm1215, %v1121, 0.0
  %1319 = vadd.xlane.f32.xlu0 %v1318
  %v1320 = vpop.xlane.xlu0 %1319
  %v1321 = vsel %vm1215, %v1122, 0.0
  %1322 = vadd.xlane.f32.xlu0 %v1321
  %v1323 = vpop.xlane.xlu0 %1322
  %v1324 = vsel %vm1215, %v1123, 0.0
  %1325 = vadd.xlane.f32.xlu0 %v1324
  %v1326 = vpop.xlane.xlu0 %1325
  %v1327 = vsel %vm1215, %v1124, 0.0
  %1328 = vadd.xlane.f32.xlu0 %v1327
  %v1329 = vpop.xlane.xlu0 %1328
  %v1330 = vsel %vm1215, %v1125, 0.0
  %1331 = vadd.xlane.f32.xlu0 %v1330
  %v1332 = vpop.xlane.xlu0 %1331
  %v1333 = vsel %vm1215, %v1126, 0.0
  %1334 = vadd.xlane.f32.xlu0 %v1333
  %v1335 = vpop.xlane.xlu0 %1334
  %v1336 = vsel %vm1215, %v1127, 0.0
  %1337 = vadd.xlane.f32.xlu0 %v1336
  %v1338 = vpop.xlane.xlu0 %1337
  %v1339 = vsel %vm1215, %v1128, 0.0
  %1340 = vadd.xlane.f32.xlu0 %v1339
  %v1341 = vpop.xlane.xlu0 %1340
  %v1342 = vsel %vm1215, %v1129, 0.0
  %1343 = vadd.xlane.f32.xlu0 %v1342
  %v1344 = vpop.xlane.xlu0 %1343
  %v1345 = vsel %vm1215, %v1130, 0.0
  %1346 = vadd.xlane.f32.xlu0 %v1345
  %v1347 = vpop.xlane.xlu0 %1346
  %v1348 = vsel %vm1215, %v1131, 0.0
  %1349 = vadd.xlane.f32.xlu0 %v1348
  %v1350 = vpop.xlane.xlu0 %1349
  %v1351 = vsel %vm1215, %v1132, 0.0
  %1352 = vadd.xlane.f32.xlu0 %v1351
  %v1353 = vpop.xlane.xlu0 %1352
  %v1354 = vsel %vm1215, %v1133, 0.0
  %1355 = vadd.xlane.f32.xlu0 %v1354
  %v1356 = vpop.xlane.xlu0 %1355
  %v1357 = vsel %vm1215, %v1134, 0.0
  %1358 = vadd.xlane.f32.xlu0 %v1357
  %v1359 = vpop.xlane.xlu0 %1358
  %v1360 = vsel %vm1215, %v1135, 0.0
  %1361 = vadd.xlane.f32.xlu0 %v1360
  %v1362 = vpop.xlane.xlu0 %1361
  %v1363 = vsel %vm1215, %v1136, 0.0
  %1364 = vadd.xlane.f32.xlu0 %v1363
  %v1365 = vpop.xlane.xlu0 %1364
  %v1366 = vsel %vm1215, %v1137, 0.0
  %1367 = vadd.xlane.f32.xlu0 %v1366
  %v1368 = vpop.xlane.xlu0 %1367
  %v1369 = vsel %vm1215, %v1138, 0.0
  %1370 = vadd.xlane.f32.xlu0 %v1369
  %v1371 = vpop.xlane.xlu0 %1370
  %v1372 = vsel %vm1215, %v1139, 0.0
  %1373 = vadd.xlane.f32.xlu0 %v1372
  %v1374 = vpop.xlane.xlu0 %1373
  %v1375 = vsel %vm1215, %v1140, 0.0
  %1376 = vadd.xlane.f32.xlu0 %v1375
  %v1377 = vpop.xlane.xlu0 %1376
  %v1378 = vsel %vm1215, %v1141, 0.0
  %1379 = vadd.xlane.f32.xlu0 %v1378
  %v1380 = vpop.xlane.xlu0 %1379
  %v1381 = vsel %vm1215, %v1142, 0.0
  %1382 = vadd.xlane.f32.xlu0 %v1381
  %v1383 = vpop.xlane.xlu0 %1382
  %v1384 = vsel %vm1215, %v1143, 0.0
  %1385 = vadd.xlane.f32.xlu0 %v1384
  %v1386 = vpop.xlane.xlu0 %1385
  %v1387 = vsel %vm1215, %v1144, 0.0
  %1388 = vadd.xlane.f32.xlu0 %v1387
  %v1389 = vpop.xlane.xlu0 %1388
  %v1390 = vsel %vm1215, %v1145, 0.0
  %1391 = vadd.xlane.f32.xlu0 %v1390
  %v1392 = vpop.xlane.xlu0 %1391
  %v1393 = vsel %vm1215, %v1146, 0.0
  %1394 = vadd.xlane.f32.xlu0 %v1393
  %v1395 = vpop.xlane.xlu0 %1394
  %v1396 = vsel %vm1215, %v1147, 0.0
  %1397 = vadd.xlane.f32.xlu0 %v1396
  %v1398 = vpop.xlane.xlu0 %1397
  %v1399 = vsel %vm1215, %v1148, 0.0
  %1400 = vadd.xlane.f32.xlu0 %v1399
  %v1401 = vpop.xlane.xlu0 %1400
  %v1402 = vsel %vm1215, %v1149, 0.0
  %1403 = vadd.xlane.f32.xlu0 %v1402
  %v1404 = vpop.xlane.xlu0 %1403
  %v1405 = vsel %vm1215, %v1150, 0.0
  %1406 = vadd.xlane.f32.xlu0 %v1405
  %v1407 = vpop.xlane.xlu0 %1406
  %v1408 = vsel %vm1215, %v1151, 0.0
  %1409 = vadd.xlane.f32.xlu0 %v1408
  %v1410 = vpop.xlane.xlu0 %1409
  %v1411 = vsel %vm1215, %v1152, 0.0
  %1412 = vadd.xlane.f32.xlu0 %v1411
  %v1413 = vpop.xlane.xlu0 %1412
  %v1414 = vsel %vm1215, %v1153, 0.0
  %1415 = vadd.xlane.f32.xlu0 %v1414
  %v1416 = vpop.xlane.xlu0 %1415
  %v1417 = vsel %vm1215, %v1154, 0.0
  %1418 = vadd.xlane.f32.xlu0 %v1417
  %v1419 = vpop.xlane.xlu0 %1418
  %v1420 = vsel %vm1215, %v1155, 0.0
  %1421 = vadd.xlane.f32.xlu0 %v1420
  %v1422 = vpop.xlane.xlu0 %1421
  %v1423 = vsel %vm1215, %v1156, 0.0
  %1424 = vadd.xlane.f32.xlu0 %v1423
  %v1425 = vpop.xlane.xlu0 %1424
  %v1426 = vsel %vm1215, %v1157, 0.0
  %1427 = vadd.xlane.f32.xlu0 %v1426
  %v1428 = vpop.xlane.xlu0 %1427
  %v1429 = vsel %vm1215, %v1158, 0.0
  %1430 = vadd.xlane.f32.xlu0 %v1429
  %v1431 = vpop.xlane.xlu0 %1430
  %v1432 = vsel %vm1215, %v1159, 0.0
  %1433 = vadd.xlane.f32.xlu0 %v1432
  %v1434 = vpop.xlane.xlu0 %1433
  %v1435 = vsel %vm1215, %v1160, 0.0
  %1436 = vadd.xlane.f32.xlu0 %v1435
  %v1437 = vpop.xlane.xlu0 %1436
  %v1438 = vsel %vm1215, %v1161, 0.0
  %1439 = vadd.xlane.f32.xlu0 %v1438
  %v1440 = vpop.xlane.xlu0 %1439
  %v1441 = vsel %vm1215, %v1162, 0.0
  %1442 = vadd.xlane.f32.xlu0 %v1441
  %v1443 = vpop.xlane.xlu0 %1442
  %v1444 = vsel %vm1215, %v1163, 0.0
  %1445 = vadd.xlane.f32.xlu0 %v1444
  %v1446 = vpop.xlane.xlu0 %1445
  %v1447 = vsel %vm1215, %v1164, 0.0
  %1448 = vadd.xlane.f32.xlu0 %v1447
  %v1449 = vpop.xlane.xlu0 %1448
  %v1450 = vsel %vm1215, %v1165, 0.0
  %1451 = vadd.xlane.f32.xlu0 %v1450
  %v1452 = vpop.xlane.xlu0 %1451
  %v1453 = vsel %vm1215, %v1166, 0.0
  %1454 = vadd.xlane.f32.xlu0 %v1453
  %v1455 = vpop.xlane.xlu0 %1454
  %v1456 = vsel %vm1215, %v1167, 0.0
  %1457 = vadd.xlane.f32.xlu0 %v1456
  %v1458 = vpop.xlane.xlu0 %1457
  %v1459 = vsel %vm1215, %v1168, 0.0
  %1460 = vadd.xlane.f32.xlu0 %v1459
  %v1461 = vpop.xlane.xlu0 %1460
  %v1462 = vsel %vm1215, %v1169, 0.0
  %1463 = vadd.xlane.f32.xlu0 %v1462
  %v1464 = vpop.xlane.xlu0 %1463
  %v1465 = vsel %vm1215, %v1170, 0.0
  %1466 = vadd.xlane.f32.xlu0 %v1465
  %v1467 = vpop.xlane.xlu0 %1466
  %v1468 = vsel %vm1215, %v1171, 0.0
  %1469 = vadd.xlane.f32.xlu0 %v1468
  %v1470 = vpop.xlane.xlu0 %1469
  %v1471 = vsel %vm1215, %v1172, 0.0
  %1472 = vadd.xlane.f32.xlu0 %v1471
  %v1473 = vpop.xlane.xlu0 %1472
  %v1474 = vsel %vm1215, %v1173, 0.0
  %1475 = vadd.xlane.f32.xlu0 %v1474
  %v1476 = vpop.xlane.xlu0 %1475
  %v1477 = vsel %vm1215, %v1174, 0.0
  %1478 = vadd.xlane.f32.xlu0 %v1477
  %v1479 = vpop.xlane.xlu0 %1478
  %v1480 = vsel %vm1215, %v1175, 0.0
  %1481 = vadd.xlane.f32.xlu0 %v1480
  %v1482 = vpop.xlane.xlu0 %1481
  %v1483 = vsel %vm1215, %v1176, 0.0
  %1484 = vadd.xlane.f32.xlu0 %v1483
  %v1485 = vpop.xlane.xlu0 %1484
  %v1486 = vsel %vm1215, %v1177, 0.0
  %1487 = vadd.xlane.f32.xlu0 %v1486
  %v1488 = vpop.xlane.xlu0 %1487
  %v1489 = vsel %vm1215, %v1178, 0.0
  %1490 = vadd.xlane.f32.xlu0 %v1489
  %v1491 = vpop.xlane.xlu0 %1490
  %v1492 = vsel %vm1215, %v1179, 0.0
  %1493 = vadd.xlane.f32.xlu0 %v1492
  %v1494 = vpop.xlane.xlu0 %1493
  %v1495 = vsel %vm1215, %v1180, 0.0
  %1496 = vadd.xlane.f32.xlu0 %v1495
  %v1497 = vpop.xlane.xlu0 %1496
  %v1498 = vsel %vm1215, %v1181, 0.0
  %1499 = vadd.xlane.f32.xlu0 %v1498
  %v1500 = vpop.xlane.xlu0 %1499
  %v1501 = vsel %vm1215, %v1182, 0.0
  %1502 = vadd.xlane.f32.xlu0 %v1501
  %v1503 = vpop.xlane.xlu0 %1502
  %v1504 = vsel %vm1215, %v1183, 0.0
  %1505 = vadd.xlane.f32.xlu0 %v1504
  %v1506 = vpop.xlane.xlu0 %1505
  %v1507 = vsel %vm1215, %v1184, 0.0
  %1508 = vadd.xlane.f32.xlu0 %v1507
  %v1509 = vpop.xlane.xlu0 %1508
  %v1510 = vsel %vm1215, %v1185, 0.0
  %1511 = vadd.xlane.f32.xlu0 %v1510
  %v1512 = vpop.xlane.xlu0 %1511
  %v1513 = vsel %vm1215, %v1186, 0.0
  %1514 = vadd.xlane.f32.xlu0 %v1513
  %v1515 = vpop.xlane.xlu0 %1514
  %v1516 = vsel %vm1215, %v1187, 0.0
  %1517 = vadd.xlane.f32.xlu0 %v1516
  %v1518 = vpop.xlane.xlu0 %1517
  %v1519 = vsel %vm1215, %v1188, 0.0
  %1520 = vadd.xlane.f32.xlu0 %v1519
  %v1521 = vpop.xlane.xlu0 %1520
  %v1522 = vsel %vm1215, %v1189, 0.0
  %1523 = vadd.xlane.f32.xlu0 %v1522
  %v1524 = vpop.xlane.xlu0 %1523
  %v1525 = vsel %vm1215, %v1190, 0.0
  %1526 = vadd.xlane.f32.xlu0 %v1525
  %v1527 = vpop.xlane.xlu0 %1526
  %v1528 = vsel %vm1215, %v1191, 0.0
  %1529 = vadd.xlane.f32.xlu0 %v1528
  %v1530 = vpop.xlane.xlu0 %1529
  %v1531 = vsel %vm1215, %v1192, 0.0
  %1532 = vadd.xlane.f32.xlu0 %v1531
  %v1533 = vpop.xlane.xlu0 %1532
  %v1534 = vsel %vm1215, %v1193, 0.0
  %1535 = vadd.xlane.f32.xlu0 %v1534
  %v1536 = vpop.xlane.xlu0 %1535
  %v1537 = vsel %vm1215, %v1194, 0.0
  %1538 = vadd.xlane.f32.xlu0 %v1537
  %v1539 = vpop.xlane.xlu0 %1538
  %v1540 = vsel %vm1215, %v1195, 0.0
  %1541 = vadd.xlane.f32.xlu0 %v1540
  %v1542 = vpop.xlane.xlu0 %1541
  %v1543 = vsel %vm1215, %v1196, 0.0
  %1544 = vadd.xlane.f32.xlu0 %v1543
  %v1545 = vpop.xlane.xlu0 %1544
  %v1546 = vsel %vm1215, %v1197, 0.0
  %1547 = vadd.xlane.f32.xlu0 %v1546
  %v1548 = vpop.xlane.xlu0 %1547
  %v1549 = vsel %vm1215, %v1198, 0.0
  %1550 = vadd.xlane.f32.xlu0 %v1549
  %v1551 = vpop.xlane.xlu0 %1550
  %v1552 = vsel %vm1215, %v1199, 0.0
  %1553 = vadd.xlane.f32.xlu0 %v1552
  %v1554 = vpop.xlane.xlu0 %1553
  %v1555 = vsel %vm1215, %v1200, 0.0
  %1556 = vadd.xlane.f32.xlu0 %v1555
  %v1557 = vpop.xlane.xlu0 %1556
  %v1558 = vsel %vm1215, %v1201, 0.0
  %1559 = vadd.xlane.f32.xlu0 %v1558
  %v1560 = vpop.xlane.xlu0 %1559
  %v1561 = vsel %vm1215, %v1202, 0.0
  %1562 = vadd.xlane.f32.xlu0 %v1561
  %v1563 = vpop.xlane.xlu0 %1562
  %v1564 = vsel %vm1215, %v1203, 0.0
  %1565 = vadd.xlane.f32.xlu0 %v1564
  %v1566 = vpop.xlane.xlu0 %1565
  %v1567 = vsel %vm1215, %v1204, 0.0
  %1568 = vadd.xlane.f32.xlu0 %v1567
  %v1569 = vpop.xlane.xlu0 %1568
  %v1570 = vsel %vm1215, %v1205, 0.0
  %1571 = vadd.xlane.f32.xlu0 %v1570
  %v1572 = vpop.xlane.xlu0 %1571
  %v1573 = vsel %vm1215, %v1206, 0.0
  %1574 = vadd.xlane.f32.xlu0 %v1573
  %v1575 = vpop.xlane.xlu0 %1574
  %v1576 = vsel %vm1215, %v1207, 0.0
  %1577 = vadd.xlane.f32.xlu0 %v1576
  %v1578 = vpop.xlane.xlu0 %1577
  %v1579 = vsel %vm1215, %v1208, 0.0
  %1580 = vadd.xlane.f32.xlu0 %v1579
  %v1581 = vpop.xlane.xlu0 %1580
  %v1582 = vsel %vm1215, %v1209, 0.0
  %1583 = vadd.xlane.f32.xlu0 %v1582
  %v1584 = vpop.xlane.xlu0 %1583
  %v1585 = vsel %vm1215, %v1210, 0.0
  %1586 = vadd.xlane.f32.xlu0 %v1585
  %v1587 = vpop.xlane.xlu0 %1586
  %v1588 = vsel %vm1215, %v1211, 0.0
  %1589 = vadd.xlane.f32.xlu0 %v1588
  %v1590 = vpop.xlane.xlu0 %1589
  %v1591 = vsel %vm1215, %v1212, 0.0
  %1592 = vadd.xlane.f32.xlu0 %v1591
  %v1593 = vpop.xlane.xlu0 %1592
  %v1594 = vsel %vm1215, %v1213, 0.0
  %1595 = vadd.xlane.f32.xlu0 %v1594
  %v1596 = vpop.xlane.xlu0 %1595
  %v1597 = vsel %vm1215, %v1214, 0.0
  %1598 = vadd.xlane.f32.xlu0 %v1597
  %v1599 = vpop.xlane.xlu0 %1598
  %vm1600 = vcmp.gt.f32.partialorder %v27, 0.0
  %vm1601 = vcmp.gt.f32.partialorder %v28, 0.0
  %vm1602 = vcmp.gt.f32.partialorder %v29, 0.0
  %vm1603 = vcmp.gt.f32.partialorder %v30, 0.0
  %v1732 = vlaneseq
  %v1733 = vand.u32 %v1732, 127
  %v1734 = vlaneseq
  %v1735 = vshrl.u32 %v1734, 7
  %v1736 = vsub.s32 %v1733, %v1735
  %v1737 = vrot.slane %v1218, %v1736
  %v1738 = vadd.s32 %v1733, 4294967288
  %v1739 = vlaneseq
  %v1740 = vshrl.u32 %v1739, 7
  %v1741 = vsub.s32 %v1738, %v1740
  %v1742 = vrot.slane %v1221, %v1741
  %vm1743 = vcmask 130112
  %v1744 = vsel %vm1743, %v1742, %v1737
  %v1745 = vadd.s32 %v1733, 4294967280
  %v1746 = vlaneseq
  %v1747 = vshrl.u32 %v1746, 7
  %v1748 = vsub.s32 %v1745, %v1747
  %v1749 = vrot.slane %v1224, %v1748
  %vm1750 = vcmask 195712
  %v1751 = vsel %vm1750, %v1749, %v1744
  %v1752 = vadd.s32 %v1733, 4294967272
  %v1753 = vlaneseq
  %v1754 = vshrl.u32 %v1753, 7
  %v1755 = vsub.s32 %v1752, %v1754
  %v1756 = vrot.slane %v1227, %v1755
  %vm1757 = vcmask 261312
  %v1758 = vsel %vm1757, %v1756, %v1751
  %v1759 = vlaneseq
  %v1760 = vshrl.u32 %v1759, 7
  %v1761 = vsub.s32 %v1733, %v1760
  %v1762 = vrot.slane %v1230, %v1761
  %v1763 = vlaneseq
  %v1764 = vshrl.u32 %v1763, 7
  %v1765 = vsub.s32 %v1738, %v1764
  %v1766 = vrot.slane %v1233, %v1765
  %v1767 = vsel %vm1743, %v1766, %v1762
  %v1768 = vlaneseq
  %v1769 = vshrl.u32 %v1768, 7
  %v1770 = vsub.s32 %v1745, %v1769
  %v1771 = vrot.slane %v1236, %v1770
  %v1772 = vsel %vm1750, %v1771, %v1767
  %v1773 = vlaneseq
  %v1774 = vshrl.u32 %v1773, 7
  %v1775 = vsub.s32 %v1752, %v1774
  %v1776 = vrot.slane %v1239, %v1775
  %v1777 = vsel %vm1757, %v1776, %v1772
  %v1778 = vlaneseq
  %v1779 = vshrl.u32 %v1778, 7
  %v1780 = vsub.s32 %v1733, %v1779
  %v1781 = vrot.slane %v1242, %v1780
  %v1782 = vlaneseq
  %v1783 = vshrl.u32 %v1782, 7
  %v1784 = vsub.s32 %v1738, %v1783
  %v1785 = vrot.slane %v1245, %v1784
  %v1786 = vsel %vm1743, %v1785, %v1781
  %v1787 = vlaneseq
  %v1788 = vshrl.u32 %v1787, 7
  %v1789 = vsub.s32 %v1745, %v1788
  %v1790 = vrot.slane %v1248, %v1789
  %v1791 = vsel %vm1750, %v1790, %v1786
  %v1792 = vlaneseq
  %v1793 = vshrl.u32 %v1792, 7
  %v1794 = vsub.s32 %v1752, %v1793
  %v1795 = vrot.slane %v1251, %v1794
  %v1796 = vsel %vm1757, %v1795, %v1791
  %v1797 = vlaneseq
  %v1798 = vshrl.u32 %v1797, 7
  %v1799 = vsub.s32 %v1733, %v1798
  %v1800 = vrot.slane %v1254, %v1799
  %v1801 = vlaneseq
  %v1802 = vshrl.u32 %v1801, 7
  %v1803 = vsub.s32 %v1738, %v1802
  %v1804 = vrot.slane %v1257, %v1803
  %v1805 = vsel %vm1743, %v1804, %v1800
  %v1806 = vlaneseq
  %v1807 = vshrl.u32 %v1806, 7
  %v1808 = vsub.s32 %v1745, %v1807
  %v1809 = vrot.slane %v1260, %v1808
  %v1810 = vsel %vm1750, %v1809, %v1805
  %v1811 = vlaneseq
  %v1812 = vshrl.u32 %v1811, 7
  %v1813 = vsub.s32 %v1752, %v1812
  %v1814 = vrot.slane %v1263, %v1813
  %v1815 = vsel %vm1757, %v1814, %v1810
  %v1816 = vlaneseq
  %v1817 = vshrl.u32 %v1816, 7
  %v1818 = vsub.s32 %v1733, %v1817
  %v1819 = vrot.slane %v1266, %v1818
  %v1820 = vlaneseq
  %v1821 = vshrl.u32 %v1820, 7
  %v1822 = vsub.s32 %v1738, %v1821
  %v1823 = vrot.slane %v1269, %v1822
  %v1824 = vsel %vm1743, %v1823, %v1819
  %v1825 = vlaneseq
  %v1826 = vshrl.u32 %v1825, 7
  %v1827 = vsub.s32 %v1745, %v1826
  %v1828 = vrot.slane %v1272, %v1827
  %v1829 = vsel %vm1750, %v1828, %v1824
  %v1830 = vlaneseq
  %v1831 = vshrl.u32 %v1830, 7
  %v1832 = vsub.s32 %v1752, %v1831
  %v1833 = vrot.slane %v1275, %v1832
  %v1834 = vsel %vm1757, %v1833, %v1829
  %v1835 = vlaneseq
  %v1836 = vshrl.u32 %v1835, 7
  %v1837 = vsub.s32 %v1733, %v1836
  %v1838 = vrot.slane %v1278, %v1837
  %v1839 = vlaneseq
  %v1840 = vshrl.u32 %v1839, 7
  %v1841 = vsub.s32 %v1738, %v1840
  %v1842 = vrot.slane %v1281, %v1841
  %v1843 = vsel %vm1743, %v1842, %v1838
  %v1844 = vlaneseq
  %v1845 = vshrl.u32 %v1844, 7
  %v1846 = vsub.s32 %v1745, %v1845
  %v1847 = vrot.slane %v1284, %v1846
  %v1848 = vsel %vm1750, %v1847, %v1843
  %v1849 = vlaneseq
  %v1850 = vshrl.u32 %v1849, 7
  %v1851 = vsub.s32 %v1752, %v1850
  %v1852 = vrot.slane %v1287, %v1851
  %v1853 = vsel %vm1757, %v1852, %v1848
  %v1854 = vlaneseq
  %v1855 = vshrl.u32 %v1854, 7
  %v1856 = vsub.s32 %v1733, %v1855
  %v1857 = vrot.slane %v1290, %v1856
  %v1858 = vlaneseq
  %v1859 = vshrl.u32 %v1858, 7
  %v1860 = vsub.s32 %v1738, %v1859
  %v1861 = vrot.slane %v1293, %v1860
  %v1862 = vsel %vm1743, %v1861, %v1857
  %v1863 = vlaneseq
  %v1864 = vshrl.u32 %v1863, 7
  %v1865 = vsub.s32 %v1745, %v1864
  %v1866 = vrot.slane %v1296, %v1865
  %v1867 = vsel %vm1750, %v1866, %v1862
  %v1868 = vlaneseq
  %v1869 = vshrl.u32 %v1868, 7
  %v1870 = vsub.s32 %v1752, %v1869
  %v1871 = vrot.slane %v1299, %v1870
  %v1872 = vsel %vm1757, %v1871, %v1867
  %v1873 = vlaneseq
  %v1874 = vshrl.u32 %v1873, 7
  %v1875 = vsub.s32 %v1733, %v1874
  %v1876 = vrot.slane %v1302, %v1875
  %v1877 = vlaneseq
  %v1878 = vshrl.u32 %v1877, 7
  %v1879 = vsub.s32 %v1738, %v1878
  %v1880 = vrot.slane %v1305, %v1879
  %v1881 = vsel %vm1743, %v1880, %v1876
  %v1882 = vlaneseq
  %v1883 = vshrl.u32 %v1882, 7
  %v1884 = vsub.s32 %v1745, %v1883
  %v1885 = vrot.slane %v1308, %v1884
  %v1886 = vsel %vm1750, %v1885, %v1881
  %v1887 = vlaneseq
  %v1888 = vshrl.u32 %v1887, 7
  %v1889 = vsub.s32 %v1752, %v1888
  %v1890 = vrot.slane %v1311, %v1889
  %v1891 = vsel %vm1757, %v1890, %v1886
  %v1892 = vlaneseq
  %v1893 = vshrl.u32 %v1892, 7
  %v1894 = vsub.s32 %v1733, %v1893
  %v1895 = vrot.slane %v1314, %v1894
  %v1896 = vlaneseq
  %v1897 = vshrl.u32 %v1896, 7
  %v1898 = vsub.s32 %v1738, %v1897
  %v1899 = vrot.slane %v1317, %v1898
  %v1900 = vsel %vm1743, %v1899, %v1895
  %v1901 = vlaneseq
  %v1902 = vshrl.u32 %v1901, 7
  %v1903 = vsub.s32 %v1745, %v1902
  %v1904 = vrot.slane %v1320, %v1903
  %v1905 = vsel %vm1750, %v1904, %v1900
  %v1906 = vlaneseq
  %v1907 = vshrl.u32 %v1906, 7
  %v1908 = vsub.s32 %v1752, %v1907
  %v1909 = vrot.slane %v1323, %v1908
  %v1910 = vsel %vm1757, %v1909, %v1905
  %v1911 = vlaneseq
  %v1912 = vshrl.u32 %v1911, 7
  %v1913 = vsub.s32 %v1733, %v1912
  %v1914 = vrot.slane %v1326, %v1913
  %v1915 = vlaneseq
  %v1916 = vshrl.u32 %v1915, 7
  %v1917 = vsub.s32 %v1738, %v1916
  %v1918 = vrot.slane %v1329, %v1917
  %v1919 = vsel %vm1743, %v1918, %v1914
  %v1920 = vlaneseq
  %v1921 = vshrl.u32 %v1920, 7
  %v1922 = vsub.s32 %v1745, %v1921
  %v1923 = vrot.slane %v1332, %v1922
  %v1924 = vsel %vm1750, %v1923, %v1919
  %v1925 = vlaneseq
  %v1926 = vshrl.u32 %v1925, 7
  %v1927 = vsub.s32 %v1752, %v1926
  %v1928 = vrot.slane %v1335, %v1927
  %v1929 = vsel %vm1757, %v1928, %v1924
  %v1930 = vlaneseq
  %v1931 = vshrl.u32 %v1930, 7
  %v1932 = vsub.s32 %v1733, %v1931
  %v1933 = vrot.slane %v1338, %v1932
  %v1934 = vlaneseq
  %v1935 = vshrl.u32 %v1934, 7
  %v1936 = vsub.s32 %v1738, %v1935
  %v1937 = vrot.slane %v1341, %v1936
  %v1938 = vsel %vm1743, %v1937, %v1933
  %v1939 = vlaneseq
  %v1940 = vshrl.u32 %v1939, 7
  %v1941 = vsub.s32 %v1745, %v1940
  %v1942 = vrot.slane %v1344, %v1941
  %v1943 = vsel %vm1750, %v1942, %v1938
  %v1944 = vlaneseq
  %v1945 = vshrl.u32 %v1944, 7
  %v1946 = vsub.s32 %v1752, %v1945
  %v1947 = vrot.slane %v1347, %v1946
  %v1948 = vsel %vm1757, %v1947, %v1943
  %v1949 = vlaneseq
  %v1950 = vshrl.u32 %v1949, 7
  %v1951 = vsub.s32 %v1733, %v1950
  %v1952 = vrot.slane %v1350, %v1951
  %v1953 = vlaneseq
  %v1954 = vshrl.u32 %v1953, 7
  %v1955 = vsub.s32 %v1738, %v1954
  %v1956 = vrot.slane %v1353, %v1955
  %v1957 = vsel %vm1743, %v1956, %v1952
  %v1958 = vlaneseq
  %v1959 = vshrl.u32 %v1958, 7
  %v1960 = vsub.s32 %v1745, %v1959
  %v1961 = vrot.slane %v1356, %v1960
  %v1962 = vsel %vm1750, %v1961, %v1957
  %v1963 = vlaneseq
  %v1964 = vshrl.u32 %v1963, 7
  %v1965 = vsub.s32 %v1752, %v1964
  %v1966 = vrot.slane %v1359, %v1965
  %v1967 = vsel %vm1757, %v1966, %v1962
  %v1968 = vlaneseq
  %v1969 = vshrl.u32 %v1968, 7
  %v1970 = vsub.s32 %v1733, %v1969
  %v1971 = vrot.slane %v1362, %v1970
  %v1972 = vlaneseq
  %v1973 = vshrl.u32 %v1972, 7
  %v1974 = vsub.s32 %v1738, %v1973
  %v1975 = vrot.slane %v1365, %v1974
  %v1976 = vsel %vm1743, %v1975, %v1971
  %v1977 = vlaneseq
  %v1978 = vshrl.u32 %v1977, 7
  %v1979 = vsub.s32 %v1745, %v1978
  %v1980 = vrot.slane %v1368, %v1979
  %v1981 = vsel %vm1750, %v1980, %v1976
  %v1982 = vlaneseq
  %v1983 = vshrl.u32 %v1982, 7
  %v1984 = vsub.s32 %v1752, %v1983
  %v1985 = vrot.slane %v1371, %v1984
  %v1986 = vsel %vm1757, %v1985, %v1981
  %v1987 = vlaneseq
  %v1988 = vshrl.u32 %v1987, 7
  %v1989 = vsub.s32 %v1733, %v1988
  %v1990 = vrot.slane %v1374, %v1989
  %v1991 = vlaneseq
  %v1992 = vshrl.u32 %v1991, 7
  %v1993 = vsub.s32 %v1738, %v1992
  %v1994 = vrot.slane %v1377, %v1993
  %v1995 = vsel %vm1743, %v1994, %v1990
  %v1996 = vlaneseq
  %v1997 = vshrl.u32 %v1996, 7
  %v1998 = vsub.s32 %v1745, %v1997
  %v1999 = vrot.slane %v1380, %v1998
  %v2000 = vsel %vm1750, %v1999, %v1995
  %v2001 = vlaneseq
  %v2002 = vshrl.u32 %v2001, 7
  %v2003 = vsub.s32 %v1752, %v2002
  %v2004 = vrot.slane %v1383, %v2003
  %v2005 = vsel %vm1757, %v2004, %v2000
  %v2006 = vlaneseq
  %v2007 = vshrl.u32 %v2006, 7
  %v2008 = vsub.s32 %v1733, %v2007
  %v2009 = vrot.slane %v1386, %v2008
  %v2010 = vlaneseq
  %v2011 = vshrl.u32 %v2010, 7
  %v2012 = vsub.s32 %v1738, %v2011
  %v2013 = vrot.slane %v1389, %v2012
  %v2014 = vsel %vm1743, %v2013, %v2009
  %v2015 = vlaneseq
  %v2016 = vshrl.u32 %v2015, 7
  %v2017 = vsub.s32 %v1745, %v2016
  %v2018 = vrot.slane %v1392, %v2017
  %v2019 = vsel %vm1750, %v2018, %v2014
  %v2020 = vlaneseq
  %v2021 = vshrl.u32 %v2020, 7
  %v2022 = vsub.s32 %v1752, %v2021
  %v2023 = vrot.slane %v1395, %v2022
  %v2024 = vsel %vm1757, %v2023, %v2019
  %v2025 = vlaneseq
  %v2026 = vshrl.u32 %v2025, 7
  %v2027 = vsub.s32 %v1733, %v2026
  %v2028 = vrot.slane %v1398, %v2027
  %v2029 = vlaneseq
  %v2030 = vshrl.u32 %v2029, 7
  %v2031 = vsub.s32 %v1738, %v2030
  %v2032 = vrot.slane %v1401, %v2031
  %v2033 = vsel %vm1743, %v2032, %v2028
  %v2034 = vlaneseq
  %v2035 = vshrl.u32 %v2034, 7
  %v2036 = vsub.s32 %v1745, %v2035
  %v2037 = vrot.slane %v1404, %v2036
  %v2038 = vsel %vm1750, %v2037, %v2033
  %v2039 = vlaneseq
  %v2040 = vshrl.u32 %v2039, 7
  %v2041 = vsub.s32 %v1752, %v2040
  %v2042 = vrot.slane %v1407, %v2041
  %v2043 = vsel %vm1757, %v2042, %v2038
  %v2044 = vlaneseq
  %v2045 = vshrl.u32 %v2044, 7
  %v2046 = vsub.s32 %v1733, %v2045
  %v2047 = vrot.slane %v1410, %v2046
  %v2048 = vlaneseq
  %v2049 = vshrl.u32 %v2048, 7
  %v2050 = vsub.s32 %v1738, %v2049
  %v2051 = vrot.slane %v1413, %v2050
  %v2052 = vsel %vm1743, %v2051, %v2047
  %v2053 = vlaneseq
  %v2054 = vshrl.u32 %v2053, 7
  %v2055 = vsub.s32 %v1745, %v2054
  %v2056 = vrot.slane %v1416, %v2055
  %v2057 = vsel %vm1750, %v2056, %v2052
  %v2058 = vlaneseq
  %v2059 = vshrl.u32 %v2058, 7
  %v2060 = vsub.s32 %v1752, %v2059
  %v2061 = vrot.slane %v1419, %v2060
  %v2062 = vsel %vm1757, %v2061, %v2057
  %v2063 = vlaneseq
  %v2064 = vshrl.u32 %v2063, 7
  %v2065 = vsub.s32 %v1733, %v2064
  %v2066 = vrot.slane %v1422, %v2065
  %v2067 = vlaneseq
  %v2068 = vshrl.u32 %v2067, 7
  %v2069 = vsub.s32 %v1738, %v2068
  %v2070 = vrot.slane %v1425, %v2069
  %v2071 = vsel %vm1743, %v2070, %v2066
  %v2072 = vlaneseq
  %v2073 = vshrl.u32 %v2072, 7
  %v2074 = vsub.s32 %v1745, %v2073
  %v2075 = vrot.slane %v1428, %v2074
  %v2076 = vsel %vm1750, %v2075, %v2071
  %v2077 = vlaneseq
  %v2078 = vshrl.u32 %v2077, 7
  %v2079 = vsub.s32 %v1752, %v2078
  %v2080 = vrot.slane %v1431, %v2079
  %v2081 = vsel %vm1757, %v2080, %v2076
  %v2082 = vlaneseq
  %v2083 = vshrl.u32 %v2082, 7
  %v2084 = vsub.s32 %v1733, %v2083
  %v2085 = vrot.slane %v1434, %v2084
  %v2086 = vlaneseq
  %v2087 = vshrl.u32 %v2086, 7
  %v2088 = vsub.s32 %v1738, %v2087
  %v2089 = vrot.slane %v1437, %v2088
  %v2090 = vsel %vm1743, %v2089, %v2085
  %v2091 = vlaneseq
  %v2092 = vshrl.u32 %v2091, 7
  %v2093 = vsub.s32 %v1745, %v2092
  %v2094 = vrot.slane %v1440, %v2093
  %v2095 = vsel %vm1750, %v2094, %v2090
  %v2096 = vlaneseq
  %v2097 = vshrl.u32 %v2096, 7
  %v2098 = vsub.s32 %v1752, %v2097
  %v2099 = vrot.slane %v1443, %v2098
  %v2100 = vsel %vm1757, %v2099, %v2095
  %v2101 = vlaneseq
  %v2102 = vshrl.u32 %v2101, 7
  %v2103 = vsub.s32 %v1733, %v2102
  %v2104 = vrot.slane %v1446, %v2103
  %v2105 = vlaneseq
  %v2106 = vshrl.u32 %v2105, 7
  %v2107 = vsub.s32 %v1738, %v2106
  %v2108 = vrot.slane %v1449, %v2107
  %v2109 = vsel %vm1743, %v2108, %v2104
  %v2110 = vlaneseq
  %v2111 = vshrl.u32 %v2110, 7
  %v2112 = vsub.s32 %v1745, %v2111
  %v2113 = vrot.slane %v1452, %v2112
  %v2114 = vsel %vm1750, %v2113, %v2109
  %v2115 = vlaneseq
  %v2116 = vshrl.u32 %v2115, 7
  %v2117 = vsub.s32 %v1752, %v2116
  %v2118 = vrot.slane %v1455, %v2117
  %v2119 = vsel %vm1757, %v2118, %v2114
  %v2120 = vlaneseq
  %v2121 = vshrl.u32 %v2120, 7
  %v2122 = vsub.s32 %v1733, %v2121
  %v2123 = vrot.slane %v1458, %v2122
  %v2124 = vlaneseq
  %v2125 = vshrl.u32 %v2124, 7
  %v2126 = vsub.s32 %v1738, %v2125
  %v2127 = vrot.slane %v1461, %v2126
  %v2128 = vsel %vm1743, %v2127, %v2123
  %v2129 = vlaneseq
  %v2130 = vshrl.u32 %v2129, 7
  %v2131 = vsub.s32 %v1745, %v2130
  %v2132 = vrot.slane %v1464, %v2131
  %v2133 = vsel %vm1750, %v2132, %v2128
  %v2134 = vlaneseq
  %v2135 = vshrl.u32 %v2134, 7
  %v2136 = vsub.s32 %v1752, %v2135
  %v2137 = vrot.slane %v1467, %v2136
  %v2138 = vsel %vm1757, %v2137, %v2133
  %v2139 = vlaneseq
  %v2140 = vshrl.u32 %v2139, 7
  %v2141 = vsub.s32 %v1733, %v2140
  %v2142 = vrot.slane %v1470, %v2141
  %v2143 = vlaneseq
  %v2144 = vshrl.u32 %v2143, 7
  %v2145 = vsub.s32 %v1738, %v2144
  %v2146 = vrot.slane %v1473, %v2145
  %v2147 = vsel %vm1743, %v2146, %v2142
  %v2148 = vlaneseq
  %v2149 = vshrl.u32 %v2148, 7
  %v2150 = vsub.s32 %v1745, %v2149
  %v2151 = vrot.slane %v1476, %v2150
  %v2152 = vsel %vm1750, %v2151, %v2147
  %v2153 = vlaneseq
  %v2154 = vshrl.u32 %v2153, 7
  %v2155 = vsub.s32 %v1752, %v2154
  %v2156 = vrot.slane %v1479, %v2155
  %v2157 = vsel %vm1757, %v2156, %v2152
  %v2158 = vlaneseq
  %v2159 = vshrl.u32 %v2158, 7
  %v2160 = vsub.s32 %v1733, %v2159
  %v2161 = vrot.slane %v1482, %v2160
  %v2162 = vlaneseq
  %v2163 = vshrl.u32 %v2162, 7
  %v2164 = vsub.s32 %v1738, %v2163
  %v2165 = vrot.slane %v1485, %v2164
  %v2166 = vsel %vm1743, %v2165, %v2161
  %v2167 = vlaneseq
  %v2168 = vshrl.u32 %v2167, 7
  %v2169 = vsub.s32 %v1745, %v2168
  %v2170 = vrot.slane %v1488, %v2169
  %v2171 = vsel %vm1750, %v2170, %v2166
  %v2172 = vlaneseq
  %v2173 = vshrl.u32 %v2172, 7
  %v2174 = vsub.s32 %v1752, %v2173
  %v2175 = vrot.slane %v1491, %v2174
  %v2176 = vsel %vm1757, %v2175, %v2171
  %v2177 = vlaneseq
  %v2178 = vshrl.u32 %v2177, 7
  %v2179 = vsub.s32 %v1733, %v2178
  %v2180 = vrot.slane %v1494, %v2179
  %v2181 = vlaneseq
  %v2182 = vshrl.u32 %v2181, 7
  %v2183 = vsub.s32 %v1738, %v2182
  %v2184 = vrot.slane %v1497, %v2183
  %v2185 = vsel %vm1743, %v2184, %v2180
  %v2186 = vlaneseq
  %v2187 = vshrl.u32 %v2186, 7
  %v2188 = vsub.s32 %v1745, %v2187
  %v2189 = vrot.slane %v1500, %v2188
  %v2190 = vsel %vm1750, %v2189, %v2185
  %v2191 = vlaneseq
  %v2192 = vshrl.u32 %v2191, 7
  %v2193 = vsub.s32 %v1752, %v2192
  %v2194 = vrot.slane %v1503, %v2193
  %v2195 = vsel %vm1757, %v2194, %v2190
  %v2196 = vlaneseq
  %v2197 = vshrl.u32 %v2196, 7
  %v2198 = vsub.s32 %v1733, %v2197
  %v2199 = vrot.slane %v1506, %v2198
  %v2200 = vlaneseq
  %v2201 = vshrl.u32 %v2200, 7
  %v2202 = vsub.s32 %v1738, %v2201
  %v2203 = vrot.slane %v1509, %v2202
  %v2204 = vsel %vm1743, %v2203, %v2199
  %v2205 = vlaneseq
  %v2206 = vshrl.u32 %v2205, 7
  %v2207 = vsub.s32 %v1745, %v2206
  %v2208 = vrot.slane %v1512, %v2207
  %v2209 = vsel %vm1750, %v2208, %v2204
  %v2210 = vlaneseq
  %v2211 = vshrl.u32 %v2210, 7
  %v2212 = vsub.s32 %v1752, %v2211
  %v2213 = vrot.slane %v1515, %v2212
  %v2214 = vsel %vm1757, %v2213, %v2209
  %v2215 = vlaneseq
  %v2216 = vshrl.u32 %v2215, 7
  %v2217 = vsub.s32 %v1733, %v2216
  %v2218 = vrot.slane %v1518, %v2217
  %v2219 = vlaneseq
  %v2220 = vshrl.u32 %v2219, 7
  %v2221 = vsub.s32 %v1738, %v2220
  %v2222 = vrot.slane %v1521, %v2221
  %v2223 = vsel %vm1743, %v2222, %v2218
  %v2224 = vlaneseq
  %v2225 = vshrl.u32 %v2224, 7
  %v2226 = vsub.s32 %v1745, %v2225
  %v2227 = vrot.slane %v1524, %v2226
  %v2228 = vsel %vm1750, %v2227, %v2223
  %v2229 = vlaneseq
  %v2230 = vshrl.u32 %v2229, 7
  %v2231 = vsub.s32 %v1752, %v2230
  %v2232 = vrot.slane %v1527, %v2231
  %v2233 = vsel %vm1757, %v2232, %v2228
  %v2234 = vlaneseq
  %v2235 = vshrl.u32 %v2234, 7
  %v2236 = vsub.s32 %v1733, %v2235
  %v2237 = vrot.slane %v1530, %v2236
  %v2238 = vlaneseq
  %v2239 = vshrl.u32 %v2238, 7
  %v2240 = vsub.s32 %v1738, %v2239
  %v2241 = vrot.slane %v1533, %v2240
  %v2242 = vsel %vm1743, %v2241, %v2237
  %v2243 = vlaneseq
  %v2244 = vshrl.u32 %v2243, 7
  %v2245 = vsub.s32 %v1745, %v2244
  %v2246 = vrot.slane %v1536, %v2245
  %v2247 = vsel %vm1750, %v2246, %v2242
  %v2248 = vlaneseq
  %v2249 = vshrl.u32 %v2248, 7
  %v2250 = vsub.s32 %v1752, %v2249
  %v2251 = vrot.slane %v1539, %v2250
  %v2252 = vsel %vm1757, %v2251, %v2247
  %v2253 = vlaneseq
  %v2254 = vshrl.u32 %v2253, 7
  %v2255 = vsub.s32 %v1733, %v2254
  %v2256 = vrot.slane %v1542, %v2255
  %v2257 = vlaneseq
  %v2258 = vshrl.u32 %v2257, 7
  %v2259 = vsub.s32 %v1738, %v2258
  %v2260 = vrot.slane %v1545, %v2259
  %v2261 = vsel %vm1743, %v2260, %v2256
  %v2262 = vlaneseq
  %v2263 = vshrl.u32 %v2262, 7
  %v2264 = vsub.s32 %v1745, %v2263
  %v2265 = vrot.slane %v1548, %v2264
  %v2266 = vsel %vm1750, %v2265, %v2261
  %v2267 = vlaneseq
  %v2268 = vshrl.u32 %v2267, 7
  %v2269 = vsub.s32 %v1752, %v2268
  %v2270 = vrot.slane %v1551, %v2269
  %v2271 = vsel %vm1757, %v2270, %v2266
  %v2272 = vlaneseq
  %v2273 = vshrl.u32 %v2272, 7
  %v2274 = vsub.s32 %v1733, %v2273
  %v2275 = vrot.slane %v1554, %v2274
  %v2276 = vlaneseq
  %v2277 = vshrl.u32 %v2276, 7
  %v2278 = vsub.s32 %v1738, %v2277
  %v2279 = vrot.slane %v1557, %v2278
  %v2280 = vsel %vm1743, %v2279, %v2275
  %v2281 = vlaneseq
  %v2282 = vshrl.u32 %v2281, 7
  %v2283 = vsub.s32 %v1745, %v2282
  %v2284 = vrot.slane %v1560, %v2283
  %v2285 = vsel %vm1750, %v2284, %v2280
  %v2286 = vlaneseq
  %v2287 = vshrl.u32 %v2286, 7
  %v2288 = vsub.s32 %v1752, %v2287
  %v2289 = vrot.slane %v1563, %v2288
  %v2290 = vsel %vm1757, %v2289, %v2285
  %v2291 = vlaneseq
  %v2292 = vshrl.u32 %v2291, 7
  %v2293 = vsub.s32 %v1733, %v2292
  %v2294 = vrot.slane %v1566, %v2293
  %v2295 = vlaneseq
  %v2296 = vshrl.u32 %v2295, 7
  %v2297 = vsub.s32 %v1738, %v2296
  %v2298 = vrot.slane %v1569, %v2297
  %v2299 = vsel %vm1743, %v2298, %v2294
  %v2300 = vlaneseq
  %v2301 = vshrl.u32 %v2300, 7
  %v2302 = vsub.s32 %v1745, %v2301
  %v2303 = vrot.slane %v1572, %v2302
  %v2304 = vsel %vm1750, %v2303, %v2299
  %v2305 = vlaneseq
  %v2306 = vshrl.u32 %v2305, 7
  %v2307 = vsub.s32 %v1752, %v2306
  %v2308 = vrot.slane %v1575, %v2307
  %v2309 = vsel %vm1757, %v2308, %v2304
  %v2310 = vlaneseq
  %v2311 = vshrl.u32 %v2310, 7
  %v2312 = vsub.s32 %v1733, %v2311
  %v2313 = vrot.slane %v1578, %v2312
  %v2314 = vlaneseq
  %v2315 = vshrl.u32 %v2314, 7
  %v2316 = vsub.s32 %v1738, %v2315
  %v2317 = vrot.slane %v1581, %v2316
  %v2318 = vsel %vm1743, %v2317, %v2313
  %v2319 = vlaneseq
  %v2320 = vshrl.u32 %v2319, 7
  %v2321 = vsub.s32 %v1745, %v2320
  %v2322 = vrot.slane %v1584, %v2321
  %v2323 = vsel %vm1750, %v2322, %v2318
  %v2324 = vlaneseq
  %v2325 = vshrl.u32 %v2324, 7
  %v2326 = vsub.s32 %v1752, %v2325
  %v2327 = vrot.slane %v1587, %v2326
  %v2328 = vsel %vm1757, %v2327, %v2323
  %v2329 = vlaneseq
  %v2330 = vshrl.u32 %v2329, 7
  %v2331 = vsub.s32 %v1733, %v2330
  %v2332 = vrot.slane %v1590, %v2331
  %v2333 = vlaneseq
  %v2334 = vshrl.u32 %v2333, 7
  %v2335 = vsub.s32 %v1738, %v2334
  %v2336 = vrot.slane %v1593, %v2335
  %v2337 = vsel %vm1743, %v2336, %v2332
  %v2338 = vlaneseq
  %v2339 = vshrl.u32 %v2338, 7
  %v2340 = vsub.s32 %v1745, %v2339
  %v2341 = vrot.slane %v1596, %v2340
  %v2342 = vsel %vm1750, %v2341, %v2337
  %v2343 = vlaneseq
  %v2344 = vshrl.u32 %v2343, 7
  %v2345 = vsub.s32 %v1752, %v2344
  %v2346 = vrot.slane %v1599, %v2345
  %v2347 = vsel %vm1757, %v2346, %v2342
  %vm2348 = vcmask 1041409
  %v2349 = vsel %vm2348, %v1777, %v1758
  %vm2350 = vcmask 1042434
  %v2351 = vsel %vm2350, %v1796, %v2349
  %vm2352 = vcmask 1043459
  %v2353 = vsel %vm2352, %v1815, %v2351
  %vm2354 = vcmask 1044484
  %v2355 = vsel %vm2354, %v1834, %v2353
  %vm2356 = vcmask 1045509
  %v2357 = vsel %vm2356, %v1853, %v2355
  %vm2358 = vcmask 1046534
  %v2359 = vsel %vm2358, %v1872, %v2357
  %vm2360 = vcmask 1047559
  %v2361 = vsel %vm2360, %v1891, %v2359
  %v2362 = vsel %vm2348, %v1929, %v1910
  %v2363 = vsel %vm2350, %v1948, %v2362
  %v2364 = vsel %vm2352, %v1967, %v2363
  %v2365 = vsel %vm2354, %v1986, %v2364
  %v2366 = vsel %vm2356, %v2005, %v2365
  %v2367 = vsel %vm2358, %v2024, %v2366
  %v2368 = vsel %vm2360, %v2043, %v2367
  %v2369 = vsel %vm2348, %v2081, %v2062
  %v2370 = vsel %vm2350, %v2100, %v2369
  %v2371 = vsel %vm2352, %v2119, %v2370
  %v2372 = vsel %vm2354, %v2138, %v2371
  %v2373 = vsel %vm2356, %v2157, %v2372
  %v2374 = vsel %vm2358, %v2176, %v2373
  %v2375 = vsel %vm2360, %v2195, %v2374
  %v2376 = vsel %vm2348, %v2233, %v2214
  %v2377 = vsel %vm2350, %v2252, %v2376
  %v2378 = vsel %vm2352, %v2271, %v2377
  %v2379 = vsel %vm2354, %v2290, %v2378
  %v2380 = vsel %vm2356, %v2309, %v2379
  %v2381 = vsel %vm2358, %v2328, %v2380
  %v2382 = vsel %vm2360, %v2347, %v2381
  %v2387 = vsel %vm1600, %v2361, -1e+30
  %v2388 = vsel %vm1601, %v2368, -1e+30
  %v2389 = vsel %vm1602, %v2375, -1e+30
  %v2390 = vsel %vm1603, %v2382, -1e+30
  %vm2391 = vcmask 261120
  %v2392 = vsel %vm2391, %v2387, -inf
  %2393 = vmax.xlane.f32.xlu0 %v2392
  %v2394 = vpop.xlane.xlu0 %2393
  %v2395 = vsel %vm2391, %v2388, -inf
  %2396 = vmax.xlane.f32.xlu0 %v2395
  %v2397 = vpop.xlane.xlu0 %2396
  %v2398 = vsel %vm2391, %v2389, -inf
  %2399 = vmax.xlane.f32.xlu0 %v2398
  %v2400 = vpop.xlane.xlu0 %2399
  %v2401 = vsel %vm2391, %v2390, -inf
  %2402 = vmax.xlane.f32.xlu0 %v2401
  %v2403 = vpop.xlane.xlu0 %2402
  %v2404 = vsub.f32 %v2387, %v2394
  %v2405 = vsub.f32 %v2388, %v2397
  %v2406 = vsub.f32 %v2389, %v2400
  %v2407 = vsub.f32 %v2390, %v2403
  %v2408 = vmul.f32 %v2404, 1.442695
  %v2409 = vpow.pop %v2408
  %v2410 = vmul.f32 %v2405, 1.442695
  %v2411 = vpow.pop %v2410
  %v2412 = vmul.f32 %v2406, 1.442695
  %v2413 = vpow.pop %v2412
  %v2414 = vmul.f32 %v2407, 1.442695
  %v2415 = vpow.pop %v2414
  %v2416 = vsel %vm1600, %v2409, 0.0
  %v2417 = vsel %vm1601, %v2411, 0.0
  %v2418 = vsel %vm1602, %v2413, 0.0
  %v2419 = vsel %vm1603, %v2415, 0.0
  %v2420 = vsel %vm2391, %v2416, 0.0
  %2421 = vadd.xlane.f32.xlu0 %v2420
  %v2422 = vpop.xlane.xlu0 %2421
  %v2423 = vsel %vm2391, %v2417, 0.0
  %2424 = vadd.xlane.f32.xlu0 %v2423
  %v2425 = vpop.xlane.xlu0 %2424
  %v2426 = vsel %vm2391, %v2418, 0.0
  %2427 = vadd.xlane.f32.xlu0 %v2426
  %v2428 = vpop.xlane.xlu0 %2427
  %v2429 = vsel %vm2391, %v2419, 0.0
  %2430 = vadd.xlane.f32.xlu0 %v2429
  %v2431 = vpop.xlane.xlu0 %2430
  %v2432 = vrcp.pop %v2422
  %v2433 = vrcp.pop %v2425
  %v2434 = vrcp.pop %v2428
  %v2435 = vrcp.pop %v2431
  %v2436 = vmul.f32 %v2416, %v2432
  %v2437 = vmul.f32 %v2417, %v2433
  %v2438 = vmul.f32 %v2418, %v2434
  %v2439 = vmul.f32 %v2419, %v2435
  %v2440 = vld [vmem:[%s5] sm:$0x1]
  %v2442 = vlaneseq
  %v2443 = vshrl.u32 %v2442, 7
  %v2444 = vsub.s32 0, %v2443
  %v2445 = vrot.slane %v2440, %v2444
  %v2448 = vsel %vm2391, %v2436, 0
  %v2451 = vsel %vm2391, %v2437, 0
  %v2454 = vsel %vm2391, %v2438, 0
  %v2457 = vsel %vm2391, %v2439, 0
  %2459 = vmatprep.subr.mxu0 0.0
  %2460 = vmatpush1.msra.mxu0 %v126
  %2461 = vmatprep.subr.mxu0 0.0
  %2462 = vmatpush1.msra.mxu0 %v131
  %2463 = vmatprep.subr.mxu0 0.0
  %2464 = vmatpush1.msra.mxu0 %v136
  %2465 = vmatprep.subr.mxu0 0.0
  %2466 = vmatpush1.msra.mxu0 %v141
  %2467 = vmatprep.subr.mxu0 0.0
  %2468 = vmatpush1.msra.mxu0 0.0
  %2469 = vmatprep.subr.mxu0 0.0
  %2470 = vmatpush1.msra.mxu0 0.0
  %2471 = vmatprep.subr.mxu0 0.0
  %2472 = vmatpush1.msra.mxu0 0.0
  %2473 = vmatprep.subr.mxu0 0.0
  %2474 = vmatpush1.msra.mxu0 0.0
  %2475 = vmatprep.subr.mxu0 0.0
  %2476 = vmatpush1.msra.mxu0 0.0
  %2477 = vmatprep.subr.mxu0 0.0
  %2478 = vmatpush1.msra.mxu0 0.0
  %2479 = vmatprep.subr.mxu0 0.0
  %2480 = vmatpush1.msra.mxu0 0.0
  %2481 = vmatprep.subr.mxu0 0.0
  %2482 = vmatpush1.msra.mxu0 0.0
  %2483 = vmatprep.subr.mxu0 0.0
  %2484 = vmatpush1.msra.mxu0 0.0
  %2485 = vmatprep.subr.mxu0 0.0
  %2486 = vmatpush1.msra.mxu0 0.0
  %2487 = vmatprep.subr.mxu0 0.0
  %2488 = vmatpush1.msra.mxu0 0.0
  %2489 = vmatprep.subr.mxu0 0.0
  %2490 = vmatpush1.msra.mxu0 0.0
  %2491 = vmatprep.subr.mxu0 0.0
  %2492 = vmatpush1.msra.mxu0 0.0
  %2493 = vmatprep.subr.mxu0 0.0
  %2494 = vmatpush1.msra.mxu0 0.0
  %2495 = vmatprep.subr.mxu0 0.0
  %2496 = vmatpush1.msra.mxu0 0.0
  %2497 = vmatprep.subr.mxu0 0.0
  %2498 = vmatpush1.msra.mxu0 0.0
  %2499 = vmatprep.subr.mxu0 0.0
  %2500 = vmatpush1.msra.mxu0 0.0
  %2501 = vmatprep.subr.mxu0 0.0
  %2502 = vmatpush1.msra.mxu0 0.0
  %2503 = vmatprep.subr.mxu0 0.0
  %2504 = vmatpush1.msra.mxu0 0.0
  %2505 = vmatprep.subr.mxu0 0.0
  %2506 = vmatpush1.msra.mxu0 0.0
  %2507 = vmatprep.subr.mxu0 0.0
  %2508 = vmatpush1.msra.mxu0 0.0
  %2509 = vmatprep.subr.mxu0 0.0
  %2510 = vmatpush1.msra.mxu0 0.0
  %2511 = vmatprep.subr.mxu0 0.0
  %2512 = vmatpush1.msra.mxu0 0.0
  %2513 = vmatprep.subr.mxu0 0.0
  %2514 = vmatpush1.msra.mxu0 0.0
  %2515 = vmatprep.subr.mxu0 0.0
  %2516 = vmatpush1.msra.mxu0 0.0
  %2517 = vmatprep.subr.mxu0 0.0
  %2518 = vmatpush1.msra.mxu0 0.0
  %2519 = vmatprep.subr.mxu0 0.0
  %2520 = vmatpush1.msra.mxu0 0.0
  %2521 = vmatprep.subr.mxu0 0.0
  %2522 = vmatpush1.msra.mxu0 0.0
  %2523 = vmatprep.mubr.f32.mxu0 0.0
  %2524 = vmatmul.mubr.f32.gmra.mrb[0].mxu0 %v2448
  %v2525 = vpop.f32.mrb[0].mxu0
  %v2526 = vadd.f32 %v2445, %v2525
  %v2527 = vpop.f32.mrb[0].mxu0
  %2528 = vmatprep.mubr.f32.mxu0 0.0
  %2529 = vmatmul.mubr.f32.gmra.mrb[0].mxu0 %v2451
  %v2530 = vpop.f32.mrb[0].mxu0
  %v2531 = vadd.f32 %v2445, %v2530
  %v2532 = vpop.f32.mrb[0].mxu0
  %2533 = vmatprep.mubr.f32.mxu0 0.0
  %2534 = vmatmul.mubr.f32.gmra.mrb[0].mxu0 %v2454
  %v2535 = vpop.f32.mrb[0].mxu0
  %v2536 = vadd.f32 %v2445, %v2535
  %v2537 = vpop.f32.mrb[0].mxu0
  %2538 = vmatprep.mubr.f32.mxu0 0.0
  %2539 = vmatmul.mubr.f32.gmra.mrb[0].mxu0 %v2457
  %v2540 = vpop.f32.mrb[0].mxu0
  %v2541 = vadd.f32 %v2445, %v2540
  %v2542 = vpop.f32.mrb[0].mxu0
  %2543 = vdwg.mxu0
  %v2544 = vsel %vm1215, %v2526, -inf
  %2545 = vmax.xlane.f32.xlu0 %v2544
  %v2546 = vpop.xlane.xlu0 %2545
  %v2547 = vsel %vm1215, %v2531, -inf
  %2548 = vmax.xlane.f32.xlu0 %v2547
  %v2549 = vpop.xlane.xlu0 %2548
  %v2550 = vsel %vm1215, %v2536, -inf
  %2551 = vmax.xlane.f32.xlu0 %v2550
  %v2552 = vpop.xlane.xlu0 %2551
  %v2553 = vsel %vm1215, %v2541, -inf
  %2554 = vmax.xlane.f32.xlu0 %v2553
  %v2555 = vpop.xlane.xlu0 %2554
  %v2556 = vsub.f32 %v2526, %v2546
  %v2557 = vsub.f32 %v2531, %v2549
  %v2558 = vsub.f32 %v2536, %v2552
  %v2559 = vsub.f32 %v2541, %v2555
  %v2560 = vmul.f32 %v2556, 1.442695
  %v2561 = vpow.pop %v2560
  %v2562 = vmul.f32 %v2557, 1.442695
  %v2563 = vpow.pop %v2562
  %v2564 = vmul.f32 %v2558, 1.442695
  %v2565 = vpow.pop %v2564
  %v2566 = vmul.f32 %v2559, 1.442695
  %v2567 = vpow.pop %v2566
  %v2568 = vsel %vm1215, %v2561, 0.0
  %2569 = vadd.xlane.f32.xlu0 %v2568
  %v2570 = vpop.xlane.xlu0 %2569
  %v2571 = vsel %vm1215, %v2563, 0.0
  %2572 = vadd.xlane.f32.xlu0 %v2571
  %v2573 = vpop.xlane.xlu0 %2572
  %v2574 = vsel %vm1215, %v2565, 0.0
  %2575 = vadd.xlane.f32.xlu0 %v2574
  %v2576 = vpop.xlane.xlu0 %2575
  %v2577 = vsel %vm1215, %v2567, 0.0
  %2578 = vadd.xlane.f32.xlu0 %v2577
  %v2579 = vpop.xlane.xlu0 %2578
  %v2580 = vlog2.pop %v2570
  %v2581 = vmul.f32 %v2580, 0.6931472
  %v2582 = vlog2.pop %v2573
  %v2583 = vmul.f32 %v2582, 0.6931472
  %v2584 = vlog2.pop %v2576
  %v2585 = vmul.f32 %v2584, 0.6931472
  %v2586 = vlog2.pop %v2579
  %v2587 = vmul.f32 %v2586, 0.6931472
  %v2588 = vsub.f32 %v2556, %v2581
  %v2589 = vsub.f32 %v2557, %v2583
  %v2590 = vsub.f32 %v2558, %v2585
  %v2591 = vsub.f32 %v2559, %v2587
  %2592 = vst.msk [vmem:[%s6] sm:$0xff] %vm1215, %v2588
  %2593 = vst.msk [vmem:[%s6 + $0x8] sm:$0xff] %vm1215, %v2589
  %2594 = vst.msk [vmem:[%s6 + $0x10] sm:$0xff] %vm1215, %v2590
  %2595 = vst.msk [vmem:[%s6 + $0x18] sm:$0xff] %vm1215, %v2591
  // Predicated region
  $region26: #{gps_conv_net_forward.9} parent=0 // pred_check
    _
  $region27: #{gps_conv_net_forward.9} parent=0 // pred_check_branch
    %2597 = sbr.rel (0) target = $region29
  $region28: #{gps_conv_net_forward.9} parent=0 // pred_region
    _
  $region29: #{gps_conv_net_forward.9} parent=0 // pred_fallthru
    _
  // Predicated region
  $region30: #{gps_conv_net_forward.9} parent=0 // pred_check
    _
  $region31: #{gps_conv_net_forward.9} parent=0 // pred_check_branch
    %2599 = sbr.rel (0) target = $region33
  $region32: #{gps_conv_net_forward.9} parent=0 // pred_region
    _
  $region33: #{gps_conv_net_forward.9} parent=0 // pred_fallthru
    _

// kernel: gps_conv_net_forward.6
$region0: #{gps_conv_net_forward.6}
  #allocation0 [shape = 'u32[]', space=smem, size = 0x4, offset = 0x4, fixed_abs, tag = 'smem constant byte address 0x4 - core index']
  #allocation1 [shape = 'u32[144,128]{1,0:T(1,128)}', space=vmem, size = 0x12000, scoped, tag = 'internal scratch']
  %s0 = inlined_call_operand.vmem [shape: f32[32,64], index: 0, kind: input, shape index: {}]
  %s1 = inlined_call_operand.vmem [shape: f32[32,32], index: 1, kind: input, shape index: {}]
  %s2 = inlined_call_operand.vmem [shape: f32[64,128], index: 2, kind: input, shape index: {}]
  %s3 = inlined_call_operand.vmem [shape: f32[1,128], index: 3, kind: input, shape index: {}]
  %s4 = inlined_call_operand.vmem [shape: f32[1,64], index: 4, kind: input, shape index: {}]
  %s5 = inlined_call_operand.vmem [shape: f32[1,64], index: 5, kind: input, shape index: {}]
  %s6 = inlined_call_operand.vmem [shape: f32[1,64], index: 6, kind: input, shape index: {}]
  %s7 = inlined_call_operand.vmem [shape: f32[1,64], index: 7, kind: input, shape index: {}]
  %s8 = inlined_call_operand.vmem [shape: f32[64,192], index: 8, kind: input, shape index: {}]
  %s9 = inlined_call_operand.vmem [shape: f32[1,192], index: 9, kind: input, shape index: {}]
  %s10 = inlined_call_operand.vmem [shape: f32[64,64], index: 10, kind: input, shape index: {}]
  %s11 = inlined_call_operand.vmem [shape: f32[1,64], index: 11, kind: input, shape index: {}]
  %s12 = inlined_call_operand.vmem [shape: f32[1,64], index: 12, kind: input, shape index: {}]
  %s13 = inlined_call_operand.vmem [shape: f32[1,64], index: 13, kind: input, shape index: {}]
  %s14 = inlined_call_operand.vmem [shape: f32[64,128], index: 14, kind: input, shape index: {}]
  %s15 = inlined_call_operand.vmem [shape: f32[1,128], index: 15, kind: input, shape index: {}]
  %s16 = inlined_call_operand.vmem [shape: f32[128,64], index: 16, kind: input, shape index: {}]
  %s17 = inlined_call_operand.vmem [shape: f32[1,64], index: 17, kind: input, shape index: {}]
  %s18 = inlined_call_operand.vmem [shape: f32[1,64], index: 18, kind: input, shape index: {}]
  %s19 = inlined_call_operand.vmem [shape: f32[1,64], index: 19, kind: input, shape index: {}]
  %s20 = inlined_call_operand.vmem [shape: f32[32,64], index: 20, kind: output, shape index: {}]
  %s21 = sld [smem:[#allocation0]]
  $region90: #{gps_conv_net_forward.6} parent=0
    _
  %s23 = ssub.s32 1, %s21
  %s24 = scalar_select 0, %s23, %s21
  // Predicated region
  $region2: #{gps_conv_net_forward.6} parent=0 // pred_check
    _
  $region3: #{gps_conv_net_forward.6} parent=0 // pred_check_branch
    %26 = sbr.rel (0) target = $region5
  $region4: #{gps_conv_net_forward.6} parent=0 // pred_region
    _
  $region5: #{gps_conv_net_forward.6} parent=0 // pred_fallthru
    _
  // Predicated region
  $region6: #{gps_conv_net_forward.6} parent=0 // pred_check
    _
  $region7: #{gps_conv_net_forward.6} parent=0 // pred_check_branch
    %28 = sbr.rel (0) target = $region9
  $region8: #{gps_conv_net_forward.6} parent=0 // pred_region
    _
  $region9: #{gps_conv_net_forward.6} parent=0 // pred_fallthru
    _
  // Predicated region
  $region10: #{gps_conv_net_forward.6} parent=0 // pred_check
    _
  $region11: #{gps_conv_net_forward.6} parent=0 // pred_check_branch
    %30 = sbr.rel (0) target = $region13
  $region12: #{gps_conv_net_forward.6} parent=0 // pred_region
    _
  $region13: #{gps_conv_net_forward.6} parent=0 // pred_fallthru
    _
  // Predicated region
  $region14: #{gps_conv_net_forward.6} parent=0 // pred_check
    _
  $region15: #{gps_conv_net_forward.6} parent=0 // pred_check_branch
    %32 = sbr.rel (0) target = $region17
  $region16: #{gps_conv_net_forward.6} parent=0 // pred_region
    _
  $region17: #{gps_conv_net_forward.6} parent=0 // pred_fallthru
    _
  // Predicated region
  $region18: #{gps_conv_net_forward.6} parent=0 // pred_check
    _
  $region19: #{gps_conv_net_forward.6} parent=0 // pred_check_branch
    %34 = sbr.rel (0) target = $region21
  $region20: #{gps_conv_net_forward.6} parent=0 // pred_region
    _
  $region21: #{gps_conv_net_forward.6} parent=0 // pred_fallthru
    _
  // Predicated region
  $region22: #{gps_conv_net_forward.6} parent=0 // pred_check
    _
  $region23: #{gps_conv_net_forward.6} parent=0 // pred_check_branch
    %36 = sbr.rel (0) target = $region25
  $region24: #{gps_conv_net_forward.6} parent=0 // pred_region
    _
  $region25: #{gps_conv_net_forward.6} parent=0 // pred_fallthru
    _
  // Predicated region
  $region26: #{gps_conv_net_forward.6} parent=0 // pred_check
    _
  $region27: #{gps_conv_net_forward.6} parent=0 // pred_check_branch
    %38 = sbr.rel (0) target = $region29
  $region28: #{gps_conv_net_forward.6} parent=0 // pred_region
    _
  $region29: #{gps_conv_net_forward.6} parent=0 // pred_fallthru
    _
  // Predicated region
  $region30: #{gps_conv_net_forward.6} parent=0 // pred_check
    _
  $region31: #{gps_conv_net_forward.6} parent=0 // pred_check_branch
    %40 = sbr.rel (0) target = $region33
  $region32: #{gps_conv_net_forward.6} parent=0 // pred_region
    _
  $region33: #{gps_conv_net_forward.6} parent=0 // pred_fallthru
    _
  // Predicated region
  $region34: #{gps_conv_net_forward.6} parent=0 // pred_check
    _
  $region35: #{gps_conv_net_forward.6} parent=0 // pred_check_branch
    %42 = sbr.rel (0) target = $region37
  $region36: #{gps_conv_net_forward.6} parent=0 // pred_region
    _
  $region37: #{gps_conv_net_forward.6} parent=0 // pred_fallthru
    _
  // Predicated region
  $region38: #{gps_conv_net_forward.6} parent=0 // pred_check
    _
  $region39: #{gps_conv_net_forward.6} parent=0 // pred_check_branch
    %44 = sbr.rel (0) target = $region41
  $region40: #{gps_conv_net_forward.6} parent=0 // pred_region
    _
  $region41: #{gps_conv_net_forward.6} parent=0 // pred_fallthru
    _
  // Predicated region
  $region42: #{gps_conv_net_forward.6} parent=0 // pred_check
    _
  $region43: #{gps_conv_net_forward.6} parent=0 // pred_check_branch
    %46 = sbr.rel (0) target = $region45
  $region44: #{gps_conv_net_forward.6} parent=0 // pred_region
    _
  $region45: #{gps_conv_net_forward.6} parent=0 // pred_fallthru
    _
  // Predicated region
  $region46: #{gps_conv_net_forward.6} parent=0 // pred_check
    _
  $region47: #{gps_conv_net_forward.6} parent=0 // pred_check_branch
    %48 = sbr.rel (0) target = $region49
  $region48: #{gps_conv_net_forward.6} parent=0 // pred_region
    _
  $region49: #{gps_conv_net_forward.6} parent=0 // pred_fallthru
    _
  // Predicated region
  $region50: #{gps_conv_net_forward.6} parent=0 // pred_check
    _
  $region51: #{gps_conv_net_forward.6} parent=0 // pred_check_branch
    %50 = sbr.rel (0) target = $region53
  $region52: #{gps_conv_net_forward.6} parent=0 // pred_region
    _
  $region53: #{gps_conv_net_forward.6} parent=0 // pred_fallthru
    _
  // Predicated region
  $region54: #{gps_conv_net_forward.6} parent=0 // pred_check
    _
  $region55: #{gps_conv_net_forward.6} parent=0 // pred_check_branch
    %52 = sbr.rel (0) target = $region57
  $region56: #{gps_conv_net_forward.6} parent=0 // pred_region
    _
  $region57: #{gps_conv_net_forward.6} parent=0 // pred_fallthru
    _
  // Predicated region
  $region58: #{gps_conv_net_forward.6} parent=0 // pred_check
    _
  $region59: #{gps_conv_net_forward.6} parent=0 // pred_check_branch
    %54 = sbr.rel (0) target = $region61
  $region60: #{gps_conv_net_forward.6} parent=0 // pred_region
    _
  $region61: #{gps_conv_net_forward.6} parent=0 // pred_fallthru
    _
  // Predicated region
  $region62: #{gps_conv_net_forward.6} parent=0 // pred_check
    _
  $region63: #{gps_conv_net_forward.6} parent=0 // pred_check_branch
    %56 = sbr.rel (0) target = $region65
  $region64: #{gps_conv_net_forward.6} parent=0 // pred_region
    _
  $region65: #{gps_conv_net_forward.6} parent=0 // pred_fallthru
    _
  // Predicated region
  $region66: #{gps_conv_net_forward.6} parent=0 // pred_check
    _
  $region67: #{gps_conv_net_forward.6} parent=0 // pred_check_branch
    %58 = sbr.rel (0) target = $region69
  $region68: #{gps_conv_net_forward.6} parent=0 // pred_region
    _
  $region69: #{gps_conv_net_forward.6} parent=0 // pred_fallthru
    _
  // Predicated region
  $region70: #{gps_conv_net_forward.6} parent=0 // pred_check
    _
  $region71: #{gps_conv_net_forward.6} parent=0 // pred_check_branch
    %60 = sbr.rel (0) target = $region73
  $region72: #{gps_conv_net_forward.6} parent=0 // pred_region
    _
  $region73: #{gps_conv_net_forward.6} parent=0 // pred_fallthru
    _
  // Predicated region
  $region74: #{gps_conv_net_forward.6} parent=0 // pred_check
    _
  $region75: #{gps_conv_net_forward.6} parent=0 // pred_check_branch
    %62 = sbr.rel (0) target = $region77
  $region76: #{gps_conv_net_forward.6} parent=0 // pred_region
    _
  $region77: #{gps_conv_net_forward.6} parent=0 // pred_fallthru
    _
  // Predicated region
  $region78: #{gps_conv_net_forward.6} parent=0 // pred_check
    _
  $region79: #{gps_conv_net_forward.6} parent=0 // pred_check_branch
    %64 = sbr.rel (0) target = $region81
  $region80: #{gps_conv_net_forward.6} parent=0 // pred_region
    _
  $region81: #{gps_conv_net_forward.6} parent=0 // pred_fallthru
    _
  %v65 = vld [vmem:[%s0] sm:$0xff]
  %v66 = vld [vmem:[%s0 + $0x8] sm:$0xff]
  %v67 = vld [vmem:[%s0 + $0x10] sm:$0xff]
  %v68 = vld [vmem:[%s0 + $0x18] sm:$0xff]
  %v69 = vld [vmem:[%s1] sm:$0xff]
  %v70 = vld [vmem:[%s1 + $0x8] sm:$0xff]
  %v71 = vld [vmem:[%s1 + $0x10] sm:$0xff]
  %v72 = vld [vmem:[%s1 + $0x18] sm:$0xff]
  %v73 = vld [vmem:[%s2] sm:$0xff]
  %v74 = vld [vmem:[%s2 + $0x8] sm:$0xff]
  %v75 = vld [vmem:[%s2 + $0x10] sm:$0xff]
  %v76 = vld [vmem:[%s2 + $0x18] sm:$0xff]
  %v77 = vld [vmem:[%s2 + $0x20] sm:$0xff]
  %v78 = vld [vmem:[%s2 + $0x28] sm:$0xff]
  %v79 = vld [vmem:[%s2 + $0x30] sm:$0xff]
  %v80 = vld [vmem:[%s2 + $0x38] sm:$0xff]
  %v81 = vld [vmem:[%s3] sm:$0x1]
  %v83 = vlaneseq
  %v84 = vshrl.u32 %v83, 7
  %v85 = vsub.s32 0, %v84
  %v86 = vrot.slane %v81, %v85
  %vm88 = vcmask 523264
  %v90 = vsel %vm88, %v65, 0
  %v93 = vsel %vm88, %v66, 0
  %v96 = vsel %vm88, %v67, 0
  %v99 = vsel %vm88, %v68, 0
  %101 = vmatprep.subr.mxu0 0.0
  %102 = vmatpush1.msra.mxu0 %v73
  %103 = vmatprep.subr.mxu0 0.0
  %104 = vmatpush1.msra.mxu0 %v74
  %105 = vmatprep.subr.mxu0 0.0
  %106 = vmatpush1.msra.mxu0 %v75
  %107 = vmatprep.subr.mxu0 0.0
  %108 = vmatpush1.msra.mxu0 %v76
  %109 = vmatprep.subr.mxu0 0.0
  %110 = vmatpush1.msra.mxu0 %v77
  %111 = vmatprep.subr.mxu0 0.0
  %112 = vmatpush1.msra.mxu0 %v78
  %113 = vmatprep.subr.mxu0 0.0
  %114 = vmatpush1.msra.mxu0 %v79
  %115 = vmatprep.subr.mxu0 0.0
  %116 = vmatpush1.msra.mxu0 %v80
  %117 = vmatprep.subr.mxu0 0.0
  %118 = vmatpush1.msra.mxu0 0.0
  %119 = vmatprep.subr.mxu0 0.0
  %120 = vmatpush1.msra.mxu0 0.0
  %121 = vmatprep.subr.mxu0 0.0
  %122 = vmatpush1.msra.mxu0 0.0
  %123 = vmatprep.subr.mxu0 0.0
  %124 = vmatpush1.msra.mxu0 0.0
  %125 = vmatprep.subr.mxu0 0.0
  %126 = vmatpush1.msra.mxu0 0.0
  %127 = vmatprep.subr.mxu0 0.0
  %128 = vmatpush1.msra.mxu0 0.0
  %129 = vmatprep.subr.mxu0 0.0
  %130 = vmatpush1.msra.mxu0 0.0
  %131 = vmatprep.subr.mxu0 0.0
  %132 = vmatpush1.msra.mxu0 0.0
  %133 = vmatprep.subr.mxu0 0.0
  %134 = vmatpush1.msra.mxu0 0.0
  %135 = vmatprep.subr.mxu0 0.0
  %136 = vmatpush1.msra.mxu0 0.0
  %137 = vmatprep.subr.mxu0 0.0
  %138 = vmatpush1.msra.mxu0 0.0
  %139 = vmatprep.subr.mxu0 0.0
  %140 = vmatpush1.msra.mxu0 0.0
  %141 = vmatprep.subr.mxu0 0.0
  %142 = vmatpush1.msra.mxu0 0.0
  %143 = vmatprep.subr.mxu0 0.0
  %144 = vmatpush1.msra.mxu0 0.0
  %145 = vmatprep.subr.mxu0 0.0
  %146 = vmatpush1.msra.mxu0 0.0
  %147 = vmatprep.subr.mxu0 0.0
  %148 = vmatpush1.msra.mxu0 0.0
  %149 = vmatprep.subr.mxu0 0.0
  %150 = vmatpush1.msra.mxu0 0.0
  %151 = vmatprep.subr.mxu0 0.0
  %152 = vmatpush1.msra.mxu0 0.0
  %153 = vmatprep.subr.mxu0 0.0
  %154 = vmatpush1.msra.mxu0 0.0
  %155 = vmatprep.subr.mxu0 0.0
  %156 = vmatpush1.msra.mxu0 0.0
  %157 = vmatprep.subr.mxu0 0.0
  %158 = vmatpush1.msra.mxu0 0.0
  %159 = vmatprep.subr.mxu0 0.0
  %160 = vmatpush1.msra.mxu0 0.0
  %161 = vmatprep.subr.mxu0 0.0
  %162 = vmatpush1.msra.mxu0 0.0
  %163 = vmatprep.subr.mxu0 0.0
  %164 = vmatpush1.msra.mxu0 0.0
  %165 = vmatprep.mubr.f32.mxu0 0.0
  %166 = vmatmul.mubr.f32.gmra.mrb[0].mxu0 %v90
  %v167 = vpop.f32.mrb[0].mxu0
  %v168 = vadd.f32 %v86, %v167
  %v169 = vpop.f32.mrb[0].mxu0
  %170 = vmatprep.mubr.f32.mxu0 0.0
  %171 = vmatmul.mubr.f32.gmra.mrb[0].mxu0 %v93
  %v172 = vpop.f32.mrb[0].mxu0
  %v173 = vadd.f32 %v86, %v172
  %v174 = vpop.f32.mrb[0].mxu0
  %175 = vmatprep.mubr.f32.mxu0 0.0
  %176 = vmatmul.mubr.f32.gmra.mrb[0].mxu0 %v96
  %v177 = vpop.f32.mrb[0].mxu0
  %v178 = vadd.f32 %v86, %v177
  %v179 = vpop.f32.mrb[0].mxu0
  %180 = vmatprep.mubr.f32.mxu0 0.0
  %181 = vmatmul.mubr.f32.gmra.mrb[0].mxu0 %v99
  %v182 = vpop.f32.mrb[0].mxu0
  %v183 = vadd.f32 %v86, %v182
  %v184 = vpop.f32.mrb[0].mxu0
  %185 = vdwg.mxu0
  %v190 = vcombine.high %v168, %v168
  %v192 = vunpack.c.l.s4 1966171168
  %v193 = vunpack.c.0.s8 %v192
  %v194 = vlaneseq
  %v195 = vshrl.u32 %v194, 7
  %v196 = vsub.s32 %v193, %v195
  %v197 = vrot.slane %v168, %v196
  %v199 = vunpack.c.l.s4 1966171168
  %v200 = vunpack.c.0.s8 %v199
  %v201 = vlaneseq
  %v202 = vshrl.u32 %v201, 7
  %v203 = vsub.s32 %v200, %v202
  %v204 = vrot.slane %v190, %v203
  %v205 = vcombine.high %v197, %v197
  %v206 = vcombine.high %v204, %v204
  %v208 = vunpack.c.l.s4 1966171168
  %v209 = vunpack.c.0.s8 %v208
  %v210 = vlaneseq
  %v211 = vshrl.u32 %v210, 7
  %v212 = vsub.s32 %v209, %v211
  %v213 = vrot.slane %v197, %v212
  %v215 = vunpack.c.l.s4 1966171168
  %v216 = vunpack.c.0.s8 %v215
  %v217 = vlaneseq
  %v218 = vshrl.u32 %v217, 7
  %v219 = vsub.s32 %v216, %v218
  %v220 = vrot.slane %v204, %v219
  %v222 = vunpack.c.l.s4 1966171168
  %v223 = vunpack.c.0.s8 %v222
  %v224 = vlaneseq
  %v225 = vshrl.u32 %v224, 7
  %v226 = vsub.s32 %v223, %v225
  %v227 = vrot.slane %v205, %v226
  %v229 = vunpack.c.l.s4 1966171168
  %v230 = vunpack.c.0.s8 %v229
  %v231 = vlaneseq
  %v232 = vshrl.u32 %v231, 7
  %v233 = vsub.s32 %v230, %v232
  %v234 = vrot.slane %v206, %v233
  %v235 = vcombine.high %v213, %v213
  %v236 = vcombine.high %v220, %v220
  %v237 = vcombine.high %v227, %v227
  %v238 = vcombine.high %v234, %v234
  %v239 = vcombine.high %v173, %v173
  %v241 = vunpack.c.l.s4 1966171168
  %v242 = vunpack.c.0.s8 %v241
  %v243 = vlaneseq
  %v244 = vshrl.u32 %v243, 7
  %v245 = vsub.s32 %v242, %v244
  %v246 = vrot.slane %v173, %v245
  %v248 = vunpack.c.l.s4 1966171168
  %v249 = vunpack.c.0.s8 %v248
  %v250 = vlaneseq
  %v251 = vshrl.u32 %v250, 7
  %v252 = vsub.s32 %v249, %v251
  %v253 = vrot.slane %v239, %v252
  %v254 = vcombine.high %v246, %v246
  %v255 = vcombine.high %v253, %v253
  %v257 = vunpack.c.l.s4 1966171168
  %v258 = vunpack.c.0.s8 %v257
  %v259 = vlaneseq
  %v260 = vshrl.u32 %v259, 7
  %v261 = vsub.s32 %v258, %v260
  %v262 = vrot.slane %v246, %v261
  %v264 = vunpack.c.l.s4 1966171168
  %v265 = vunpack.c.0.s8 %v264
  %v266 = vlaneseq
  %v267 = vshrl.u32 %v266, 7
  %v268 = vsub.s32 %v265, %v267
  %v269 = vrot.slane %v253, %v268
  %v271 = vunpack.c.l.s4 1966171168
  %v272 = vunpack.c.0.s8 %v271
  %v273 = vlaneseq
  %v274 = vshrl.u32 %v273, 7
  %v275 = vsub.s32 %v272, %v274
  %v276 = vrot.slane %v254, %v275
  %v278 = vunpack.c.l.s4 1966171168
  %v279 = vunpack.c.0.s8 %v278
  %v280 = vlaneseq
  %v281 = vshrl.u32 %v280, 7
  %v282 = vsub.s32 %v279, %v281
  %v283 = vrot.slane %v255, %v282
  %v284 = vcombine.high %v262, %v262
  %v285 = vcombine.high %v269, %v269
  %v286 = vcombine.high %v276, %v276
  %v287 = vcombine.high %v283, %v283
  %v288 = vcombine.high %v178, %v178
  %v290 = vunpack.c.l.s4 1966171168
  %v291 = vunpack.c.0.s8 %v290
  %v292 = vlaneseq
  %v293 = vshrl.u32 %v292, 7
  %v294 = vsub.s32 %v291, %v293
  %v295 = vrot.slane %v178, %v294
  %v297 = vunpack.c.l.s4 1966171168
  %v298 = vunpack.c.0.s8 %v297
  %v299 = vlaneseq
  %v300 = vshrl.u32 %v299, 7
  %v301 = vsub.s32 %v298, %v300
  %v302 = vrot.slane %v288, %v301
  %v303 = vcombine.high %v295, %v295
  %v304 = vcombine.high %v302, %v302
  %v306 = vunpack.c.l.s4 1966171168
  %v307 = vunpack.c.0.s8 %v306
  %v308 = vlaneseq
  %v309 = vshrl.u32 %v308, 7
  %v310 = vsub.s32 %v307, %v309
  %v311 = vrot.slane %v295, %v310
  %v313 = vunpack.c.l.s4 1966171168
  %v314 = vunpack.c.0.s8 %v313
  %v315 = vlaneseq
  %v316 = vshrl.u32 %v315, 7
  %v317 = vsub.s32 %v314, %v316
  %v318 = vrot.slane %v302, %v317
  %v320 = vunpack.c.l.s4 1966171168
  %v321 = vunpack.c.0.s8 %v320
  %v322 = vlaneseq
  %v323 = vshrl.u32 %v322, 7
  %v324 = vsub.s32 %v321, %v323
  %v325 = vrot.slane %v303, %v324
  %v327 = vunpack.c.l.s4 1966171168
  %v328 = vunpack.c.0.s8 %v327
  %v329 = vlaneseq
  %v330 = vshrl.u32 %v329, 7
  %v331 = vsub.s32 %v328, %v330
  %v332 = vrot.slane %v304, %v331
  %v333 = vcombine.high %v311, %v311
  %v334 = vcombine.high %v318, %v318
  %v335 = vcombine.high %v325, %v325
  %v336 = vcombine.high %v332, %v332
  %v337 = vcombine.high %v183, %v183
  %v339 = vunpack.c.l.s4 1966171168
  %v340 = vunpack.c.0.s8 %v339
  %v341 = vlaneseq
  %v342 = vshrl.u32 %v341, 7
  %v343 = vsub.s32 %v340, %v342
  %v344 = vrot.slane %v183, %v343
  %v346 = vunpack.c.l.s4 1966171168
  %v347 = vunpack.c.0.s8 %v346
  %v348 = vlaneseq
  %v349 = vshrl.u32 %v348, 7
  %v350 = vsub.s32 %v347, %v349
  %v351 = vrot.slane %v337, %v350
  %v352 = vcombine.high %v344, %v344
  %v353 = vcombine.high %v351, %v351
  %v355 = vunpack.c.l.s4 1966171168
  %v356 = vunpack.c.0.s8 %v355
  %v357 = vlaneseq
  %v358 = vshrl.u32 %v357, 7
  %v359 = vsub.s32 %v356, %v358
  %v360 = vrot.slane %v344, %v359
  %v362 = vunpack.c.l.s4 1966171168
  %v363 = vunpack.c.0.s8 %v362
  %v364 = vlaneseq
  %v365 = vshrl.u32 %v364, 7
  %v366 = vsub.s32 %v363, %v365
  %v367 = vrot.slane %v351, %v366
  %v369 = vunpack.c.l.s4 1966171168
  %v370 = vunpack.c.0.s8 %v369
  %v371 = vlaneseq
  %v372 = vshrl.u32 %v371, 7
  %v373 = vsub.s32 %v370, %v372
  %v374 = vrot.slane %v352, %v373
  %v376 = vunpack.c.l.s4 1966171168
  %v377 = vunpack.c.0.s8 %v376
  %v378 = vlaneseq
  %v379 = vshrl.u32 %v378, 7
  %v380 = vsub.s32 %v377, %v379
  %v381 = vrot.slane %v353, %v380
  %v382 = vcombine.high %v360, %v360
  %v383 = vcombine.high %v367, %v367
  %v384 = vcombine.high %v374, %v374
  %v385 = vcombine.high %v381, %v381
  %v386 = vlaneseq
  %v387 = vshrl.u32 %v386, 7
  %v388 = vsub.s32 0, %v387
  %v389 = vrot.slane %v213, %v388
  %v390 = vlaneseq
  %v391 = vshrl.u32 %v390, 7
  %v392 = vsub.s32 0, %v391
  %v393 = vrot.slane %v227, %v392
  %v394 = vlaneseq
  %v395 = vshrl.u32 %v394, 7
  %v396 = vsub.s32 0, %v395
  %v397 = vrot.slane %v235, %v396
  %v398 = vlaneseq
  %v399 = vshrl.u32 %v398, 7
  %v400 = vsub.s32 0, %v399
  %v401 = vrot.slane %v237, %v400
  %v402 = vlaneseq
  %v403 = vshrl.u32 %v402, 7
  %v404 = vsub.s32 0, %v403
  %v405 = vrot.slane %v220, %v404
  %v406 = vlaneseq
  %v407 = vshrl.u32 %v406, 7
  %v408 = vsub.s32 0, %v407
  %v409 = vrot.slane %v234, %v408
  %v410 = vlaneseq
  %v411 = vshrl.u32 %v410, 7
  %v412 = vsub.s32 0, %v411
  %v413 = vrot.slane %v236, %v412
  %v414 = vlaneseq
  %v415 = vshrl.u32 %v414, 7
  %v416 = vsub.s32 0, %v415
  %v417 = vrot.slane %v238, %v416
  %v418 = vlaneseq
  %v419 = vshrl.u32 %v418, 7
  %v420 = vsub.s32 0, %v419
  %v421 = vrot.slane %v262, %v420
  %v422 = vlaneseq
  %v423 = vshrl.u32 %v422, 7
  %v424 = vsub.s32 0, %v423
  %v425 = vrot.slane %v276, %v424
  %v426 = vlaneseq
  %v427 = vshrl.u32 %v426, 7
  %v428 = vsub.s32 0, %v427
  %v429 = vrot.slane %v284, %v428
  %v430 = vlaneseq
  %v431 = vshrl.u32 %v430, 7
  %v432 = vsub.s32 0, %v431
  %v433 = vrot.slane %v286, %v432
  %v434 = vlaneseq
  %v435 = vshrl.u32 %v434, 7
  %v436 = vsub.s32 0, %v435
  %v437 = vrot.slane %v269, %v436
  %v438 = vlaneseq
  %v439 = vshrl.u32 %v438, 7
  %v440 = vsub.s32 0, %v439
  %v441 = vrot.slane %v283, %v440
  %v442 = vlaneseq
  %v443 = vshrl.u32 %v442, 7
  %v444 = vsub.s32 0, %v443
  %v445 = vrot.slane %v285, %v444
  %v446 = vlaneseq
  %v447 = vshrl.u32 %v446, 7
  %v448 = vsub.s32 0, %v447
  %v449 = vrot.slane %v287, %v448
  %v450 = vlaneseq
  %v451 = vshrl.u32 %v450, 7
  %v452 = vsub.s32 0, %v451
  %v453 = vrot.slane %v311, %v452
  %v454 = vlaneseq
  %v455 = vshrl.u32 %v454, 7
  %v456 = vsub.s32 0, %v455
  %v457 = vrot.slane %v325, %v456
  %v458 = vlaneseq
  %v459 = vshrl.u32 %v458, 7
  %v460 = vsub.s32 0, %v459
  %v461 = vrot.slane %v333, %v460
  %v462 = vlaneseq
  %v463 = vshrl.u32 %v462, 7
  %v464 = vsub.s32 0, %v463
  %v465 = vrot.slane %v335, %v464
  %v466 = vlaneseq
  %v467 = vshrl.u32 %v466, 7
  %v468 = vsub.s32 0, %v467
  %v469 = vrot.slane %v318, %v468
  %v470 = vlaneseq
  %v471 = vshrl.u32 %v470, 7
  %v472 = vsub.s32 0, %v471
  %v473 = vrot.slane %v332, %v472
  %v474 = vlaneseq
  %v475 = vshrl.u32 %v474, 7
  %v476 = vsub.s32 0, %v475
  %v477 = vrot.slane %v334, %v476
  %v478 = vlaneseq
  %v479 = vshrl.u32 %v478, 7
  %v480 = vsub.s32 0, %v479
  %v481 = vrot.slane %v336, %v480
  %v482 = vlaneseq
  %v483 = vshrl.u32 %v482, 7
  %v484 = vsub.s32 0, %v483
  %v485 = vrot.slane %v360, %v484
  %v486 = vlaneseq
  %v487 = vshrl.u32 %v486, 7
  %v488 = vsub.s32 0, %v487
  %v489 = vrot.slane %v374, %v488
  %v490 = vlaneseq
  %v491 = vshrl.u32 %v490, 7
  %v492 = vsub.s32 0, %v491
  %v493 = vrot.slane %v382, %v492
  %v494 = vlaneseq
  %v495 = vshrl.u32 %v494, 7
  %v496 = vsub.s32 0, %v495
  %v497 = vrot.slane %v384, %v496
  %v498 = vlaneseq
  %v499 = vshrl.u32 %v498, 7
  %v500 = vsub.s32 0, %v499
  %v501 = vrot.slane %v367, %v500
  %v502 = vlaneseq
  %v503 = vshrl.u32 %v502, 7
  %v504 = vsub.s32 0, %v503
  %v505 = vrot.slane %v381, %v504
  %v506 = vlaneseq
  %v507 = vshrl.u32 %v506, 7
  %v508 = vsub.s32 0, %v507
  %v509 = vrot.slane %v383, %v508
  %v510 = vlaneseq
  %v511 = vshrl.u32 %v510, 7
  %v512 = vsub.s32 0, %v511
  %v513 = vrot.slane %v385, %v512
  %514 = vrot.lane.b32.xlu0 %v389, 64
  %v515 = vpop.permute.xlu0 %514
  %516 = vrot.lane.b32.xlu0 %v393, 64
  %v517 = vpop.permute.xlu0 %516
  %518 = vrot.lane.b32.xlu0 %v397, 64
  %v519 = vpop.permute.xlu0 %518
  %520 = vrot.lane.b32.xlu0 %v401, 64
  %v521 = vpop.permute.xlu0 %520
  %522 = vrot.lane.b32.xlu0 %v405, 64
  %v523 = vpop.permute.xlu0 %522
  %524 = vrot.lane.b32.xlu0 %v409, 64
  %v525 = vpop.permute.xlu0 %524
  %526 = vrot.lane.b32.xlu0 %v413, 64
  %v527 = vpop.permute.xlu0 %526
  %528 = vrot.lane.b32.xlu0 %v417, 64
  %v529 = vpop.permute.xlu0 %528
  %530 = vrot.lane.b32.xlu0 %v421, 64
  %v531 = vpop.permute.xlu0 %530
  %532 = vrot.lane.b32.xlu0 %v425, 64
  %v533 = vpop.permute.xlu0 %532
  %534 = vrot.lane.b32.xlu0 %v429, 64
  %v535 = vpop.permute.xlu0 %534
  %536 = vrot.lane.b32.xlu0 %v433, 64
  %v537 = vpop.permute.xlu0 %536
  %538 = vrot.lane.b32.xlu0 %v437, 64
  %v539 = vpop.permute.xlu0 %538
  %540 = vrot.lane.b32.xlu0 %v441, 64
  %v541 = vpop.permute.xlu0 %540
  %542 = vrot.lane.b32.xlu0 %v445, 64
  %v543 = vpop.permute.xlu0 %542
  %544 = vrot.lane.b32.xlu0 %v449, 64
  %v545 = vpop.permute.xlu0 %544
  %546 = vrot.lane.b32.xlu0 %v453, 64
  %v547 = vpop.permute.xlu0 %546
  %548 = vrot.lane.b32.xlu0 %v457, 64
  %v549 = vpop.permute.xlu0 %548
  %550 = vrot.lane.b32.xlu0 %v461, 64
  %v551 = vpop.permute.xlu0 %550
  %552 = vrot.lane.b32.xlu0 %v465, 64
  %v553 = vpop.permute.xlu0 %552
  %554 = vrot.lane.b32.xlu0 %v469, 64
  %v555 = vpop.permute.xlu0 %554
  %556 = vrot.lane.b32.xlu0 %v473, 64
  %v557 = vpop.permute.xlu0 %556
  %558 = vrot.lane.b32.xlu0 %v477, 64
  %v559 = vpop.permute.xlu0 %558
  %560 = vrot.lane.b32.xlu0 %v481, 64
  %v561 = vpop.permute.xlu0 %560
  %562 = vrot.lane.b32.xlu0 %v485, 64
  %v563 = vpop.permute.xlu0 %562
  %564 = vrot.lane.b32.xlu0 %v489, 64
  %v565 = vpop.permute.xlu0 %564
  %566 = vrot.lane.b32.xlu0 %v493, 64
  %v567 = vpop.permute.xlu0 %566
  %568 = vrot.lane.b32.xlu0 %v497, 64
  %v569 = vpop.permute.xlu0 %568
  %570 = vrot.lane.b32.xlu0 %v501, 64
  %v571 = vpop.permute.xlu0 %570
  %572 = vrot.lane.b32.xlu0 %v505, 64
  %v573 = vpop.permute.xlu0 %572
  %574 = vrot.lane.b32.xlu0 %v509, 64
  %v575 = vpop.permute.xlu0 %574
  %576 = vrot.lane.b32.xlu0 %v513, 64
  %v577 = vpop.permute.xlu0 %576
  %v610 = vadd.f32 %v168, %v515
  %v611 = vadd.f32 %v173, %v515
  %v612 = vadd.f32 %v178, %v515
  %v613 = vadd.f32 %v183, %v515
  %v614 = vadd.f32 %v168, %v517
  %v615 = vadd.f32 %v173, %v517
  %v616 = vadd.f32 %v178, %v517
  %v617 = vadd.f32 %v183, %v517
  %v618 = vadd.f32 %v168, %v519
  %v619 = vadd.f32 %v173, %v519
  %v620 = vadd.f32 %v178, %v519
  %v621 = vadd.f32 %v183, %v519
  %v622 = vadd.f32 %v168, %v521
  %v623 = vadd.f32 %v173, %v521
  %v624 = vadd.f32 %v178, %v521
  %v625 = vadd.f32 %v183, %v521
  %v626 = vadd.f32 %v168, %v523
  %v627 = vadd.f32 %v173, %v523
  %v628 = vadd.f32 %v178, %v523
  %v629 = vadd.f32 %v183, %v523
  %v630 = vadd.f32 %v168, %v525
  %v631 = vadd.f32 %v173, %v525
  %v632 = vadd.f32 %v178, %v525
  %v633 = vadd.f32 %v183, %v525
  %v634 = vadd.f32 %v168, %v527
  %v635 = vadd.f32 %v173, %v527
  %v636 = vadd.f32 %v178, %v527
  %v637 = vadd.f32 %v183, %v527
  %v638 = vadd.f32 %v168, %v529
  %v639 = vadd.f32 %v173, %v529
  %v640 = vadd.f32 %v178, %v529
  %v641 = vadd.f32 %v183, %v529
  %v642 = vadd.f32 %v168, %v531
  %v643 = vadd.f32 %v173, %v531
  %v644 = vadd.f32 %v178, %v531
  %v645 = vadd.f32 %v183, %v531
  %v646 = vadd.f32 %v168, %v533
  %v647 = vadd.f32 %v173, %v533
  %v648 = vadd.f32 %v178, %v533
  %v649 = vadd.f32 %v183, %v533
  %v650 = vadd.f32 %v168, %v535
  %v651 = vadd.f32 %v173, %v535
  %v652 = vadd.f32 %v178, %v535
  %v653 = vadd.f32 %v183, %v535
  %v654 = vadd.f32 %v168, %v537
  %v655 = vadd.f32 %v173, %v537
  %v656 = vadd.f32 %v178, %v537
  %v657 = vadd.f32 %v183, %v537
  %v658 = vadd.f32 %v168, %v539
  %v659 = vadd.f32 %v173, %v539
  %v660 = vadd.f32 %v178, %v539
  %v661 = vadd.f32 %v183, %v539
  %v662 = vadd.f32 %v168, %v541
  %v663 = vadd.f32 %v173, %v541
  %v664 = vadd.f32 %v178, %v541
  %v665 = vadd.f32 %v183, %v541
  %v666 = vadd.f32 %v168, %v543
  %v667 = vadd.f32 %v173, %v543
  %v668 = vadd.f32 %v178, %v543
  %v669 = vadd.f32 %v183, %v543
  %v670 = vadd.f32 %v168, %v545
  %v671 = vadd.f32 %v173, %v545
  %v672 = vadd.f32 %v178, %v545
  %v673 = vadd.f32 %v183, %v545
  %v674 = vadd.f32 %v168, %v547
  %v675 = vadd.f32 %v173, %v547
  %v676 = vadd.f32 %v178, %v547
  %v677 = vadd.f32 %v183, %v547
  %v678 = vadd.f32 %v168, %v549
  %v679 = vadd.f32 %v173, %v549
  %v680 = vadd.f32 %v178, %v549
  %v681 = vadd.f32 %v183, %v549
  %v682 = vadd.f32 %v168, %v551
  %v683 = vadd.f32 %v173, %v551
  %v684 = vadd.f32 %v178, %v551
  %v685 = vadd.f32 %v183, %v551
  %v686 = vadd.f32 %v168, %v553
  %v687 = vadd.f32 %v173, %v553
  %v688 = vadd.f32 %v178, %v553
  %v689 = vadd.f32 %v183, %v553
  %v690 = vadd.f32 %v168, %v555
  %v691 = vadd.f32 %v173, %v555
  %v692 = vadd.f32 %v178, %v555
  %v693 = vadd.f32 %v183, %v555
  %v694 = vadd.f32 %v168, %v557
  %v695 = vadd.f32 %v173, %v557
  %v696 = vadd.f32 %v178, %v557
  %v697 = vadd.f32 %v183, %v557
  %v698 = vadd.f32 %v168, %v559
  %v699 = vadd.f32 %v173, %v559
  %v700 = vadd.f32 %v178, %v559
  %v701 = vadd.f32 %v183, %v559
  %v702 = vadd.f32 %v168, %v561
  %v703 = vadd.f32 %v173, %v561
  %v704 = vadd.f32 %v178, %v561
  %v705 = vadd.f32 %v183, %v561
  %v706 = vadd.f32 %v168, %v563
  %v707 = vadd.f32 %v173, %v563
  %v708 = vadd.f32 %v178, %v563
  %v709 = vadd.f32 %v183, %v563
  %v710 = vadd.f32 %v168, %v565
  %v711 = vadd.f32 %v173, %v565
  %v712 = vadd.f32 %v178, %v565
  %v713 = vadd.f32 %v183, %v565
  %v714 = vadd.f32 %v168, %v567
  %v715 = vadd.f32 %v173, %v567
  %v716 = vadd.f32 %v178, %v567
  %v717 = vadd.f32 %v183, %v567
  %v718 = vadd.f32 %v168, %v569
  %v719 = vadd.f32 %v173, %v569
  %v720 = vadd.f32 %v178, %v569
  %v721 = vadd.f32 %v183, %v569
  %v722 = vadd.f32 %v168, %v571
  %v723 = vadd.f32 %v173, %v571
  %v724 = vadd.f32 %v178, %v571
  %v725 = vadd.f32 %v183, %v571
  %v726 = vadd.f32 %v168, %v573
  %v727 = vadd.f32 %v173, %v573
  %v728 = vadd.f32 %v178, %v573
  %v729 = vadd.f32 %v183, %v573
  %v730 = vadd.f32 %v168, %v575
  %v731 = vadd.f32 %v173, %v575
  %v732 = vadd.f32 %v178, %v575
  %v733 = vadd.f32 %v183, %v575
  %v734 = vadd.f32 %v168, %v577
  %v735 = vadd.f32 %v173, %v577
  %v736 = vadd.f32 %v178, %v577
  %v737 = vadd.f32 %v183, %v577
  %vm738 = vcmp.gt.f32.partialorder %v610, 0.0
  %vm739 = vcmp.gt.f32.partialorder %v611, 0.0
  %vm740 = vcmp.gt.f32.partialorder %v612, 0.0
  %vm741 = vcmp.gt.f32.partialorder %v613, 0.0
  %vm742 = vcmp.gt.f32.partialorder %v614, 0.0
  %vm743 = vcmp.gt.f32.partialorder %v615, 0.0
  %vm744 = vcmp.gt.f32.partialorder %v616, 0.0
  %vm745 = vcmp.gt.f32.partialorder %v617, 0.0
  %vm746 = vcmp.gt.f32.partialorder %v618, 0.0
  %vm747 = vcmp.gt.f32.partialorder %v619, 0.0
  %vm748 = vcmp.gt.f32.partialorder %v620, 0.0
  %vm749 = vcmp.gt.f32.partialorder %v621, 0.0
  %vm750 = vcmp.gt.f32.partialorder %v622, 0.0
  %vm751 = vcmp.gt.f32.partialorder %v623, 0.0
  %vm752 = vcmp.gt.f32.partialorder %v624, 0.0
  %vm753 = vcmp.gt.f32.partialorder %v625, 0.0
  %vm754 = vcmp.gt.f32.partialorder %v626, 0.0
  %vm755 = vcmp.gt.f32.partialorder %v627, 0.0
  %vm756 = vcmp.gt.f32.partialorder %v628, 0.0
  %vm757 = vcmp.gt.f32.partialorder %v629, 0.0
  %vm758 = vcmp.gt.f32.partialorder %v630, 0.0
  %vm759 = vcmp.gt.f32.partialorder %v631, 0.0
  %vm760 = vcmp.gt.f32.partialorder %v632, 0.0
  %vm761 = vcmp.gt.f32.partialorder %v633, 0.0
  %vm762 = vcmp.gt.f32.partialorder %v634, 0.0
  %vm763 = vcmp.gt.f32.partialorder %v635, 0.0
  %vm764 = vcmp.gt.f32.partialorder %v636, 0.0
  %vm765 = vcmp.gt.f32.partialorder %v637, 0.0
  %vm766 = vcmp.gt.f32.partialorder %v638, 0.0
  %vm767 = vcmp.gt.f32.partialorder %v639, 0.0
  %vm768 = vcmp.gt.f32.partialorder %v640, 0.0
  %vm769 = vcmp.gt.f32.partialorder %v641, 0.0
  %vm770 = vcmp.gt.f32.partialorder %v642, 0.0
  %vm771 = vcmp.gt.f32.partialorder %v643, 0.0
  %vm772 = vcmp.gt.f32.partialorder %v644, 0.0
  %vm773 = vcmp.gt.f32.partialorder %v645, 0.0
  %vm774 = vcmp.gt.f32.partialorder %v646, 0.0
  %vm775 = vcmp.gt.f32.partialorder %v647, 0.0
  %vm776 = vcmp.gt.f32.partialorder %v648, 0.0
  %vm777 = vcmp.gt.f32.partialorder %v649, 0.0
  %vm778 = vcmp.gt.f32.partialorder %v650, 0.0
  %vm779 = vcmp.gt.f32.partialorder %v651, 0.0
  %vm780 = vcmp.gt.f32.partialorder %v652, 0.0
  %vm781 = vcmp.gt.f32.partialorder %v653, 0.0
  %vm782 = vcmp.gt.f32.partialorder %v654, 0.0
  %vm783 = vcmp.gt.f32.partialorder %v655, 0.0
  %vm784 = vcmp.gt.f32.partialorder %v656, 0.0
  %vm785 = vcmp.gt.f32.partialorder %v657, 0.0
  %vm786 = vcmp.gt.f32.partialorder %v658, 0.0
  %vm787 = vcmp.gt.f32.partialorder %v659, 0.0
  %vm788 = vcmp.gt.f32.partialorder %v660, 0.0
  %vm789 = vcmp.gt.f32.partialorder %v661, 0.0
  %vm790 = vcmp.gt.f32.partialorder %v662, 0.0
  %vm791 = vcmp.gt.f32.partialorder %v663, 0.0
  %vm792 = vcmp.gt.f32.partialorder %v664, 0.0
  %vm793 = vcmp.gt.f32.partialorder %v665, 0.0
  %vm794 = vcmp.gt.f32.partialorder %v666, 0.0
  %vm795 = vcmp.gt.f32.partialorder %v667, 0.0
  %vm796 = vcmp.gt.f32.partialorder %v668, 0.0
  %vm797 = vcmp.gt.f32.partialorder %v669, 0.0
  %vm798 = vcmp.gt.f32.partialorder %v670, 0.0
  %vm799 = vcmp.gt.f32.partialorder %v671, 0.0
  %vm800 = vcmp.gt.f32.partialorder %v672, 0.0
  %vm801 = vcmp.gt.f32.partialorder %v673, 0.0
  %vm802 = vcmp.gt.f32.partialorder %v674, 0.0
  %vm803 = vcmp.gt.f32.partialorder %v675, 0.0
  %vm804 = vcmp.gt.f32.partialorder %v676, 0.0
  %vm805 = vcmp.gt.f32.partialorder %v677, 0.0
  %vm806 = vcmp.gt.f32.partialorder %v678, 0.0
  %vm807 = vcmp.gt.f32.partialorder %v679, 0.0
  %vm808 = vcmp.gt.f32.partialorder %v680, 0.0
  %vm809 = vcmp.gt.f32.partialorder %v681, 0.0
  %vm810 = vcmp.gt.f32.partialorder %v682, 0.0
  %vm811 = vcmp.gt.f32.partialorder %v683, 0.0
  %vm812 = vcmp.gt.f32.partialorder %v684, 0.0
  %vm813 = vcmp.gt.f32.partialorder %v685, 0.0
  %vm814 = vcmp.gt.f32.partialorder %v686, 0.0
  %vm815 = vcmp.gt.f32.partialorder %v687, 0.0
  %vm816 = vcmp.gt.f32.partialorder %v688, 0.0
  %vm817 = vcmp.gt.f32.partialorder %v689, 0.0
  %vm818 = vcmp.gt.f32.partialorder %v690, 0.0
  %vm819 = vcmp.gt.f32.partialorder %v691, 0.0
  %vm820 = vcmp.gt.f32.partialorder %v692, 0.0
  %vm821 = vcmp.gt.f32.partialorder %v693, 0.0
  %vm822 = vcmp.gt.f32.partialorder %v694, 0.0
  %vm823 = vcmp.gt.f32.partialorder %v695, 0.0
  %vm824 = vcmp.gt.f32.partialorder %v696, 0.0
  %vm825 = vcmp.gt.f32.partialorder %v697, 0.0
  %vm826 = vcmp.gt.f32.partialorder %v698, 0.0
  %vm827 = vcmp.gt.f32.partialorder %v699, 0.0
  %vm828 = vcmp.gt.f32.partialorder %v700, 0.0
  %vm829 = vcmp.gt.f32.partialorder %v701, 0.0
  %vm830 = vcmp.gt.f32.partialorder %v702, 0.0
  %vm831 = vcmp.gt.f32.partialorder %v703, 0.0
  %vm832 = vcmp.gt.f32.partialorder %v704, 0.0
  %vm833 = vcmp.gt.f32.partialorder %v705, 0.0
  %vm834 = vcmp.gt.f32.partialorder %v706, 0.0
  %vm835 = vcmp.gt.f32.partialorder %v707, 0.0
  %vm836 = vcmp.gt.f32.partialorder %v708, 0.0
  %vm837 = vcmp.gt.f32.partialorder %v709, 0.0
  %vm838 = vcmp.gt.f32.partialorder %v710, 0.0
  %vm839 = vcmp.gt.f32.partialorder %v711, 0.0
  %vm840 = vcmp.gt.f32.partialorder %v712, 0.0
  %vm841 = vcmp.gt.f32.partialorder %v713, 0.0
  %vm842 = vcmp.gt.f32.partialorder %v714, 0.0
  %vm843 = vcmp.gt.f32.partialorder %v715, 0.0
  %vm844 = vcmp.gt.f32.partialorder %v716, 0.0
  %vm845 = vcmp.gt.f32.partialorder %v717, 0.0
  %vm846 = vcmp.gt.f32.partialorder %v718, 0.0
  %vm847 = vcmp.gt.f32.partialorder %v719, 0.0
  %vm848 = vcmp.gt.f32.partialorder %v720, 0.0
  %vm849 = vcmp.gt.f32.partialorder %v721, 0.0
  %vm850 = vcmp.gt.f32.partialorder %v722, 0.0
  %vm851 = vcmp.gt.f32.partialorder %v723, 0.0
  %vm852 = vcmp.gt.f32.partialorder %v724, 0.0
  %vm853 = vcmp.gt.f32.partialorder %v725, 0.0
  %vm854 = vcmp.gt.f32.partialorder %v726, 0.0
  %vm855 = vcmp.gt.f32.partialorder %v727, 0.0
  %vm856 = vcmp.gt.f32.partialorder %v728, 0.0
  %vm857 = vcmp.gt.f32.partialorder %v729, 0.0
  %vm858 = vcmp.gt.f32.partialorder %v730, 0.0
  %vm859 = vcmp.gt.f32.partialorder %v731, 0.0
  %vm860 = vcmp.gt.f32.partialorder %v732, 0.0
  %vm861 = vcmp.gt.f32.partialorder %v733, 0.0
  %vm862 = vcmp.gt.f32.partialorder %v734, 0.0
  %vm863 = vcmp.gt.f32.partialorder %v735, 0.0
  %vm864 = vcmp.gt.f32.partialorder %v736, 0.0
  %vm865 = vcmp.gt.f32.partialorder %v737, 0.0
  %v866 = vmul.f32 %v610, 0.2
  %v867 = vmul.f32 %v611, 0.2
  %v868 = vmul.f32 %v612, 0.2
  %v869 = vmul.f32 %v613, 0.2
  %v870 = vmul.f32 %v614, 0.2
  %v871 = vmul.f32 %v615, 0.2
  %v872 = vmul.f32 %v616, 0.2
  %v873 = vmul.f32 %v617, 0.2
  %v874 = vmul.f32 %v618, 0.2
  %v875 = vmul.f32 %v619, 0.2
  %v876 = vmul.f32 %v620, 0.2
  %v877 = vmul.f32 %v621, 0.2
  %v878 = vmul.f32 %v622, 0.2
  %v879 = vmul.f32 %v623, 0.2
  %v880 = vmul.f32 %v624, 0.2
  %v881 = vmul.f32 %v625, 0.2
  %v882 = vmul.f32 %v626, 0.2
  %v883 = vmul.f32 %v627, 0.2
  %v884 = vmul.f32 %v628, 0.2
  %v885 = vmul.f32 %v629, 0.2
  %v886 = vmul.f32 %v630, 0.2
  %v887 = vmul.f32 %v631, 0.2
  %v888 = vmul.f32 %v632, 0.2
  %v889 = vmul.f32 %v633, 0.2
  %v890 = vmul.f32 %v634, 0.2
  %v891 = vmul.f32 %v635, 0.2
  %v892 = vmul.f32 %v636, 0.2
  %v893 = vmul.f32 %v637, 0.2
  %v894 = vmul.f32 %v638, 0.2
  %v895 = vmul.f32 %v639, 0.2
  %v896 = vmul.f32 %v640, 0.2
  %v897 = vmul.f32 %v641, 0.2
  %v898 = vmul.f32 %v642, 0.2
  %v899 = vmul.f32 %v643, 0.2
  %v900 = vmul.f32 %v644, 0.2
  %v901 = vmul.f32 %v645, 0.2
  %v902 = vmul.f32 %v646, 0.2
  %v903 = vmul.f32 %v647, 0.2
  %v904 = vmul.f32 %v648, 0.2
  %v905 = vmul.f32 %v649, 0.2
  %v906 = vmul.f32 %v650, 0.2
  %v907 = vmul.f32 %v651, 0.2
  %v908 = vmul.f32 %v652, 0.2
  %v909 = vmul.f32 %v653, 0.2
  %v910 = vmul.f32 %v654, 0.2
  %v911 = vmul.f32 %v655, 0.2
  %v912 = vmul.f32 %v656, 0.2
  %v913 = vmul.f32 %v657, 0.2
  %v914 = vmul.f32 %v658, 0.2
  %v915 = vmul.f32 %v659, 0.2
  %v916 = vmul.f32 %v660, 0.2
  %v917 = vmul.f32 %v661, 0.2
  %v918 = vmul.f32 %v662, 0.2
  %v919 = vmul.f32 %v663, 0.2
  %v920 = vmul.f32 %v664, 0.2
  %v921 = vmul.f32 %v665, 0.2
  %v922 = vmul.f32 %v666, 0.2
  %v923 = vmul.f32 %v667, 0.2
  %v924 = vmul.f32 %v668, 0.2
  %v925 = vmul.f32 %v669, 0.2
  %v926 = vmul.f32 %v670, 0.2
  %v927 = vmul.f32 %v671, 0.2
  %v928 = vmul.f32 %v672, 0.2
  %v929 = vmul.f32 %v673, 0.2
  %v930 = vmul.f32 %v674, 0.2
  %v931 = vmul.f32 %v675, 0.2
  %v932 = vmul.f32 %v676, 0.2
  %v933 = vmul.f32 %v677, 0.2
  %v934 = vmul.f32 %v678, 0.2
  %v935 = vmul.f32 %v679, 0.2
  %v936 = vmul.f32 %v680, 0.2
  %v937 = vmul.f32 %v681, 0.2
  %v938 = vmul.f32 %v682, 0.2
  %v939 = vmul.f32 %v683, 0.2
  %v940 = vmul.f32 %v684, 0.2
  %v941 = vmul.f32 %v685, 0.2
  %v942 = vmul.f32 %v686, 0.2
  %v943 = vmul.f32 %v687, 0.2
  %v944 = vmul.f32 %v688, 0.2
  %v945 = vmul.f32 %v689, 0.2
  %v946 = vmul.f32 %v690, 0.2
  %v947 = vmul.f32 %v691, 0.2
  %v948 = vmul.f32 %v692, 0.2
  %v949 = vmul.f32 %v693, 0.2
  %v950 = vmul.f32 %v694, 0.2
  %v951 = vmul.f32 %v695, 0.2
  %v952 = vmul.f32 %v696, 0.2
  %v953 = vmul.f32 %v697, 0.2
  %v954 = vmul.f32 %v698, 0.2
  %v955 = vmul.f32 %v699, 0.2
  %v956 = vmul.f32 %v700, 0.2
  %v957 = vmul.f32 %v701, 0.2
  %v958 = vmul.f32 %v702, 0.2
  %v959 = vmul.f32 %v703, 0.2
  %v960 = vmul.f32 %v704, 0.2
  %v961 = vmul.f32 %v705, 0.2
  %v962 = vmul.f32 %v706, 0.2
  %v963 = vmul.f32 %v707, 0.2
  %v964 = vmul.f32 %v708, 0.2
  %v965 = vmul.f32 %v709, 0.2
  %v966 = vmul.f32 %v710, 0.2
  %v967 = vmul.f32 %v711, 0.2
  %v968 = vmul.f32 %v712, 0.2
  %v969 = vmul.f32 %v713, 0.2
  %v970 = vmul.f32 %v714, 0.2
  %v971 = vmul.f32 %v715, 0.2
  %v972 = vmul.f32 %v716, 0.2
  %v973 = vmul.f32 %v717, 0.2
  %v974 = vmul.f32 %v718, 0.2
  %v975 = vmul.f32 %v719, 0.2
  %v976 = vmul.f32 %v720, 0.2
  %v977 = vmul.f32 %v721, 0.2
  %v978 = vmul.f32 %v722, 0.2
  %v979 = vmul.f32 %v723, 0.2
  %v980 = vmul.f32 %v724, 0.2
  %v981 = vmul.f32 %v725, 0.2
  %v982 = vmul.f32 %v726, 0.2
  %v983 = vmul.f32 %v727, 0.2
  %v984 = vmul.f32 %v728, 0.2
  %v985 = vmul.f32 %v729, 0.2
  %v986 = vmul.f32 %v730, 0.2
  %v987 = vmul.f32 %v731, 0.2
  %v988 = vmul.f32 %v732, 0.2
  %v989 = vmul.f32 %v733, 0.2
  %v990 = vmul.f32 %v734, 0.2
  %v991 = vmul.f32 %v735, 0.2
  %v992 = vmul.f32 %v736, 0.2
  %v993 = vmul.f32 %v737, 0.2
  %v994 = vsel %vm738, %v610, %v866
  %v995 = vsel %vm739, %v611, %v867
  %v996 = vsel %vm740, %v612, %v868
  %v997 = vsel %vm741, %v613, %v869
  %v998 = vsel %vm742, %v614, %v870
  %v999 = vsel %vm743, %v615, %v871
  %v1000 = vsel %vm744, %v616, %v872
  %v1001 = vsel %vm745, %v617, %v873
  %v1002 = vsel %vm746, %v618, %v874
  %v1003 = vsel %vm747, %v619, %v875
  %v1004 = vsel %vm748, %v620, %v876
  %v1005 = vsel %vm749, %v621, %v877
  %v1006 = vsel %vm750, %v622, %v878
  %v1007 = vsel %vm751, %v623, %v879
  %v1008 = vsel %vm752, %v624, %v880
  %v1009 = vsel %vm753, %v625, %v881
  %v1010 = vsel %vm754, %v626, %v882
  %v1011 = vsel %vm755, %v627, %v883
  %v1012 = vsel %vm756, %v628, %v884
  %v1013 = vsel %vm757, %v629, %v885
  %v1014 = vsel %vm758, %v630, %v886
  %v1015 = vsel %vm759, %v631, %v887
  %v1016 = vsel %vm760, %v632, %v888
  %v1017 = vsel %vm761, %v633, %v889
  %v1018 = vsel %vm762, %v634, %v890
  %v1019 = vsel %vm763, %v635, %v891
  %v1020 = vsel %vm764, %v636, %v892
  %v1021 = vsel %vm765, %v637, %v893
  %v1022 = vsel %vm766, %v638, %v894
  %v1023 = vsel %vm767, %v639, %v895
  %v1024 = vsel %vm768, %v640, %v896
  %v1025 = vsel %vm769, %v641, %v897
  %v1026 = vsel %vm770, %v642, %v898
  %v1027 = vsel %vm771, %v643, %v899
  %v1028 = vsel %vm772, %v644, %v900
  %v1029 = vsel %vm773, %v645, %v901
  %v1030 = vsel %vm774, %v646, %v902
  %v1031 = vsel %vm775, %v647, %v903
  %v1032 = vsel %vm776, %v648, %v904
  %v1033 = vsel %vm777, %v649, %v905
  %v1034 = vsel %vm778, %v650, %v906
  %v1035 = vsel %vm779, %v651, %v907
  %v1036 = vsel %vm780, %v652, %v908
  %v1037 = vsel %vm781, %v653, %v909
  %v1038 = vsel %vm782, %v654, %v910
  %v1039 = vsel %vm783, %v655, %v911
  %v1040 = vsel %vm784, %v656, %v912
  %v1041 = vsel %vm785, %v657, %v913
  %v1042 = vsel %vm786, %v658, %v914
  %v1043 = vsel %vm787, %v659, %v915
  %v1044 = vsel %vm788, %v660, %v916
  %v1045 = vsel %vm789, %v661, %v917
  %v1046 = vsel %vm790, %v662, %v918
  %v1047 = vsel %vm791, %v663, %v919
  %v1048 = vsel %vm792, %v664, %v920
  %v1049 = vsel %vm793, %v665, %v921
  %v1050 = vsel %vm794, %v666, %v922
  %v1051 = vsel %vm795, %v667, %v923
  %v1052 = vsel %vm796, %v668, %v924
  %v1053 = vsel %vm797, %v669, %v925
  %v1054 = vsel %vm798, %v670, %v926
  %v1055 = vsel %vm799, %v671, %v927
  %v1056 = vsel %vm800, %v672, %v928
  %v1057 = vsel %vm801, %v673, %v929
  %v1058 = vsel %vm802, %v674, %v930
  %v1059 = vsel %vm803, %v675, %v931
  %v1060 = vsel %vm804, %v676, %v932
  %v1061 = vsel %vm805, %v677, %v933
  %v1062 = vsel %vm806, %v678, %v934
  %v1063 = vsel %vm807, %v679, %v935
  %v1064 = vsel %vm808, %v680, %v936
  %v1065 = vsel %vm809, %v681, %v937
  %v1066 = vsel %vm810, %v682, %v938
  %v1067 = vsel %vm811, %v683, %v939
  %v1068 = vsel %vm812, %v684, %v940
  %v1069 = vsel %vm813, %v685, %v941
  %v1070 = vsel %vm814, %v686, %v942
  %v1071 = vsel %vm815, %v687, %v943
  %v1072 = vsel %vm816, %v688, %v944
  %v1073 = vsel %vm817, %v689, %v945
  %v1074 = vsel %vm818, %v690, %v946
  %v1075 = vsel %vm819, %v691, %v947
  %v1076 = vsel %vm820, %v692, %v948
  %v1077 = vsel %vm821, %v693, %v949
  %v1078 = vsel %vm822, %v694, %v950
  %v1079 = vsel %vm823, %v695, %v951
  %v1080 = vsel %vm824, %v696, %v952
  %v1081 = vsel %vm825, %v697, %v953
  %v1082 = vsel %vm826, %v698, %v954
  %v1083 = vsel %vm827, %v699, %v955
  %v1084 = vsel %vm828, %v700, %v956
  %v1085 = vsel %vm829, %v701, %v957
  %v1086 = vsel %vm830, %v702, %v958
  %v1087 = vsel %vm831, %v703, %v959
  %v1088 = vsel %vm832, %v704, %v960
  %v1089 = vsel %vm833, %v705, %v961
  %v1090 = vsel %vm834, %v706, %v962
  %v1091 = vsel %vm835, %v707, %v963
  %v1092 = vsel %vm836, %v708, %v964
  %v1093 = vsel %vm837, %v709, %v965
  %v1094 = vsel %vm838, %v710, %v966
  %v1095 = vsel %vm839, %v711, %v967
  %v1096 = vsel %vm840, %v712, %v968
  %v1097 = vsel %vm841, %v713, %v969
  %v1098 = vsel %vm842, %v714, %v970
  %v1099 = vsel %vm843, %v715, %v971
  %v1100 = vsel %vm844, %v716, %v972
  %v1101 = vsel %vm845, %v717, %v973
  %v1102 = vsel %vm846, %v718, %v974
  %v1103 = vsel %vm847, %v719, %v975
  %v1104 = vsel %vm848, %v720, %v976
  %v1105 = vsel %vm849, %v721, %v977
  %v1106 = vsel %vm850, %v722, %v978
  %v1107 = vsel %vm851, %v723, %v979
  %v1108 = vsel %vm852, %v724, %v980
  %v1109 = vsel %vm853, %v725, %v981
  %v1110 = vsel %vm854, %v726, %v982
  %v1111 = vsel %vm855, %v727, %v983
  %v1112 = vsel %vm856, %v728, %v984
  %v1113 = vsel %vm857, %v729, %v985
  %v1114 = vsel %vm858, %v730, %v986
  %v1115 = vsel %vm859, %v731, %v987
  %v1116 = vsel %vm860, %v732, %v988
  %v1117 = vsel %vm861, %v733, %v989
  %v1118 = vsel %vm862, %v734, %v990
  %v1119 = vsel %vm863, %v735, %v991
  %v1120 = vsel %vm864, %v736, %v992
  %v1121 = vsel %vm865, %v737, %v993
  %v1122 = vld [vmem:[%s4] sm:$0x1]
  %v1124 = vlaneseq
  %v1125 = vshrl.u32 %v1124, 7
  %v1126 = vsub.s32 0, %v1125
  %v1127 = vrot.slane %v1122, %v1126
  %v1129 = vmul.f32 %v994, %v1127
  %v1130 = vmul.f32 %v995, %v1127
  %v1131 = vmul.f32 %v996, %v1127
  %v1132 = vmul.f32 %v997, %v1127
  %v1133 = vmul.f32 %v998, %v1127
  %v1134 = vmul.f32 %v999, %v1127
  %v1135 = vmul.f32 %v1000, %v1127
  %v1136 = vmul.f32 %v1001, %v1127
  %v1137 = vmul.f32 %v1002, %v1127
  %v1138 = vmul.f32 %v1003, %v1127
  %v1139 = vmul.f32 %v1004, %v1127
  %v1140 = vmul.f32 %v1005, %v1127
  %v1141 = vmul.f32 %v1006, %v1127
  %v1142 = vmul.f32 %v1007, %v1127
  %v1143 = vmul.f32 %v1008, %v1127
  %v1144 = vmul.f32 %v1009, %v1127
  %v1145 = vmul.f32 %v1010, %v1127
  %v1146 = vmul.f32 %v1011, %v1127
  %v1147 = vmul.f32 %v1012, %v1127
  %v1148 = vmul.f32 %v1013, %v1127
  %v1149 = vmul.f32 %v1014, %v1127
  %v1150 = vmul.f32 %v1015, %v1127
  %v1151 = vmul.f32 %v1016, %v1127
  %v1152 = vmul.f32 %v1017, %v1127
  %v1153 = vmul.f32 %v1018, %v1127
  %v1154 = vmul.f32 %v1019, %v1127
  %v1155 = vmul.f32 %v1020, %v1127
  %v1156 = vmul.f32 %v1021, %v1127
  %v1157 = vmul.f32 %v1022, %v1127
  %v1158 = vmul.f32 %v1023, %v1127
  %v1159 = vmul.f32 %v1024, %v1127
  %v1160 = vmul.f32 %v1025, %v1127
  %v1161 = vmul.f32 %v1026, %v1127
  %v1162 = vmul.f32 %v1027, %v1127
  %v1163 = vmul.f32 %v1028, %v1127
  %v1164 = vmul.f32 %v1029, %v1127
  %v1165 = vmul.f32 %v1030, %v1127
  %v1166 = vmul.f32 %v1031, %v1127
  %v1167 = vmul.f32 %v1032, %v1127
  %v1168 = vmul.f32 %v1033, %v1127
  %v1169 = vmul.f32 %v1034, %v1127
  %v1170 = vmul.f32 %v1035, %v1127
  %v1171 = vmul.f32 %v1036, %v1127
  %v1172 = vmul.f32 %v1037, %v1127
  %v1173 = vmul.f32 %v1038, %v1127
  %v1174 = vmul.f32 %v1039, %v1127
  %v1175 = vmul.f32 %v1040, %v1127
  %v1176 = vmul.f32 %v1041, %v1127
  %v1177 = vmul.f32 %v1042, %v1127
  %v1178 = vmul.f32 %v1043, %v1127
  %v1179 = vmul.f32 %v1044, %v1127
  %v1180 = vmul.f32 %v1045, %v1127
  %v1181 = vmul.f32 %v1046, %v1127
  %v1182 = vmul.f32 %v1047, %v1127
  %v1183 = vmul.f32 %v1048, %v1127
  %v1184 = vmul.f32 %v1049, %v1127
  %v1185 = vmul.f32 %v1050, %v1127
  %v1186 = vmul.f32 %v1051, %v1127
  %v1187 = vmul.f32 %v1052, %v1127
  %v1188 = vmul.f32 %v1053, %v1127
  %v1189 = vmul.f32 %v1054, %v1127
  %v1190 = vmul.f32 %v1055, %v1127
  %v1191 = vmul.f32 %v1056, %v1127
  %v1192 = vmul.f32 %v1057, %v1127
  %v1193 = vmul.f32 %v1058, %v1127
  %v1194 = vmul.f32 %v1059, %v1127
  %v1195 = vmul.f32 %v1060, %v1127
  %v1196 = vmul.f32 %v1061, %v1127
  %v1197 = vmul.f32 %v1062, %v1127
  %v1198 = vmul.f32 %v1063, %v1127
  %v1199 = vmul.f32 %v1064, %v1127
  %v1200 = vmul.f32 %v1065, %v1127
  %v1201 = vmul.f32 %v1066, %v1127
  %v1202 = vmul.f32 %v1067, %v1127
  %v1203 = vmul.f32 %v1068, %v1127
  %v1204 = vmul.f32 %v1069, %v1127
  %v1205 = vmul.f32 %v1070, %v1127
  %v1206 = vmul.f32 %v1071, %v1127
  %v1207 = vmul.f32 %v1072, %v1127
  %v1208 = vmul.f32 %v1073, %v1127
  %v1209 = vmul.f32 %v1074, %v1127
  %v1210 = vmul.f32 %v1075, %v1127
  %v1211 = vmul.f32 %v1076, %v1127
  %v1212 = vmul.f32 %v1077, %v1127
  %v1213 = vmul.f32 %v1078, %v1127
  %v1214 = vmul.f32 %v1079, %v1127
  %v1215 = vmul.f32 %v1080, %v1127
  %v1216 = vmul.f32 %v1081, %v1127
  %v1217 = vmul.f32 %v1082, %v1127
  %v1218 = vmul.f32 %v1083, %v1127
  %v1219 = vmul.f32 %v1084, %v1127
  %v1220 = vmul.f32 %v1085, %v1127
  %v1221 = vmul.f32 %v1086, %v1127
  %v1222 = vmul.f32 %v1087, %v1127
  %v1223 = vmul.f32 %v1088, %v1127
  %v1224 = vmul.f32 %v1089, %v1127
  %v1225 = vmul.f32 %v1090, %v1127
  %v1226 = vmul.f32 %v1091, %v1127
  %v1227 = vmul.f32 %v1092, %v1127
  %v1228 = vmul.f32 %v1093, %v1127
  %v1229 = vmul.f32 %v1094, %v1127
  %v1230 = vmul.f32 %v1095, %v1127
  %v1231 = vmul.f32 %v1096, %v1127
  %v1232 = vmul.f32 %v1097, %v1127
  %v1233 = vmul.f32 %v1098, %v1127
  %v1234 = vmul.f32 %v1099, %v1127
  %v1235 = vmul.f32 %v1100, %v1127
  %v1236 = vmul.f32 %v1101, %v1127
  %v1237 = vmul.f32 %v1102, %v1127
  %v1238 = vmul.f32 %v1103, %v1127
  %v1239 = vmul.f32 %v1104, %v1127
  %v1240 = vmul.f32 %v1105, %v1127
  %v1241 = vmul.f32 %v1106, %v1127
  %v1242 = vmul.f32 %v1107, %v1127
  %v1243 = vmul.f32 %v1108, %v1127
  %v1244 = vmul.f32 %v1109, %v1127
  %v1245 = vmul.f32 %v1110, %v1127
  %v1246 = vmul.f32 %v1111, %v1127
  %v1247 = vmul.f32 %v1112, %v1127
  %v1248 = vmul.f32 %v1113, %v1127
  %v1249 = vmul.f32 %v1114, %v1127
  %v1250 = vmul.f32 %v1115, %v1127
  %v1251 = vmul.f32 %v1116, %v1127
  %v1252 = vmul.f32 %v1117, %v1127
  %v1253 = vmul.f32 %v1118, %v1127
  %v1254 = vmul.f32 %v1119, %v1127
  %v1255 = vmul.f32 %v1120, %v1127
  %v1256 = vmul.f32 %v1121, %v1127
  %v1257 = vsel %vm88, %v1129, 0.0
  %1258 = vadd.xlane.f32.xlu0 %v1257
  %v1259 = vpop.xlane.xlu0 %1258
  %v1260 = vsel %vm88, %v1130, 0.0
  %1261 = vadd.xlane.f32.xlu0 %v1260
  %v1262 = vpop.xlane.xlu0 %1261
  %v1263 = vsel %vm88, %v1131, 0.0
  %1264 = vadd.xlane.f32.xlu0 %v1263
  %v1265 = vpop.xlane.xlu0 %1264
  %v1266 = vsel %vm88, %v1132, 0.0
  %1267 = vadd.xlane.f32.xlu0 %v1266
  %v1268 = vpop.xlane.xlu0 %1267
  %v1269 = vsel %vm88, %v1133, 0.0
  %1270 = vadd.xlane.f32.xlu0 %v1269
  %v1271 = vpop.xlane.xlu0 %1270
  %v1272 = vsel %vm88, %v1134, 0.0
  %1273 = vadd.xlane.f32.xlu0 %v1272
  %v1274 = vpop.xlane.xlu0 %1273
  %v1275 = vsel %vm88, %v1135, 0.0
  %1276 = vadd.xlane.f32.xlu0 %v1275
  %v1277 = vpop.xlane.xlu0 %1276
  %v1278 = vsel %vm88, %v1136, 0.0
  %1279 = vadd.xlane.f32.xlu0 %v1278
  %v1280 = vpop.xlane.xlu0 %1279
  %v1281 = vsel %vm88, %v1137, 0.0
  %1282 = vadd.xlane.f32.xlu0 %v1281
  %v1283 = vpop.xlane.xlu0 %1282
  %v1284 = vsel %vm88, %v1138, 0.0
  %1285 = vadd.xlane.f32.xlu0 %v1284
  %v1286 = vpop.xlane.xlu0 %1285
  %v1287 = vsel %vm88, %v1139, 0.0
  %1288 = vadd.xlane.f32.xlu0 %v1287
  %v1289 = vpop.xlane.xlu0 %1288
  %v1290 = vsel %vm88, %v1140, 0.0
  %1291 = vadd.xlane.f32.xlu0 %v1290
  %v1292 = vpop.xlane.xlu0 %1291
  %v1293 = vsel %vm88, %v1141, 0.0
  %1294 = vadd.xlane.f32.xlu0 %v1293
  %v1295 = vpop.xlane.xlu0 %1294
  %v1296 = vsel %vm88, %v1142, 0.0
  %1297 = vadd.xlane.f32.xlu0 %v1296
  %v1298 = vpop.xlane.xlu0 %1297
  %v1299 = vsel %vm88, %v1143, 0.0
  %1300 = vadd.xlane.f32.xlu0 %v1299
  %v1301 = vpop.xlane.xlu0 %1300
  %v1302 = vsel %vm88, %v1144, 0.0
  %1303 = vadd.xlane.f32.xlu0 %v1302
  %v1304 = vpop.xlane.xlu0 %1303
  %v1305 = vsel %vm88, %v1145, 0.0
  %1306 = vadd.xlane.f32.xlu0 %v1305
  %v1307 = vpop.xlane.xlu0 %1306
  %v1308 = vsel %vm88, %v1146, 0.0
  %1309 = vadd.xlane.f32.xlu0 %v1308
  %v1310 = vpop.xlane.xlu0 %1309
  %v1311 = vsel %vm88, %v1147, 0.0
  %1312 = vadd.xlane.f32.xlu0 %v1311
  %v1313 = vpop.xlane.xlu0 %1312
  %v1314 = vsel %vm88, %v1148, 0.0
  %1315 = vadd.xlane.f32.xlu0 %v1314
  %v1316 = vpop.xlane.xlu0 %1315
  %v1317 = vsel %vm88, %v1149, 0.0
  %1318 = vadd.xlane.f32.xlu0 %v1317
  %v1319 = vpop.xlane.xlu0 %1318
  %v1320 = vsel %vm88, %v1150, 0.0
  %1321 = vadd.xlane.f32.xlu0 %v1320
  %v1322 = vpop.xlane.xlu0 %1321
  %v1323 = vsel %vm88, %v1151, 0.0
  %1324 = vadd.xlane.f32.xlu0 %v1323
  %v1325 = vpop.xlane.xlu0 %1324
  %v1326 = vsel %vm88, %v1152, 0.0
  %1327 = vadd.xlane.f32.xlu0 %v1326
  %v1328 = vpop.xlane.xlu0 %1327
  %v1329 = vsel %vm88, %v1153, 0.0
  %1330 = vadd.xlane.f32.xlu0 %v1329
  %v1331 = vpop.xlane.xlu0 %1330
  %v1332 = vsel %vm88, %v1154, 0.0
  %1333 = vadd.xlane.f32.xlu0 %v1332
  %v1334 = vpop.xlane.xlu0 %1333
  %v1335 = vsel %vm88, %v1155, 0.0
  %1336 = vadd.xlane.f32.xlu0 %v1335
  %v1337 = vpop.xlane.xlu0 %1336
  %v1338 = vsel %vm88, %v1156, 0.0
  %1339 = vadd.xlane.f32.xlu0 %v1338
  %v1340 = vpop.xlane.xlu0 %1339
  %v1341 = vsel %vm88, %v1157, 0.0
  %1342 = vadd.xlane.f32.xlu0 %v1341
  %v1343 = vpop.xlane.xlu0 %1342
  %v1344 = vsel %vm88, %v1158, 0.0
  %1345 = vadd.xlane.f32.xlu0 %v1344
  %v1346 = vpop.xlane.xlu0 %1345
  %v1347 = vsel %vm88, %v1159, 0.0
  %1348 = vadd.xlane.f32.xlu0 %v1347
  %v1349 = vpop.xlane.xlu0 %1348
  %v1350 = vsel %vm88, %v1160, 0.0
  %1351 = vadd.xlane.f32.xlu0 %v1350
  %v1352 = vpop.xlane.xlu0 %1351
  %v1353 = vsel %vm88, %v1161, 0.0
  %1354 = vadd.xlane.f32.xlu0 %v1353
  %v1355 = vpop.xlane.xlu0 %1354
  %v1356 = vsel %vm88, %v1162, 0.0
  %1357 = vadd.xlane.f32.xlu0 %v1356
  %v1358 = vpop.xlane.xlu0 %1357
  %v1359 = vsel %vm88, %v1163, 0.0
  %1360 = vadd.xlane.f32.xlu0 %v1359
  %v1361 = vpop.xlane.xlu0 %1360
  %v1362 = vsel %vm88, %v1164, 0.0
  %1363 = vadd.xlane.f32.xlu0 %v1362
  %v1364 = vpop.xlane.xlu0 %1363
  %v1365 = vsel %vm88, %v1165, 0.0
  %1366 = vadd.xlane.f32.xlu0 %v1365
  %v1367 = vpop.xlane.xlu0 %1366
  %v1368 = vsel %vm88, %v1166, 0.0
  %1369 = vadd.xlane.f32.xlu0 %v1368
  %v1370 = vpop.xlane.xlu0 %1369
  %v1371 = vsel %vm88, %v1167, 0.0
  %1372 = vadd.xlane.f32.xlu0 %v1371
  %v1373 = vpop.xlane.xlu0 %1372
  %v1374 = vsel %vm88, %v1168, 0.0
  %1375 = vadd.xlane.f32.xlu0 %v1374
  %v1376 = vpop.xlane.xlu0 %1375
  %v1377 = vsel %vm88, %v1169, 0.0
  %1378 = vadd.xlane.f32.xlu0 %v1377
  %v1379 = vpop.xlane.xlu0 %1378
  %v1380 = vsel %vm88, %v1170, 0.0
  %1381 = vadd.xlane.f32.xlu0 %v1380
  %v1382 = vpop.xlane.xlu0 %1381
  %v1383 = vsel %vm88, %v1171, 0.0
  %1384 = vadd.xlane.f32.xlu0 %v1383
  %v1385 = vpop.xlane.xlu0 %1384
  %v1386 = vsel %vm88, %v1172, 0.0
  %1387 = vadd.xlane.f32.xlu0 %v1386
  %v1388 = vpop.xlane.xlu0 %1387
  %v1389 = vsel %vm88, %v1173, 0.0
  %1390 = vadd.xlane.f32.xlu0 %v1389
  %v1391 = vpop.xlane.xlu0 %1390
  %v1392 = vsel %vm88, %v1174, 0.0
  %1393 = vadd.xlane.f32.xlu0 %v1392
  %v1394 = vpop.xlane.xlu0 %1393
  %v1395 = vsel %vm88, %v1175, 0.0
  %1396 = vadd.xlane.f32.xlu0 %v1395
  %v1397 = vpop.xlane.xlu0 %1396
  %v1398 = vsel %vm88, %v1176, 0.0
  %1399 = vadd.xlane.f32.xlu0 %v1398
  %v1400 = vpop.xlane.xlu0 %1399
  %v1401 = vsel %vm88, %v1177, 0.0
  %1402 = vadd.xlane.f32.xlu0 %v1401
  %v1403 = vpop.xlane.xlu0 %1402
  %v1404 = vsel %vm88, %v1178, 0.0
  %1405 = vadd.xlane.f32.xlu0 %v1404
  %v1406 = vpop.xlane.xlu0 %1405
  %v1407 = vsel %vm88, %v1179, 0.0
  %1408 = vadd.xlane.f32.xlu0 %v1407
  %v1409 = vpop.xlane.xlu0 %1408
  %v1410 = vsel %vm88, %v1180, 0.0
  %1411 = vadd.xlane.f32.xlu0 %v1410
  %v1412 = vpop.xlane.xlu0 %1411
  %v1413 = vsel %vm88, %v1181, 0.0
  %1414 = vadd.xlane.f32.xlu0 %v1413
  %v1415 = vpop.xlane.xlu0 %1414
  %v1416 = vsel %vm88, %v1182, 0.0
  %1417 = vadd.xlane.f32.xlu0 %v1416
  %v1418 = vpop.xlane.xlu0 %1417
  %v1419 = vsel %vm88, %v1183, 0.0
  %1420 = vadd.xlane.f32.xlu0 %v1419
  %v1421 = vpop.xlane.xlu0 %1420
  %v1422 = vsel %vm88, %v1184, 0.0
  %1423 = vadd.xlane.f32.xlu0 %v1422
  %v1424 = vpop.xlane.xlu0 %1423
  %v1425 = vsel %vm88, %v1185, 0.0
  %1426 = vadd.xlane.f32.xlu0 %v1425
  %v1427 = vpop.xlane.xlu0 %1426
  %v1428 = vsel %vm88, %v1186, 0.0
  %1429 = vadd.xlane.f32.xlu0 %v1428
  %v1430 = vpop.xlane.xlu0 %1429
  %v1431 = vsel %vm88, %v1187, 0.0
  %1432 = vadd.xlane.f32.xlu0 %v1431
  %v1433 = vpop.xlane.xlu0 %1432
  %v1434 = vsel %vm88, %v1188, 0.0
  %1435 = vadd.xlane.f32.xlu0 %v1434
  %v1436 = vpop.xlane.xlu0 %1435
  %v1437 = vsel %vm88, %v1189, 0.0
  %1438 = vadd.xlane.f32.xlu0 %v1437
  %v1439 = vpop.xlane.xlu0 %1438
  %v1440 = vsel %vm88, %v1190, 0.0
  %1441 = vadd.xlane.f32.xlu0 %v1440
  %v1442 = vpop.xlane.xlu0 %1441
  %v1443 = vsel %vm88, %v1191, 0.0
  %1444 = vadd.xlane.f32.xlu0 %v1443
  %v1445 = vpop.xlane.xlu0 %1444
  %v1446 = vsel %vm88, %v1192, 0.0
  %1447 = vadd.xlane.f32.xlu0 %v1446
  %v1448 = vpop.xlane.xlu0 %1447
  %v1449 = vsel %vm88, %v1193, 0.0
  %1450 = vadd.xlane.f32.xlu0 %v1449
  %v1451 = vpop.xlane.xlu0 %1450
  %v1452 = vsel %vm88, %v1194, 0.0
  %1453 = vadd.xlane.f32.xlu0 %v1452
  %v1454 = vpop.xlane.xlu0 %1453
  %v1455 = vsel %vm88, %v1195, 0.0
  %1456 = vadd.xlane.f32.xlu0 %v1455
  %v1457 = vpop.xlane.xlu0 %1456
  %v1458 = vsel %vm88, %v1196, 0.0
  %1459 = vadd.xlane.f32.xlu0 %v1458
  %v1460 = vpop.xlane.xlu0 %1459
  %v1461 = vsel %vm88, %v1197, 0.0
  %1462 = vadd.xlane.f32.xlu0 %v1461
  %v1463 = vpop.xlane.xlu0 %1462
  %v1464 = vsel %vm88, %v1198, 0.0
  %1465 = vadd.xlane.f32.xlu0 %v1464
  %v1466 = vpop.xlane.xlu0 %1465
  %v1467 = vsel %vm88, %v1199, 0.0
  %1468 = vadd.xlane.f32.xlu0 %v1467
  %v1469 = vpop.xlane.xlu0 %1468
  %v1470 = vsel %vm88, %v1200, 0.0
  %1471 = vadd.xlane.f32.xlu0 %v1470
  %v1472 = vpop.xlane.xlu0 %1471
  %v1473 = vsel %vm88, %v1201, 0.0
  %1474 = vadd.xlane.f32.xlu0 %v1473
  %v1475 = vpop.xlane.xlu0 %1474
  %v1476 = vsel %vm88, %v1202, 0.0
  %1477 = vadd.xlane.f32.xlu0 %v1476
  %v1478 = vpop.xlane.xlu0 %1477
  %v1479 = vsel %vm88, %v1203, 0.0
  %1480 = vadd.xlane.f32.xlu0 %v1479
  %v1481 = vpop.xlane.xlu0 %1480
  %v1482 = vsel %vm88, %v1204, 0.0
  %1483 = vadd.xlane.f32.xlu0 %v1482
  %v1484 = vpop.xlane.xlu0 %1483
  %v1485 = vsel %vm88, %v1205, 0.0
  %1486 = vadd.xlane.f32.xlu0 %v1485
  %v1487 = vpop.xlane.xlu0 %1486
  %v1488 = vsel %vm88, %v1206, 0.0
  %1489 = vadd.xlane.f32.xlu0 %v1488
  %v1490 = vpop.xlane.xlu0 %1489
  %v1491 = vsel %vm88, %v1207, 0.0
  %1492 = vadd.xlane.f32.xlu0 %v1491
  %v1493 = vpop.xlane.xlu0 %1492
  %v1494 = vsel %vm88, %v1208, 0.0
  %1495 = vadd.xlane.f32.xlu0 %v1494
  %v1496 = vpop.xlane.xlu0 %1495
  %v1497 = vsel %vm88, %v1209, 0.0
  %1498 = vadd.xlane.f32.xlu0 %v1497
  %v1499 = vpop.xlane.xlu0 %1498
  %v1500 = vsel %vm88, %v1210, 0.0
  %1501 = vadd.xlane.f32.xlu0 %v1500
  %v1502 = vpop.xlane.xlu0 %1501
  %v1503 = vsel %vm88, %v1211, 0.0
  %1504 = vadd.xlane.f32.xlu0 %v1503
  %v1505 = vpop.xlane.xlu0 %1504
  %v1506 = vsel %vm88, %v1212, 0.0
  %1507 = vadd.xlane.f32.xlu0 %v1506
  %v1508 = vpop.xlane.xlu0 %1507
  %v1509 = vsel %vm88, %v1213, 0.0
  %1510 = vadd.xlane.f32.xlu0 %v1509
  %v1511 = vpop.xlane.xlu0 %1510
  %v1512 = vsel %vm88, %v1214, 0.0
  %1513 = vadd.xlane.f32.xlu0 %v1512
  %v1514 = vpop.xlane.xlu0 %1513
  %v1515 = vsel %vm88, %v1215, 0.0
  %1516 = vadd.xlane.f32.xlu0 %v1515
  %v1517 = vpop.xlane.xlu0 %1516
  %v1518 = vsel %vm88, %v1216, 0.0
  %1519 = vadd.xlane.f32.xlu0 %v1518
  %v1520 = vpop.xlane.xlu0 %1519
  %v1521 = vsel %vm88, %v1217, 0.0
  %1522 = vadd.xlane.f32.xlu0 %v1521
  %v1523 = vpop.xlane.xlu0 %1522
  %v1524 = vsel %vm88, %v1218, 0.0
  %1525 = vadd.xlane.f32.xlu0 %v1524
  %v1526 = vpop.xlane.xlu0 %1525
  %v1527 = vsel %vm88, %v1219, 0.0
  %1528 = vadd.xlane.f32.xlu0 %v1527
  %v1529 = vpop.xlane.xlu0 %1528
  %v1530 = vsel %vm88, %v1220, 0.0
  %1531 = vadd.xlane.f32.xlu0 %v1530
  %v1532 = vpop.xlane.xlu0 %1531
  %v1533 = vsel %vm88, %v1221, 0.0
  %1534 = vadd.xlane.f32.xlu0 %v1533
  %v1535 = vpop.xlane.xlu0 %1534
  %v1536 = vsel %vm88, %v1222, 0.0
  %1537 = vadd.xlane.f32.xlu0 %v1536
  %v1538 = vpop.xlane.xlu0 %1537
  %v1539 = vsel %vm88, %v1223, 0.0
  %1540 = vadd.xlane.f32.xlu0 %v1539
  %v1541 = vpop.xlane.xlu0 %1540
  %v1542 = vsel %vm88, %v1224, 0.0
  %1543 = vadd.xlane.f32.xlu0 %v1542
  %v1544 = vpop.xlane.xlu0 %1543
  %v1545 = vsel %vm88, %v1225, 0.0
  %1546 = vadd.xlane.f32.xlu0 %v1545
  %v1547 = vpop.xlane.xlu0 %1546
  %v1548 = vsel %vm88, %v1226, 0.0
  %1549 = vadd.xlane.f32.xlu0 %v1548
  %v1550 = vpop.xlane.xlu0 %1549
  %v1551 = vsel %vm88, %v1227, 0.0
  %1552 = vadd.xlane.f32.xlu0 %v1551
  %v1553 = vpop.xlane.xlu0 %1552
  %v1554 = vsel %vm88, %v1228, 0.0
  %1555 = vadd.xlane.f32.xlu0 %v1554
  %v1556 = vpop.xlane.xlu0 %1555
  %v1557 = vsel %vm88, %v1229, 0.0
  %1558 = vadd.xlane.f32.xlu0 %v1557
  %v1559 = vpop.xlane.xlu0 %1558
  %v1560 = vsel %vm88, %v1230, 0.0
  %1561 = vadd.xlane.f32.xlu0 %v1560
  %v1562 = vpop.xlane.xlu0 %1561
  %v1563 = vsel %vm88, %v1231, 0.0
  %1564 = vadd.xlane.f32.xlu0 %v1563
  %v1565 = vpop.xlane.xlu0 %1564
  %v1566 = vsel %vm88, %v1232, 0.0
  %1567 = vadd.xlane.f32.xlu0 %v1566
  %v1568 = vpop.xlane.xlu0 %1567
  %v1569 = vsel %vm88, %v1233, 0.0
  %1570 = vadd.xlane.f32.xlu0 %v1569
  %v1571 = vpop.xlane.xlu0 %1570
  %v1572 = vsel %vm88, %v1234, 0.0
  %1573 = vadd.xlane.f32.xlu0 %v1572
  %v1574 = vpop.xlane.xlu0 %1573
  %v1575 = vsel %vm88, %v1235, 0.0
  %1576 = vadd.xlane.f32.xlu0 %v1575
  %v1577 = vpop.xlane.xlu0 %1576
  %v1578 = vsel %vm88, %v1236, 0.0
  %1579 = vadd.xlane.f32.xlu0 %v1578
  %v1580 = vpop.xlane.xlu0 %1579
  %v1581 = vsel %vm88, %v1237, 0.0
  %1582 = vadd.xlane.f32.xlu0 %v1581
  %v1583 = vpop.xlane.xlu0 %1582
  %v1584 = vsel %vm88, %v1238, 0.0
  %1585 = vadd.xlane.f32.xlu0 %v1584
  %v1586 = vpop.xlane.xlu0 %1585
  %v1587 = vsel %vm88, %v1239, 0.0
  %1588 = vadd.xlane.f32.xlu0 %v1587
  %v1589 = vpop.xlane.xlu0 %1588
  %v1590 = vsel %vm88, %v1240, 0.0
  %1591 = vadd.xlane.f32.xlu0 %v1590
  %v1592 = vpop.xlane.xlu0 %1591
  %v1593 = vsel %vm88, %v1241, 0.0
  %1594 = vadd.xlane.f32.xlu0 %v1593
  %v1595 = vpop.xlane.xlu0 %1594
  %v1596 = vsel %vm88, %v1242, 0.0
  %1597 = vadd.xlane.f32.xlu0 %v1596
  %v1598 = vpop.xlane.xlu0 %1597
  %v1599 = vsel %vm88, %v1243, 0.0
  %1600 = vadd.xlane.f32.xlu0 %v1599
  %v1601 = vpop.xlane.xlu0 %1600
  %v1602 = vsel %vm88, %v1244, 0.0
  %1603 = vadd.xlane.f32.xlu0 %v1602
  %v1604 = vpop.xlane.xlu0 %1603
  %v1605 = vsel %vm88, %v1245, 0.0
  %1606 = vadd.xlane.f32.xlu0 %v1605
  %v1607 = vpop.xlane.xlu0 %1606
  %v1608 = vsel %vm88, %v1246, 0.0
  %1609 = vadd.xlane.f32.xlu0 %v1608
  %v1610 = vpop.xlane.xlu0 %1609
  %v1611 = vsel %vm88, %v1247, 0.0
  %1612 = vadd.xlane.f32.xlu0 %v1611
  %v1613 = vpop.xlane.xlu0 %1612
  %v1614 = vsel %vm88, %v1248, 0.0
  %1615 = vadd.xlane.f32.xlu0 %v1614
  %v1616 = vpop.xlane.xlu0 %1615
  %v1617 = vsel %vm88, %v1249, 0.0
  %1618 = vadd.xlane.f32.xlu0 %v1617
  %v1619 = vpop.xlane.xlu0 %1618
  %v1620 = vsel %vm88, %v1250, 0.0
  %1621 = vadd.xlane.f32.xlu0 %v1620
  %v1622 = vpop.xlane.xlu0 %1621
  %v1623 = vsel %vm88, %v1251, 0.0
  %1624 = vadd.xlane.f32.xlu0 %v1623
  %v1625 = vpop.xlane.xlu0 %1624
  %v1626 = vsel %vm88, %v1252, 0.0
  %1627 = vadd.xlane.f32.xlu0 %v1626
  %v1628 = vpop.xlane.xlu0 %1627
  %v1629 = vsel %vm88, %v1253, 0.0
  %1630 = vadd.xlane.f32.xlu0 %v1629
  %v1631 = vpop.xlane.xlu0 %1630
  %v1632 = vsel %vm88, %v1254, 0.0
  %1633 = vadd.xlane.f32.xlu0 %v1632
  %v1634 = vpop.xlane.xlu0 %1633
  %v1635 = vsel %vm88, %v1255, 0.0
  %1636 = vadd.xlane.f32.xlu0 %v1635
  %v1637 = vpop.xlane.xlu0 %1636
  %v1638 = vsel %vm88, %v1256, 0.0
  %1639 = vadd.xlane.f32.xlu0 %v1638
  %v1640 = vpop.xlane.xlu0 %1639
  %vm1641 = vcmp.gt.f32.partialorder %v69, 0.0
  %vm1642 = vcmp.gt.f32.partialorder %v70, 0.0
  %vm1643 = vcmp.gt.f32.partialorder %v71, 0.0
  %vm1644 = vcmp.gt.f32.partialorder %v72, 0.0
  %v1773 = vlaneseq
  %v1774 = vand.u32 %v1773, 127
  %v1775 = vlaneseq
  %v1776 = vshrl.u32 %v1775, 7
  %v1777 = vsub.s32 %v1774, %v1776
  %v1778 = vrot.slane %v1259, %v1777
  %v1779 = vadd.s32 %v1774, 4294967288
  %v1780 = vlaneseq
  %v1781 = vshrl.u32 %v1780, 7
  %v1782 = vsub.s32 %v1779, %v1781
  %v1783 = vrot.slane %v1262, %v1782
  %vm1784 = vcmask 130112
  %v1785 = vsel %vm1784, %v1783, %v1778
  %v1786 = vadd.s32 %v1774, 4294967280
  %v1787 = vlaneseq
  %v1788 = vshrl.u32 %v1787, 7
  %v1789 = vsub.s32 %v1786, %v1788
  %v1790 = vrot.slane %v1265, %v1789
  %vm1791 = vcmask 195712
  %v1792 = vsel %vm1791, %v1790, %v1785
  %v1793 = vadd.s32 %v1774, 4294967272
  %v1794 = vlaneseq
  %v1795 = vshrl.u32 %v1794, 7
  %v1796 = vsub.s32 %v1793, %v1795
  %v1797 = vrot.slane %v1268, %v1796
  %vm1798 = vcmask 261312
  %v1799 = vsel %vm1798, %v1797, %v1792
  %v1800 = vlaneseq
  %v1801 = vshrl.u32 %v1800, 7
  %v1802 = vsub.s32 %v1774, %v1801
  %v1803 = vrot.slane %v1271, %v1802
  %v1804 = vlaneseq
  %v1805 = vshrl.u32 %v1804, 7
  %v1806 = vsub.s32 %v1779, %v1805
  %v1807 = vrot.slane %v1274, %v1806
  %v1808 = vsel %vm1784, %v1807, %v1803
  %v1809 = vlaneseq
  %v1810 = vshrl.u32 %v1809, 7
  %v1811 = vsub.s32 %v1786, %v1810
  %v1812 = vrot.slane %v1277, %v1811
  %v1813 = vsel %vm1791, %v1812, %v1808
  %v1814 = vlaneseq
  %v1815 = vshrl.u32 %v1814, 7
  %v1816 = vsub.s32 %v1793, %v1815
  %v1817 = vrot.slane %v1280, %v1816
  %v1818 = vsel %vm1798, %v1817, %v1813
  %v1819 = vlaneseq
  %v1820 = vshrl.u32 %v1819, 7
  %v1821 = vsub.s32 %v1774, %v1820
  %v1822 = vrot.slane %v1283, %v1821
  %v1823 = vlaneseq
  %v1824 = vshrl.u32 %v1823, 7
  %v1825 = vsub.s32 %v1779, %v1824
  %v1826 = vrot.slane %v1286, %v1825
  %v1827 = vsel %vm1784, %v1826, %v1822
  %v1828 = vlaneseq
  %v1829 = vshrl.u32 %v1828, 7
  %v1830 = vsub.s32 %v1786, %v1829
  %v1831 = vrot.slane %v1289, %v1830
  %v1832 = vsel %vm1791, %v1831, %v1827
  %v1833 = vlaneseq
  %v1834 = vshrl.u32 %v1833, 7
  %v1835 = vsub.s32 %v1793, %v1834
  %v1836 = vrot.slane %v1292, %v1835
  %v1837 = vsel %vm1798, %v1836, %v1832
  %v1838 = vlaneseq
  %v1839 = vshrl.u32 %v1838, 7
  %v1840 = vsub.s32 %v1774, %v1839
  %v1841 = vrot.slane %v1295, %v1840
  %v1842 = vlaneseq
  %v1843 = vshrl.u32 %v1842, 7
  %v1844 = vsub.s32 %v1779, %v1843
  %v1845 = vrot.slane %v1298, %v1844
  %v1846 = vsel %vm1784, %v1845, %v1841
  %v1847 = vlaneseq
  %v1848 = vshrl.u32 %v1847, 7
  %v1849 = vsub.s32 %v1786, %v1848
  %v1850 = vrot.slane %v1301, %v1849
  %v1851 = vsel %vm1791, %v1850, %v1846
  %v1852 = vlaneseq
  %v1853 = vshrl.u32 %v1852, 7
  %v1854 = vsub.s32 %v1793, %v1853
  %v1855 = vrot.slane %v1304, %v1854
  %v1856 = vsel %vm1798, %v1855, %v1851
  %v1857 = vlaneseq
  %v1858 = vshrl.u32 %v1857, 7
  %v1859 = vsub.s32 %v1774, %v1858
  %v1860 = vrot.slane %v1307, %v1859
  %v1861 = vlaneseq
  %v1862 = vshrl.u32 %v1861, 7
  %v1863 = vsub.s32 %v1779, %v1862
  %v1864 = vrot.slane %v1310, %v1863
  %v1865 = vsel %vm1784, %v1864, %v1860
  %v1866 = vlaneseq
  %v1867 = vshrl.u32 %v1866, 7
  %v1868 = vsub.s32 %v1786, %v1867
  %v1869 = vrot.slane %v1313, %v1868
  %v1870 = vsel %vm1791, %v1869, %v1865
  %v1871 = vlaneseq
  %v1872 = vshrl.u32 %v1871, 7
  %v1873 = vsub.s32 %v1793, %v1872
  %v1874 = vrot.slane %v1316, %v1873
  %v1875 = vsel %vm1798, %v1874, %v1870
  %v1876 = vlaneseq
  %v1877 = vshrl.u32 %v1876, 7
  %v1878 = vsub.s32 %v1774, %v1877
  %v1879 = vrot.slane %v1319, %v1878
  %v1880 = vlaneseq
  %v1881 = vshrl.u32 %v1880, 7
  %v1882 = vsub.s32 %v1779, %v1881
  %v1883 = vrot.slane %v1322, %v1882
  %v1884 = vsel %vm1784, %v1883, %v1879
  %v1885 = vlaneseq
  %v1886 = vshrl.u32 %v1885, 7
  %v1887 = vsub.s32 %v1786, %v1886
  %v1888 = vrot.slane %v1325, %v1887
  %v1889 = vsel %vm1791, %v1888, %v1884
  %v1890 = vlaneseq
  %v1891 = vshrl.u32 %v1890, 7
  %v1892 = vsub.s32 %v1793, %v1891
  %v1893 = vrot.slane %v1328, %v1892
  %v1894 = vsel %vm1798, %v1893, %v1889
  %v1895 = vlaneseq
  %v1896 = vshrl.u32 %v1895, 7
  %v1897 = vsub.s32 %v1774, %v1896
  %v1898 = vrot.slane %v1331, %v1897
  %v1899 = vlaneseq
  %v1900 = vshrl.u32 %v1899, 7
  %v1901 = vsub.s32 %v1779, %v1900
  %v1902 = vrot.slane %v1334, %v1901
  %v1903 = vsel %vm1784, %v1902, %v1898
  %v1904 = vlaneseq
  %v1905 = vshrl.u32 %v1904, 7
  %v1906 = vsub.s32 %v1786, %v1905
  %v1907 = vrot.slane %v1337, %v1906
  %v1908 = vsel %vm1791, %v1907, %v1903
  %v1909 = vlaneseq
  %v1910 = vshrl.u32 %v1909, 7
  %v1911 = vsub.s32 %v1793, %v1910
  %v1912 = vrot.slane %v1340, %v1911
  %v1913 = vsel %vm1798, %v1912, %v1908
  %v1914 = vlaneseq
  %v1915 = vshrl.u32 %v1914, 7
  %v1916 = vsub.s32 %v1774, %v1915
  %v1917 = vrot.slane %v1343, %v1916
  %v1918 = vlaneseq
  %v1919 = vshrl.u32 %v1918, 7
  %v1920 = vsub.s32 %v1779, %v1919
  %v1921 = vrot.slane %v1346, %v1920
  %v1922 = vsel %vm1784, %v1921, %v1917
  %v1923 = vlaneseq
  %v1924 = vshrl.u32 %v1923, 7
  %v1925 = vsub.s32 %v1786, %v1924
  %v1926 = vrot.slane %v1349, %v1925
  %v1927 = vsel %vm1791, %v1926, %v1922
  %v1928 = vlaneseq
  %v1929 = vshrl.u32 %v1928, 7
  %v1930 = vsub.s32 %v1793, %v1929
  %v1931 = vrot.slane %v1352, %v1930
  %v1932 = vsel %vm1798, %v1931, %v1927
  %v1933 = vlaneseq
  %v1934 = vshrl.u32 %v1933, 7
  %v1935 = vsub.s32 %v1774, %v1934
  %v1936 = vrot.slane %v1355, %v1935
  %v1937 = vlaneseq
  %v1938 = vshrl.u32 %v1937, 7
  %v1939 = vsub.s32 %v1779, %v1938
  %v1940 = vrot.slane %v1358, %v1939
  %v1941 = vsel %vm1784, %v1940, %v1936
  %v1942 = vlaneseq
  %v1943 = vshrl.u32 %v1942, 7
  %v1944 = vsub.s32 %v1786, %v1943
  %v1945 = vrot.slane %v1361, %v1944
  %v1946 = vsel %vm1791, %v1945, %v1941
  %v1947 = vlaneseq
  %v1948 = vshrl.u32 %v1947, 7
  %v1949 = vsub.s32 %v1793, %v1948
  %v1950 = vrot.slane %v1364, %v1949
  %v1951 = vsel %vm1798, %v1950, %v1946
  %v1952 = vlaneseq
  %v1953 = vshrl.u32 %v1952, 7
  %v1954 = vsub.s32 %v1774, %v1953
  %v1955 = vrot.slane %v1367, %v1954
  %v1956 = vlaneseq
  %v1957 = vshrl.u32 %v1956, 7
  %v1958 = vsub.s32 %v1779, %v1957
  %v1959 = vrot.slane %v1370, %v1958
  %v1960 = vsel %vm1784, %v1959, %v1955
  %v1961 = vlaneseq
  %v1962 = vshrl.u32 %v1961, 7
  %v1963 = vsub.s32 %v1786, %v1962
  %v1964 = vrot.slane %v1373, %v1963
  %v1965 = vsel %vm1791, %v1964, %v1960
  %v1966 = vlaneseq
  %v1967 = vshrl.u32 %v1966, 7
  %v1968 = vsub.s32 %v1793, %v1967
  %v1969 = vrot.slane %v1376, %v1968
  %v1970 = vsel %vm1798, %v1969, %v1965
  %v1971 = vlaneseq
  %v1972 = vshrl.u32 %v1971, 7
  %v1973 = vsub.s32 %v1774, %v1972
  %v1974 = vrot.slane %v1379, %v1973
  %v1975 = vlaneseq
  %v1976 = vshrl.u32 %v1975, 7
  %v1977 = vsub.s32 %v1779, %v1976
  %v1978 = vrot.slane %v1382, %v1977
  %v1979 = vsel %vm1784, %v1978, %v1974
  %v1980 = vlaneseq
  %v1981 = vshrl.u32 %v1980, 7
  %v1982 = vsub.s32 %v1786, %v1981
  %v1983 = vrot.slane %v1385, %v1982
  %v1984 = vsel %vm1791, %v1983, %v1979
  %v1985 = vlaneseq
  %v1986 = vshrl.u32 %v1985, 7
  %v1987 = vsub.s32 %v1793, %v1986
  %v1988 = vrot.slane %v1388, %v1987
  %v1989 = vsel %vm1798, %v1988, %v1984
  %v1990 = vlaneseq
  %v1991 = vshrl.u32 %v1990, 7
  %v1992 = vsub.s32 %v1774, %v1991
  %v1993 = vrot.slane %v1391, %v1992
  %v1994 = vlaneseq
  %v1995 = vshrl.u32 %v1994, 7
  %v1996 = vsub.s32 %v1779, %v1995
  %v1997 = vrot.slane %v1394, %v1996
  %v1998 = vsel %vm1784, %v1997, %v1993
  %v1999 = vlaneseq
  %v2000 = vshrl.u32 %v1999, 7
  %v2001 = vsub.s32 %v1786, %v2000
  %v2002 = vrot.slane %v1397, %v2001
  %v2003 = vsel %vm1791, %v2002, %v1998
  %v2004 = vlaneseq
  %v2005 = vshrl.u32 %v2004, 7
  %v2006 = vsub.s32 %v1793, %v2005
  %v2007 = vrot.slane %v1400, %v2006
  %v2008 = vsel %vm1798, %v2007, %v2003
  %v2009 = vlaneseq
  %v2010 = vshrl.u32 %v2009, 7
  %v2011 = vsub.s32 %v1774, %v2010
  %v2012 = vrot.slane %v1403, %v2011
  %v2013 = vlaneseq
  %v2014 = vshrl.u32 %v2013, 7
  %v2015 = vsub.s32 %v1779, %v2014
  %v2016 = vrot.slane %v1406, %v2015
  %v2017 = vsel %vm1784, %v2016, %v2012
  %v2018 = vlaneseq
  %v2019 = vshrl.u32 %v2018, 7
  %v2020 = vsub.s32 %v1786, %v2019
  %v2021 = vrot.slane %v1409, %v2020
  %v2022 = vsel %vm1791, %v2021, %v2017
  %v2023 = vlaneseq
  %v2024 = vshrl.u32 %v2023, 7
  %v2025 = vsub.s32 %v1793, %v2024
  %v2026 = vrot.slane %v1412, %v2025
  %v2027 = vsel %vm1798, %v2026, %v2022
  %v2028 = vlaneseq
  %v2029 = vshrl.u32 %v2028, 7
  %v2030 = vsub.s32 %v1774, %v2029
  %v2031 = vrot.slane %v1415, %v2030
  %v2032 = vlaneseq
  %v2033 = vshrl.u32 %v2032, 7
  %v2034 = vsub.s32 %v1779, %v2033
  %v2035 = vrot.slane %v1418, %v2034
  %v2036 = vsel %vm1784, %v2035, %v2031
  %v2037 = vlaneseq
  %v2038 = vshrl.u32 %v2037, 7
  %v2039 = vsub.s32 %v1786, %v2038
  %v2040 = vrot.slane %v1421, %v2039
  %v2041 = vsel %vm1791, %v2040, %v2036
  %v2042 = vlaneseq
  %v2043 = vshrl.u32 %v2042, 7
  %v2044 = vsub.s32 %v1793, %v2043
  %v2045 = vrot.slane %v1424, %v2044
  %v2046 = vsel %vm1798, %v2045, %v2041
  %v2047 = vlaneseq
  %v2048 = vshrl.u32 %v2047, 7
  %v2049 = vsub.s32 %v1774, %v2048
  %v2050 = vrot.slane %v1427, %v2049
  %v2051 = vlaneseq
  %v2052 = vshrl.u32 %v2051, 7
  %v2053 = vsub.s32 %v1779, %v2052
  %v2054 = vrot.slane %v1430, %v2053
  %v2055 = vsel %vm1784, %v2054, %v2050
  %v2056 = vlaneseq
  %v2057 = vshrl.u32 %v2056, 7
  %v2058 = vsub.s32 %v1786, %v2057
  %v2059 = vrot.slane %v1433, %v2058
  %v2060 = vsel %vm1791, %v2059, %v2055
  %v2061 = vlaneseq
  %v2062 = vshrl.u32 %v2061, 7
  %v2063 = vsub.s32 %v1793, %v2062
  %v2064 = vrot.slane %v1436, %v2063
  %v2065 = vsel %vm1798, %v2064, %v2060
  %v2066 = vlaneseq
  %v2067 = vshrl.u32 %v2066, 7
  %v2068 = vsub.s32 %v1774, %v2067
  %v2069 = vrot.slane %v1439, %v2068
  %v2070 = vlaneseq
  %v2071 = vshrl.u32 %v2070, 7
  %v2072 = vsub.s32 %v1779, %v2071
  %v2073 = vrot.slane %v1442, %v2072
  %v2074 = vsel %vm1784, %v2073, %v2069
  %v2075 = vlaneseq
  %v2076 = vshrl.u32 %v2075, 7
  %v2077 = vsub.s32 %v1786, %v2076
  %v2078 = vrot.slane %v1445, %v2077
  %v2079 = vsel %vm1791, %v2078, %v2074
  %v2080 = vlaneseq
  %v2081 = vshrl.u32 %v2080, 7
  %v2082 = vsub.s32 %v1793, %v2081
  %v2083 = vrot.slane %v1448, %v2082
  %v2084 = vsel %vm1798, %v2083, %v2079
  %v2085 = vlaneseq
  %v2086 = vshrl.u32 %v2085, 7
  %v2087 = vsub.s32 %v1774, %v2086
  %v2088 = vrot.slane %v1451, %v2087
  %v2089 = vlaneseq
  %v2090 = vshrl.u32 %v2089, 7
  %v2091 = vsub.s32 %v1779, %v2090
  %v2092 = vrot.slane %v1454, %v2091
  %v2093 = vsel %vm1784, %v2092, %v2088
  %v2094 = vlaneseq
  %v2095 = vshrl.u32 %v2094, 7
  %v2096 = vsub.s32 %v1786, %v2095
  %v2097 = vrot.slane %v1457, %v2096
  %v2098 = vsel %vm1791, %v2097, %v2093
  %v2099 = vlaneseq
  %v2100 = vshrl.u32 %v2099, 7
  %v2101 = vsub.s32 %v1793, %v2100
  %v2102 = vrot.slane %v1460, %v2101
  %v2103 = vsel %vm1798, %v2102, %v2098
  %v2104 = vlaneseq
  %v2105 = vshrl.u32 %v2104, 7
  %v2106 = vsub.s32 %v1774, %v2105
  %v2107 = vrot.slane %v1463, %v2106
  %v2108 = vlaneseq
  %v2109 = vshrl.u32 %v2108, 7
  %v2110 = vsub.s32 %v1779, %v2109
  %v2111 = vrot.slane %v1466, %v2110
  %v2112 = vsel %vm1784, %v2111, %v2107
  %v2113 = vlaneseq
  %v2114 = vshrl.u32 %v2113, 7
  %v2115 = vsub.s32 %v1786, %v2114
  %v2116 = vrot.slane %v1469, %v2115
  %v2117 = vsel %vm1791, %v2116, %v2112
  %v2118 = vlaneseq
  %v2119 = vshrl.u32 %v2118, 7
  %v2120 = vsub.s32 %v1793, %v2119
  %v2121 = vrot.slane %v1472, %v2120
  %v2122 = vsel %vm1798, %v2121, %v2117
  %v2123 = vlaneseq
  %v2124 = vshrl.u32 %v2123, 7
  %v2125 = vsub.s32 %v1774, %v2124
  %v2126 = vrot.slane %v1475, %v2125
  %v2127 = vlaneseq
  %v2128 = vshrl.u32 %v2127, 7
  %v2129 = vsub.s32 %v1779, %v2128
  %v2130 = vrot.slane %v1478, %v2129
  %v2131 = vsel %vm1784, %v2130, %v2126
  %v2132 = vlaneseq
  %v2133 = vshrl.u32 %v2132, 7
  %v2134 = vsub.s32 %v1786, %v2133
  %v2135 = vrot.slane %v1481, %v2134
  %v2136 = vsel %vm1791, %v2135, %v2131
  %v2137 = vlaneseq
  %v2138 = vshrl.u32 %v2137, 7
  %v2139 = vsub.s32 %v1793, %v2138
  %v2140 = vrot.slane %v1484, %v2139
  %v2141 = vsel %vm1798, %v2140, %v2136
  %v2142 = vlaneseq
  %v2143 = vshrl.u32 %v2142, 7
  %v2144 = vsub.s32 %v1774, %v2143
  %v2145 = vrot.slane %v1487, %v2144
  %v2146 = vlaneseq
  %v2147 = vshrl.u32 %v2146, 7
  %v2148 = vsub.s32 %v1779, %v2147
  %v2149 = vrot.slane %v1490, %v2148
  %v2150 = vsel %vm1784, %v2149, %v2145
  %v2151 = vlaneseq
  %v2152 = vshrl.u32 %v2151, 7
  %v2153 = vsub.s32 %v1786, %v2152
  %v2154 = vrot.slane %v1493, %v2153
  %v2155 = vsel %vm1791, %v2154, %v2150
  %v2156 = vlaneseq
  %v2157 = vshrl.u32 %v2156, 7
  %v2158 = vsub.s32 %v1793, %v2157
  %v2159 = vrot.slane %v1496, %v2158
  %v2160 = vsel %vm1798, %v2159, %v2155
  %v2161 = vlaneseq
  %v2162 = vshrl.u32 %v2161, 7
  %v2163 = vsub.s32 %v1774, %v2162
  %v2164 = vrot.slane %v1499, %v2163
  %v2165 = vlaneseq
  %v2166 = vshrl.u32 %v2165, 7
  %v2167 = vsub.s32 %v1779, %v2166
  %v2168 = vrot.slane %v1502, %v2167
  %v2169 = vsel %vm1784, %v2168, %v2164
  %v2170 = vlaneseq
  %v2171 = vshrl.u32 %v2170, 7
  %v2172 = vsub.s32 %v1786, %v2171
  %v2173 = vrot.slane %v1505, %v2172
  %v2174 = vsel %vm1791, %v2173, %v2169
  %v2175 = vlaneseq
  %v2176 = vshrl.u32 %v2175, 7
  %v2177 = vsub.s32 %v1793, %v2176
  %v2178 = vrot.slane %v1508, %v2177
  %v2179 = vsel %vm1798, %v2178, %v2174
  %v2180 = vlaneseq
  %v2181 = vshrl.u32 %v2180, 7
  %v2182 = vsub.s32 %v1774, %v2181
  %v2183 = vrot.slane %v1511, %v2182
  %v2184 = vlaneseq
  %v2185 = vshrl.u32 %v2184, 7
  %v2186 = vsub.s32 %v1779, %v2185
  %v2187 = vrot.slane %v1514, %v2186
  %v2188 = vsel %vm1784, %v2187, %v2183
  %v2189 = vlaneseq
  %v2190 = vshrl.u32 %v2189, 7
  %v2191 = vsub.s32 %v1786, %v2190
  %v2192 = vrot.slane %v1517, %v2191
  %v2193 = vsel %vm1791, %v2192, %v2188
  %v2194 = vlaneseq
  %v2195 = vshrl.u32 %v2194, 7
  %v2196 = vsub.s32 %v1793, %v2195
  %v2197 = vrot.slane %v1520, %v2196
  %v2198 = vsel %vm1798, %v2197, %v2193
  %v2199 = vlaneseq
  %v2200 = vshrl.u32 %v2199, 7
  %v2201 = vsub.s32 %v1774, %v2200
  %v2202 = vrot.slane %v1523, %v2201
  %v2203 = vlaneseq
  %v2204 = vshrl.u32 %v2203, 7
  %v2205 = vsub.s32 %v1779, %v2204
  %v2206 = vrot.slane %v1526, %v2205
  %v2207 = vsel %vm1784, %v2206, %v2202
  %v2208 = vlaneseq
  %v2209 = vshrl.u32 %v2208, 7
  %v2210 = vsub.s32 %v1786, %v2209
  %v2211 = vrot.slane %v1529, %v2210
  %v2212 = vsel %vm1791, %v2211, %v2207
  %v2213 = vlaneseq
  %v2214 = vshrl.u32 %v2213, 7
  %v2215 = vsub.s32 %v1793, %v2214
  %v2216 = vrot.slane %v1532, %v2215
  %v2217 = vsel %vm1798, %v2216, %v2212
  %v2218 = vlaneseq
  %v2219 = vshrl.u32 %v2218, 7
  %v2220 = vsub.s32 %v1774, %v2219
  %v2221 = vrot.slane %v1535, %v2220
  %v2222 = vlaneseq
  %v2223 = vshrl.u32 %v2222, 7
  %v2224 = vsub.s32 %v1779, %v2223
  %v2225 = vrot.slane %v1538, %v2224
  %v2226 = vsel %vm1784, %v2225, %v2221
  %v2227 = vlaneseq
  %v2228 = vshrl.u32 %v2227, 7
  %v2229 = vsub.s32 %v1786, %v2228
  %v2230 = vrot.slane %v1541, %v2229
  %v2231 = vsel %vm1791, %v2230, %v2226
  %v2232 = vlaneseq
  %v2233 = vshrl.u32 %v2232, 7
  %v2234 = vsub.s32 %v1793, %v2233
  %v2235 = vrot.slane %v1544, %v2234
  %v2236 = vsel %vm1798, %v2235, %v2231
  %v2237 = vlaneseq
  %v2238 = vshrl.u32 %v2237, 7
  %v2239 = vsub.s32 %v1774, %v2238
  %v2240 = vrot.slane %v1547, %v2239
  %v2241 = vlaneseq
  %v2242 = vshrl.u32 %v2241, 7
  %v2243 = vsub.s32 %v1779, %v2242
  %v2244 = vrot.slane %v1550, %v2243
  %v2245 = vsel %vm1784, %v2244, %v2240
  %v2246 = vlaneseq
  %v2247 = vshrl.u32 %v2246, 7
  %v2248 = vsub.s32 %v1786, %v2247
  %v2249 = vrot.slane %v1553, %v2248
  %v2250 = vsel %vm1791, %v2249, %v2245
  %v2251 = vlaneseq
  %v2252 = vshrl.u32 %v2251, 7
  %v2253 = vsub.s32 %v1793, %v2252
  %v2254 = vrot.slane %v1556, %v2253
  %v2255 = vsel %vm1798, %v2254, %v2250
  %v2256 = vlaneseq
  %v2257 = vshrl.u32 %v2256, 7
  %v2258 = vsub.s32 %v1774, %v2257
  %v2259 = vrot.slane %v1559, %v2258
  %v2260 = vlaneseq
  %v2261 = vshrl.u32 %v2260, 7
  %v2262 = vsub.s32 %v1779, %v2261
  %v2263 = vrot.slane %v1562, %v2262
  %v2264 = vsel %vm1784, %v2263, %v2259
  %v2265 = vlaneseq
  %v2266 = vshrl.u32 %v2265, 7
  %v2267 = vsub.s32 %v1786, %v2266
  %v2268 = vrot.slane %v1565, %v2267
  %v2269 = vsel %vm1791, %v2268, %v2264
  %v2270 = vlaneseq
  %v2271 = vshrl.u32 %v2270, 7
  %v2272 = vsub.s32 %v1793, %v2271
  %v2273 = vrot.slane %v1568, %v2272
  %v2274 = vsel %vm1798, %v2273, %v2269
  %v2275 = vlaneseq
  %v2276 = vshrl.u32 %v2275, 7
  %v2277 = vsub.s32 %v1774, %v2276
  %v2278 = vrot.slane %v1571, %v2277
  %v2279 = vlaneseq
  %v2280 = vshrl.u32 %v2279, 7
  %v2281 = vsub.s32 %v1779, %v2280
  %v2282 = vrot.slane %v1574, %v2281
  %v2283 = vsel %vm1784, %v2282, %v2278
  %v2284 = vlaneseq
  %v2285 = vshrl.u32 %v2284, 7
  %v2286 = vsub.s32 %v1786, %v2285
  %v2287 = vrot.slane %v1577, %v2286
  %v2288 = vsel %vm1791, %v2287, %v2283
  %v2289 = vlaneseq
  %v2290 = vshrl.u32 %v2289, 7
  %v2291 = vsub.s32 %v1793, %v2290
  %v2292 = vrot.slane %v1580, %v2291
  %v2293 = vsel %vm1798, %v2292, %v2288
  %v2294 = vlaneseq
  %v2295 = vshrl.u32 %v2294, 7
  %v2296 = vsub.s32 %v1774, %v2295
  %v2297 = vrot.slane %v1583, %v2296
  %v2298 = vlaneseq
  %v2299 = vshrl.u32 %v2298, 7
  %v2300 = vsub.s32 %v1779, %v2299
  %v2301 = vrot.slane %v1586, %v2300
  %v2302 = vsel %vm1784, %v2301, %v2297
  %v2303 = vlaneseq
  %v2304 = vshrl.u32 %v2303, 7
  %v2305 = vsub.s32 %v1786, %v2304
  %v2306 = vrot.slane %v1589, %v2305
  %v2307 = vsel %vm1791, %v2306, %v2302
  %v2308 = vlaneseq
  %v2309 = vshrl.u32 %v2308, 7
  %v2310 = vsub.s32 %v1793, %v2309
  %v2311 = vrot.slane %v1592, %v2310
  %v2312 = vsel %vm1798, %v2311, %v2307
  %v2313 = vlaneseq
  %v2314 = vshrl.u32 %v2313, 7
  %v2315 = vsub.s32 %v1774, %v2314
  %v2316 = vrot.slane %v1595, %v2315
  %v2317 = vlaneseq
  %v2318 = vshrl.u32 %v2317, 7
  %v2319 = vsub.s32 %v1779, %v2318
  %v2320 = vrot.slane %v1598, %v2319
  %v2321 = vsel %vm1784, %v2320, %v2316
  %v2322 = vlaneseq
  %v2323 = vshrl.u32 %v2322, 7
  %v2324 = vsub.s32 %v1786, %v2323
  %v2325 = vrot.slane %v1601, %v2324
  %v2326 = vsel %vm1791, %v2325, %v2321
  %v2327 = vlaneseq
  %v2328 = vshrl.u32 %v2327, 7
  %v2329 = vsub.s32 %v1793, %v2328
  %v2330 = vrot.slane %v1604, %v2329
  %v2331 = vsel %vm1798, %v2330, %v2326
  %v2332 = vlaneseq
  %v2333 = vshrl.u32 %v2332, 7
  %v2334 = vsub.s32 %v1774, %v2333
  %v2335 = vrot.slane %v1607, %v2334
  %v2336 = vlaneseq
  %v2337 = vshrl.u32 %v2336, 7
  %v2338 = vsub.s32 %v1779, %v2337
  %v2339 = vrot.slane %v1610, %v2338
  %v2340 = vsel %vm1784, %v2339, %v2335
  %v2341 = vlaneseq
  %v2342 = vshrl.u32 %v2341, 7
  %v2343 = vsub.s32 %v1786, %v2342
  %v2344 = vrot.slane %v1613, %v2343
  %v2345 = vsel %vm1791, %v2344, %v2340
  %v2346 = vlaneseq
  %v2347 = vshrl.u32 %v2346, 7
  %v2348 = vsub.s32 %v1793, %v2347
  %v2349 = vrot.slane %v1616, %v2348
  %v2350 = vsel %vm1798, %v2349, %v2345
  %v2351 = vlaneseq
  %v2352 = vshrl.u32 %v2351, 7
  %v2353 = vsub.s32 %v1774, %v2352
  %v2354 = vrot.slane %v1619, %v2353
  %v2355 = vlaneseq
  %v2356 = vshrl.u32 %v2355, 7
  %v2357 = vsub.s32 %v1779, %v2356
  %v2358 = vrot.slane %v1622, %v2357
  %v2359 = vsel %vm1784, %v2358, %v2354
  %v2360 = vlaneseq
  %v2361 = vshrl.u32 %v2360, 7
  %v2362 = vsub.s32 %v1786, %v2361
  %v2363 = vrot.slane %v1625, %v2362
  %v2364 = vsel %vm1791, %v2363, %v2359
  %v2365 = vlaneseq
  %v2366 = vshrl.u32 %v2365, 7
  %v2367 = vsub.s32 %v1793, %v2366
  %v2368 = vrot.slane %v1628, %v2367
  %v2369 = vsel %vm1798, %v2368, %v2364
  %v2370 = vlaneseq
  %v2371 = vshrl.u32 %v2370, 7
  %v2372 = vsub.s32 %v1774, %v2371
  %v2373 = vrot.slane %v1631, %v2372
  %v2374 = vlaneseq
  %v2375 = vshrl.u32 %v2374, 7
  %v2376 = vsub.s32 %v1779, %v2375
  %v2377 = vrot.slane %v1634, %v2376
  %v2378 = vsel %vm1784, %v2377, %v2373
  %v2379 = vlaneseq
  %v2380 = vshrl.u32 %v2379, 7
  %v2381 = vsub.s32 %v1786, %v2380
  %v2382 = vrot.slane %v1637, %v2381
  %v2383 = vsel %vm1791, %v2382, %v2378
  %v2384 = vlaneseq
  %v2385 = vshrl.u32 %v2384, 7
  %v2386 = vsub.s32 %v1793, %v2385
  %v2387 = vrot.slane %v1640, %v2386
  %v2388 = vsel %vm1798, %v2387, %v2383
  %vm2389 = vcmask 1041409
  %v2390 = vsel %vm2389, %v1818, %v1799
  %vm2391 = vcmask 1042434
  %v2392 = vsel %vm2391, %v1837, %v2390
  %vm2393 = vcmask 1043459
  %v2394 = vsel %vm2393, %v1856, %v2392
  %vm2395 = vcmask 1044484
  %v2396 = vsel %vm2395, %v1875, %v2394
  %vm2397 = vcmask 1045509
  %v2398 = vsel %vm2397, %v1894, %v2396
  %vm2399 = vcmask 1046534
  %v2400 = vsel %vm2399, %v1913, %v2398
  %vm2401 = vcmask 1047559
  %v2402 = vsel %vm2401, %v1932, %v2400
  %v2403 = vsel %vm2389, %v1970, %v1951
  %v2404 = vsel %vm2391, %v1989, %v2403
  %v2405 = vsel %vm2393, %v2008, %v2404
  %v2406 = vsel %vm2395, %v2027, %v2405
  %v2407 = vsel %vm2397, %v2046, %v2406
  %v2408 = vsel %vm2399, %v2065, %v2407
  %v2409 = vsel %vm2401, %v2084, %v2408
  %v2410 = vsel %vm2389, %v2122, %v2103
  %v2411 = vsel %vm2391, %v2141, %v2410
  %v2412 = vsel %vm2393, %v2160, %v2411
  %v2413 = vsel %vm2395, %v2179, %v2412
  %v2414 = vsel %vm2397, %v2198, %v2413
  %v2415 = vsel %vm2399, %v2217, %v2414
  %v2416 = vsel %vm2401, %v2236, %v2415
  %v2417 = vsel %vm2389, %v2274, %v2255
  %v2418 = vsel %vm2391, %v2293, %v2417
  %v2419 = vsel %vm2393, %v2312, %v2418
  %v2420 = vsel %vm2395, %v2331, %v2419
  %v2421 = vsel %vm2397, %v2350, %v2420
  %v2422 = vsel %vm2399, %v2369, %v2421
  %v2423 = vsel %vm2401, %v2388, %v2422
  %v2428 = vsel %vm1641, %v2402, -1e+30
  %v2429 = vsel %vm1642, %v2409, -1e+30
  %v2430 = vsel %vm1643, %v2416, -1e+30
  %v2431 = vsel %vm1644, %v2423, -1e+30
  %vm2432 = vcmask 261120
  %v2433 = vsel %vm2432, %v2428, -inf
  %2434 = vmax.xlane.f32.xlu0 %v2433
  %v2435 = vpop.xlane.xlu0 %2434
  %v2436 = vsel %vm2432, %v2429, -inf
  %2437 = vmax.xlane.f32.xlu0 %v2436
  %v2438 = vpop.xlane.xlu0 %2437
  %v2439 = vsel %vm2432, %v2430, -inf
  %2440 = vmax.xlane.f32.xlu0 %v2439
  %v2441 = vpop.xlane.xlu0 %2440
  %v2442 = vsel %vm2432, %v2431, -inf
  %2443 = vmax.xlane.f32.xlu0 %v2442
  %v2444 = vpop.xlane.xlu0 %2443
  %v2445 = vsub.f32 %v2428, %v2435
  %v2446 = vsub.f32 %v2429, %v2438
  %v2447 = vsub.f32 %v2430, %v2441
  %v2448 = vsub.f32 %v2431, %v2444
  %v2449 = vmul.f32 %v2445, 1.442695
  %v2450 = vpow.pop %v2449
  %v2451 = vmul.f32 %v2446, 1.442695
  %v2452 = vpow.pop %v2451
  %v2453 = vmul.f32 %v2447, 1.442695
  %v2454 = vpow.pop %v2453
  %v2455 = vmul.f32 %v2448, 1.442695
  %v2456 = vpow.pop %v2455
  %v2457 = vsel %vm1641, %v2450, 0.0
  %v2458 = vsel %vm1642, %v2452, 0.0
  %v2459 = vsel %vm1643, %v2454, 0.0
  %v2460 = vsel %vm1644, %v2456, 0.0
  %v2461 = vsel %vm2432, %v2457, 0.0
  %2462 = vadd.xlane.f32.xlu0 %v2461
  %v2463 = vpop.xlane.xlu0 %2462
  %v2464 = vsel %vm2432, %v2458, 0.0
  %2465 = vadd.xlane.f32.xlu0 %v2464
  %v2466 = vpop.xlane.xlu0 %2465
  %v2467 = vsel %vm2432, %v2459, 0.0
  %2468 = vadd.xlane.f32.xlu0 %v2467
  %v2469 = vpop.xlane.xlu0 %2468
  %v2470 = vsel %vm2432, %v2460, 0.0
  %2471 = vadd.xlane.f32.xlu0 %v2470
  %v2472 = vpop.xlane.xlu0 %2471
  %v2473 = vrcp.pop %v2463
  %v2474 = vrcp.pop %v2466
  %v2475 = vrcp.pop %v2469
  %v2476 = vrcp.pop %v2472
  %v2477 = vmul.f32 %v2457, %v2473
  %v2478 = vmul.f32 %v2458, %v2474
  %v2479 = vmul.f32 %v2459, %v2475
  %v2480 = vmul.f32 %v2460, %v2476
  %v2481 = vld [vmem:[%s5] sm:$0x1]
  %v2483 = vlaneseq
  %v2484 = vshrl.u32 %v2483, 7
  %v2485 = vsub.s32 0, %v2484
  %v2486 = vrot.slane %v2481, %v2485
  %v2489 = vsel %vm2432, %v2477, 0
  %v2492 = vsel %vm2432, %v2478, 0
  %v2495 = vsel %vm2432, %v2479, 0
  %v2498 = vsel %vm2432, %v2480, 0
  %2500 = vmatprep.subr.mxu0 0.0
  %2501 = vmatpush1.msra.mxu0 %v168
  %2502 = vmatprep.subr.mxu0 0.0
  %2503 = vmatpush1.msra.mxu0 %v173
  %2504 = vmatprep.subr.mxu0 0.0
  %2505 = vmatpush1.msra.mxu0 %v178
  %2506 = vmatprep.subr.mxu0 0.0
  %2507 = vmatpush1.msra.mxu0 %v183
  %2508 = vmatprep.subr.mxu0 0.0
  %2509 = vmatpush1.msra.mxu0 0.0
  %2510 = vmatprep.subr.mxu0 0.0
  %2511 = vmatpush1.msra.mxu0 0.0
  %2512 = vmatprep.subr.mxu0 0.0
  %2513 = vmatpush1.msra.mxu0 0.0
  %2514 = vmatprep.subr.mxu0 0.0
  %2515 = vmatpush1.msra.mxu0 0.0
  %2516 = vmatprep.subr.mxu0 0.0
  %2517 = vmatpush1.msra.mxu0 0.0
  %2518 = vmatprep.subr.mxu0 0.0
  %2519 = vmatpush1.msra.mxu0 0.0
  %2520 = vmatprep.subr.mxu0 0.0
  %2521 = vmatpush1.msra.mxu0 0.0
  %2522 = vmatprep.subr.mxu0 0.0
  %2523 = vmatpush1.msra.mxu0 0.0
  %2524 = vmatprep.subr.mxu0 0.0
  %2525 = vmatpush1.msra.mxu0 0.0
  %2526 = vmatprep.subr.mxu0 0.0
  %2527 = vmatpush1.msra.mxu0 0.0
  %2528 = vmatprep.subr.mxu0 0.0
  %2529 = vmatpush1.msra.mxu0 0.0
  %2530 = vmatprep.subr.mxu0 0.0
  %2531 = vmatpush1.msra.mxu0 0.0
  %2532 = vmatprep.subr.mxu0 0.0
  %2533 = vmatpush1.msra.mxu0 0.0
  %2534 = vmatprep.subr.mxu0 0.0
  %2535 = vmatpush1.msra.mxu0 0.0
  %2536 = vmatprep.subr.mxu0 0.0
  %2537 = vmatpush1.msra.mxu0 0.0
  %2538 = vmatprep.subr.mxu0 0.0
  %2539 = vmatpush1.msra.mxu0 0.0
  %2540 = vmatprep.subr.mxu0 0.0
  %2541 = vmatpush1.msra.mxu0 0.0
  %2542 = vmatprep.subr.mxu0 0.0
  %2543 = vmatpush1.msra.mxu0 0.0
  %2544 = vmatprep.subr.mxu0 0.0
  %2545 = vmatpush1.msra.mxu0 0.0
  %2546 = vmatprep.subr.mxu0 0.0
  %2547 = vmatpush1.msra.mxu0 0.0
  %2548 = vmatprep.subr.mxu0 0.0
  %2549 = vmatpush1.msra.mxu0 0.0
  %2550 = vmatprep.subr.mxu0 0.0
  %2551 = vmatpush1.msra.mxu0 0.0
  %2552 = vmatprep.subr.mxu0 0.0
  %2553 = vmatpush1.msra.mxu0 0.0
  %2554 = vmatprep.subr.mxu0 0.0
  %2555 = vmatpush1.msra.mxu0 0.0
  %2556 = vmatprep.subr.mxu0 0.0
  %2557 = vmatpush1.msra.mxu0 0.0
  %2558 = vmatprep.subr.mxu0 0.0
  %2559 = vmatpush1.msra.mxu0 0.0
  %2560 = vmatprep.subr.mxu0 0.0
  %2561 = vmatpush1.msra.mxu0 0.0
  %2562 = vmatprep.subr.mxu0 0.0
  %2563 = vmatpush1.msra.mxu0 0.0
  %2564 = vmatprep.mubr.f32.mxu0 0.0
  %2565 = vmatmul.mubr.f32.gmra.mrb[0].mxu0 %v2489
  %v2566 = vpop.f32.mrb[0].mxu0
  %v2567 = vadd.f32 %v2486, %v2566
  %v2568 = vpop.f32.mrb[0].mxu0
  %2569 = vmatprep.mubr.f32.mxu0 0.0
  %2570 = vmatmul.mubr.f32.gmra.mrb[0].mxu0 %v2492
  %v2571 = vpop.f32.mrb[0].mxu0
  %v2572 = vadd.f32 %v2486, %v2571
  %v2573 = vpop.f32.mrb[0].mxu0
  %2574 = vmatprep.mubr.f32.mxu0 0.0
  %2575 = vmatmul.mubr.f32.gmra.mrb[0].mxu0 %v2495
  %v2576 = vpop.f32.mrb[0].mxu0
  %v2577 = vadd.f32 %v2486, %v2576
  %v2578 = vpop.f32.mrb[0].mxu0
  %2579 = vmatprep.mubr.f32.mxu0 0.0
  %2580 = vmatmul.mubr.f32.gmra.mrb[0].mxu0 %v2498
  %v2581 = vpop.f32.mrb[0].mxu0
  %v2582 = vadd.f32 %v2486, %v2581
  %v2583 = vpop.f32.mrb[0].mxu0
  %2584 = vdwg.mxu0
  %v2585 = vadd.f32 %v2567, %v65
  %v2586 = vadd.f32 %v2572, %v66
  %v2587 = vadd.f32 %v2577, %v67
  %v2588 = vadd.f32 %v2582, %v68
  %v2589 = vld [vmem:[%s6] sm:$0x1]
  %v2591 = vlaneseq
  %v2592 = vshrl.u32 %v2591, 7
  %v2593 = vsub.s32 0, %v2592
  %v2594 = vrot.slane %v2589, %v2593
  %v2596 = vmul.f32 %v2585, %v2594
  %v2597 = vmul.f32 %v2586, %v2594
  %v2598 = vmul.f32 %v2587, %v2594
  %v2599 = vmul.f32 %v2588, %v2594
  %v2600 = vld [vmem:[%s7] sm:$0x1]
  %v2602 = vlaneseq
  %v2603 = vshrl.u32 %v2602, 7
  %v2604 = vsub.s32 0, %v2603
  %v2605 = vrot.slane %v2600, %v2604
  %v2607 = vadd.f32 %v2596, %v2605
  %v2608 = vadd.f32 %v2597, %v2605
  %v2609 = vadd.f32 %v2598, %v2605
  %v2610 = vadd.f32 %v2599, %v2605
  %v2611 = vld [vmem:[%s8] sm:$0xff]
  %v2612 = vld [vmem:[%s8 + $0x8] sm:$0xff]
  %v2613 = vld [vmem:[%s8 + $0x10] sm:$0xff]
  %v2614 = vld [vmem:[%s8 + $0x18] sm:$0xff]
  %v2615 = vld [vmem:[%s8 + $0x20] sm:$0xff]
  %v2616 = vld [vmem:[%s8 + $0x28] sm:$0xff]
  %v2617 = vld [vmem:[%s8 + $0x30] sm:$0xff]
  %v2618 = vld [vmem:[%s8 + $0x38] sm:$0xff]
  %v2619 = vld [vmem:[%s8 + $0x40] sm:$0xff]
  %v2620 = vld [vmem:[%s8 + $0x48] sm:$0xff]
  %v2621 = vld [vmem:[%s8 + $0x50] sm:$0xff]
  %v2622 = vld [vmem:[%s8 + $0x58] sm:$0xff]
  %v2623 = vld [vmem:[%s8 + $0x60] sm:$0xff]
  %v2624 = vld [vmem:[%s8 + $0x68] sm:$0xff]
  %v2625 = vld [vmem:[%s8 + $0x70] sm:$0xff]
  %v2626 = vld [vmem:[%s8 + $0x78] sm:$0xff]
  %v2627 = vld [vmem:[%s9] sm:$0x3]
  %v2629 = vlaneseq
  %v2630 = vshrl.u32 %v2629, 7
  %v2631 = vsub.s32 0, %v2630
  %v2632 = vrot.slane %v2627, %v2631
  %v2633 = vlaneseq
  %v2634 = vshrl.u32 %v2633, 7
  %v2635 = vsub.s32 1, %v2634
  %v2636 = vrot.slane %v2627, %v2635
  %2639 = vmatprep.subr.mxu0 %v2612
  %2640 = vmatpush1.msra.mxu0 %v2611
  %2641 = vmatprep.subr.mxu0 %v2614
  %2642 = vmatpush1.msra.mxu0 %v2613
  %2643 = vmatprep.subr.mxu0 %v2616
  %2644 = vmatpush1.msra.mxu0 %v2615
  %2645 = vmatprep.subr.mxu0 %v2618
  %2646 = vmatpush1.msra.mxu0 %v2617
  %2647 = vmatprep.subr.mxu0 %v2620
  %2648 = vmatpush1.msra.mxu0 %v2619
  %2649 = vmatprep.subr.mxu0 %v2622
  %2650 = vmatpush1.msra.mxu0 %v2621
  %2651 = vmatprep.subr.mxu0 %v2624
  %2652 = vmatpush1.msra.mxu0 %v2623
  %2653 = vmatprep.subr.mxu0 %v2626
  %2654 = vmatpush1.msra.mxu0 %v2625
  %2655 = vmatprep.subr.mxu0 0.0
  %2656 = vmatpush1.msra.mxu0 0.0
  %2657 = vmatprep.subr.mxu0 0.0
  %2658 = vmatpush1.msra.mxu0 0.0
  %2659 = vmatprep.subr.mxu0 0.0
  %2660 = vmatpush1.msra.mxu0 0.0
  %2661 = vmatprep.subr.mxu0 0.0
  %2662 = vmatpush1.msra.mxu0 0.0
  %2663 = vmatprep.subr.mxu0 0.0
  %2664 = vmatpush1.msra.mxu0 0.0
  %2665 = vmatprep.subr.mxu0 0.0
  %2666 = vmatpush1.msra.mxu0 0.0
  %2667 = vmatprep.subr.mxu0 0.0
  %2668 = vmatpush1.msra.mxu0 0.0
  %2669 = vmatprep.subr.mxu0 0.0
  %2670 = vmatpush1.msra.mxu0 0.0
  %2671 = vmatprep.subr.mxu0 0.0
  %2672 = vmatpush1.msra.mxu0 0.0
  %2673 = vmatprep.subr.mxu0 0.0
  %2674 = vmatpush1.msra.mxu0 0.0
  %2675 = vmatprep.subr.mxu0 0.0
  %2676 = vmatpush1.msra.mxu0 0.0
  %2677 = vmatprep.subr.mxu0 0.0
  %2678 = vmatpush1.msra.mxu0 0.0
  %2679 = vmatprep.subr.mxu0 0.0
  %2680 = vmatpush1.msra.mxu0 0.0
  %2681 = vmatprep.subr.mxu0 0.0
  %2682 = vmatpush1.msra.mxu0 0.0
  %2683 = vmatprep.subr.mxu0 0.0
  %2684 = vmatpush1.msra.mxu0 0.0
  %2685 = vmatprep.subr.mxu0 0.0
  %2686 = vmatpush1.msra.mxu0 0.0
  %2687 = vmatprep.subr.mxu0 0.0
  %2688 = vmatpush1.msra.mxu0 0.0
  %2689 = vmatprep.subr.mxu0 0.0
  %2690 = vmatpush1.msra.mxu0 0.0
  %2691 = vmatprep.subr.mxu0 0.0
  %2692 = vmatpush1.msra.mxu0 0.0
  %2693 = vmatprep.subr.mxu0 0.0
  %2694 = vmatpush1.msra.mxu0 0.0
  %2695 = vmatprep.subr.mxu0 0.0
  %2696 = vmatpush1.msra.mxu0 0.0
  %2697 = vmatprep.subr.mxu0 0.0
  %2698 = vmatpush1.msra.mxu0 0.0
  %2699 = vmatprep.subr.mxu0 0.0
  %2700 = vmatpush1.msra.mxu0 0.0
  %2701 = vmatprep.subr.mxu0 0.0
  %2702 = vmatpush1.msra.mxu0 0.0
  %2703 = vmatprep.mubr.f32.mxu0 0.0
  %2704 = vmatmul.mubr.f32.gmra.mrb[0].mxu0 %v90
  %v2705 = vpop.f32.mrb[0].mxu0
  %v2706 = vadd.f32 %v2632, %v2705
  %v2707 = vpop.f32.mrb[0].mxu0
  %v2708 = vadd.f32 %v2636, %v2707
  %2709 = vmatprep.mubr.f32.mxu0 0.0
  %2710 = vmatmul.mubr.f32.gmra.mrb[0].mxu0 %v93
  %v2711 = vpop.f32.mrb[0].mxu0
  %v2712 = vadd.f32 %v2632, %v2711
  %v2713 = vpop.f32.mrb[0].mxu0
  %v2714 = vadd.f32 %v2636, %v2713
  %2715 = vmatprep.mubr.f32.mxu0 0.0
  %2716 = vmatmul.mubr.f32.gmra.mrb[0].mxu0 %v96
  %v2717 = vpop.f32.mrb[0].mxu0
  %v2718 = vadd.f32 %v2632, %v2717
  %v2719 = vpop.f32.mrb[0].mxu0
  %v2720 = vadd.f32 %v2636, %v2719
  %2721 = vmatprep.mubr.f32.mxu0 0.0
  %2722 = vmatmul.mubr.f32.gmra.mrb[0].mxu0 %v99
  %v2723 = vpop.f32.mrb[0].mxu0
  %v2724 = vadd.f32 %v2632, %v2723
  %v2725 = vpop.f32.mrb[0].mxu0
  %v2726 = vadd.f32 %v2636, %v2725
  %2727 = vdwg.mxu0
  %v2728 = vmul.f32 %v2706, 0.25
  %v2729 = vmul.f32 %v2712, 0.25
  %v2730 = vmul.f32 %v2718, 0.25
  %v2731 = vmul.f32 %v2724, 0.25
  %2736 = vrot.lane.b32.xlu0 %v2706, 64
  %v2737 = vpop.permute.xlu0 %2736
  %2738 = vrot.lane.b32.xlu0 %v2712, 64
  %v2739 = vpop.permute.xlu0 %2738
  %2740 = vrot.lane.b32.xlu0 %v2718, 64
  %v2741 = vpop.permute.xlu0 %2740
  %2742 = vrot.lane.b32.xlu0 %v2724, 64
  %v2743 = vpop.permute.xlu0 %2742
  %vm2744 = vcmask 130048
  %v2746 = vsel %vm2744, %v2728, 0
  %v2749 = vsel %vm2744, %v2729, 0
  %v2752 = vsel %vm2744, %v2730, 0
  %v2755 = vsel %vm2744, %v2731, 0
  %v2757 = vsel %vm2744, %v2737, 0
  %v2759 = vsel %vm2744, %v2739, 0
  %v2761 = vsel %vm2744, %v2741, 0
  %v2763 = vsel %vm2744, %v2743, 0
  %2765 = vmatprep.subr.mxu0 0.0
  %2766 = vmatpush1.xpose.msra.mxu0 %v2757
  %2767 = vmatprep.subr.mxu0 0.0
  %2768 = vmatpush1.xpose.msra.mxu0 %v2759
  %2769 = vmatprep.subr.mxu0 0.0
  %2770 = vmatpush1.xpose.msra.mxu0 %v2761
  %2771 = vmatprep.subr.mxu0 0.0
  %2772 = vmatpush1.xpose.msra.mxu0 %v2763
  %2773 = vmatprep.subr.mxu0 0.0
  %2774 = vmatpush1.xpose.msra.mxu0 0.0
  %2775 = vmatprep.subr.mxu0 0.0
  %2776 = vmatpush1.xpose.msra.mxu0 0.0
  %2777 = vmatprep.subr.mxu0 0.0
  %2778 = vmatpush1.xpose.msra.mxu0 0.0
  %2779 = vmatprep.subr.mxu0 0.0
  %2780 = vmatpush1.xpose.msra.mxu0 0.0
  %2781 = vmatprep.subr.mxu0 0.0
  %2782 = vmatpush1.xpose.msra.mxu0 0.0
  %2783 = vmatprep.subr.mxu0 0.0
  %2784 = vmatpush1.xpose.msra.mxu0 0.0
  %2785 = vmatprep.subr.mxu0 0.0
  %2786 = vmatpush1.xpose.msra.mxu0 0.0
  %2787 = vmatprep.subr.mxu0 0.0
  %2788 = vmatpush1.xpose.msra.mxu0 0.0
  %2789 = vmatprep.subr.mxu0 0.0
  %2790 = vmatpush1.xpose.msra.mxu0 0.0
  %2791 = vmatprep.subr.mxu0 0.0
  %2792 = vmatpush1.xpose.msra.mxu0 0.0
  %2793 = vmatprep.subr.mxu0 0.0
  %2794 = vmatpush1.xpose.msra.mxu0 0.0
  %2795 = vmatprep.subr.mxu0 0.0
  %2796 = vmatpush1.xpose.msra.mxu0 0.0
  %2797 = vmatprep.subr.mxu0 0.0
  %2798 = vmatpush1.xpose.msra.mxu0 0.0
  %2799 = vmatprep.subr.mxu0 0.0
  %2800 = vmatpush1.xpose.msra.mxu0 0.0
  %2801 = vmatprep.subr.mxu0 0.0
  %2802 = vmatpush1.xpose.msra.mxu0 0.0
  %2803 = vmatprep.subr.mxu0 0.0
  %2804 = vmatpush1.xpose.msra.mxu0 0.0
  %2805 = vmatprep.subr.mxu0 0.0
  %2806 = vmatpush1.xpose.msra.mxu0 0.0
  %2807 = vmatprep.subr.mxu0 0.0
  %2808 = vmatpush1.xpose.msra.mxu0 0.0
  %2809 = vmatprep.subr.mxu0 0.0
  %2810 = vmatpush1.xpose.msra.mxu0 0.0
  %2811 = vmatprep.subr.mxu0 0.0
  %2812 = vmatpush1.xpose.msra.mxu0 0.0
  %2813 = vmatprep.subr.mxu0 0.0
  %2814 = vmatpush1.xpose.msra.mxu0 0.0
  %2815 = vmatprep.subr.mxu0 0.0
  %2816 = vmatpush1.xpose.msra.mxu0 0.0
  %2817 = vmatprep.subr.mxu0 0.0
  %2818 = vmatpush1.xpose.msra.mxu0 0.0
  %2819 = vmatprep.subr.mxu0 0.0
  %2820 = vmatpush1.xpose.msra.mxu0 0.0
  %2821 = vmatprep.subr.mxu0 0.0
  %2822 = vmatpush1.xpose.msra.mxu0 0.0
  %2823 = vmatprep.subr.mxu0 0.0
  %2824 = vmatpush1.xpose.msra.mxu0 0.0
  %2825 = vmatprep.subr.mxu0 0.0
  %2826 = vmatpush1.xpose.msra.mxu0 0.0
  %2827 = vmatprep.subr.mxu0 0.0
  %2828 = vmatpush1.xpose.msra.mxu0 0.0
  %2829 = vmatprep.mubr.f32.mxu0 0.0
  %2830 = vmatmul.mubr.f32.gmra.mrb[0].mxu0 %v2746
  %v2831 = vpop.f32.mrb[0].mxu0
  %v2832 = vadd.f32 0.0, %v2831
  %v2833 = vpop.f32.mrb[0].mxu0
  %2834 = vmatprep.mubr.f32.mxu0 0.0
  %2835 = vmatmul.mubr.f32.gmra.mrb[0].mxu0 %v2749
  %v2836 = vpop.f32.mrb[0].mxu0
  %v2837 = vadd.f32 0.0, %v2836
  %v2838 = vpop.f32.mrb[0].mxu0
  %2839 = vmatprep.mubr.f32.mxu0 0.0
  %2840 = vmatmul.mubr.f32.gmra.mrb[0].mxu0 %v2752
  %v2841 = vpop.f32.mrb[0].mxu0
  %v2842 = vadd.f32 0.0, %v2841
  %v2843 = vpop.f32.mrb[0].mxu0
  %2844 = vmatprep.mubr.f32.mxu0 0.0
  %2845 = vmatmul.mubr.f32.gmra.mrb[0].mxu0 %v2755
  %v2846 = vpop.f32.mrb[0].mxu0
  %v2847 = vadd.f32 0.0, %v2846
  %v2848 = vpop.f32.mrb[0].mxu0
  %2849 = vdwg.mxu0
  %v2850 = vsel %vm2432, %v2832, -inf
  %2851 = vmax.xlane.f32.xlu0 %v2850
  %v2852 = vpop.xlane.xlu0 %2851
  %v2853 = vsel %vm2432, %v2837, -inf
  %2854 = vmax.xlane.f32.xlu0 %v2853
  %v2855 = vpop.xlane.xlu0 %2854
  %v2856 = vsel %vm2432, %v2842, -inf
  %2857 = vmax.xlane.f32.xlu0 %v2856
  %v2858 = vpop.xlane.xlu0 %2857
  %v2859 = vsel %vm2432, %v2847, -inf
  %2860 = vmax.xlane.f32.xlu0 %v2859
  %v2861 = vpop.xlane.xlu0 %2860
  %v2862 = vsub.f32 %v2832, %v2852
  %v2863 = vsub.f32 %v2837, %v2855
  %v2864 = vsub.f32 %v2842, %v2858
  %v2865 = vsub.f32 %v2847, %v2861
  %v2866 = vmul.f32 %v2862, 1.442695
  %v2867 = vpow.pop %v2866
  %v2868 = vmul.f32 %v2863, 1.442695
  %v2869 = vpow.pop %v2868
  %v2870 = vmul.f32 %v2864, 1.442695
  %v2871 = vpow.pop %v2870
  %v2872 = vmul.f32 %v2865, 1.442695
  %v2873 = vpow.pop %v2872
  %v2874 = vsel %vm2432, %v2867, 0.0
  %2875 = vadd.xlane.f32.xlu0 %v2874
  %v2876 = vpop.xlane.xlu0 %2875
  %v2877 = vsel %vm2432, %v2869, 0.0
  %2878 = vadd.xlane.f32.xlu0 %v2877
  %v2879 = vpop.xlane.xlu0 %2878
  %v2880 = vsel %vm2432, %v2871, 0.0
  %2881 = vadd.xlane.f32.xlu0 %v2880
  %v2882 = vpop.xlane.xlu0 %2881
  %v2883 = vsel %vm2432, %v2873, 0.0
  %2884 = vadd.xlane.f32.xlu0 %v2883
  %v2885 = vpop.xlane.xlu0 %2884
  %v2886 = vrcp.pop %v2876
  %v2887 = vrcp.pop %v2879
  %v2888 = vrcp.pop %v2882
  %v2889 = vrcp.pop %v2885
  %v2890 = vmul.f32 %v2867, %v2886
  %v2891 = vmul.f32 %v2869, %v2887
  %v2892 = vmul.f32 %v2871, %v2888
  %v2893 = vmul.f32 %v2873, %v2889
  %v2895 = vsel %vm2432, %v2890, 0
  %v2898 = vsel %vm2432, %v2891, 0
  %v2901 = vsel %vm2432, %v2892, 0
  %v2904 = vsel %vm2432, %v2893, 0
  %2906 = vmatprep.subr.mxu0 0.0
  %2907 = vmatpush1.msra.mxu0 %v2708
  %2908 = vmatprep.subr.mxu0 0.0
  %2909 = vmatpush1.msra.mxu0 %v2714
  %2910 = vmatprep.subr.mxu0 0.0
  %2911 = vmatpush1.msra.mxu0 %v2720
  %2912 = vmatprep.subr.mxu0 0.0
  %2913 = vmatpush1.msra.mxu0 %v2726
  %2914 = vmatprep.subr.mxu0 0.0
  %2915 = vmatpush1.msra.mxu0 0.0
  %2916 = vmatprep.subr.mxu0 0.0
  %2917 = vmatpush1.msra.mxu0 0.0
  %2918 = vmatprep.subr.mxu0 0.0
  %2919 = vmatpush1.msra.mxu0 0.0
  %2920 = vmatprep.subr.mxu0 0.0
  %2921 = vmatpush1.msra.mxu0 0.0
  %2922 = vmatprep.subr.mxu0 0.0
  %2923 = vmatpush1.msra.mxu0 0.0
  %2924 = vmatprep.subr.mxu0 0.0
  %2925 = vmatpush1.msra.mxu0 0.0
  %2926 = vmatprep.subr.mxu0 0.0
  %2927 = vmatpush1.msra.mxu0 0.0
  %2928 = vmatprep.subr.mxu0 0.0
  %2929 = vmatpush1.msra.mxu0 0.0
  %2930 = vmatprep.subr.mxu0 0.0
  %2931 = vmatpush1.msra.mxu0 0.0
  %2932 = vmatprep.subr.mxu0 0.0
  %2933 = vmatpush1.msra.mxu0 0.0
  %2934 = vmatprep.subr.mxu0 0.0
  %2935 = vmatpush1.msra.mxu0 0.0
  %2936 = vmatprep.subr.mxu0 0.0
  %2937 = vmatpush1.msra.mxu0 0.0
  %2938 = vmatprep.subr.mxu0 0.0
  %2939 = vmatpush1.msra.mxu0 0.0
  %2940 = vmatprep.subr.mxu0 0.0
  %2941 = vmatpush1.msra.mxu0 0.0
  %2942 = vmatprep.subr.mxu0 0.0
  %2943 = vmatpush1.msra.mxu0 0.0
  %2944 = vmatprep.subr.mxu0 0.0
  %2945 = vmatpush1.msra.mxu0 0.0
  %2946 = vmatprep.subr.mxu0 0.0
  %2947 = vmatpush1.msra.mxu0 0.0
  %2948 = vmatprep.subr.mxu0 0.0
  %2949 = vmatpush1.msra.mxu0 0.0
  %2950 = vmatprep.subr.mxu0 0.0
  %2951 = vmatpush1.msra.mxu0 0.0
  %2952 = vmatprep.subr.mxu0 0.0
  %2953 = vmatpush1.msra.mxu0 0.0
  %2954 = vmatprep.subr.mxu0 0.0
  %2955 = vmatpush1.msra.mxu0 0.0
  %2956 = vmatprep.subr.mxu0 0.0
  %2957 = vmatpush1.msra.mxu0 0.0
  %2958 = vmatprep.subr.mxu0 0.0
  %2959 = vmatpush1.msra.mxu0 0.0
  %2960 = vmatprep.subr.mxu0 0.0
  %2961 = vmatpush1.msra.mxu0 0.0
  %2962 = vmatprep.subr.mxu0 0.0
  %2963 = vmatpush1.msra.mxu0 0.0
  %2964 = vmatprep.subr.mxu0 0.0
  %2965 = vmatpush1.msra.mxu0 0.0
  %2966 = vmatprep.subr.mxu0 0.0
  %2967 = vmatpush1.msra.mxu0 0.0
  %2968 = vmatprep.subr.mxu0 0.0
  %2969 = vmatpush1.msra.mxu0 0.0
  %2970 = vmatprep.mubr.f32.mxu0 0.0
  %2971 = vmatmul.mubr.f32.gmra.mrb[0].mxu0 %v2895
  %v2972 = vpop.f32.mrb[0].mxu0
  %v2973 = vadd.f32 0.0, %v2972
  %v2974 = vpop.f32.mrb[0].mxu0
  %2975 = vmatprep.mubr.f32.mxu0 0.0
  %2976 = vmatmul.mubr.f32.gmra.mrb[0].mxu0 %v2898
  %v2977 = vpop.f32.mrb[0].mxu0
  %v2978 = vadd.f32 0.0, %v2977
  %v2979 = vpop.f32.mrb[0].mxu0
  %2980 = vmatprep.mubr.f32.mxu0 0.0
  %2981 = vmatmul.mubr.f32.gmra.mrb[0].mxu0 %v2901
  %v2982 = vpop.f32.mrb[0].mxu0
  %v2983 = vadd.f32 0.0, %v2982
  %v2984 = vpop.f32.mrb[0].mxu0
  %2985 = vmatprep.mubr.f32.mxu0 0.0
  %2986 = vmatmul.mubr.f32.gmra.mrb[0].mxu0 %v2904
  %v2987 = vpop.f32.mrb[0].mxu0
  %v2988 = vadd.f32 0.0, %v2987
  %v2989 = vpop.f32.mrb[0].mxu0
  %2990 = vdwg.mxu0
  %v2991 = vld [vmem:[%s10] sm:$0xff]
  %v2992 = vld [vmem:[%s10 + $0x8] sm:$0xff]
  %2993 = vrot.lane.b32.xlu0 %v2728, 112
  %v2994 = vpop.permute.xlu0 %2993
  %2995 = vrot.lane.b32.xlu0 %v2729, 112
  %v2996 = vpop.permute.xlu0 %2995
  %2997 = vrot.lane.b32.xlu0 %v2730, 112
  %v2998 = vpop.permute.xlu0 %2997
  %2999 = vrot.lane.b32.xlu0 %v2731, 112
  %v3000 = vpop.permute.xlu0 %2999
  %3001 = vrot.lane.b32.xlu0 %v2706, 48
  %v3002 = vpop.permute.xlu0 %3001
  %3003 = vrot.lane.b32.xlu0 %v2712, 48
  %v3004 = vpop.permute.xlu0 %3003
  %3005 = vrot.lane.b32.xlu0 %v2718, 48
  %v3006 = vpop.permute.xlu0 %3005
  %3007 = vrot.lane.b32.xlu0 %v2724, 48
  %v3008 = vpop.permute.xlu0 %3007
  %v3009 = vsel %vm2744, %v2994, 0
  %v3011 = vsel %vm2744, %v2996, 0
  %v3013 = vsel %vm2744, %v2998, 0
  %v3015 = vsel %vm2744, %v3000, 0
  %v3017 = vsel %vm2744, %v3002, 0
  %v3019 = vsel %vm2744, %v3004, 0
  %v3021 = vsel %vm2744, %v3006, 0
  %v3023 = vsel %vm2744, %v3008, 0
  %3025 = vmatprep.subr.mxu0 0.0
  %3026 = vmatpush1.xpose.msra.mxu0 %v3017
  %3027 = vmatprep.subr.mxu0 0.0
  %3028 = vmatpush1.xpose.msra.mxu0 %v3019
  %3029 = vmatprep.subr.mxu0 0.0
  %3030 = vmatpush1.xpose.msra.mxu0 %v3021
  %3031 = vmatprep.subr.mxu0 0.0
  %3032 = vmatpush1.xpose.msra.mxu0 %v3023
  %3033 = vmatprep.subr.mxu0 0.0
  %3034 = vmatpush1.xpose.msra.mxu0 0.0
  %3035 = vmatprep.subr.mxu0 0.0
  %3036 = vmatpush1.xpose.msra.mxu0 0.0
  %3037 = vmatprep.subr.mxu0 0.0
  %3038 = vmatpush1.xpose.msra.mxu0 0.0
  %3039 = vmatprep.subr.mxu0 0.0
  %3040 = vmatpush1.xpose.msra.mxu0 0.0
  %3041 = vmatprep.subr.mxu0 0.0
  %3042 = vmatpush1.xpose.msra.mxu0 0.0
  %3043 = vmatprep.subr.mxu0 0.0
  %3044 = vmatpush1.xpose.msra.mxu0 0.0
  %3045 = vmatprep.subr.mxu0 0.0
  %3046 = vmatpush1.xpose.msra.mxu0 0.0
  %3047 = vmatprep.subr.mxu0 0.0
  %3048 = vmatpush1.xpose.msra.mxu0 0.0
  %3049 = vmatprep.subr.mxu0 0.0
  %3050 = vmatpush1.xpose.msra.mxu0 0.0
  %3051 = vmatprep.subr.mxu0 0.0
  %3052 = vmatpush1.xpose.msra.mxu0 0.0
  %3053 = vmatprep.subr.mxu0 0.0
  %3054 = vmatpush1.xpose.msra.mxu0 0.0
  %3055 = vmatprep.subr.mxu0 0.0
  %3056 = vmatpush1.xpose.msra.mxu0 0.0
  %3057 = vmatprep.subr.mxu0 0.0
  %3058 = vmatpush1.xpose.msra.mxu0 0.0
  %3059 = vmatprep.subr.mxu0 0.0
  %3060 = vmatpush1.xpose.msra.mxu0 0.0
  %3061 = vmatprep.subr.mxu0 0.0
  %3062 = vmatpush1.xpose.msra.mxu0 0.0
  %3063 = vmatprep.subr.mxu0 0.0
  %3064 = vmatpush1.xpose.msra.mxu0 0.0
  %3065 = vmatprep.subr.mxu0 0.0
  %3066 = vmatpush1.xpose.msra.mxu0 0.0
  %3067 = vmatprep.subr.mxu0 0.0
  %3068 = vmatpush1.xpose.msra.mxu0 0.0
  %3069 = vmatprep.subr.mxu0 0.0
  %3070 = vmatpush1.xpose.msra.mxu0 0.0
  %3071 = vmatprep.subr.mxu0 0.0
  %3072 = vmatpush1.xpose.msra.mxu0 0.0
  %3073 = vmatprep.subr.mxu0 0.0
  %3074 = vmatpush1.xpose.msra.mxu0 0.0
  %3075 = vmatprep.subr.mxu0 0.0
  %3076 = vmatpush1.xpose.msra.mxu0 0.0
  %3077 = vmatprep.subr.mxu0 0.0
  %3078 = vmatpush1.xpose.msra.mxu0 0.0
  %3079 = vmatprep.subr.mxu0 0.0
  %3080 = vmatpush1.xpose.msra.mxu0 0.0
  %3081 = vmatprep.subr.mxu0 0.0
  %3082 = vmatpush1.xpose.msra.mxu0 0.0
  %3083 = vmatprep.subr.mxu0 0.0
  %3084 = vmatpush1.xpose.msra.mxu0 0.0
  %3085 = vmatprep.subr.mxu0 0.0
  %3086 = vmatpush1.xpose.msra.mxu0 0.0
  %3087 = vmatprep.subr.mxu0 0.0
  %3088 = vmatpush1.xpose.msra.mxu0 0.0
  %3089 = vmatprep.mubr.f32.mxu0 0.0
  %3090 = vmatmul.mubr.f32.gmra.mrb[0].mxu0 %v3009
  %v3091 = vpop.f32.mrb[0].mxu0
  %v3092 = vadd.f32 0.0, %v3091
  %v3093 = vpop.f32.mrb[0].mxu0
  %3094 = vmatprep.mubr.f32.mxu0 0.0
  %3095 = vmatmul.mubr.f32.gmra.mrb[0].mxu0 %v3011
  %v3096 = vpop.f32.mrb[0].mxu0
  %v3097 = vadd.f32 0.0, %v3096
  %v3098 = vpop.f32.mrb[0].mxu0
  %3099 = vmatprep.mubr.f32.mxu0 0.0
  %3100 = vmatmul.mubr.f32.gmra.mrb[0].mxu0 %v3013
  %v3101 = vpop.f32.mrb[0].mxu0
  %v3102 = vadd.f32 0.0, %v3101
  %v3103 = vpop.f32.mrb[0].mxu0
  %3104 = vmatprep.mubr.f32.mxu0 0.0
  %3105 = vmatmul.mubr.f32.gmra.mrb[0].mxu0 %v3015
  %v3106 = vpop.f32.mrb[0].mxu0
  %v3107 = vadd.f32 0.0, %v3106
  %v3108 = vpop.f32.mrb[0].mxu0
  %3109 = vdwg.mxu0
  %v3110 = vsel %vm2432, %v3092, -inf
  %3111 = vmax.xlane.f32.xlu0 %v3110
  %v3112 = vpop.xlane.xlu0 %3111
  %v3113 = vsel %vm2432, %v3097, -inf
  %3114 = vmax.xlane.f32.xlu0 %v3113
  %v3115 = vpop.xlane.xlu0 %3114
  %v3116 = vsel %vm2432, %v3102, -inf
  %3117 = vmax.xlane.f32.xlu0 %v3116
  %v3118 = vpop.xlane.xlu0 %3117
  %v3119 = vsel %vm2432, %v3107, -inf
  %3120 = vmax.xlane.f32.xlu0 %v3119
  %v3121 = vpop.xlane.xlu0 %3120
  %v3122 = vsub.f32 %v3092, %v3112
  %v3123 = vsub.f32 %v3097, %v3115
  %v3124 = vsub.f32 %v3102, %v3118
  %v3125 = vsub.f32 %v3107, %v3121
  %v3126 = vmul.f32 %v3122, 1.442695
  %v3127 = vpow.pop %v3126
  %v3128 = vmul.f32 %v3123, 1.442695
  %v3129 = vpow.pop %v3128
  %v3130 = vmul.f32 %v3124, 1.442695
  %v3131 = vpow.pop %v3130
  %v3132 = vmul.f32 %v3125, 1.442695
  %v3133 = vpow.pop %v3132
  %v3134 = vsel %vm2432, %v3127, 0.0
  %3135 = vadd.xlane.f32.xlu0 %v3134
  %v3136 = vpop.xlane.xlu0 %3135
  %v3137 = vsel %vm2432, %v3129, 0.0
  %3138 = vadd.xlane.f32.xlu0 %v3137
  %v3139 = vpop.xlane.xlu0 %3138
  %v3140 = vsel %vm2432, %v3131, 0.0
  %3141 = vadd.xlane.f32.xlu0 %v3140
  %v3142 = vpop.xlane.xlu0 %3141
  %v3143 = vsel %vm2432, %v3133, 0.0
  %3144 = vadd.xlane.f32.xlu0 %v3143
  %v3145 = vpop.xlane.xlu0 %3144
  %v3146 = vrcp.pop %v3136
  %v3147 = vrcp.pop %v3139
  %v3148 = vrcp.pop %v3142
  %v3149 = vrcp.pop %v3145
  %v3150 = vmul.f32 %v3127, %v3146
  %v3151 = vmul.f32 %v3129, %v3147
  %v3152 = vmul.f32 %v3131, %v3148
  %v3153 = vmul.f32 %v3133, %v3149
  %3158 = vrot.lane.b32.xlu0 %v2708, 112
  %v3159 = vpop.permute.xlu0 %3158
  %3160 = vrot.lane.b32.xlu0 %v2714, 112
  %v3161 = vpop.permute.xlu0 %3160
  %3162 = vrot.lane.b32.xlu0 %v2720, 112
  %v3163 = vpop.permute.xlu0 %3162
  %3164 = vrot.lane.b32.xlu0 %v2726, 112
  %v3165 = vpop.permute.xlu0 %3164
  %v3171 = vsel %vm2432, %v3150, 0
  %v3174 = vsel %vm2432, %v3151, 0
  %v3177 = vsel %vm2432, %v3152, 0
  %v3180 = vsel %vm2432, %v3153, 0
  %3182 = vmatprep.subr.mxu0 0.0
  %3183 = vmatpush1.msra.mxu0 %v3159
  %3184 = vmatprep.subr.mxu0 0.0
  %3185 = vmatpush1.msra.mxu0 %v3161
  %3186 = vmatprep.subr.mxu0 0.0
  %3187 = vmatpush1.msra.mxu0 %v3163
  %3188 = vmatprep.subr.mxu0 0.0
  %3189 = vmatpush1.msra.mxu0 %v3165
  %3190 = vmatprep.subr.mxu0 0.0
  %3191 = vmatpush1.msra.mxu0 0.0
  %3192 = vmatprep.subr.mxu0 0.0
  %3193 = vmatpush1.msra.mxu0 0.0
  %3194 = vmatprep.subr.mxu0 0.0
  %3195 = vmatpush1.msra.mxu0 0.0
  %3196 = vmatprep.subr.mxu0 0.0
  %3197 = vmatpush1.msra.mxu0 0.0
  %3198 = vmatprep.subr.mxu0 0.0
  %3199 = vmatpush1.msra.mxu0 0.0
  %3200 = vmatprep.subr.mxu0 0.0
  %3201 = vmatpush1.msra.mxu0 0.0
  %3202 = vmatprep.subr.mxu0 0.0
  %3203 = vmatpush1.msra.mxu0 0.0
  %3204 = vmatprep.subr.mxu0 0.0
  %3205 = vmatpush1.msra.mxu0 0.0
  %3206 = vmatprep.subr.mxu0 0.0
  %3207 = vmatpush1.msra.mxu0 0.0
  %3208 = vmatprep.subr.mxu0 0.0
  %3209 = vmatpush1.msra.mxu0 0.0
  %3210 = vmatprep.subr.mxu0 0.0
  %3211 = vmatpush1.msra.mxu0 0.0
  %3212 = vmatprep.subr.mxu0 0.0
  %3213 = vmatpush1.msra.mxu0 0.0
  %3214 = vmatprep.subr.mxu0 0.0
  %3215 = vmatpush1.msra.mxu0 0.0
  %3216 = vmatprep.subr.mxu0 0.0
  %3217 = vmatpush1.msra.mxu0 0.0
  %3218 = vmatprep.subr.mxu0 0.0
  %3219 = vmatpush1.msra.mxu0 0.0
  %3220 = vmatprep.subr.mxu0 0.0
  %3221 = vmatpush1.msra.mxu0 0.0
  %3222 = vmatprep.subr.mxu0 0.0
  %3223 = vmatpush1.msra.mxu0 0.0
  %3224 = vmatprep.subr.mxu0 0.0
  %3225 = vmatpush1.msra.mxu0 0.0
  %3226 = vmatprep.subr.mxu0 0.0
  %3227 = vmatpush1.msra.mxu0 0.0
  %3228 = vmatprep.subr.mxu0 0.0
  %3229 = vmatpush1.msra.mxu0 0.0
  %3230 = vmatprep.subr.mxu0 0.0
  %3231 = vmatpush1.msra.mxu0 0.0
  %3232 = vmatprep.subr.mxu0 0.0
  %3233 = vmatpush1.msra.mxu0 0.0
  %3234 = vmatprep.subr.mxu0 0.0
  %3235 = vmatpush1.msra.mxu0 0.0
  %3236 = vmatprep.subr.mxu0 0.0
  %3237 = vmatpush1.msra.mxu0 0.0
  %3238 = vmatprep.subr.mxu0 0.0
  %3239 = vmatpush1.msra.mxu0 0.0
  %3240 = vmatprep.subr.mxu0 0.0
  %3241 = vmatpush1.msra.mxu0 0.0
  %3242 = vmatprep.subr.mxu0 0.0
  %3243 = vmatpush1.msra.mxu0 0.0
  %3244 = vmatprep.subr.mxu0 0.0
  %3245 = vmatpush1.msra.mxu0 0.0
  %3246 = vmatprep.mubr.f32.mxu0 0.0
  %3247 = vmatmul.mubr.f32.gmra.mrb[0].mxu0 %v3171
  %v3248 = vpop.f32.mrb[0].mxu0
  %v3249 = vadd.f32 0.0, %v3248
  %v3250 = vpop.f32.mrb[0].mxu0
  %3251 = vmatprep.mubr.f32.mxu0 0.0
  %3252 = vmatmul.mubr.f32.gmra.mrb[0].mxu0 %v3174
  %v3253 = vpop.f32.mrb[0].mxu0
  %v3254 = vadd.f32 0.0, %v3253
  %v3255 = vpop.f32.mrb[0].mxu0
  %3256 = vmatprep.mubr.f32.mxu0 0.0
  %3257 = vmatmul.mubr.f32.gmra.mrb[0].mxu0 %v3177
  %v3258 = vpop.f32.mrb[0].mxu0
  %v3259 = vadd.f32 0.0, %v3258
  %v3260 = vpop.f32.mrb[0].mxu0
  %3261 = vmatprep.mubr.f32.mxu0 0.0
  %3262 = vmatmul.mubr.f32.gmra.mrb[0].mxu0 %v3180
  %v3263 = vpop.f32.mrb[0].mxu0
  %v3264 = vadd.f32 0.0, %v3263
  %v3265 = vpop.f32.mrb[0].mxu0
  %3266 = vdwg.mxu0
  %v3267 = vld [vmem:[%s10 + $0x10] sm:$0xff]
  %v3268 = vld [vmem:[%s10 + $0x18] sm:$0xff]
  %v3270 = vsel %vm2744, %v3249, 0
  %v3273 = vsel %vm2744, %v3254, 0
  %v3276 = vsel %vm2744, %v3259, 0
  %v3279 = vsel %vm2744, %v3264, 0
  %3281 = vmatprep.subr.mxu0 0.0
  %3282 = vmatpush1.msra.mxu0 %v3267
  %3283 = vmatprep.subr.mxu0 0.0
  %3284 = vmatpush1.msra.mxu0 %v3268
  %3285 = vmatprep.subr.mxu0 0.0
  %3286 = vmatpush1.msra.mxu0 0.0
  %3287 = vmatprep.subr.mxu0 0.0
  %3288 = vmatpush1.msra.mxu0 0.0
  %3289 = vmatprep.subr.mxu0 0.0
  %3290 = vmatpush1.msra.mxu0 0.0
  %3291 = vmatprep.subr.mxu0 0.0
  %3292 = vmatpush1.msra.mxu0 0.0
  %3293 = vmatprep.subr.mxu0 0.0
  %3294 = vmatpush1.msra.mxu0 0.0
  %3295 = vmatprep.subr.mxu0 0.0
  %3296 = vmatpush1.msra.mxu0 0.0
  %3297 = vmatprep.subr.mxu0 0.0
  %3298 = vmatpush1.msra.mxu0 0.0
  %3299 = vmatprep.subr.mxu0 0.0
  %3300 = vmatpush1.msra.mxu0 0.0
  %3301 = vmatprep.subr.mxu0 0.0
  %3302 = vmatpush1.msra.mxu0 0.0
  %3303 = vmatprep.subr.mxu0 0.0
  %3304 = vmatpush1.msra.mxu0 0.0
  %3305 = vmatprep.subr.mxu0 0.0
  %3306 = vmatpush1.msra.mxu0 0.0
  %3307 = vmatprep.subr.mxu0 0.0
  %3308 = vmatpush1.msra.mxu0 0.0
  %3309 = vmatprep.subr.mxu0 0.0
  %3310 = vmatpush1.msra.mxu0 0.0
  %3311 = vmatprep.subr.mxu0 0.0
  %3312 = vmatpush1.msra.mxu0 0.0
  %3313 = vmatprep.subr.mxu0 0.0
  %3314 = vmatpush1.msra.mxu0 0.0
  %3315 = vmatprep.subr.mxu0 0.0
  %3316 = vmatpush1.msra.mxu0 0.0
  %3317 = vmatprep.subr.mxu0 0.0
  %3318 = vmatpush1.msra.mxu0 0.0
  %3319 = vmatprep.subr.mxu0 0.0
  %3320 = vmatpush1.msra.mxu0 0.0
  %3321 = vmatprep.subr.mxu0 0.0
  %3322 = vmatpush1.msra.mxu0 0.0
  %3323 = vmatprep.subr.mxu0 0.0
  %3324 = vmatpush1.msra.mxu0 0.0
  %3325 = vmatprep.subr.mxu0 0.0
  %3326 = vmatpush1.msra.mxu0 0.0
  %3327 = vmatprep.subr.mxu0 0.0
  %3328 = vmatpush1.msra.mxu0 0.0
  %3329 = vmatprep.subr.mxu0 0.0
  %3330 = vmatpush1.msra.mxu0 0.0
  %3331 = vmatprep.subr.mxu0 0.0
  %3332 = vmatpush1.msra.mxu0 0.0
  %3333 = vmatprep.subr.mxu0 0.0
  %3334 = vmatpush1.msra.mxu0 0.0
  %3335 = vmatprep.subr.mxu0 0.0
  %3336 = vmatpush1.msra.mxu0 0.0
  %3337 = vmatprep.subr.mxu0 0.0
  %3338 = vmatpush1.msra.mxu0 0.0
  %3339 = vmatprep.subr.mxu0 0.0
  %3340 = vmatpush1.msra.mxu0 0.0
  %3341 = vmatprep.subr.mxu0 0.0
  %3342 = vmatpush1.msra.mxu0 0.0
  %3343 = vmatprep.subr.mxu0 0.0
  %3344 = vmatpush1.msra.mxu0 0.0
  %3345 = vmatprep.mubr.f32.mxu0 0.0
  %3346 = vmatmul.mubr.f32.gmra.mrb[0].mxu0 %v3270
  %v3347 = vpop.f32.mrb[0].mxu0
  %v3348 = vadd.f32 0.0, %v3347
  %v3349 = vpop.f32.mrb[0].mxu0
  %3350 = vmatprep.mubr.f32.mxu0 0.0
  %3351 = vmatmul.mubr.f32.gmra.mrb[0].mxu0 %v3273
  %v3352 = vpop.f32.mrb[0].mxu0
  %v3353 = vadd.f32 0.0, %v3352
  %v3354 = vpop.f32.mrb[0].mxu0
  %3355 = vmatprep.mubr.f32.mxu0 0.0
  %3356 = vmatmul.mubr.f32.gmra.mrb[0].mxu0 %v3276
  %v3357 = vpop.f32.mrb[0].mxu0
  %v3358 = vadd.f32 0.0, %v3357
  %v3359 = vpop.f32.mrb[0].mxu0
  %3360 = vmatprep.mubr.f32.mxu0 0.0
  %3361 = vmatmul.mubr.f32.gmra.mrb[0].mxu0 %v3279
  %v3362 = vpop.f32.mrb[0].mxu0
  %v3363 = vadd.f32 0.0, %v3362
  %v3364 = vpop.f32.mrb[0].mxu0
  %3365 = vdwg.mxu0
  %v3367 = vsel %vm2744, %v2973, 0
  %v3370 = vsel %vm2744, %v2978, 0
  %v3373 = vsel %vm2744, %v2983, 0
  %v3376 = vsel %vm2744, %v2988, 0
  %3378 = vmatprep.subr.mxu0 0.0
  %3379 = vmatpush1.msra.mxu0 %v2991
  %3380 = vmatprep.subr.mxu0 0.0
  %3381 = vmatpush1.msra.mxu0 %v2992
  %3382 = vmatprep.subr.mxu0 0.0
  %3383 = vmatpush1.msra.mxu0 0.0
  %3384 = vmatprep.subr.mxu0 0.0
  %3385 = vmatpush1.msra.mxu0 0.0
  %3386 = vmatprep.subr.mxu0 0.0
  %3387 = vmatpush1.msra.mxu0 0.0
  %3388 = vmatprep.subr.mxu0 0.0
  %3389 = vmatpush1.msra.mxu0 0.0
  %3390 = vmatprep.subr.mxu0 0.0
  %3391 = vmatpush1.msra.mxu0 0.0
  %3392 = vmatprep.subr.mxu0 0.0
  %3393 = vmatpush1.msra.mxu0 0.0
  %3394 = vmatprep.subr.mxu0 0.0
  %3395 = vmatpush1.msra.mxu0 0.0
  %3396 = vmatprep.subr.mxu0 0.0
  %3397 = vmatpush1.msra.mxu0 0.0
  %3398 = vmatprep.subr.mxu0 0.0
  %3399 = vmatpush1.msra.mxu0 0.0
  %3400 = vmatprep.subr.mxu0 0.0
  %3401 = vmatpush1.msra.mxu0 0.0
  %3402 = vmatprep.subr.mxu0 0.0
  %3403 = vmatpush1.msra.mxu0 0.0
  %3404 = vmatprep.subr.mxu0 0.0
  %3405 = vmatpush1.msra.mxu0 0.0
  %3406 = vmatprep.subr.mxu0 0.0
  %3407 = vmatpush1.msra.mxu0 0.0
  %3408 = vmatprep.subr.mxu0 0.0
  %3409 = vmatpush1.msra.mxu0 0.0
  %3410 = vmatprep.subr.mxu0 0.0
  %3411 = vmatpush1.msra.mxu0 0.0
  %3412 = vmatprep.subr.mxu0 0.0
  %3413 = vmatpush1.msra.mxu0 0.0
  %3414 = vmatprep.subr.mxu0 0.0
  %3415 = vmatpush1.msra.mxu0 0.0
  %3416 = vmatprep.subr.mxu0 0.0
  %3417 = vmatpush1.msra.mxu0 0.0
  %3418 = vmatprep.subr.mxu0 0.0
  %3419 = vmatpush1.msra.mxu0 0.0
  %3420 = vmatprep.subr.mxu0 0.0
  %3421 = vmatpush1.msra.mxu0 0.0
  %3422 = vmatprep.subr.mxu0 0.0
  %3423 = vmatpush1.msra.mxu0 0.0
  %3424 = vmatprep.subr.mxu0 0.0
  %3425 = vmatpush1.msra.mxu0 0.0
  %3426 = vmatprep.subr.mxu0 0.0
  %3427 = vmatpush1.msra.mxu0 0.0
  %3428 = vmatprep.subr.mxu0 0.0
  %3429 = vmatpush1.msra.mxu0 0.0
  %3430 = vmatprep.subr.mxu0 0.0
  %3431 = vmatpush1.msra.mxu0 0.0
  %3432 = vmatprep.subr.mxu0 0.0
  %3433 = vmatpush1.msra.mxu0 0.0
  %3434 = vmatprep.subr.mxu0 0.0
  %3435 = vmatpush1.msra.mxu0 0.0
  %3436 = vmatprep.subr.mxu0 0.0
  %3437 = vmatpush1.msra.mxu0 0.0
  %3438 = vmatprep.subr.mxu0 0.0
  %3439 = vmatpush1.msra.mxu0 0.0
  %3440 = vmatprep.subr.mxu0 0.0
  %3441 = vmatpush1.msra.mxu0 0.0
  %3442 = vmatprep.mubr.f32.mxu0 0.0
  %3443 = vmatmul.mubr.f32.gmra.mrb[0].mxu0 %v3367
  %v3444 = vpop.f32.mrb[0].mxu0
  %v3445 = vadd.f32 %v3348, %v3444
  %v3446 = vpop.f32.mrb[0].mxu0
  %3447 = vmatprep.mubr.f32.mxu0 0.0
  %3448 = vmatmul.mubr.f32.gmra.mrb[0].mxu0 %v3370
  %v3449 = vpop.f32.mrb[0].mxu0
  %v3450 = vadd.f32 %v3353, %v3449
  %v3451 = vpop.f32.mrb[0].mxu0
  %3452 = vmatprep.mubr.f32.mxu0 0.0
  %3453 = vmatmul.mubr.f32.gmra.mrb[0].mxu0 %v3373
  %v3454 = vpop.f32.mrb[0].mxu0
  %v3455 = vadd.f32 %v3358, %v3454
  %v3456 = vpop.f32.mrb[0].mxu0
  %3457 = vmatprep.mubr.f32.mxu0 0.0
  %3458 = vmatmul.mubr.f32.gmra.mrb[0].mxu0 %v3376
  %v3459 = vpop.f32.mrb[0].mxu0
  %v3460 = vadd.f32 %v3363, %v3459
  %v3461 = vpop.f32.mrb[0].mxu0
  %3462 = vdwg.mxu0
  %3463 = vrot.lane.b32.xlu0 %v2728, 96
  %v3464 = vpop.permute.xlu0 %3463
  %3465 = vrot.lane.b32.xlu0 %v2729, 96
  %v3466 = vpop.permute.xlu0 %3465
  %3467 = vrot.lane.b32.xlu0 %v2730, 96
  %v3468 = vpop.permute.xlu0 %3467
  %3469 = vrot.lane.b32.xlu0 %v2731, 96
  %v3470 = vpop.permute.xlu0 %3469
  %3471 = vrot.lane.b32.xlu0 %v2706, 32
  %v3472 = vpop.permute.xlu0 %3471
  %3473 = vrot.lane.b32.xlu0 %v2712, 32
  %v3474 = vpop.permute.xlu0 %3473
  %3475 = vrot.lane.b32.xlu0 %v2718, 32
  %v3476 = vpop.permute.xlu0 %3475
  %3477 = vrot.lane.b32.xlu0 %v2724, 32
  %v3478 = vpop.permute.xlu0 %3477
  %v3479 = vsel %vm2744, %v3464, 0
  %v3481 = vsel %vm2744, %v3466, 0
  %v3483 = vsel %vm2744, %v3468, 0
  %v3485 = vsel %vm2744, %v3470, 0
  %v3487 = vsel %vm2744, %v3472, 0
  %v3489 = vsel %vm2744, %v3474, 0
  %v3491 = vsel %vm2744, %v3476, 0
  %v3493 = vsel %vm2744, %v3478, 0
  %3495 = vmatprep.subr.mxu0 0.0
  %3496 = vmatpush1.xpose.msra.mxu0 %v3487
  %3497 = vmatprep.subr.mxu0 0.0
  %3498 = vmatpush1.xpose.msra.mxu0 %v3489
  %3499 = vmatprep.subr.mxu0 0.0
  %3500 = vmatpush1.xpose.msra.mxu0 %v3491
  %3501 = vmatprep.subr.mxu0 0.0
  %3502 = vmatpush1.xpose.msra.mxu0 %v3493
  %3503 = vmatprep.subr.mxu0 0.0
  %3504 = vmatpush1.xpose.msra.mxu0 0.0
  %3505 = vmatprep.subr.mxu0 0.0
  %3506 = vmatpush1.xpose.msra.mxu0 0.0
  %3507 = vmatprep.subr.mxu0 0.0
  %3508 = vmatpush1.xpose.msra.mxu0 0.0
  %3509 = vmatprep.subr.mxu0 0.0
  %3510 = vmatpush1.xpose.msra.mxu0 0.0
  %3511 = vmatprep.subr.mxu0 0.0
  %3512 = vmatpush1.xpose.msra.mxu0 0.0
  %3513 = vmatprep.subr.mxu0 0.0
  %3514 = vmatpush1.xpose.msra.mxu0 0.0
  %3515 = vmatprep.subr.mxu0 0.0
  %3516 = vmatpush1.xpose.msra.mxu0 0.0
  %3517 = vmatprep.subr.mxu0 0.0
  %3518 = vmatpush1.xpose.msra.mxu0 0.0
  %3519 = vmatprep.subr.mxu0 0.0
  %3520 = vmatpush1.xpose.msra.mxu0 0.0
  %3521 = vmatprep.subr.mxu0 0.0
  %3522 = vmatpush1.xpose.msra.mxu0 0.0
  %3523 = vmatprep.subr.mxu0 0.0
  %3524 = vmatpush1.xpose.msra.mxu0 0.0
  %3525 = vmatprep.subr.mxu0 0.0
  %3526 = vmatpush1.xpose.msra.mxu0 0.0
  %3527 = vmatprep.subr.mxu0 0.0
  %3528 = vmatpush1.xpose.msra.mxu0 0.0
  %3529 = vmatprep.subr.mxu0 0.0
  %3530 = vmatpush1.xpose.msra.mxu0 0.0
  %3531 = vmatprep.subr.mxu0 0.0
  %3532 = vmatpush1.xpose.msra.mxu0 0.0
  %3533 = vmatprep.subr.mxu0 0.0
  %3534 = vmatpush1.xpose.msra.mxu0 0.0
  %3535 = vmatprep.subr.mxu0 0.0
  %3536 = vmatpush1.xpose.msra.mxu0 0.0
  %3537 = vmatprep.subr.mxu0 0.0
  %3538 = vmatpush1.xpose.msra.mxu0 0.0
  %3539 = vmatprep.subr.mxu0 0.0
  %3540 = vmatpush1.xpose.msra.mxu0 0.0
  %3541 = vmatprep.subr.mxu0 0.0
  %3542 = vmatpush1.xpose.msra.mxu0 0.0
  %3543 = vmatprep.subr.mxu0 0.0
  %3544 = vmatpush1.xpose.msra.mxu0 0.0
  %3545 = vmatprep.subr.mxu0 0.0
  %3546 = vmatpush1.xpose.msra.mxu0 0.0
  %3547 = vmatprep.subr.mxu0 0.0
  %3548 = vmatpush1.xpose.msra.mxu0 0.0
  %3549 = vmatprep.subr.mxu0 0.0
  %3550 = vmatpush1.xpose.msra.mxu0 0.0
  %3551 = vmatprep.subr.mxu0 0.0
  %3552 = vmatpush1.xpose.msra.mxu0 0.0
  %3553 = vmatprep.subr.mxu0 0.0
  %3554 = vmatpush1.xpose.msra.mxu0 0.0
  %3555 = vmatprep.subr.mxu0 0.0
  %3556 = vmatpush1.xpose.msra.mxu0 0.0
  %3557 = vmatprep.subr.mxu0 0.0
  %3558 = vmatpush1.xpose.msra.mxu0 0.0
  %3559 = vmatprep.mubr.f32.mxu0 0.0
  %3560 = vmatmul.mubr.f32.gmra.mrb[0].mxu0 %v3479
  %v3561 = vpop.f32.mrb[0].mxu0
  %v3562 = vadd.f32 0.0, %v3561
  %v3563 = vpop.f32.mrb[0].mxu0
  %3564 = vmatprep.mubr.f32.mxu0 0.0
  %3565 = vmatmul.mubr.f32.gmra.mrb[0].mxu0 %v3481
  %v3566 = vpop.f32.mrb[0].mxu0
  %v3567 = vadd.f32 0.0, %v3566
  %v3568 = vpop.f32.mrb[0].mxu0
  %3569 = vmatprep.mubr.f32.mxu0 0.0
  %3570 = vmatmul.mubr.f32.gmra.mrb[0].mxu0 %v3483
  %v3571 = vpop.f32.mrb[0].mxu0
  %v3572 = vadd.f32 0.0, %v3571
  %v3573 = vpop.f32.mrb[0].mxu0
  %3574 = vmatprep.mubr.f32.mxu0 0.0
  %3575 = vmatmul.mubr.f32.gmra.mrb[0].mxu0 %v3485
  %v3576 = vpop.f32.mrb[0].mxu0
  %v3577 = vadd.f32 0.0, %v3576
  %v3578 = vpop.f32.mrb[0].mxu0
  %3579 = vdwg.mxu0
  %v3580 = vsel %vm2432, %v3562, -inf
  %3581 = vmax.xlane.f32.xlu0 %v3580
  %v3582 = vpop.xlane.xlu0 %3581
  %v3583 = vsel %vm2432, %v3567, -inf
  %3584 = vmax.xlane.f32.xlu0 %v3583
  %v3585 = vpop.xlane.xlu0 %3584
  %v3586 = vsel %vm2432, %v3572, -inf
  %3587 = vmax.xlane.f32.xlu0 %v3586
  %v3588 = vpop.xlane.xlu0 %3587
  %v3589 = vsel %vm2432, %v3577, -inf
  %3590 = vmax.xlane.f32.xlu0 %v3589
  %v3591 = vpop.xlane.xlu0 %3590
  %v3592 = vsub.f32 %v3562, %v3582
  %v3593 = vsub.f32 %v3567, %v3585
  %v3594 = vsub.f32 %v3572, %v3588
  %v3595 = vsub.f32 %v3577, %v3591
  %v3596 = vmul.f32 %v3592, 1.442695
  %v3597 = vpow.pop %v3596
  %v3598 = vmul.f32 %v3593, 1.442695
  %v3599 = vpow.pop %v3598
  %v3600 = vmul.f32 %v3594, 1.442695
  %v3601 = vpow.pop %v3600
  %v3602 = vmul.f32 %v3595, 1.442695
  %v3603 = vpow.pop %v3602
  %v3604 = vsel %vm2432, %v3597, 0.0
  %3605 = vadd.xlane.f32.xlu0 %v3604
  %v3606 = vpop.xlane.xlu0 %3605
  %v3607 = vsel %vm2432, %v3599, 0.0
  %3608 = vadd.xlane.f32.xlu0 %v3607
  %v3609 = vpop.xlane.xlu0 %3608
  %v3610 = vsel %vm2432, %v3601, 0.0
  %3611 = vadd.xlane.f32.xlu0 %v3610
  %v3612 = vpop.xlane.xlu0 %3611
  %v3613 = vsel %vm2432, %v3603, 0.0
  %3614 = vadd.xlane.f32.xlu0 %v3613
  %v3615 = vpop.xlane.xlu0 %3614
  %v3616 = vrcp.pop %v3606
  %v3617 = vrcp.pop %v3609
  %v3618 = vrcp.pop %v3612
  %v3619 = vrcp.pop %v3615
  %v3620 = vmul.f32 %v3597, %v3616
  %v3621 = vmul.f32 %v3599, %v3617
  %v3622 = vmul.f32 %v3601, %v3618
  %v3623 = vmul.f32 %v3603, %v3619
  %3624 = vrot.lane.b32.xlu0 %v2708, 96
  %v3625 = vpop.permute.xlu0 %3624
  %3626 = vrot.lane.b32.xlu0 %v2714, 96
  %v3627 = vpop.permute.xlu0 %3626
  %3628 = vrot.lane.b32.xlu0 %v2720, 96
  %v3629 = vpop.permute.xlu0 %3628
  %3630 = vrot.lane.b32.xlu0 %v2726, 96
  %v3631 = vpop.permute.xlu0 %3630
  %v3637 = vsel %vm2432, %v3620, 0
  %v3640 = vsel %vm2432, %v3621, 0
  %v3643 = vsel %vm2432, %v3622, 0
  %v3646 = vsel %vm2432, %v3623, 0
  %3648 = vmatprep.subr.mxu0 0.0
  %3649 = vmatpush1.msra.mxu0 %v3625
  %3650 = vmatprep.subr.mxu0 0.0
  %3651 = vmatpush1.msra.mxu0 %v3627
  %3652 = vmatprep.subr.mxu0 0.0
  %3653 = vmatpush1.msra.mxu0 %v3629
  %3654 = vmatprep.subr.mxu0 0.0
  %3655 = vmatpush1.msra.mxu0 %v3631
  %3656 = vmatprep.subr.mxu0 0.0
  %3657 = vmatpush1.msra.mxu0 0.0
  %3658 = vmatprep.subr.mxu0 0.0
  %3659 = vmatpush1.msra.mxu0 0.0
  %3660 = vmatprep.subr.mxu0 0.0
  %3661 = vmatpush1.msra.mxu0 0.0
  %3662 = vmatprep.subr.mxu0 0.0
  %3663 = vmatpush1.msra.mxu0 0.0
  %3664 = vmatprep.subr.mxu0 0.0
  %3665 = vmatpush1.msra.mxu0 0.0
  %3666 = vmatprep.subr.mxu0 0.0
  %3667 = vmatpush1.msra.mxu0 0.0
  %3668 = vmatprep.subr.mxu0 0.0
  %3669 = vmatpush1.msra.mxu0 0.0
  %3670 = vmatprep.subr.mxu0 0.0
  %3671 = vmatpush1.msra.mxu0 0.0
  %3672 = vmatprep.subr.mxu0 0.0
  %3673 = vmatpush1.msra.mxu0 0.0
  %3674 = vmatprep.subr.mxu0 0.0
  %3675 = vmatpush1.msra.mxu0 0.0
  %3676 = vmatprep.subr.mxu0 0.0
  %3677 = vmatpush1.msra.mxu0 0.0
  %3678 = vmatprep.subr.mxu0 0.0
  %3679 = vmatpush1.msra.mxu0 0.0
  %3680 = vmatprep.subr.mxu0 0.0
  %3681 = vmatpush1.msra.mxu0 0.0
  %3682 = vmatprep.subr.mxu0 0.0
  %3683 = vmatpush1.msra.mxu0 0.0
  %3684 = vmatprep.subr.mxu0 0.0
  %3685 = vmatpush1.msra.mxu0 0.0
  %3686 = vmatprep.subr.mxu0 0.0
  %3687 = vmatpush1.msra.mxu0 0.0
  %3688 = vmatprep.subr.mxu0 0.0
  %3689 = vmatpush1.msra.mxu0 0.0
  %3690 = vmatprep.subr.mxu0 0.0
  %3691 = vmatpush1.msra.mxu0 0.0
  %3692 = vmatprep.subr.mxu0 0.0
  %3693 = vmatpush1.msra.mxu0 0.0
  %3694 = vmatprep.subr.mxu0 0.0
  %3695 = vmatpush1.msra.mxu0 0.0
  %3696 = vmatprep.subr.mxu0 0.0
  %3697 = vmatpush1.msra.mxu0 0.0
  %3698 = vmatprep.subr.mxu0 0.0
  %3699 = vmatpush1.msra.mxu0 0.0
  %3700 = vmatprep.subr.mxu0 0.0
  %3701 = vmatpush1.msra.mxu0 0.0
  %3702 = vmatprep.subr.mxu0 0.0
  %3703 = vmatpush1.msra.mxu0 0.0
  %3704 = vmatprep.subr.mxu0 0.0
  %3705 = vmatpush1.msra.mxu0 0.0
  %3706 = vmatprep.subr.mxu0 0.0
  %3707 = vmatpush1.msra.mxu0 0.0
  %3708 = vmatprep.subr.mxu0 0.0
  %3709 = vmatpush1.msra.mxu0 0.0
  %3710 = vmatprep.subr.mxu0 0.0
  %3711 = vmatpush1.msra.mxu0 0.0
  %3712 = vmatprep.mubr.f32.mxu0 0.0
  %3713 = vmatmul.mubr.f32.gmra.mrb[0].mxu0 %v3637
  %v3714 = vpop.f32.mrb[0].mxu0
  %v3715 = vadd.f32 0.0, %v3714
  %v3716 = vpop.f32.mrb[0].mxu0
  %3717 = vmatprep.mubr.f32.mxu0 0.0
  %3718 = vmatmul.mubr.f32.gmra.mrb[0].mxu0 %v3640
  %v3719 = vpop.f32.mrb[0].mxu0
  %v3720 = vadd.f32 0.0, %v3719
  %v3721 = vpop.f32.mrb[0].mxu0
  %3722 = vmatprep.mubr.f32.mxu0 0.0
  %3723 = vmatmul.mubr.f32.gmra.mrb[0].mxu0 %v3643
  %v3724 = vpop.f32.mrb[0].mxu0
  %v3725 = vadd.f32 0.0, %v3724
  %v3726 = vpop.f32.mrb[0].mxu0
  %3727 = vmatprep.mubr.f32.mxu0 0.0
  %3728 = vmatmul.mubr.f32.gmra.mrb[0].mxu0 %v3646
  %v3729 = vpop.f32.mrb[0].mxu0
  %v3730 = vadd.f32 0.0, %v3729
  %v3731 = vpop.f32.mrb[0].mxu0
  %3732 = vdwg.mxu0
  %v3733 = vld [vmem:[%s10 + $0x20] sm:$0xff]
  %v3734 = vld [vmem:[%s10 + $0x28] sm:$0xff]
  %v3736 = vsel %vm2744, %v3715, 0
  %v3739 = vsel %vm2744, %v3720, 0
  %v3742 = vsel %vm2744, %v3725, 0
  %v3745 = vsel %vm2744, %v3730, 0
  %3747 = vmatprep.subr.mxu0 0.0
  %3748 = vmatpush1.msra.mxu0 %v3733
  %3749 = vmatprep.subr.mxu0 0.0
  %3750 = vmatpush1.msra.mxu0 %v3734
  %3751 = vmatprep.subr.mxu0 0.0
  %3752 = vmatpush1.msra.mxu0 0.0
  %3753 = vmatprep.subr.mxu0 0.0
  %3754 = vmatpush1.msra.mxu0 0.0
  %3755 = vmatprep.subr.mxu0 0.0
  %3756 = vmatpush1.msra.mxu0 0.0
  %3757 = vmatprep.subr.mxu0 0.0
  %3758 = vmatpush1.msra.mxu0 0.0
  %3759 = vmatprep.subr.mxu0 0.0
  %3760 = vmatpush1.msra.mxu0 0.0
  %3761 = vmatprep.subr.mxu0 0.0
  %3762 = vmatpush1.msra.mxu0 0.0
  %3763 = vmatprep.subr.mxu0 0.0
  %3764 = vmatpush1.msra.mxu0 0.0
  %3765 = vmatprep.subr.mxu0 0.0
  %3766 = vmatpush1.msra.mxu0 0.0
  %3767 = vmatprep.subr.mxu0 0.0
  %3768 = vmatpush1.msra.mxu0 0.0
  %3769 = vmatprep.subr.mxu0 0.0
  %3770 = vmatpush1.msra.mxu0 0.0
  %3771 = vmatprep.subr.mxu0 0.0
  %3772 = vmatpush1.msra.mxu0 0.0
  %3773 = vmatprep.subr.mxu0 0.0
  %3774 = vmatpush1.msra.mxu0 0.0
  %3775 = vmatprep.subr.mxu0 0.0
  %3776 = vmatpush1.msra.mxu0 0.0
  %3777 = vmatprep.subr.mxu0 0.0
  %3778 = vmatpush1.msra.mxu0 0.0
  %3779 = vmatprep.subr.mxu0 0.0
  %3780 = vmatpush1.msra.mxu0 0.0
  %3781 = vmatprep.subr.mxu0 0.0
  %3782 = vmatpush1.msra.mxu0 0.0
  %3783 = vmatprep.subr.mxu0 0.0
  %3784 = vmatpush1.msra.mxu0 0.0
  %3785 = vmatprep.subr.mxu0 0.0
  %3786 = vmatpush1.msra.mxu0 0.0
  %3787 = vmatprep.subr.mxu0 0.0
  %3788 = vmatpush1.msra.mxu0 0.0
  %3789 = vmatprep.subr.mxu0 0.0
  %3790 = vmatpush1.msra.mxu0 0.0
  %3791 = vmatprep.subr.mxu0 0.0
  %3792 = vmatpush1.msra.mxu0 0.0
  %3793 = vmatprep.subr.mxu0 0.0
  %3794 = vmatpush1.msra.mxu0 0.0
  %3795 = vmatprep.subr.mxu0 0.0
  %3796 = vmatpush1.msra.mxu0 0.0
  %3797 = vmatprep.subr.mxu0 0.0
  %3798 = vmatpush1.msra.mxu0 0.0
  %3799 = vmatprep.subr.mxu0 0.0
  %3800 = vmatpush1.msra.mxu0 0.0
  %3801 = vmatprep.subr.mxu0 0.0
  %3802 = vmatpush1.msra.mxu0 0.0
  %3803 = vmatprep.subr.mxu0 0.0
  %3804 = vmatpush1.msra.mxu0 0.0
  %3805 = vmatprep.subr.mxu0 0.0
  %3806 = vmatpush1.msra.mxu0 0.0
  %3807 = vmatprep.subr.mxu0 0.0
  %3808 = vmatpush1.msra.mxu0 0.0
  %3809 = vmatprep.subr.mxu0 0.0
  %3810 = vmatpush1.msra.mxu0 0.0
  %3811 = vmatprep.mubr.f32.mxu0 0.0
  %3812 = vmatmul.mubr.f32.gmra.mrb[0].mxu0 %v3736
  %v3813 = vpop.f32.mrb[0].mxu0
  %v3814 = vadd.f32 0.0, %v3813
  %v3815 = vpop.f32.mrb[0].mxu0
  %3816 = vmatprep.mubr.f32.mxu0 0.0
  %3817 = vmatmul.mubr.f32.gmra.mrb[0].mxu0 %v3739
  %v3818 = vpop.f32.mrb[0].mxu0
  %v3819 = vadd.f32 0.0, %v3818
  %v3820 = vpop.f32.mrb[0].mxu0
  %3821 = vmatprep.mubr.f32.mxu0 0.0
  %3822 = vmatmul.mubr.f32.gmra.mrb[0].mxu0 %v3742
  %v3823 = vpop.f32.mrb[0].mxu0
  %v3824 = vadd.f32 0.0, %v3823
  %v3825 = vpop.f32.mrb[0].mxu0
  %3826 = vmatprep.mubr.f32.mxu0 0.0
  %3827 = vmatmul.mubr.f32.gmra.mrb[0].mxu0 %v3745
  %v3828 = vpop.f32.mrb[0].mxu0
  %v3829 = vadd.f32 0.0, %v3828
  %v3830 = vpop.f32.mrb[0].mxu0
  %3831 = vdwg.mxu0
  %v3832 = vadd.f32 %v3445, %v3814
  %v3833 = vadd.f32 %v3450, %v3819
  %v3834 = vadd.f32 %v3455, %v3824
  %v3835 = vadd.f32 %v3460, %v3829
  %3836 = vrot.lane.b32.xlu0 %v2728, 80
  %v3837 = vpop.permute.xlu0 %3836
  %3838 = vrot.lane.b32.xlu0 %v2729, 80
  %v3839 = vpop.permute.xlu0 %3838
  %3840 = vrot.lane.b32.xlu0 %v2730, 80
  %v3841 = vpop.permute.xlu0 %3840
  %3842 = vrot.lane.b32.xlu0 %v2731, 80
  %v3843 = vpop.permute.xlu0 %3842
  %3844 = vrot.lane.b32.xlu0 %v2706, 16
  %v3845 = vpop.permute.xlu0 %3844
  %3846 = vrot.lane.b32.xlu0 %v2712, 16
  %v3847 = vpop.permute.xlu0 %3846
  %3848 = vrot.lane.b32.xlu0 %v2718, 16
  %v3849 = vpop.permute.xlu0 %3848
  %3850 = vrot.lane.b32.xlu0 %v2724, 16
  %v3851 = vpop.permute.xlu0 %3850
  %v3852 = vsel %vm2744, %v3837, 0
  %v3854 = vsel %vm2744, %v3839, 0
  %v3856 = vsel %vm2744, %v3841, 0
  %v3858 = vsel %vm2744, %v3843, 0
  %v3860 = vsel %vm2744, %v3845, 0
  %v3862 = vsel %vm2744, %v3847, 0
  %v3864 = vsel %vm2744, %v3849, 0
  %v3866 = vsel %vm2744, %v3851, 0
  %3868 = vmatprep.subr.mxu0 0.0
  %3869 = vmatpush1.xpose.msra.mxu0 %v3860
  %3870 = vmatprep.subr.mxu0 0.0
  %3871 = vmatpush1.xpose.msra.mxu0 %v3862
  %3872 = vmatprep.subr.mxu0 0.0
  %3873 = vmatpush1.xpose.msra.mxu0 %v3864
  %3874 = vmatprep.subr.mxu0 0.0
  %3875 = vmatpush1.xpose.msra.mxu0 %v3866
  %3876 = vmatprep.subr.mxu0 0.0
  %3877 = vmatpush1.xpose.msra.mxu0 0.0
  %3878 = vmatprep.subr.mxu0 0.0
  %3879 = vmatpush1.xpose.msra.mxu0 0.0
  %3880 = vmatprep.subr.mxu0 0.0
  %3881 = vmatpush1.xpose.msra.mxu0 0.0
  %3882 = vmatprep.subr.mxu0 0.0
  %3883 = vmatpush1.xpose.msra.mxu0 0.0
  %3884 = vmatprep.subr.mxu0 0.0
  %3885 = vmatpush1.xpose.msra.mxu0 0.0
  %3886 = vmatprep.subr.mxu0 0.0
  %3887 = vmatpush1.xpose.msra.mxu0 0.0
  %3888 = vmatprep.subr.mxu0 0.0
  %3889 = vmatpush1.xpose.msra.mxu0 0.0
  %3890 = vmatprep.subr.mxu0 0.0
  %3891 = vmatpush1.xpose.msra.mxu0 0.0
  %3892 = vmatprep.subr.mxu0 0.0
  %3893 = vmatpush1.xpose.msra.mxu0 0.0
  %3894 = vmatprep.subr.mxu0 0.0
  %3895 = vmatpush1.xpose.msra.mxu0 0.0
  %3896 = vmatprep.subr.mxu0 0.0
  %3897 = vmatpush1.xpose.msra.mxu0 0.0
  %3898 = vmatprep.subr.mxu0 0.0
  %3899 = vmatpush1.xpose.msra.mxu0 0.0
  %3900 = vmatprep.subr.mxu0 0.0
  %3901 = vmatpush1.xpose.msra.mxu0 0.0
  %3902 = vmatprep.subr.mxu0 0.0
  %3903 = vmatpush1.xpose.msra.mxu0 0.0
  %3904 = vmatprep.subr.mxu0 0.0
  %3905 = vmatpush1.xpose.msra.mxu0 0.0
  %3906 = vmatprep.subr.mxu0 0.0
  %3907 = vmatpush1.xpose.msra.mxu0 0.0
  %3908 = vmatprep.subr.mxu0 0.0
  %3909 = vmatpush1.xpose.msra.mxu0 0.0
  %3910 = vmatprep.subr.mxu0 0.0
  %3911 = vmatpush1.xpose.msra.mxu0 0.0
  %3912 = vmatprep.subr.mxu0 0.0
  %3913 = vmatpush1.xpose.msra.mxu0 0.0
  %3914 = vmatprep.subr.mxu0 0.0
  %3915 = vmatpush1.xpose.msra.mxu0 0.0
  %3916 = vmatprep.subr.mxu0 0.0
  %3917 = vmatpush1.xpose.msra.mxu0 0.0
  %3918 = vmatprep.subr.mxu0 0.0
  %3919 = vmatpush1.xpose.msra.mxu0 0.0
  %3920 = vmatprep.subr.mxu0 0.0
  %3921 = vmatpush1.xpose.msra.mxu0 0.0
  %3922 = vmatprep.subr.mxu0 0.0
  %3923 = vmatpush1.xpose.msra.mxu0 0.0
  %3924 = vmatprep.subr.mxu0 0.0
  %3925 = vmatpush1.xpose.msra.mxu0 0.0
  %3926 = vmatprep.subr.mxu0 0.0
  %3927 = vmatpush1.xpose.msra.mxu0 0.0
  %3928 = vmatprep.subr.mxu0 0.0
  %3929 = vmatpush1.xpose.msra.mxu0 0.0
  %3930 = vmatprep.subr.mxu0 0.0
  %3931 = vmatpush1.xpose.msra.mxu0 0.0
  %3932 = vmatprep.mubr.f32.mxu0 0.0
  %3933 = vmatmul.mubr.f32.gmra.mrb[0].mxu0 %v3852
  %v3934 = vpop.f32.mrb[0].mxu0
  %v3935 = vadd.f32 0.0, %v3934
  %v3936 = vpop.f32.mrb[0].mxu0
  %3937 = vmatprep.mubr.f32.mxu0 0.0
  %3938 = vmatmul.mubr.f32.gmra.mrb[0].mxu0 %v3854
  %v3939 = vpop.f32.mrb[0].mxu0
  %v3940 = vadd.f32 0.0, %v3939
  %v3941 = vpop.f32.mrb[0].mxu0
  %3942 = vmatprep.mubr.f32.mxu0 0.0
  %3943 = vmatmul.mubr.f32.gmra.mrb[0].mxu0 %v3856
  %v3944 = vpop.f32.mrb[0].mxu0
  %v3945 = vadd.f32 0.0, %v3944
  %v3946 = vpop.f32.mrb[0].mxu0
  %3947 = vmatprep.mubr.f32.mxu0 0.0
  %3948 = vmatmul.mubr.f32.gmra.mrb[0].mxu0 %v3858
  %v3949 = vpop.f32.mrb[0].mxu0
  %v3950 = vadd.f32 0.0, %v3949
  %v3951 = vpop.f32.mrb[0].mxu0
  %3952 = vdwg.mxu0
  %v3953 = vsel %vm2432, %v3935, -inf
  %3954 = vmax.xlane.f32.xlu0 %v3953
  %v3955 = vpop.xlane.xlu0 %3954
  %v3956 = vsel %vm2432, %v3940, -inf
  %3957 = vmax.xlane.f32.xlu0 %v3956
  %v3958 = vpop.xlane.xlu0 %3957
  %v3959 = vsel %vm2432, %v3945, -inf
  %3960 = vmax.xlane.f32.xlu0 %v3959
  %v3961 = vpop.xlane.xlu0 %3960
  %v3962 = vsel %vm2432, %v3950, -inf
  %3963 = vmax.xlane.f32.xlu0 %v3962
  %v3964 = vpop.xlane.xlu0 %3963
  %v3965 = vsub.f32 %v3935, %v3955
  %v3966 = vsub.f32 %v3940, %v3958
  %v3967 = vsub.f32 %v3945, %v3961
  %v3968 = vsub.f32 %v3950, %v3964
  %v3969 = vmul.f32 %v3965, 1.442695
  %v3970 = vpow.pop %v3969
  %v3971 = vmul.f32 %v3966, 1.442695
  %v3972 = vpow.pop %v3971
  %v3973 = vmul.f32 %v3967, 1.442695
  %v3974 = vpow.pop %v3973
  %v3975 = vmul.f32 %v3968, 1.442695
  %v3976 = vpow.pop %v3975
  %v3977 = vsel %vm2432, %v3970, 0.0
  %3978 = vadd.xlane.f32.xlu0 %v3977
  %v3979 = vpop.xlane.xlu0 %3978
  %v3980 = vsel %vm2432, %v3972, 0.0
  %3981 = vadd.xlane.f32.xlu0 %v3980
  %v3982 = vpop.xlane.xlu0 %3981
  %v3983 = vsel %vm2432, %v3974, 0.0
  %3984 = vadd.xlane.f32.xlu0 %v3983
  %v3985 = vpop.xlane.xlu0 %3984
  %v3986 = vsel %vm2432, %v3976, 0.0
  %3987 = vadd.xlane.f32.xlu0 %v3986
  %v3988 = vpop.xlane.xlu0 %3987
  %v3989 = vrcp.pop %v3979
  %v3990 = vrcp.pop %v3982
  %v3991 = vrcp.pop %v3985
  %v3992 = vrcp.pop %v3988
  %v3993 = vmul.f32 %v3970, %v3989
  %v3994 = vmul.f32 %v3972, %v3990
  %v3995 = vmul.f32 %v3974, %v3991
  %v3996 = vmul.f32 %v3976, %v3992
  %3997 = vrot.lane.b32.xlu0 %v2708, 80
  %v3998 = vpop.permute.xlu0 %3997
  %3999 = vrot.lane.b32.xlu0 %v2714, 80
  %v4000 = vpop.permute.xlu0 %3999
  %4001 = vrot.lane.b32.xlu0 %v2720, 80
  %v4002 = vpop.permute.xlu0 %4001
  %4003 = vrot.lane.b32.xlu0 %v2726, 80
  %v4004 = vpop.permute.xlu0 %4003
  %v4010 = vsel %vm2432, %v3993, 0
  %v4013 = vsel %vm2432, %v3994, 0
  %v4016 = vsel %vm2432, %v3995, 0
  %v4019 = vsel %vm2432, %v3996, 0
  %4021 = vmatprep.subr.mxu0 0.0
  %4022 = vmatpush1.msra.mxu0 %v3998
  %4023 = vmatprep.subr.mxu0 0.0
  %4024 = vmatpush1.msra.mxu0 %v4000
  %4025 = vmatprep.subr.mxu0 0.0
  %4026 = vmatpush1.msra.mxu0 %v4002
  %4027 = vmatprep.subr.mxu0 0.0
  %4028 = vmatpush1.msra.mxu0 %v4004
  %4029 = vmatprep.subr.mxu0 0.0
  %4030 = vmatpush1.msra.mxu0 0.0
  %4031 = vmatprep.subr.mxu0 0.0
  %4032 = vmatpush1.msra.mxu0 0.0
  %4033 = vmatprep.subr.mxu0 0.0
  %4034 = vmatpush1.msra.mxu0 0.0
  %4035 = vmatprep.subr.mxu0 0.0
  %4036 = vmatpush1.msra.mxu0 0.0
  %4037 = vmatprep.subr.mxu0 0.0
  %4038 = vmatpush1.msra.mxu0 0.0
  %4039 = vmatprep.subr.mxu0 0.0
  %4040 = vmatpush1.msra.mxu0 0.0
  %4041 = vmatprep.subr.mxu0 0.0
  %4042 = vmatpush1.msra.mxu0 0.0
  %4043 = vmatprep.subr.mxu0 0.0
  %4044 = vmatpush1.msra.mxu0 0.0
  %4045 = vmatprep.subr.mxu0 0.0
  %4046 = vmatpush1.msra.mxu0 0.0
  %4047 = vmatprep.subr.mxu0 0.0
  %4048 = vmatpush1.msra.mxu0 0.0
  %4049 = vmatprep.subr.mxu0 0.0
  %4050 = vmatpush1.msra.mxu0 0.0
  %4051 = vmatprep.subr.mxu0 0.0
  %4052 = vmatpush1.msra.mxu0 0.0
  %4053 = vmatprep.subr.mxu0 0.0
  %4054 = vmatpush1.msra.mxu0 0.0
  %4055 = vmatprep.subr.mxu0 0.0
  %4056 = vmatpush1.msra.mxu0 0.0
  %4057 = vmatprep.subr.mxu0 0.0
  %4058 = vmatpush1.msra.mxu0 0.0
  %4059 = vmatprep.subr.mxu0 0.0
  %4060 = vmatpush1.msra.mxu0 0.0
  %4061 = vmatprep.subr.mxu0 0.0
  %4062 = vmatpush1.msra.mxu0 0.0
  %4063 = vmatprep.subr.mxu0 0.0
  %4064 = vmatpush1.msra.mxu0 0.0
  %4065 = vmatprep.subr.mxu0 0.0
  %4066 = vmatpush1.msra.mxu0 0.0
  %4067 = vmatprep.subr.mxu0 0.0
  %4068 = vmatpush1.msra.mxu0 0.0
  %4069 = vmatprep.subr.mxu0 0.0
  %4070 = vmatpush1.msra.mxu0 0.0
  %4071 = vmatprep.subr.mxu0 0.0
  %4072 = vmatpush1.msra.mxu0 0.0
  %4073 = vmatprep.subr.mxu0 0.0
  %4074 = vmatpush1.msra.mxu0 0.0
  %4075 = vmatprep.subr.mxu0 0.0
  %4076 = vmatpush1.msra.mxu0 0.0
  %4077 = vmatprep.subr.mxu0 0.0
  %4078 = vmatpush1.msra.mxu0 0.0
  %4079 = vmatprep.subr.mxu0 0.0
  %4080 = vmatpush1.msra.mxu0 0.0
  %4081 = vmatprep.subr.mxu0 0.0
  %4082 = vmatpush1.msra.mxu0 0.0
  %4083 = vmatprep.subr.mxu0 0.0
  %4084 = vmatpush1.msra.mxu0 0.0
  %4085 = vmatprep.mubr.f32.mxu0 0.0
  %4086 = vmatmul.mubr.f32.gmra.mrb[0].mxu0 %v4010
  %v4087 = vpop.f32.mrb[0].mxu0
  %v4088 = vadd.f32 0.0, %v4087
  %v4089 = vpop.f32.mrb[0].mxu0
  %4090 = vmatprep.mubr.f32.mxu0 0.0
  %4091 = vmatmul.mubr.f32.gmra.mrb[0].mxu0 %v4013
  %v4092 = vpop.f32.mrb[0].mxu0
  %v4093 = vadd.f32 0.0, %v4092
  %v4094 = vpop.f32.mrb[0].mxu0
  %4095 = vmatprep.mubr.f32.mxu0 0.0
  %4096 = vmatmul.mubr.f32.gmra.mrb[0].mxu0 %v4016
  %v4097 = vpop.f32.mrb[0].mxu0
  %v4098 = vadd.f32 0.0, %v4097
  %v4099 = vpop.f32.mrb[0].mxu0
  %4100 = vmatprep.mubr.f32.mxu0 0.0
  %4101 = vmatmul.mubr.f32.gmra.mrb[0].mxu0 %v4019
  %v4102 = vpop.f32.mrb[0].mxu0
  %v4103 = vadd.f32 0.0, %v4102
  %v4104 = vpop.f32.mrb[0].mxu0
  %4105 = vdwg.mxu0
  %v4106 = vld [vmem:[%s10 + $0x30] sm:$0xff]
  %v4107 = vld [vmem:[%s10 + $0x38] sm:$0xff]
  %v4109 = vsel %vm2744, %v4088, 0
  %v4112 = vsel %vm2744, %v4093, 0
  %v4115 = vsel %vm2744, %v4098, 0
  %v4118 = vsel %vm2744, %v4103, 0
  %4120 = vmatprep.subr.mxu0 0.0
  %4121 = vmatpush1.msra.mxu0 %v4106
  %4122 = vmatprep.subr.mxu0 0.0
  %4123 = vmatpush1.msra.mxu0 %v4107
  %4124 = vmatprep.subr.mxu0 0.0
  %4125 = vmatpush1.msra.mxu0 0.0
  %4126 = vmatprep.subr.mxu0 0.0
  %4127 = vmatpush1.msra.mxu0 0.0
  %4128 = vmatprep.subr.mxu0 0.0
  %4129 = vmatpush1.msra.mxu0 0.0
  %4130 = vmatprep.subr.mxu0 0.0
  %4131 = vmatpush1.msra.mxu0 0.0
  %4132 = vmatprep.subr.mxu0 0.0
  %4133 = vmatpush1.msra.mxu0 0.0
  %4134 = vmatprep.subr.mxu0 0.0
  %4135 = vmatpush1.msra.mxu0 0.0
  %4136 = vmatprep.subr.mxu0 0.0
  %4137 = vmatpush1.msra.mxu0 0.0
  %4138 = vmatprep.subr.mxu0 0.0
  %4139 = vmatpush1.msra.mxu0 0.0
  %4140 = vmatprep.subr.mxu0 0.0
  %4141 = vmatpush1.msra.mxu0 0.0
  %4142 = vmatprep.subr.mxu0 0.0
  %4143 = vmatpush1.msra.mxu0 0.0
  %4144 = vmatprep.subr.mxu0 0.0
  %4145 = vmatpush1.msra.mxu0 0.0
  %4146 = vmatprep.subr.mxu0 0.0
  %4147 = vmatpush1.msra.mxu0 0.0
  %4148 = vmatprep.subr.mxu0 0.0
  %4149 = vmatpush1.msra.mxu0 0.0
  %4150 = vmatprep.subr.mxu0 0.0
  %4151 = vmatpush1.msra.mxu0 0.0
  %4152 = vmatprep.subr.mxu0 0.0
  %4153 = vmatpush1.msra.mxu0 0.0
  %4154 = vmatprep.subr.mxu0 0.0
  %4155 = vmatpush1.msra.mxu0 0.0
  %4156 = vmatprep.subr.mxu0 0.0
  %4157 = vmatpush1.msra.mxu0 0.0
  %4158 = vmatprep.subr.mxu0 0.0
  %4159 = vmatpush1.msra.mxu0 0.0
  %4160 = vmatprep.subr.mxu0 0.0
  %4161 = vmatpush1.msra.mxu0 0.0
  %4162 = vmatprep.subr.mxu0 0.0
  %4163 = vmatpush1.msra.mxu0 0.0
  %4164 = vmatprep.subr.mxu0 0.0
  %4165 = vmatpush1.msra.mxu0 0.0
  %4166 = vmatprep.subr.mxu0 0.0
  %4167 = vmatpush1.msra.mxu0 0.0
  %4168 = vmatprep.subr.mxu0 0.0
  %4169 = vmatpush1.msra.mxu0 0.0
  %4170 = vmatprep.subr.mxu0 0.0
  %4171 = vmatpush1.msra.mxu0 0.0
  %4172 = vmatprep.subr.mxu0 0.0
  %4173 = vmatpush1.msra.mxu0 0.0
  %4174 = vmatprep.subr.mxu0 0.0
  %4175 = vmatpush1.msra.mxu0 0.0
  %4176 = vmatprep.subr.mxu0 0.0
  %4177 = vmatpush1.msra.mxu0 0.0
  %4178 = vmatprep.subr.mxu0 0.0
  %4179 = vmatpush1.msra.mxu0 0.0
  %4180 = vmatprep.subr.mxu0 0.0
  %4181 = vmatpush1.msra.mxu0 0.0
  %4182 = vmatprep.subr.mxu0 0.0
  %4183 = vmatpush1.msra.mxu0 0.0
  %4184 = vmatprep.mubr.f32.mxu0 0.0
  %4185 = vmatmul.mubr.f32.gmra.mrb[0].mxu0 %v4109
  %v4186 = vpop.f32.mrb[0].mxu0
  %v4187 = vadd.f32 0.0, %v4186
  %v4188 = vpop.f32.mrb[0].mxu0
  %4189 = vmatprep.mubr.f32.mxu0 0.0
  %4190 = vmatmul.mubr.f32.gmra.mrb[0].mxu0 %v4112
  %v4191 = vpop.f32.mrb[0].mxu0
  %v4192 = vadd.f32 0.0, %v4191
  %v4193 = vpop.f32.mrb[0].mxu0
  %4194 = vmatprep.mubr.f32.mxu0 0.0
  %4195 = vmatmul.mubr.f32.gmra.mrb[0].mxu0 %v4115
  %v4196 = vpop.f32.mrb[0].mxu0
  %v4197 = vadd.f32 0.0, %v4196
  %v4198 = vpop.f32.mrb[0].mxu0
  %4199 = vmatprep.mubr.f32.mxu0 0.0
  %4200 = vmatmul.mubr.f32.gmra.mrb[0].mxu0 %v4118
  %v4201 = vpop.f32.mrb[0].mxu0
  %v4202 = vadd.f32 0.0, %v4201
  %v4203 = vpop.f32.mrb[0].mxu0
  %4204 = vdwg.mxu0
  %v4205 = vadd.f32 %v3832, %v4187
  %v4206 = vadd.f32 %v3833, %v4192
  %v4207 = vadd.f32 %v3834, %v4197
  %v4208 = vadd.f32 %v3835, %v4202
  %v4209 = vld [vmem:[%s11] sm:$0x1]
  %v4211 = vlaneseq
  %v4212 = vshrl.u32 %v4211, 7
  %v4213 = vsub.s32 0, %v4212
  %v4214 = vrot.slane %v4209, %v4213
  %v4216 = vadd.f32 %v4205, %v4214
  %v4217 = vadd.f32 %v4206, %v4214
  %v4218 = vadd.f32 %v4207, %v4214
  %v4219 = vadd.f32 %v4208, %v4214
  %v4220 = vadd.f32 %v4216, %v65
  %v4221 = vadd.f32 %v4217, %v66
  %v4222 = vadd.f32 %v4218, %v67
  %v4223 = vadd.f32 %v4219, %v68
  %v4224 = vld [vmem:[%s12] sm:$0x1]
  %v4226 = vlaneseq
  %v4227 = vshrl.u32 %v4226, 7
  %v4228 = vsub.s32 0, %v4227
  %v4229 = vrot.slane %v4224, %v4228
  %v4231 = vmul.f32 %v4220, %v4229
  %v4232 = vmul.f32 %v4221, %v4229
  %v4233 = vmul.f32 %v4222, %v4229
  %v4234 = vmul.f32 %v4223, %v4229
  %v4235 = vld [vmem:[%s13] sm:$0x1]
  %v4237 = vlaneseq
  %v4238 = vshrl.u32 %v4237, 7
  %v4239 = vsub.s32 0, %v4238
  %v4240 = vrot.slane %v4235, %v4239
  %v4242 = vadd.f32 %v4231, %v4240
  %v4243 = vadd.f32 %v4232, %v4240
  %v4244 = vadd.f32 %v4233, %v4240
  %v4245 = vadd.f32 %v4234, %v4240
  %v4246 = vadd.f32 %v2607, %v4242
  %v4247 = vadd.f32 %v2608, %v4243
  %v4248 = vadd.f32 %v2609, %v4244
  %v4249 = vadd.f32 %v2610, %v4245
  %v4250 = vld [vmem:[%s14] sm:$0xff]
  %v4251 = vld [vmem:[%s14 + $0x8] sm:$0xff]
  %v4252 = vld [vmem:[%s14 + $0x10] sm:$0xff]
  %v4253 = vld [vmem:[%s14 + $0x18] sm:$0xff]
  %v4254 = vld [vmem:[%s14 + $0x20] sm:$0xff]
  %v4255 = vld [vmem:[%s14 + $0x28] sm:$0xff]
  %v4256 = vld [vmem:[%s14 + $0x30] sm:$0xff]
  %v4257 = vld [vmem:[%s14 + $0x38] sm:$0xff]
  %v4258 = vld [vmem:[%s15] sm:$0x1]
  %v4260 = vlaneseq
  %v4261 = vshrl.u32 %v4260, 7
  %v4262 = vsub.s32 0, %v4261
  %v4263 = vrot.slane %v4258, %v4262
  %v4266 = vsel %vm88, %v4246, 0
  %v4269 = vsel %vm88, %v4247, 0
  %v4272 = vsel %vm88, %v4248, 0
  %v4275 = vsel %vm88, %v4249, 0
  %4277 = vmatprep.subr.mxu0 0.0
  %4278 = vmatpush1.msra.mxu0 %v4250
  %4279 = vmatprep.subr.mxu0 0.0
  %4280 = vmatpush1.msra.mxu0 %v4251
  %4281 = vmatprep.subr.mxu0 0.0
  %4282 = vmatpush1.msra.mxu0 %v4252
  %4283 = vmatprep.subr.mxu0 0.0
  %4284 = vmatpush1.msra.mxu0 %v4253
  %4285 = vmatprep.subr.mxu0 0.0
  %4286 = vmatpush1.msra.mxu0 %v4254
  %4287 = vmatprep.subr.mxu0 0.0
  %4288 = vmatpush1.msra.mxu0 %v4255
  %4289 = vmatprep.subr.mxu0 0.0
  %4290 = vmatpush1.msra.mxu0 %v4256
  %4291 = vmatprep.subr.mxu0 0.0
  %4292 = vmatpush1.msra.mxu0 %v4257
  %4293 = vmatprep.subr.mxu0 0.0
  %4294 = vmatpush1.msra.mxu0 0.0
  %4295 = vmatprep.subr.mxu0 0.0
  %4296 = vmatpush1.msra.mxu0 0.0
  %4297 = vmatprep.subr.mxu0 0.0
  %4298 = vmatpush1.msra.mxu0 0.0
  %4299 = vmatprep.subr.mxu0 0.0
  %4300 = vmatpush1.msra.mxu0 0.0
  %4301 = vmatprep.subr.mxu0 0.0
  %4302 = vmatpush1.msra.mxu0 0.0
  %4303 = vmatprep.subr.mxu0 0.0
  %4304 = vmatpush1.msra.mxu0 0.0
  %4305 = vmatprep.subr.mxu0 0.0
  %4306 = vmatpush1.msra.mxu0 0.0
  %4307 = vmatprep.subr.mxu0 0.0
  %4308 = vmatpush1.msra.mxu0 0.0
  %4309 = vmatprep.subr.mxu0 0.0
  %4310 = vmatpush1.msra.mxu0 0.0
  %4311 = vmatprep.subr.mxu0 0.0
  %4312 = vmatpush1.msra.mxu0 0.0
  %4313 = vmatprep.subr.mxu0 0.0
  %4314 = vmatpush1.msra.mxu0 0.0
  %4315 = vmatprep.subr.mxu0 0.0
  %4316 = vmatpush1.msra.mxu0 0.0
  %4317 = vmatprep.subr.mxu0 0.0
  %4318 = vmatpush1.msra.mxu0 0.0
  %4319 = vmatprep.subr.mxu0 0.0
  %4320 = vmatpush1.msra.mxu0 0.0
  %4321 = vmatprep.subr.mxu0 0.0
  %4322 = vmatpush1.msra.mxu0 0.0
  %4323 = vmatprep.subr.mxu0 0.0
  %4324 = vmatpush1.msra.mxu0 0.0
  %4325 = vmatprep.subr.mxu0 0.0
  %4326 = vmatpush1.msra.mxu0 0.0
  %4327 = vmatprep.subr.mxu0 0.0
  %4328 = vmatpush1.msra.mxu0 0.0
  %4329 = vmatprep.subr.mxu0 0.0
  %4330 = vmatpush1.msra.mxu0 0.0
  %4331 = vmatprep.subr.mxu0 0.0
  %4332 = vmatpush1.msra.mxu0 0.0
  %4333 = vmatprep.subr.mxu0 0.0
  %4334 = vmatpush1.msra.mxu0 0.0
  %4335 = vmatprep.subr.mxu0 0.0
  %4336 = vmatpush1.msra.mxu0 0.0
  %4337 = vmatprep.subr.mxu0 0.0
  %4338 = vmatpush1.msra.mxu0 0.0
  %4339 = vmatprep.subr.mxu0 0.0
  %4340 = vmatpush1.msra.mxu0 0.0
  %4341 = vmatprep.mubr.f32.mxu0 0.0
  %4342 = vmatmul.mubr.f32.gmra.mrb[0].mxu0 %v4266
  %v4343 = vpop.f32.mrb[0].mxu0
  %v4344 = vadd.f32 %v4263, %v4343
  %v4345 = vpop.f32.mrb[0].mxu0
  %4346 = vmatprep.mubr.f32.mxu0 0.0
  %4347 = vmatmul.mubr.f32.gmra.mrb[0].mxu0 %v4269
  %v4348 = vpop.f32.mrb[0].mxu0
  %v4349 = vadd.f32 %v4263, %v4348
  %v4350 = vpop.f32.mrb[0].mxu0
  %4351 = vmatprep.mubr.f32.mxu0 0.0
  %4352 = vmatmul.mubr.f32.gmra.mrb[0].mxu0 %v4272
  %v4353 = vpop.f32.mrb[0].mxu0
  %v4354 = vadd.f32 %v4263, %v4353
  %v4355 = vpop.f32.mrb[0].mxu0
  %4356 = vmatprep.mubr.f32.mxu0 0.0
  %4357 = vmatmul.mubr.f32.gmra.mrb[0].mxu0 %v4275
  %v4358 = vpop.f32.mrb[0].mxu0
  %v4359 = vadd.f32 %v4263, %v4358
  %v4360 = vpop.f32.mrb[0].mxu0
  %4361 = vdwg.mxu0
  %v4362 = vmax.f32 %v4344, 0.0
  %v4363 = vmax.f32 %v4349, 0.0
  %v4364 = vmax.f32 %v4354, 0.0
  %v4365 = vmax.f32 %v4359, 0.0
  %v4366 = vld [vmem:[%s16] sm:$0xff]
  %v4367 = vld [vmem:[%s16 + $0x8] sm:$0xff]
  %v4368 = vld [vmem:[%s16 + $0x10] sm:$0xff]
  %v4369 = vld [vmem:[%s16 + $0x18] sm:$0xff]
  %v4370 = vld [vmem:[%s16 + $0x20] sm:$0xff]
  %v4371 = vld [vmem:[%s16 + $0x28] sm:$0xff]
  %v4372 = vld [vmem:[%s16 + $0x30] sm:$0xff]
  %v4373 = vld [vmem:[%s16 + $0x38] sm:$0xff]
  %v4374 = vld [vmem:[%s16 + $0x40] sm:$0xff]
  %v4375 = vld [vmem:[%s16 + $0x48] sm:$0xff]
  %v4376 = vld [vmem:[%s16 + $0x50] sm:$0xff]
  %v4377 = vld [vmem:[%s16 + $0x58] sm:$0xff]
  %v4378 = vld [vmem:[%s16 + $0x60] sm:$0xff]
  %v4379 = vld [vmem:[%s16 + $0x68] sm:$0xff]
  %v4380 = vld [vmem:[%s16 + $0x70] sm:$0xff]
  %v4381 = vld [vmem:[%s16 + $0x78] sm:$0xff]
  %v4382 = vld [vmem:[%s17] sm:$0x1]
  %v4384 = vlaneseq
  %v4385 = vshrl.u32 %v4384, 7
  %v4386 = vsub.s32 0, %v4385
  %v4387 = vrot.slane %v4382, %v4386
  %4389 = vmatprep.subr.mxu0 0.0
  %4390 = vmatpush1.msra.mxu0 %v4366
  %4391 = vmatprep.subr.mxu0 0.0
  %4392 = vmatpush1.msra.mxu0 %v4367
  %4393 = vmatprep.subr.mxu0 0.0
  %4394 = vmatpush1.msra.mxu0 %v4368
  %4395 = vmatprep.subr.mxu0 0.0
  %4396 = vmatpush1.msra.mxu0 %v4369
  %4397 = vmatprep.subr.mxu0 0.0
  %4398 = vmatpush1.msra.mxu0 %v4370
  %4399 = vmatprep.subr.mxu0 0.0
  %4400 = vmatpush1.msra.mxu0 %v4371
  %4401 = vmatprep.subr.mxu0 0.0
  %4402 = vmatpush1.msra.mxu0 %v4372
  %4403 = vmatprep.subr.mxu0 0.0
  %4404 = vmatpush1.msra.mxu0 %v4373
  %4405 = vmatprep.subr.mxu0 0.0
  %4406 = vmatpush1.msra.mxu0 %v4374
  %4407 = vmatprep.subr.mxu0 0.0
  %4408 = vmatpush1.msra.mxu0 %v4375
  %4409 = vmatprep.subr.mxu0 0.0
  %4410 = vmatpush1.msra.mxu0 %v4376
  %4411 = vmatprep.subr.mxu0 0.0
  %4412 = vmatpush1.msra.mxu0 %v4377
  %4413 = vmatprep.subr.mxu0 0.0
  %4414 = vmatpush1.msra.mxu0 %v4378
  %4415 = vmatprep.subr.mxu0 0.0
  %4416 = vmatpush1.msra.mxu0 %v4379
  %4417 = vmatprep.subr.mxu0 0.0
  %4418 = vmatpush1.msra.mxu0 %v4380
  %4419 = vmatprep.subr.mxu0 0.0
  %4420 = vmatpush1.msra.mxu0 %v4381
  %4421 = vmatprep.subr.mxu0 0.0
  %4422 = vmatpush1.msra.mxu0 0.0
  %4423 = vmatprep.subr.mxu0 0.0
  %4424 = vmatpush1.msra.mxu0 0.0
  %4425 = vmatprep.subr.mxu0 0.0
  %4426 = vmatpush1.msra.mxu0 0.0
  %4427 = vmatprep.subr.mxu0 0.0
  %4428 = vmatpush1.msra.mxu0 0.0
  %4429 = vmatprep.subr.mxu0 0.0
  %4430 = vmatpush1.msra.mxu0 0.0
  %4431 = vmatprep.subr.mxu0 0.0
  %4432 = vmatpush1.msra.mxu0 0.0
  %4433 = vmatprep.subr.mxu0 0.0
  %4434 = vmatpush1.msra.mxu0 0.0
  %4435 = vmatprep.subr.mxu0 0.0
  %4436 = vmatpush1.msra.mxu0 0.0
  %4437 = vmatprep.subr.mxu0 0.0
  %4438 = vmatpush1.msra.mxu0 0.0
  %4439 = vmatprep.subr.mxu0 0.0
  %4440 = vmatpush1.msra.mxu0 0.0
  %4441 = vmatprep.subr.mxu0 0.0
  %4442 = vmatpush1.msra.mxu0 0.0
  %4443 = vmatprep.subr.mxu0 0.0
  %4444 = vmatpush1.msra.mxu0 0.0
  %4445 = vmatprep.subr.mxu0 0.0
  %4446 = vmatpush1.msra.mxu0 0.0
  %4447 = vmatprep.subr.mxu0 0.0
  %4448 = vmatpush1.msra.mxu0 0.0
  %4449 = vmatprep.subr.mxu0 0.0
  %4450 = vmatpush1.msra.mxu0 0.0
  %4451 = vmatprep.subr.mxu0 0.0
  %4452 = vmatpush1.msra.mxu0 0.0
  %4453 = vmatprep.mubr.f32.mxu0 0.0
  %4454 = vmatmul.mubr.f32.gmra.mrb[0].mxu0 %v4362
  %v4455 = vpop.f32.mrb[0].mxu0
  %v4456 = vadd.f32 %v4387, %v4455
  %v4457 = vpop.f32.mrb[0].mxu0
  %4458 = vmatprep.mubr.f32.mxu0 0.0
  %4459 = vmatmul.mubr.f32.gmra.mrb[0].mxu0 %v4363
  %v4460 = vpop.f32.mrb[0].mxu0
  %v4461 = vadd.f32 %v4387, %v4460
  %v4462 = vpop.f32.mrb[0].mxu0
  %4463 = vmatprep.mubr.f32.mxu0 0.0
  %4464 = vmatmul.mubr.f32.gmra.mrb[0].mxu0 %v4364
  %v4465 = vpop.f32.mrb[0].mxu0
  %v4466 = vadd.f32 %v4387, %v4465
  %v4467 = vpop.f32.mrb[0].mxu0
  %4468 = vmatprep.mubr.f32.mxu0 0.0
  %4469 = vmatmul.mubr.f32.gmra.mrb[0].mxu0 %v4365
  %v4470 = vpop.f32.mrb[0].mxu0
  %v4471 = vadd.f32 %v4387, %v4470
  %v4472 = vpop.f32.mrb[0].mxu0
  %4473 = vdwg.mxu0
  %v4474 = vadd.f32 %v4246, %v4456
  %v4475 = vadd.f32 %v4247, %v4461
  %v4476 = vadd.f32 %v4248, %v4466
  %v4477 = vadd.f32 %v4249, %v4471
  %v4478 = vld [vmem:[%s18] sm:$0x1]
  %v4480 = vlaneseq
  %v4481 = vshrl.u32 %v4480, 7
  %v4482 = vsub.s32 0, %v4481
  %v4483 = vrot.slane %v4478, %v4482
  %v4485 = vmul.f32 %v4474, %v4483
  %v4486 = vmul.f32 %v4475, %v4483
  %v4487 = vmul.f32 %v4476, %v4483
  %v4488 = vmul.f32 %v4477, %v4483
  %v4489 = vld [vmem:[%s19] sm:$0x1]
  %v4491 = vlaneseq
  %v4492 = vshrl.u32 %v4491, 7
  %v4493 = vsub.s32 0, %v4492
  %v4494 = vrot.slane %v4489, %v4493
  %v4496 = vadd.f32 %v4485, %v4494
  %v4497 = vadd.f32 %v4486, %v4494
  %v4498 = vadd.f32 %v4487, %v4494
  %v4499 = vadd.f32 %v4488, %v4494
  %v4500 = vmax.f32 %v4496, 0.0
  %v4501 = vmax.f32 %v4497, 0.0
  %v4502 = vmax.f32 %v4498, 0.0
  %v4503 = vmax.f32 %v4499, 0.0
  %4504 = vst.msk [vmem:[%s20] sm:$0xff] %vm88, %v4500
  %4505 = vst.msk [vmem:[%s20 + $0x8] sm:$0xff] %vm88, %v4501
  %4506 = vst.msk [vmem:[%s20 + $0x10] sm:$0xff] %vm88, %v4502
  %4507 = vst.msk [vmem:[%s20 + $0x18] sm:$0xff] %vm88, %v4503
  // Predicated region
  $region82: #{gps_conv_net_forward.6} parent=0 // pred_check
    _
  $region83: #{gps_conv_net_forward.6} parent=0 // pred_check_branch
    %4509 = sbr.rel (0) target = $region85
  $region84: #{gps_conv_net_forward.6} parent=0 // pred_region
    _
  $region85: #{gps_conv_net_forward.6} parent=0 // pred_fallthru
    _
  // Predicated region
  $region86: #{gps_conv_net_forward.6} parent=0 // pred_check
    _
  $region87: #{gps_conv_net_forward.6} parent=0 // pred_check_branch
    %4511 = sbr.rel (0) target = $region89
  $region88: #{gps_conv_net_forward.6} parent=0 // pred_region
    _
  $region89: #{gps_conv_net_forward.6} parent=0 // pred_fallthru
    _

// kernel: gps_conv_net_forward.7
$region0: #{gps_conv_net_forward.7}
  #allocation0 [shape = 'u32[]', space=smem, size = 0x4, offset = 0x4, fixed_abs, tag = 'smem constant byte address 0x4 - core index']
  #allocation1 [shape = 'u32[144,128]{1,0:T(1,128)}', space=vmem, size = 0x12000, scoped, tag = 'internal scratch']
  %s0 = inlined_call_operand.vmem [shape: f32[32,64], index: 0, kind: input, shape index: {}]
  %s1 = inlined_call_operand.vmem [shape: f32[32,32], index: 1, kind: input, shape index: {}]
  %s2 = inlined_call_operand.vmem [shape: f32[64,128], index: 2, kind: input, shape index: {}]
  %s3 = inlined_call_operand.vmem [shape: f32[1,128], index: 3, kind: input, shape index: {}]
  %s4 = inlined_call_operand.vmem [shape: f32[1,64], index: 4, kind: input, shape index: {}]
  %s5 = inlined_call_operand.vmem [shape: f32[1,64], index: 5, kind: input, shape index: {}]
  %s6 = inlined_call_operand.vmem [shape: f32[1,64], index: 6, kind: input, shape index: {}]
  %s7 = inlined_call_operand.vmem [shape: f32[1,64], index: 7, kind: input, shape index: {}]
  %s8 = inlined_call_operand.vmem [shape: f32[64,192], index: 8, kind: input, shape index: {}]
  %s9 = inlined_call_operand.vmem [shape: f32[1,192], index: 9, kind: input, shape index: {}]
  %s10 = inlined_call_operand.vmem [shape: f32[64,64], index: 10, kind: input, shape index: {}]
  %s11 = inlined_call_operand.vmem [shape: f32[1,64], index: 11, kind: input, shape index: {}]
  %s12 = inlined_call_operand.vmem [shape: f32[1,64], index: 12, kind: input, shape index: {}]
  %s13 = inlined_call_operand.vmem [shape: f32[1,64], index: 13, kind: input, shape index: {}]
  %s14 = inlined_call_operand.vmem [shape: f32[64,128], index: 14, kind: input, shape index: {}]
  %s15 = inlined_call_operand.vmem [shape: f32[1,128], index: 15, kind: input, shape index: {}]
  %s16 = inlined_call_operand.vmem [shape: f32[128,64], index: 16, kind: input, shape index: {}]
  %s17 = inlined_call_operand.vmem [shape: f32[1,64], index: 17, kind: input, shape index: {}]
  %s18 = inlined_call_operand.vmem [shape: f32[1,64], index: 18, kind: input, shape index: {}]
  %s19 = inlined_call_operand.hbm [shape: f32[1,64], index: 19, kind: input, shape index: {}]
  %s20 = inlined_call_operand.vmem [shape: f32[32,64], index: 20, kind: output, shape index: {}]
  %s21 = sld [smem:[#allocation0]]
  $region94: #{gps_conv_net_forward.7} parent=0
    _
  %s23 = ssub.s32 1, %s21
  %s24 = scalar_select 0, %s23, %s21
  $region1: #{gps_conv_net_forward.7} parent=0
    #allocation2 [shape = 'u8[512]{0}', space=vmem, size = 0x400, scoped, tag = 'input window, operand 19, single buffered']
    #allocation3 [shape = 's32[1]{0}', space=sflag, size = 0x4, scoped, tag = 'scoped memory for gps_conv_net_forward.7']
    %25 = vsyncpa [#allocation3], 0
    // Predicated region
    $region2: #{gps_conv_net_forward.7} parent=1 // pred_check
      _
    $region3: #{gps_conv_net_forward.7} parent=1 // pred_check_branch
      %27 = sbr.rel (0) target = $region5
    $region4: #{gps_conv_net_forward.7} parent=1 // pred_region
      _
    $region5: #{gps_conv_net_forward.7} parent=1 // pred_fallthru
      _
    // Predicated region
    $region6: #{gps_conv_net_forward.7} parent=1 // pred_check
      _
    $region7: #{gps_conv_net_forward.7} parent=1 // pred_check_branch
      %29 = sbr.rel (0) target = $region9
    $region8: #{gps_conv_net_forward.7} parent=1 // pred_region
      _
    $region9: #{gps_conv_net_forward.7} parent=1 // pred_fallthru
      _
    // Predicated region
    $region10: #{gps_conv_net_forward.7} parent=1 // pred_check
      _
    $region11: #{gps_conv_net_forward.7} parent=1 // pred_check_branch
      %31 = sbr.rel (0) target = $region13
    $region12: #{gps_conv_net_forward.7} parent=1 // pred_region
      _
    $region13: #{gps_conv_net_forward.7} parent=1 // pred_fallthru
      _
    // Predicated region
    $region14: #{gps_conv_net_forward.7} parent=1 // pred_check
      _
    $region15: #{gps_conv_net_forward.7} parent=1 // pred_check_branch
      %33 = sbr.rel (0) target = $region17
    $region16: #{gps_conv_net_forward.7} parent=1 // pred_region
      _
    $region17: #{gps_conv_net_forward.7} parent=1 // pred_fallthru
      _
    // Predicated region
    $region18: #{gps_conv_net_forward.7} parent=1 // pred_check
      _
    $region19: #{gps_conv_net_forward.7} parent=1 // pred_check_branch
      %35 = sbr.rel (0) target = $region21
    $region20: #{gps_conv_net_forward.7} parent=1 // pred_region
      _
    $region21: #{gps_conv_net_forward.7} parent=1 // pred_fallthru
      _
    // Predicated region
    $region22: #{gps_conv_net_forward.7} parent=1 // pred_check
      _
    $region23: #{gps_conv_net_forward.7} parent=1 // pred_check_branch
      %37 = sbr.rel (0) target = $region25
    $region24: #{gps_conv_net_forward.7} parent=1 // pred_region
      _
    $region25: #{gps_conv_net_forward.7} parent=1 // pred_fallthru
      _
    // Predicated region
    $region26: #{gps_conv_net_forward.7} parent=1 // pred_check
      _
    $region27: #{gps_conv_net_forward.7} parent=1 // pred_check_branch
      %39 = sbr.rel (0) target = $region29
    $region28: #{gps_conv_net_forward.7} parent=1 // pred_region
      _
    $region29: #{gps_conv_net_forward.7} parent=1 // pred_fallthru
      _
    // Predicated region
    $region30: #{gps_conv_net_forward.7} parent=1 // pred_check
      _
    $region31: #{gps_conv_net_forward.7} parent=1 // pred_check_branch
      %41 = sbr.rel (0) target = $region33
    $region32: #{gps_conv_net_forward.7} parent=1 // pred_region
      _
    $region33: #{gps_conv_net_forward.7} parent=1 // pred_fallthru
      _
    // Predicated region
    $region34: #{gps_conv_net_forward.7} parent=1 // pred_check
      _
    $region35: #{gps_conv_net_forward.7} parent=1 // pred_check_branch
      %43 = sbr.rel (0) target = $region37
    $region36: #{gps_conv_net_forward.7} parent=1 // pred_region
      _
    $region37: #{gps_conv_net_forward.7} parent=1 // pred_fallthru
      _
    // Predicated region
    $region38: #{gps_conv_net_forward.7} parent=1 // pred_check
      _
    $region39: #{gps_conv_net_forward.7} parent=1 // pred_check_branch
      %45 = sbr.rel (0) target = $region41
    $region40: #{gps_conv_net_forward.7} parent=1 // pred_region
      _
    $region41: #{gps_conv_net_forward.7} parent=1 // pred_fallthru
      _
    // Predicated region
    $region42: #{gps_conv_net_forward.7} parent=1 // pred_check
      _
    $region43: #{gps_conv_net_forward.7} parent=1 // pred_check_branch
      %47 = sbr.rel (0) target = $region45
    $region44: #{gps_conv_net_forward.7} parent=1 // pred_region
      _
    $region45: #{gps_conv_net_forward.7} parent=1 // pred_fallthru
      _
    // Predicated region
    $region46: #{gps_conv_net_forward.7} parent=1 // pred_check
      _
    $region47: #{gps_conv_net_forward.7} parent=1 // pred_check_branch
      %49 = sbr.rel (0) target = $region49
    $region48: #{gps_conv_net_forward.7} parent=1 // pred_region
      _
    $region49: #{gps_conv_net_forward.7} parent=1 // pred_fallthru
      _
    // Predicated region
    $region50: #{gps_conv_net_forward.7} parent=1 // pred_check
      _
    $region51: #{gps_conv_net_forward.7} parent=1 // pred_check_branch
      %51 = sbr.rel (0) target = $region53
    $region52: #{gps_conv_net_forward.7} parent=1 // pred_region
      _
    $region53: #{gps_conv_net_forward.7} parent=1 // pred_fallthru
      _
    // Predicated region
    $region54: #{gps_conv_net_forward.7} parent=1 // pred_check
      _
    $region55: #{gps_conv_net_forward.7} parent=1 // pred_check_branch
      %53 = sbr.rel (0) target = $region57
    $region56: #{gps_conv_net_forward.7} parent=1 // pred_region
      _
    $region57: #{gps_conv_net_forward.7} parent=1 // pred_fallthru
      _
    // Predicated region
    $region58: #{gps_conv_net_forward.7} parent=1 // pred_check
      _
    $region59: #{gps_conv_net_forward.7} parent=1 // pred_check_branch
      %55 = sbr.rel (0) target = $region61
    $region60: #{gps_conv_net_forward.7} parent=1 // pred_region
      _
    $region61: #{gps_conv_net_forward.7} parent=1 // pred_fallthru
      _
    // Predicated region
    $region62: #{gps_conv_net_forward.7} parent=1 // pred_check
      _
    $region63: #{gps_conv_net_forward.7} parent=1 // pred_check_branch
      %57 = sbr.rel (0) target = $region65
    $region64: #{gps_conv_net_forward.7} parent=1 // pred_region
      _
    $region65: #{gps_conv_net_forward.7} parent=1 // pred_fallthru
      _
    // Predicated region
    $region66: #{gps_conv_net_forward.7} parent=1 // pred_check
      _
    $region67: #{gps_conv_net_forward.7} parent=1 // pred_check_branch
      %59 = sbr.rel (0) target = $region69
    $region68: #{gps_conv_net_forward.7} parent=1 // pred_region
      _
    $region69: #{gps_conv_net_forward.7} parent=1 // pred_fallthru
      _
    // Predicated region
    $region70: #{gps_conv_net_forward.7} parent=1 // pred_check
      _
    $region71: #{gps_conv_net_forward.7} parent=1 // pred_check_branch
      %61 = sbr.rel (0) target = $region73
    $region72: #{gps_conv_net_forward.7} parent=1 // pred_region
      _
    $region73: #{gps_conv_net_forward.7} parent=1 // pred_fallthru
      _
    // Predicated region
    $region74: #{gps_conv_net_forward.7} parent=1 // pred_check
      _
    $region75: #{gps_conv_net_forward.7} parent=1 // pred_check_branch
      %63 = sbr.rel (0) target = $region77
    $region76: #{gps_conv_net_forward.7} parent=1 // pred_region
      _
    $region77: #{gps_conv_net_forward.7} parent=1 // pred_fallthru
      _
    // Predicated region
    $region78: #{gps_conv_net_forward.7} parent=1 // pred_check
      _
    $region79: #{gps_conv_net_forward.7} parent=1 // pred_check_branch
      %65 = sbr.rel (0) target = $region81
    $region80: #{gps_conv_net_forward.7} parent=1 // pred_region
      %s67 = ssub.s32 16, 16
      %68 = vsyncadd [#allocation3], %s67
      %s70 = sshll.u32 [#allocation2], 4
      %s71 = int_to_ptr.vmem [resolvable:$true] %s70
      %73 = dma.hbm_to_vmem [thread:$0]  %s19, 16, %s71, [#allocation3]
    $region81: #{gps_conv_net_forward.7} parent=1 // pred_fallthru
      _
    // Predicated region
    $region82: #{gps_conv_net_forward.7} parent=1 // pred_check
      _
    $region83: #{gps_conv_net_forward.7} parent=1 // pred_check_branch
      %75 = sbr.rel (0) target = $region85
    $region84: #{gps_conv_net_forward.7} parent=1 // pred_region
      %76 = dma.done [#allocation3], 16
    $region85: #{gps_conv_net_forward.7} parent=1 // pred_fallthru
      _
    %v77 = vld [vmem:[%s0] sm:$0xff]
    %v78 = vld [vmem:[%s0 + $0x8] sm:$0xff]
    %v79 = vld [vmem:[%s0 + $0x10] sm:$0xff]
    %v80 = vld [vmem:[%s0 + $0x18] sm:$0xff]
    %v81 = vld [vmem:[%s1] sm:$0xff]
    %v82 = vld [vmem:[%s1 + $0x8] sm:$0xff]
    %v83 = vld [vmem:[%s1 + $0x10] sm:$0xff]
    %v84 = vld [vmem:[%s1 + $0x18] sm:$0xff]
    %v85 = vld [vmem:[%s2] sm:$0xff]
    %v86 = vld [vmem:[%s2 + $0x8] sm:$0xff]
    %v87 = vld [vmem:[%s2 + $0x10] sm:$0xff]
    %v88 = vld [vmem:[%s2 + $0x18] sm:$0xff]
    %v89 = vld [vmem:[%s2 + $0x20] sm:$0xff]
    %v90 = vld [vmem:[%s2 + $0x28] sm:$0xff]
    %v91 = vld [vmem:[%s2 + $0x30] sm:$0xff]
    %v92 = vld [vmem:[%s2 + $0x38] sm:$0xff]
    %v93 = vld [vmem:[%s3] sm:$0x1]
    %v95 = vlaneseq
    %v96 = vshrl.u32 %v95, 7
    %v97 = vsub.s32 0, %v96
    %v98 = vrot.slane %v93, %v97
    %vm100 = vcmask 523264
    %v102 = vsel %vm100, %v77, 0
    %v105 = vsel %vm100, %v78, 0
    %v108 = vsel %vm100, %v79, 0
    %v111 = vsel %vm100, %v80, 0
    %113 = vmatprep.subr.mxu0 0.0
    %114 = vmatpush1.msra.mxu0 %v85
    %115 = vmatprep.subr.mxu0 0.0
    %116 = vmatpush1.msra.mxu0 %v86
    %117 = vmatprep.subr.mxu0 0.0
    %118 = vmatpush1.msra.mxu0 %v87
    %119 = vmatprep.subr.mxu0 0.0
    %120 = vmatpush1.msra.mxu0 %v88
    %121 = vmatprep.subr.mxu0 0.0
    %122 = vmatpush1.msra.mxu0 %v89
    %123 = vmatprep.subr.mxu0 0.0
    %124 = vmatpush1.msra.mxu0 %v90
    %125 = vmatprep.subr.mxu0 0.0
    %126 = vmatpush1.msra.mxu0 %v91
    %127 = vmatprep.subr.mxu0 0.0
    %128 = vmatpush1.msra.mxu0 %v92
    %129 = vmatprep.subr.mxu0 0.0
    %130 = vmatpush1.msra.mxu0 0.0
    %131 = vmatprep.subr.mxu0 0.0
    %132 = vmatpush1.msra.mxu0 0.0
    %133 = vmatprep.subr.mxu0 0.0
    %134 = vmatpush1.msra.mxu0 0.0
    %135 = vmatprep.subr.mxu0 0.0
    %136 = vmatpush1.msra.mxu0 0.0
    %137 = vmatprep.subr.mxu0 0.0
    %138 = vmatpush1.msra.mxu0 0.0
    %139 = vmatprep.subr.mxu0 0.0
    %140 = vmatpush1.msra.mxu0 0.0
    %141 = vmatprep.subr.mxu0 0.0
    %142 = vmatpush1.msra.mxu0 0.0
    %143 = vmatprep.subr.mxu0 0.0
    %144 = vmatpush1.msra.mxu0 0.0
    %145 = vmatprep.subr.mxu0 0.0
    %146 = vmatpush1.msra.mxu0 0.0
    %147 = vmatprep.subr.mxu0 0.0
    %148 = vmatpush1.msra.mxu0 0.0
    %149 = vmatprep.subr.mxu0 0.0
    %150 = vmatpush1.msra.mxu0 0.0
    %151 = vmatprep.subr.mxu0 0.0
    %152 = vmatpush1.msra.mxu0 0.0
    %153 = vmatprep.subr.mxu0 0.0
    %154 = vmatpush1.msra.mxu0 0.0
    %155 = vmatprep.subr.mxu0 0.0
    %156 = vmatpush1.msra.mxu0 0.0
    %157 = vmatprep.subr.mxu0 0.0
    %158 = vmatpush1.msra.mxu0 0.0
    %159 = vmatprep.subr.mxu0 0.0
    %160 = vmatpush1.msra.mxu0 0.0
    %161 = vmatprep.subr.mxu0 0.0
    %162 = vmatpush1.msra.mxu0 0.0
    %163 = vmatprep.subr.mxu0 0.0
    %164 = vmatpush1.msra.mxu0 0.0
    %165 = vmatprep.subr.mxu0 0.0
    %166 = vmatpush1.msra.mxu0 0.0
    %167 = vmatprep.subr.mxu0 0.0
    %168 = vmatpush1.msra.mxu0 0.0
    %169 = vmatprep.subr.mxu0 0.0
    %170 = vmatpush1.msra.mxu0 0.0
    %171 = vmatprep.subr.mxu0 0.0
    %172 = vmatpush1.msra.mxu0 0.0
    %173 = vmatprep.subr.mxu0 0.0
    %174 = vmatpush1.msra.mxu0 0.0
    %175 = vmatprep.subr.mxu0 0.0
    %176 = vmatpush1.msra.mxu0 0.0
    %177 = vmatprep.mubr.f32.mxu0 0.0
    %178 = vmatmul.mubr.f32.gmra.mrb[0].mxu0 %v102
    %v179 = vpop.f32.mrb[0].mxu0
    %v180 = vadd.f32 %v98, %v179
    %v181 = vpop.f32.mrb[0].mxu0
    %182 = vmatprep.mubr.f32.mxu0 0.0
    %183 = vmatmul.mubr.f32.gmra.mrb[0].mxu0 %v105
    %v184 = vpop.f32.mrb[0].mxu0
    %v185 = vadd.f32 %v98, %v184
    %v186 = vpop.f32.mrb[0].mxu0
    %187 = vmatprep.mubr.f32.mxu0 0.0
    %188 = vmatmul.mubr.f32.gmra.mrb[0].mxu0 %v108
    %v189 = vpop.f32.mrb[0].mxu0
    %v190 = vadd.f32 %v98, %v189
    %v191 = vpop.f32.mrb[0].mxu0
    %192 = vmatprep.mubr.f32.mxu0 0.0
    %193 = vmatmul.mubr.f32.gmra.mrb[0].mxu0 %v111
    %v194 = vpop.f32.mrb[0].mxu0
    %v195 = vadd.f32 %v98, %v194
    %v196 = vpop.f32.mrb[0].mxu0
    %197 = vdwg.mxu0
    %v202 = vcombine.high %v180, %v180
    %v204 = vunpack.c.l.s4 1966171168
    %v205 = vunpack.c.0.s8 %v204
    %v206 = vlaneseq
    %v207 = vshrl.u32 %v206, 7
    %v208 = vsub.s32 %v205, %v207
    %v209 = vrot.slane %v180, %v208
    %v211 = vunpack.c.l.s4 1966171168
    %v212 = vunpack.c.0.s8 %v211
    %v213 = vlaneseq
    %v214 = vshrl.u32 %v213, 7
    %v215 = vsub.s32 %v212, %v214
    %v216 = vrot.slane %v202, %v215
    %v217 = vcombine.high %v209, %v209
    %v218 = vcombine.high %v216, %v216
    %v220 = vunpack.c.l.s4 1966171168
    %v221 = vunpack.c.0.s8 %v220
    %v222 = vlaneseq
    %v223 = vshrl.u32 %v222, 7
    %v224 = vsub.s32 %v221, %v223
    %v225 = vrot.slane %v209, %v224
    %v227 = vunpack.c.l.s4 1966171168
    %v228 = vunpack.c.0.s8 %v227
    %v229 = vlaneseq
    %v230 = vshrl.u32 %v229, 7
    %v231 = vsub.s32 %v228, %v230
    %v232 = vrot.slane %v216, %v231
    %v234 = vunpack.c.l.s4 1966171168
    %v235 = vunpack.c.0.s8 %v234
    %v236 = vlaneseq
    %v237 = vshrl.u32 %v236, 7
    %v238 = vsub.s32 %v235, %v237
    %v239 = vrot.slane %v217, %v238
    %v241 = vunpack.c.l.s4 1966171168
    %v242 = vunpack.c.0.s8 %v241
    %v243 = vlaneseq
    %v244 = vshrl.u32 %v243, 7
    %v245 = vsub.s32 %v242, %v244
    %v246 = vrot.slane %v218, %v245
    %v247 = vcombine.high %v225, %v225
    %v248 = vcombine.high %v232, %v232
    %v249 = vcombine.high %v239, %v239
    %v250 = vcombine.high %v246, %v246
    %v251 = vcombine.high %v185, %v185
    %v253 = vunpack.c.l.s4 1966171168
    %v254 = vunpack.c.0.s8 %v253
    %v255 = vlaneseq
    %v256 = vshrl.u32 %v255, 7
    %v257 = vsub.s32 %v254, %v256
    %v258 = vrot.slane %v185, %v257
    %v260 = vunpack.c.l.s4 1966171168
    %v261 = vunpack.c.0.s8 %v260
    %v262 = vlaneseq
    %v263 = vshrl.u32 %v262, 7
    %v264 = vsub.s32 %v261, %v263
    %v265 = vrot.slane %v251, %v264
    %v266 = vcombine.high %v258, %v258
    %v267 = vcombine.high %v265, %v265
    %v269 = vunpack.c.l.s4 1966171168
    %v270 = vunpack.c.0.s8 %v269
    %v271 = vlaneseq
    %v272 = vshrl.u32 %v271, 7
    %v273 = vsub.s32 %v270, %v272
    %v274 = vrot.slane %v258, %v273
    %v276 = vunpack.c.l.s4 1966171168
    %v277 = vunpack.c.0.s8 %v276
    %v278 = vlaneseq
    %v279 = vshrl.u32 %v278, 7
    %v280 = vsub.s32 %v277, %v279
    %v281 = vrot.slane %v265, %v280
    %v283 = vunpack.c.l.s4 1966171168
    %v284 = vunpack.c.0.s8 %v283
    %v285 = vlaneseq
    %v286 = vshrl.u32 %v285, 7
    %v287 = vsub.s32 %v284, %v286
    %v288 = vrot.slane %v266, %v287
    %v290 = vunpack.c.l.s4 1966171168
    %v291 = vunpack.c.0.s8 %v290
    %v292 = vlaneseq
    %v293 = vshrl.u32 %v292, 7
    %v294 = vsub.s32 %v291, %v293
    %v295 = vrot.slane %v267, %v294
    %v296 = vcombine.high %v274, %v274
    %v297 = vcombine.high %v281, %v281
    %v298 = vcombine.high %v288, %v288
    %v299 = vcombine.high %v295, %v295
    %v300 = vcombine.high %v190, %v190
    %v302 = vunpack.c.l.s4 1966171168
    %v303 = vunpack.c.0.s8 %v302
    %v304 = vlaneseq
    %v305 = vshrl.u32 %v304, 7
    %v306 = vsub.s32 %v303, %v305
    %v307 = vrot.slane %v190, %v306
    %v309 = vunpack.c.l.s4 1966171168
    %v310 = vunpack.c.0.s8 %v309
    %v311 = vlaneseq
    %v312 = vshrl.u32 %v311, 7
    %v313 = vsub.s32 %v310, %v312
    %v314 = vrot.slane %v300, %v313
    %v315 = vcombine.high %v307, %v307
    %v316 = vcombine.high %v314, %v314
    %v318 = vunpack.c.l.s4 1966171168
    %v319 = vunpack.c.0.s8 %v318
    %v320 = vlaneseq
    %v321 = vshrl.u32 %v320, 7
    %v322 = vsub.s32 %v319, %v321
    %v323 = vrot.slane %v307, %v322
    %v325 = vunpack.c.l.s4 1966171168
    %v326 = vunpack.c.0.s8 %v325
    %v327 = vlaneseq
    %v328 = vshrl.u32 %v327, 7
    %v329 = vsub.s32 %v326, %v328
    %v330 = vrot.slane %v314, %v329
    %v332 = vunpack.c.l.s4 1966171168
    %v333 = vunpack.c.0.s8 %v332
    %v334 = vlaneseq
    %v335 = vshrl.u32 %v334, 7
    %v336 = vsub.s32 %v333, %v335
    %v337 = vrot.slane %v315, %v336
    %v339 = vunpack.c.l.s4 1966171168
    %v340 = vunpack.c.0.s8 %v339
    %v341 = vlaneseq
    %v342 = vshrl.u32 %v341, 7
    %v343 = vsub.s32 %v340, %v342
    %v344 = vrot.slane %v316, %v343
    %v345 = vcombine.high %v323, %v323
    %v346 = vcombine.high %v330, %v330
    %v347 = vcombine.high %v337, %v337
    %v348 = vcombine.high %v344, %v344
    %v349 = vcombine.high %v195, %v195
    %v351 = vunpack.c.l.s4 1966171168
    %v352 = vunpack.c.0.s8 %v351
    %v353 = vlaneseq
    %v354 = vshrl.u32 %v353, 7
    %v355 = vsub.s32 %v352, %v354
    %v356 = vrot.slane %v195, %v355
    %v358 = vunpack.c.l.s4 1966171168
    %v359 = vunpack.c.0.s8 %v358
    %v360 = vlaneseq
    %v361 = vshrl.u32 %v360, 7
    %v362 = vsub.s32 %v359, %v361
    %v363 = vrot.slane %v349, %v362
    %v364 = vcombine.high %v356, %v356
    %v365 = vcombine.high %v363, %v363
    %v367 = vunpack.c.l.s4 1966171168
    %v368 = vunpack.c.0.s8 %v367
    %v369 = vlaneseq
    %v370 = vshrl.u32 %v369, 7
    %v371 = vsub.s32 %v368, %v370
    %v372 = vrot.slane %v356, %v371
    %v374 = vunpack.c.l.s4 1966171168
    %v375 = vunpack.c.0.s8 %v374
    %v376 = vlaneseq
    %v377 = vshrl.u32 %v376, 7
    %v378 = vsub.s32 %v375, %v377
    %v379 = vrot.slane %v363, %v378
    %v381 = vunpack.c.l.s4 1966171168
    %v382 = vunpack.c.0.s8 %v381
    %v383 = vlaneseq
    %v384 = vshrl.u32 %v383, 7
    %v385 = vsub.s32 %v382, %v384
    %v386 = vrot.slane %v364, %v385
    %v388 = vunpack.c.l.s4 1966171168
    %v389 = vunpack.c.0.s8 %v388
    %v390 = vlaneseq
    %v391 = vshrl.u32 %v390, 7
    %v392 = vsub.s32 %v389, %v391
    %v393 = vrot.slane %v365, %v392
    %v394 = vcombine.high %v372, %v372
    %v395 = vcombine.high %v379, %v379
    %v396 = vcombine.high %v386, %v386
    %v397 = vcombine.high %v393, %v393
    %v398 = vlaneseq
    %v399 = vshrl.u32 %v398, 7
    %v400 = vsub.s32 0, %v399
    %v401 = vrot.slane %v225, %v400
    %v402 = vlaneseq
    %v403 = vshrl.u32 %v402, 7
    %v404 = vsub.s32 0, %v403
    %v405 = vrot.slane %v239, %v404
    %v406 = vlaneseq
    %v407 = vshrl.u32 %v406, 7
    %v408 = vsub.s32 0, %v407
    %v409 = vrot.slane %v247, %v408
    %v410 = vlaneseq
    %v411 = vshrl.u32 %v410, 7
    %v412 = vsub.s32 0, %v411
    %v413 = vrot.slane %v249, %v412
    %v414 = vlaneseq
    %v415 = vshrl.u32 %v414, 7
    %v416 = vsub.s32 0, %v415
    %v417 = vrot.slane %v232, %v416
    %v418 = vlaneseq
    %v419 = vshrl.u32 %v418, 7
    %v420 = vsub.s32 0, %v419
    %v421 = vrot.slane %v246, %v420
    %v422 = vlaneseq
    %v423 = vshrl.u32 %v422, 7
    %v424 = vsub.s32 0, %v423
    %v425 = vrot.slane %v248, %v424
    %v426 = vlaneseq
    %v427 = vshrl.u32 %v426, 7
    %v428 = vsub.s32 0, %v427
    %v429 = vrot.slane %v250, %v428
    %v430 = vlaneseq
    %v431 = vshrl.u32 %v430, 7
    %v432 = vsub.s32 0, %v431
    %v433 = vrot.slane %v274, %v432
    %v434 = vlaneseq
    %v435 = vshrl.u32 %v434, 7
    %v436 = vsub.s32 0, %v435
    %v437 = vrot.slane %v288, %v436
    %v438 = vlaneseq
    %v439 = vshrl.u32 %v438, 7
    %v440 = vsub.s32 0, %v439
    %v441 = vrot.slane %v296, %v440
    %v442 = vlaneseq
    %v443 = vshrl.u32 %v442, 7
    %v444 = vsub.s32 0, %v443
    %v445 = vrot.slane %v298, %v444
    %v446 = vlaneseq
    %v447 = vshrl.u32 %v446, 7
    %v448 = vsub.s32 0, %v447
    %v449 = vrot.slane %v281, %v448
    %v450 = vlaneseq
    %v451 = vshrl.u32 %v450, 7
    %v452 = vsub.s32 0, %v451
    %v453 = vrot.slane %v295, %v452
    %v454 = vlaneseq
    %v455 = vshrl.u32 %v454, 7
    %v456 = vsub.s32 0, %v455
    %v457 = vrot.slane %v297, %v456
    %v458 = vlaneseq
    %v459 = vshrl.u32 %v458, 7
    %v460 = vsub.s32 0, %v459
    %v461 = vrot.slane %v299, %v460
    %v462 = vlaneseq
    %v463 = vshrl.u32 %v462, 7
    %v464 = vsub.s32 0, %v463
    %v465 = vrot.slane %v323, %v464
    %v466 = vlaneseq
    %v467 = vshrl.u32 %v466, 7
    %v468 = vsub.s32 0, %v467
    %v469 = vrot.slane %v337, %v468
    %v470 = vlaneseq
    %v471 = vshrl.u32 %v470, 7
    %v472 = vsub.s32 0, %v471
    %v473 = vrot.slane %v345, %v472
    %v474 = vlaneseq
    %v475 = vshrl.u32 %v474, 7
    %v476 = vsub.s32 0, %v475
    %v477 = vrot.slane %v347, %v476
    %v478 = vlaneseq
    %v479 = vshrl.u32 %v478, 7
    %v480 = vsub.s32 0, %v479
    %v481 = vrot.slane %v330, %v480
    %v482 = vlaneseq
    %v483 = vshrl.u32 %v482, 7
    %v484 = vsub.s32 0, %v483
    %v485 = vrot.slane %v344, %v484
    %v486 = vlaneseq
    %v487 = vshrl.u32 %v486, 7
    %v488 = vsub.s32 0, %v487
    %v489 = vrot.slane %v346, %v488
    %v490 = vlaneseq
    %v491 = vshrl.u32 %v490, 7
    %v492 = vsub.s32 0, %v491
    %v493 = vrot.slane %v348, %v492
    %v494 = vlaneseq
    %v495 = vshrl.u32 %v494, 7
    %v496 = vsub.s32 0, %v495
    %v497 = vrot.slane %v372, %v496
    %v498 = vlaneseq
    %v499 = vshrl.u32 %v498, 7
    %v500 = vsub.s32 0, %v499
    %v501 = vrot.slane %v386, %v500
    %v502 = vlaneseq
    %v503 = vshrl.u32 %v502, 7
    %v504 = vsub.s32 0, %v503
    %v505 = vrot.slane %v394, %v504
    %v506 = vlaneseq
    %v507 = vshrl.u32 %v506, 7
    %v508 = vsub.s32 0, %v507
    %v509 = vrot.slane %v396, %v508
    %v510 = vlaneseq
    %v511 = vshrl.u32 %v510, 7
    %v512 = vsub.s32 0, %v511
    %v513 = vrot.slane %v379, %v512
    %v514 = vlaneseq
    %v515 = vshrl.u32 %v514, 7
    %v516 = vsub.s32 0, %v515
    %v517 = vrot.slane %v393, %v516
    %v518 = vlaneseq
    %v519 = vshrl.u32 %v518, 7
    %v520 = vsub.s32 0, %v519
    %v521 = vrot.slane %v395, %v520
    %v522 = vlaneseq
    %v523 = vshrl.u32 %v522, 7
    %v524 = vsub.s32 0, %v523
    %v525 = vrot.slane %v397, %v524
    %526 = vrot.lane.b32.xlu0 %v401, 64
    %v527 = vpop.permute.xlu0 %526
    %528 = vrot.lane.b32.xlu0 %v405, 64
    %v529 = vpop.permute.xlu0 %528
    %530 = vrot.lane.b32.xlu0 %v409, 64
    %v531 = vpop.permute.xlu0 %530
    %532 = vrot.lane.b32.xlu0 %v413, 64
    %v533 = vpop.permute.xlu0 %532
    %534 = vrot.lane.b32.xlu0 %v417, 64
    %v535 = vpop.permute.xlu0 %534
    %536 = vrot.lane.b32.xlu0 %v421, 64
    %v537 = vpop.permute.xlu0 %536
    %538 = vrot.lane.b32.xlu0 %v425, 64
    %v539 = vpop.permute.xlu0 %538
    %540 = vrot.lane.b32.xlu0 %v429, 64
    %v541 = vpop.permute.xlu0 %540
    %542 = vrot.lane.b32.xlu0 %v433, 64
    %v543 = vpop.permute.xlu0 %542
    %544 = vrot.lane.b32.xlu0 %v437, 64
    %v545 = vpop.permute.xlu0 %544
    %546 = vrot.lane.b32.xlu0 %v441, 64
    %v547 = vpop.permute.xlu0 %546
    %548 = vrot.lane.b32.xlu0 %v445, 64
    %v549 = vpop.permute.xlu0 %548
    %550 = vrot.lane.b32.xlu0 %v449, 64
    %v551 = vpop.permute.xlu0 %550
    %552 = vrot.lane.b32.xlu0 %v453, 64
    %v553 = vpop.permute.xlu0 %552
    %554 = vrot.lane.b32.xlu0 %v457, 64
    %v555 = vpop.permute.xlu0 %554
    %556 = vrot.lane.b32.xlu0 %v461, 64
    %v557 = vpop.permute.xlu0 %556
    %558 = vrot.lane.b32.xlu0 %v465, 64
    %v559 = vpop.permute.xlu0 %558
    %560 = vrot.lane.b32.xlu0 %v469, 64
    %v561 = vpop.permute.xlu0 %560
    %562 = vrot.lane.b32.xlu0 %v473, 64
    %v563 = vpop.permute.xlu0 %562
    %564 = vrot.lane.b32.xlu0 %v477, 64
    %v565 = vpop.permute.xlu0 %564
    %566 = vrot.lane.b32.xlu0 %v481, 64
    %v567 = vpop.permute.xlu0 %566
    %568 = vrot.lane.b32.xlu0 %v485, 64
    %v569 = vpop.permute.xlu0 %568
    %570 = vrot.lane.b32.xlu0 %v489, 64
    %v571 = vpop.permute.xlu0 %570
    %572 = vrot.lane.b32.xlu0 %v493, 64
    %v573 = vpop.permute.xlu0 %572
    %574 = vrot.lane.b32.xlu0 %v497, 64
    %v575 = vpop.permute.xlu0 %574
    %576 = vrot.lane.b32.xlu0 %v501, 64
    %v577 = vpop.permute.xlu0 %576
    %578 = vrot.lane.b32.xlu0 %v505, 64
    %v579 = vpop.permute.xlu0 %578
    %580 = vrot.lane.b32.xlu0 %v509, 64
    %v581 = vpop.permute.xlu0 %580
    %582 = vrot.lane.b32.xlu0 %v513, 64
    %v583 = vpop.permute.xlu0 %582
    %584 = vrot.lane.b32.xlu0 %v517, 64
    %v585 = vpop.permute.xlu0 %584
    %586 = vrot.lane.b32.xlu0 %v521, 64
    %v587 = vpop.permute.xlu0 %586
    %588 = vrot.lane.b32.xlu0 %v525, 64
    %v589 = vpop.permute.xlu0 %588
    %v622 = vadd.f32 %v180, %v527
    %v623 = vadd.f32 %v185, %v527
    %v624 = vadd.f32 %v190, %v527
    %v625 = vadd.f32 %v195, %v527
    %v626 = vadd.f32 %v180, %v529
    %v627 = vadd.f32 %v185, %v529
    %v628 = vadd.f32 %v190, %v529
    %v629 = vadd.f32 %v195, %v529
    %v630 = vadd.f32 %v180, %v531
    %v631 = vadd.f32 %v185, %v531
    %v632 = vadd.f32 %v190, %v531
    %v633 = vadd.f32 %v195, %v531
    %v634 = vadd.f32 %v180, %v533
    %v635 = vadd.f32 %v185, %v533
    %v636 = vadd.f32 %v190, %v533
    %v637 = vadd.f32 %v195, %v533
    %v638 = vadd.f32 %v180, %v535
    %v639 = vadd.f32 %v185, %v535
    %v640 = vadd.f32 %v190, %v535
    %v641 = vadd.f32 %v195, %v535
    %v642 = vadd.f32 %v180, %v537
    %v643 = vadd.f32 %v185, %v537
    %v644 = vadd.f32 %v190, %v537
    %v645 = vadd.f32 %v195, %v537
    %v646 = vadd.f32 %v180, %v539
    %v647 = vadd.f32 %v185, %v539
    %v648 = vadd.f32 %v190, %v539
    %v649 = vadd.f32 %v195, %v539
    %v650 = vadd.f32 %v180, %v541
    %v651 = vadd.f32 %v185, %v541
    %v652 = vadd.f32 %v190, %v541
    %v653 = vadd.f32 %v195, %v541
    %v654 = vadd.f32 %v180, %v543
    %v655 = vadd.f32 %v185, %v543
    %v656 = vadd.f32 %v190, %v543
    %v657 = vadd.f32 %v195, %v543
    %v658 = vadd.f32 %v180, %v545
    %v659 = vadd.f32 %v185, %v545
    %v660 = vadd.f32 %v190, %v545
    %v661 = vadd.f32 %v195, %v545
    %v662 = vadd.f32 %v180, %v547
    %v663 = vadd.f32 %v185, %v547
    %v664 = vadd.f32 %v190, %v547
    %v665 = vadd.f32 %v195, %v547
    %v666 = vadd.f32 %v180, %v549
    %v667 = vadd.f32 %v185, %v549
    %v668 = vadd.f32 %v190, %v549
    %v669 = vadd.f32 %v195, %v549
    %v670 = vadd.f32 %v180, %v551
    %v671 = vadd.f32 %v185, %v551
    %v672 = vadd.f32 %v190, %v551
    %v673 = vadd.f32 %v195, %v551
    %v674 = vadd.f32 %v180, %v553
    %v675 = vadd.f32 %v185, %v553
    %v676 = vadd.f32 %v190, %v553
    %v677 = vadd.f32 %v195, %v553
    %v678 = vadd.f32 %v180, %v555
    %v679 = vadd.f32 %v185, %v555
    %v680 = vadd.f32 %v190, %v555
    %v681 = vadd.f32 %v195, %v555
    %v682 = vadd.f32 %v180, %v557
    %v683 = vadd.f32 %v185, %v557
    %v684 = vadd.f32 %v190, %v557
    %v685 = vadd.f32 %v195, %v557
    %v686 = vadd.f32 %v180, %v559
    %v687 = vadd.f32 %v185, %v559
    %v688 = vadd.f32 %v190, %v559
    %v689 = vadd.f32 %v195, %v559
    %v690 = vadd.f32 %v180, %v561
    %v691 = vadd.f32 %v185, %v561
    %v692 = vadd.f32 %v190, %v561
    %v693 = vadd.f32 %v195, %v561
    %v694 = vadd.f32 %v180, %v563
    %v695 = vadd.f32 %v185, %v563
    %v696 = vadd.f32 %v190, %v563
    %v697 = vadd.f32 %v195, %v563
    %v698 = vadd.f32 %v180, %v565
    %v699 = vadd.f32 %v185, %v565
    %v700 = vadd.f32 %v190, %v565
    %v701 = vadd.f32 %v195, %v565
    %v702 = vadd.f32 %v180, %v567
    %v703 = vadd.f32 %v185, %v567
    %v704 = vadd.f32 %v190, %v567
    %v705 = vadd.f32 %v195, %v567
    %v706 = vadd.f32 %v180, %v569
    %v707 = vadd.f32 %v185, %v569
    %v708 = vadd.f32 %v190, %v569
    %v709 = vadd.f32 %v195, %v569
    %v710 = vadd.f32 %v180, %v571
    %v711 = vadd.f32 %v185, %v571
    %v712 = vadd.f32 %v190, %v571
    %v713 = vadd.f32 %v195, %v571
    %v714 = vadd.f32 %v180, %v573
    %v715 = vadd.f32 %v185, %v573
    %v716 = vadd.f32 %v190, %v573
    %v717 = vadd.f32 %v195, %v573
    %v718 = vadd.f32 %v180, %v575
    %v719 = vadd.f32 %v185, %v575
    %v720 = vadd.f32 %v190, %v575
    %v721 = vadd.f32 %v195, %v575
    %v722 = vadd.f32 %v180, %v577
    %v723 = vadd.f32 %v185, %v577
    %v724 = vadd.f32 %v190, %v577
    %v725 = vadd.f32 %v195, %v577
    %v726 = vadd.f32 %v180, %v579
    %v727 = vadd.f32 %v185, %v579
    %v728 = vadd.f32 %v190, %v579
    %v729 = vadd.f32 %v195, %v579
    %v730 = vadd.f32 %v180, %v581
    %v731 = vadd.f32 %v185, %v581
    %v732 = vadd.f32 %v190, %v581
    %v733 = vadd.f32 %v195, %v581
    %v734 = vadd.f32 %v180, %v583
    %v735 = vadd.f32 %v185, %v583
    %v736 = vadd.f32 %v190, %v583
    %v737 = vadd.f32 %v195, %v583
    %v738 = vadd.f32 %v180, %v585
    %v739 = vadd.f32 %v185, %v585
    %v740 = vadd.f32 %v190, %v585
    %v741 = vadd.f32 %v195, %v585
    %v742 = vadd.f32 %v180, %v587
    %v743 = vadd.f32 %v185, %v587
    %v744 = vadd.f32 %v190, %v587
    %v745 = vadd.f32 %v195, %v587
    %v746 = vadd.f32 %v180, %v589
    %v747 = vadd.f32 %v185, %v589
    %v748 = vadd.f32 %v190, %v589
    %v749 = vadd.f32 %v195, %v589
    %vm750 = vcmp.gt.f32.partialorder %v622, 0.0
    %vm751 = vcmp.gt.f32.partialorder %v623, 0.0
    %vm752 = vcmp.gt.f32.partialorder %v624, 0.0
    %vm753 = vcmp.gt.f32.partialorder %v625, 0.0
    %vm754 = vcmp.gt.f32.partialorder %v626, 0.0
    %vm755 = vcmp.gt.f32.partialorder %v627, 0.0
    %vm756 = vcmp.gt.f32.partialorder %v628, 0.0
    %vm757 = vcmp.gt.f32.partialorder %v629, 0.0
    %vm758 = vcmp.gt.f32.partialorder %v630, 0.0
    %vm759 = vcmp.gt.f32.partialorder %v631, 0.0
    %vm760 = vcmp.gt.f32.partialorder %v632, 0.0
    %vm761 = vcmp.gt.f32.partialorder %v633, 0.0
    %vm762 = vcmp.gt.f32.partialorder %v634, 0.0
    %vm763 = vcmp.gt.f32.partialorder %v635, 0.0
    %vm764 = vcmp.gt.f32.partialorder %v636, 0.0
    %vm765 = vcmp.gt.f32.partialorder %v637, 0.0
    %vm766 = vcmp.gt.f32.partialorder %v638, 0.0
    %vm767 = vcmp.gt.f32.partialorder %v639, 0.0
    %vm768 = vcmp.gt.f32.partialorder %v640, 0.0
    %vm769 = vcmp.gt.f32.partialorder %v641, 0.0
    %vm770 = vcmp.gt.f32.partialorder %v642, 0.0
    %vm771 = vcmp.gt.f32.partialorder %v643, 0.0
    %vm772 = vcmp.gt.f32.partialorder %v644, 0.0
    %vm773 = vcmp.gt.f32.partialorder %v645, 0.0
    %vm774 = vcmp.gt.f32.partialorder %v646, 0.0
    %vm775 = vcmp.gt.f32.partialorder %v647, 0.0
    %vm776 = vcmp.gt.f32.partialorder %v648, 0.0
    %vm777 = vcmp.gt.f32.partialorder %v649, 0.0
    %vm778 = vcmp.gt.f32.partialorder %v650, 0.0
    %vm779 = vcmp.gt.f32.partialorder %v651, 0.0
    %vm780 = vcmp.gt.f32.partialorder %v652, 0.0
    %vm781 = vcmp.gt.f32.partialorder %v653, 0.0
    %vm782 = vcmp.gt.f32.partialorder %v654, 0.0
    %vm783 = vcmp.gt.f32.partialorder %v655, 0.0
    %vm784 = vcmp.gt.f32.partialorder %v656, 0.0
    %vm785 = vcmp.gt.f32.partialorder %v657, 0.0
    %vm786 = vcmp.gt.f32.partialorder %v658, 0.0
    %vm787 = vcmp.gt.f32.partialorder %v659, 0.0
    %vm788 = vcmp.gt.f32.partialorder %v660, 0.0
    %vm789 = vcmp.gt.f32.partialorder %v661, 0.0
    %vm790 = vcmp.gt.f32.partialorder %v662, 0.0
    %vm791 = vcmp.gt.f32.partialorder %v663, 0.0
    %vm792 = vcmp.gt.f32.partialorder %v664, 0.0
    %vm793 = vcmp.gt.f32.partialorder %v665, 0.0
    %vm794 = vcmp.gt.f32.partialorder %v666, 0.0
    %vm795 = vcmp.gt.f32.partialorder %v667, 0.0
    %vm796 = vcmp.gt.f32.partialorder %v668, 0.0
    %vm797 = vcmp.gt.f32.partialorder %v669, 0.0
    %vm798 = vcmp.gt.f32.partialorder %v670, 0.0
    %vm799 = vcmp.gt.f32.partialorder %v671, 0.0
    %vm800 = vcmp.gt.f32.partialorder %v672, 0.0
    %vm801 = vcmp.gt.f32.partialorder %v673, 0.0
    %vm802 = vcmp.gt.f32.partialorder %v674, 0.0
    %vm803 = vcmp.gt.f32.partialorder %v675, 0.0
    %vm804 = vcmp.gt.f32.partialorder %v676, 0.0
    %vm805 = vcmp.gt.f32.partialorder %v677, 0.0
    %vm806 = vcmp.gt.f32.partialorder %v678, 0.0
    %vm807 = vcmp.gt.f32.partialorder %v679, 0.0
    %vm808 = vcmp.gt.f32.partialorder %v680, 0.0
    %vm809 = vcmp.gt.f32.partialorder %v681, 0.0
    %vm810 = vcmp.gt.f32.partialorder %v682, 0.0
    %vm811 = vcmp.gt.f32.partialorder %v683, 0.0
    %vm812 = vcmp.gt.f32.partialorder %v684, 0.0
    %vm813 = vcmp.gt.f32.partialorder %v685, 0.0
    %vm814 = vcmp.gt.f32.partialorder %v686, 0.0
    %vm815 = vcmp.gt.f32.partialorder %v687, 0.0
    %vm816 = vcmp.gt.f32.partialorder %v688, 0.0
    %vm817 = vcmp.gt.f32.partialorder %v689, 0.0
    %vm818 = vcmp.gt.f32.partialorder %v690, 0.0
    %vm819 = vcmp.gt.f32.partialorder %v691, 0.0
    %vm820 = vcmp.gt.f32.partialorder %v692, 0.0
    %vm821 = vcmp.gt.f32.partialorder %v693, 0.0
    %vm822 = vcmp.gt.f32.partialorder %v694, 0.0
    %vm823 = vcmp.gt.f32.partialorder %v695, 0.0
    %vm824 = vcmp.gt.f32.partialorder %v696, 0.0
    %vm825 = vcmp.gt.f32.partialorder %v697, 0.0
    %vm826 = vcmp.gt.f32.partialorder %v698, 0.0
    %vm827 = vcmp.gt.f32.partialorder %v699, 0.0
    %vm828 = vcmp.gt.f32.partialorder %v700, 0.0
    %vm829 = vcmp.gt.f32.partialorder %v701, 0.0
    %vm830 = vcmp.gt.f32.partialorder %v702, 0.0
    %vm831 = vcmp.gt.f32.partialorder %v703, 0.0
    %vm832 = vcmp.gt.f32.partialorder %v704, 0.0
    %vm833 = vcmp.gt.f32.partialorder %v705, 0.0
    %vm834 = vcmp.gt.f32.partialorder %v706, 0.0
    %vm835 = vcmp.gt.f32.partialorder %v707, 0.0
    %vm836 = vcmp.gt.f32.partialorder %v708, 0.0
    %vm837 = vcmp.gt.f32.partialorder %v709, 0.0
    %vm838 = vcmp.gt.f32.partialorder %v710, 0.0
    %vm839 = vcmp.gt.f32.partialorder %v711, 0.0
    %vm840 = vcmp.gt.f32.partialorder %v712, 0.0
    %vm841 = vcmp.gt.f32.partialorder %v713, 0.0
    %vm842 = vcmp.gt.f32.partialorder %v714, 0.0
    %vm843 = vcmp.gt.f32.partialorder %v715, 0.0
    %vm844 = vcmp.gt.f32.partialorder %v716, 0.0
    %vm845 = vcmp.gt.f32.partialorder %v717, 0.0
    %vm846 = vcmp.gt.f32.partialorder %v718, 0.0
    %vm847 = vcmp.gt.f32.partialorder %v719, 0.0
    %vm848 = vcmp.gt.f32.partialorder %v720, 0.0
    %vm849 = vcmp.gt.f32.partialorder %v721, 0.0
    %vm850 = vcmp.gt.f32.partialorder %v722, 0.0
    %vm851 = vcmp.gt.f32.partialorder %v723, 0.0
    %vm852 = vcmp.gt.f32.partialorder %v724, 0.0
    %vm853 = vcmp.gt.f32.partialorder %v725, 0.0
    %vm854 = vcmp.gt.f32.partialorder %v726, 0.0
    %vm855 = vcmp.gt.f32.partialorder %v727, 0.0
    %vm856 = vcmp.gt.f32.partialorder %v728, 0.0
    %vm857 = vcmp.gt.f32.partialorder %v729, 0.0
    %vm858 = vcmp.gt.f32.partialorder %v730, 0.0
    %vm859 = vcmp.gt.f32.partialorder %v731, 0.0
    %vm860 = vcmp.gt.f32.partialorder %v732, 0.0
    %vm861 = vcmp.gt.f32.partialorder %v733, 0.0
    %vm862 = vcmp.gt.f32.partialorder %v734, 0.0
    %vm863 = vcmp.gt.f32.partialorder %v735, 0.0
    %vm864 = vcmp.gt.f32.partialorder %v736, 0.0
    %vm865 = vcmp.gt.f32.partialorder %v737, 0.0
    %vm866 = vcmp.gt.f32.partialorder %v738, 0.0
    %vm867 = vcmp.gt.f32.partialorder %v739, 0.0
    %vm868 = vcmp.gt.f32.partialorder %v740, 0.0
    %vm869 = vcmp.gt.f32.partialorder %v741, 0.0
    %vm870 = vcmp.gt.f32.partialorder %v742, 0.0
    %vm871 = vcmp.gt.f32.partialorder %v743, 0.0
    %vm872 = vcmp.gt.f32.partialorder %v744, 0.0
    %vm873 = vcmp.gt.f32.partialorder %v745, 0.0
    %vm874 = vcmp.gt.f32.partialorder %v746, 0.0
    %vm875 = vcmp.gt.f32.partialorder %v747, 0.0
    %vm876 = vcmp.gt.f32.partialorder %v748, 0.0
    %vm877 = vcmp.gt.f32.partialorder %v749, 0.0
    %v878 = vmul.f32 %v622, 0.2
    %v879 = vmul.f32 %v623, 0.2
    %v880 = vmul.f32 %v624, 0.2
    %v881 = vmul.f32 %v625, 0.2
    %v882 = vmul.f32 %v626, 0.2
    %v883 = vmul.f32 %v627, 0.2
    %v884 = vmul.f32 %v628, 0.2
    %v885 = vmul.f32 %v629, 0.2
    %v886 = vmul.f32 %v630, 0.2
    %v887 = vmul.f32 %v631, 0.2
    %v888 = vmul.f32 %v632, 0.2
    %v889 = vmul.f32 %v633, 0.2
    %v890 = vmul.f32 %v634, 0.2
    %v891 = vmul.f32 %v635, 0.2
    %v892 = vmul.f32 %v636, 0.2
    %v893 = vmul.f32 %v637, 0.2
    %v894 = vmul.f32 %v638, 0.2
    %v895 = vmul.f32 %v639, 0.2
    %v896 = vmul.f32 %v640, 0.2
    %v897 = vmul.f32 %v641, 0.2
    %v898 = vmul.f32 %v642, 0.2
    %v899 = vmul.f32 %v643, 0.2
    %v900 = vmul.f32 %v644, 0.2
    %v901 = vmul.f32 %v645, 0.2
    %v902 = vmul.f32 %v646, 0.2
    %v903 = vmul.f32 %v647, 0.2
    %v904 = vmul.f32 %v648, 0.2
    %v905 = vmul.f32 %v649, 0.2
    %v906 = vmul.f32 %v650, 0.2
    %v907 = vmul.f32 %v651, 0.2
    %v908 = vmul.f32 %v652, 0.2
    %v909 = vmul.f32 %v653, 0.2
    %v910 = vmul.f32 %v654, 0.2
    %v911 = vmul.f32 %v655, 0.2
    %v912 = vmul.f32 %v656, 0.2
    %v913 = vmul.f32 %v657, 0.2
    %v914 = vmul.f32 %v658, 0.2
    %v915 = vmul.f32 %v659, 0.2
    %v916 = vmul.f32 %v660, 0.2
    %v917 = vmul.f32 %v661, 0.2
    %v918 = vmul.f32 %v662, 0.2
    %v919 = vmul.f32 %v663, 0.2
    %v920 = vmul.f32 %v664, 0.2
    %v921 = vmul.f32 %v665, 0.2
    %v922 = vmul.f32 %v666, 0.2
    %v923 = vmul.f32 %v667, 0.2
    %v924 = vmul.f32 %v668, 0.2
    %v925 = vmul.f32 %v669, 0.2
    %v926 = vmul.f32 %v670, 0.2
    %v927 = vmul.f32 %v671, 0.2
    %v928 = vmul.f32 %v672, 0.2
    %v929 = vmul.f32 %v673, 0.2
    %v930 = vmul.f32 %v674, 0.2
    %v931 = vmul.f32 %v675, 0.2
    %v932 = vmul.f32 %v676, 0.2
    %v933 = vmul.f32 %v677, 0.2
    %v934 = vmul.f32 %v678, 0.2
    %v935 = vmul.f32 %v679, 0.2
    %v936 = vmul.f32 %v680, 0.2
    %v937 = vmul.f32 %v681, 0.2
    %v938 = vmul.f32 %v682, 0.2
    %v939 = vmul.f32 %v683, 0.2
    %v940 = vmul.f32 %v684, 0.2
    %v941 = vmul.f32 %v685, 0.2
    %v942 = vmul.f32 %v686, 0.2
    %v943 = vmul.f32 %v687, 0.2
    %v944 = vmul.f32 %v688, 0.2
    %v945 = vmul.f32 %v689, 0.2
    %v946 = vmul.f32 %v690, 0.2
    %v947 = vmul.f32 %v691, 0.2
    %v948 = vmul.f32 %v692, 0.2
    %v949 = vmul.f32 %v693, 0.2
    %v950 = vmul.f32 %v694, 0.2
    %v951 = vmul.f32 %v695, 0.2
    %v952 = vmul.f32 %v696, 0.2
    %v953 = vmul.f32 %v697, 0.2
    %v954 = vmul.f32 %v698, 0.2
    %v955 = vmul.f32 %v699, 0.2
    %v956 = vmul.f32 %v700, 0.2
    %v957 = vmul.f32 %v701, 0.2
    %v958 = vmul.f32 %v702, 0.2
    %v959 = vmul.f32 %v703, 0.2
    %v960 = vmul.f32 %v704, 0.2
    %v961 = vmul.f32 %v705, 0.2
    %v962 = vmul.f32 %v706, 0.2
    %v963 = vmul.f32 %v707, 0.2
    %v964 = vmul.f32 %v708, 0.2
    %v965 = vmul.f32 %v709, 0.2
    %v966 = vmul.f32 %v710, 0.2
    %v967 = vmul.f32 %v711, 0.2
    %v968 = vmul.f32 %v712, 0.2
    %v969 = vmul.f32 %v713, 0.2
    %v970 = vmul.f32 %v714, 0.2
    %v971 = vmul.f32 %v715, 0.2
    %v972 = vmul.f32 %v716, 0.2
    %v973 = vmul.f32 %v717, 0.2
    %v974 = vmul.f32 %v718, 0.2
    %v975 = vmul.f32 %v719, 0.2
    %v976 = vmul.f32 %v720, 0.2
    %v977 = vmul.f32 %v721, 0.2
    %v978 = vmul.f32 %v722, 0.2
    %v979 = vmul.f32 %v723, 0.2
    %v980 = vmul.f32 %v724, 0.2
    %v981 = vmul.f32 %v725, 0.2
    %v982 = vmul.f32 %v726, 0.2
    %v983 = vmul.f32 %v727, 0.2
    %v984 = vmul.f32 %v728, 0.2
    %v985 = vmul.f32 %v729, 0.2
    %v986 = vmul.f32 %v730, 0.2
    %v987 = vmul.f32 %v731, 0.2
    %v988 = vmul.f32 %v732, 0.2
    %v989 = vmul.f32 %v733, 0.2
    %v990 = vmul.f32 %v734, 0.2
    %v991 = vmul.f32 %v735, 0.2
    %v992 = vmul.f32 %v736, 0.2
    %v993 = vmul.f32 %v737, 0.2
    %v994 = vmul.f32 %v738, 0.2
    %v995 = vmul.f32 %v739, 0.2
    %v996 = vmul.f32 %v740, 0.2
    %v997 = vmul.f32 %v741, 0.2
    %v998 = vmul.f32 %v742, 0.2
    %v999 = vmul.f32 %v743, 0.2
    %v1000 = vmul.f32 %v744, 0.2
    %v1001 = vmul.f32 %v745, 0.2
    %v1002 = vmul.f32 %v746, 0.2
    %v1003 = vmul.f32 %v747, 0.2
    %v1004 = vmul.f32 %v748, 0.2
    %v1005 = vmul.f32 %v749, 0.2
    %v1006 = vsel %vm750, %v622, %v878
    %v1007 = vsel %vm751, %v623, %v879
    %v1008 = vsel %vm752, %v624, %v880
    %v1009 = vsel %vm753, %v625, %v881
    %v1010 = vsel %vm754, %v626, %v882
    %v1011 = vsel %vm755, %v627, %v883
    %v1012 = vsel %vm756, %v628, %v884
    %v1013 = vsel %vm757, %v629, %v885
    %v1014 = vsel %vm758, %v630, %v886
    %v1015 = vsel %vm759, %v631, %v887
    %v1016 = vsel %vm760, %v632, %v888
    %v1017 = vsel %vm761, %v633, %v889
    %v1018 = vsel %vm762, %v634, %v890
    %v1019 = vsel %vm763, %v635, %v891
    %v1020 = vsel %vm764, %v636, %v892
    %v1021 = vsel %vm765, %v637, %v893
    %v1022 = vsel %vm766, %v638, %v894
    %v1023 = vsel %vm767, %v639, %v895
    %v1024 = vsel %vm768, %v640, %v896
    %v1025 = vsel %vm769, %v641, %v897
    %v1026 = vsel %vm770, %v642, %v898
    %v1027 = vsel %vm771, %v643, %v899
    %v1028 = vsel %vm772, %v644, %v900
    %v1029 = vsel %vm773, %v645, %v901
    %v1030 = vsel %vm774, %v646, %v902
    %v1031 = vsel %vm775, %v647, %v903
    %v1032 = vsel %vm776, %v648, %v904
    %v1033 = vsel %vm777, %v649, %v905
    %v1034 = vsel %vm778, %v650, %v906
    %v1035 = vsel %vm779, %v651, %v907
    %v1036 = vsel %vm780, %v652, %v908
    %v1037 = vsel %vm781, %v653, %v909
    %v1038 = vsel %vm782, %v654, %v910
    %v1039 = vsel %vm783, %v655, %v911
    %v1040 = vsel %vm784, %v656, %v912
    %v1041 = vsel %vm785, %v657, %v913
    %v1042 = vsel %vm786, %v658, %v914
    %v1043 = vsel %vm787, %v659, %v915
    %v1044 = vsel %vm788, %v660, %v916
    %v1045 = vsel %vm789, %v661, %v917
    %v1046 = vsel %vm790, %v662, %v918
    %v1047 = vsel %vm791, %v663, %v919
    %v1048 = vsel %vm792, %v664, %v920
    %v1049 = vsel %vm793, %v665, %v921
    %v1050 = vsel %vm794, %v666, %v922
    %v1051 = vsel %vm795, %v667, %v923
    %v1052 = vsel %vm796, %v668, %v924
    %v1053 = vsel %vm797, %v669, %v925
    %v1054 = vsel %vm798, %v670, %v926
    %v1055 = vsel %vm799, %v671, %v927
    %v1056 = vsel %vm800, %v672, %v928
    %v1057 = vsel %vm801, %v673, %v929
    %v1058 = vsel %vm802, %v674, %v930
    %v1059 = vsel %vm803, %v675, %v931
    %v1060 = vsel %vm804, %v676, %v932
    %v1061 = vsel %vm805, %v677, %v933
    %v1062 = vsel %vm806, %v678, %v934
    %v1063 = vsel %vm807, %v679, %v935
    %v1064 = vsel %vm808, %v680, %v936
    %v1065 = vsel %vm809, %v681, %v937
    %v1066 = vsel %vm810, %v682, %v938
    %v1067 = vsel %vm811, %v683, %v939
    %v1068 = vsel %vm812, %v684, %v940
    %v1069 = vsel %vm813, %v685, %v941
    %v1070 = vsel %vm814, %v686, %v942
    %v1071 = vsel %vm815, %v687, %v943
    %v1072 = vsel %vm816, %v688, %v944
    %v1073 = vsel %vm817, %v689, %v945
    %v1074 = vsel %vm818, %v690, %v946
    %v1075 = vsel %vm819, %v691, %v947
    %v1076 = vsel %vm820, %v692, %v948
    %v1077 = vsel %vm821, %v693, %v949
    %v1078 = vsel %vm822, %v694, %v950
    %v1079 = vsel %vm823, %v695, %v951
    %v1080 = vsel %vm824, %v696, %v952
    %v1081 = vsel %vm825, %v697, %v953
    %v1082 = vsel %vm826, %v698, %v954
    %v1083 = vsel %vm827, %v699, %v955
    %v1084 = vsel %vm828, %v700, %v956
    %v1085 = vsel %vm829, %v701, %v957
    %v1086 = vsel %vm830, %v702, %v958
    %v1087 = vsel %vm831, %v703, %v959
    %v1088 = vsel %vm832, %v704, %v960
    %v1089 = vsel %vm833, %v705, %v961
    %v1090 = vsel %vm834, %v706, %v962
    %v1091 = vsel %vm835, %v707, %v963
    %v1092 = vsel %vm836, %v708, %v964
    %v1093 = vsel %vm837, %v709, %v965
    %v1094 = vsel %vm838, %v710, %v966
    %v1095 = vsel %vm839, %v711, %v967
    %v1096 = vsel %vm840, %v712, %v968
    %v1097 = vsel %vm841, %v713, %v969
    %v1098 = vsel %vm842, %v714, %v970
    %v1099 = vsel %vm843, %v715, %v971
    %v1100 = vsel %vm844, %v716, %v972
    %v1101 = vsel %vm845, %v717, %v973
    %v1102 = vsel %vm846, %v718, %v974
    %v1103 = vsel %vm847, %v719, %v975
    %v1104 = vsel %vm848, %v720, %v976
    %v1105 = vsel %vm849, %v721, %v977
    %v1106 = vsel %vm850, %v722, %v978
    %v1107 = vsel %vm851, %v723, %v979
    %v1108 = vsel %vm852, %v724, %v980
    %v1109 = vsel %vm853, %v725, %v981
    %v1110 = vsel %vm854, %v726, %v982
    %v1111 = vsel %vm855, %v727, %v983
    %v1112 = vsel %vm856, %v728, %v984
    %v1113 = vsel %vm857, %v729, %v985
    %v1114 = vsel %vm858, %v730, %v986
    %v1115 = vsel %vm859, %v731, %v987
    %v1116 = vsel %vm860, %v732, %v988
    %v1117 = vsel %vm861, %v733, %v989
    %v1118 = vsel %vm862, %v734, %v990
    %v1119 = vsel %vm863, %v735, %v991
    %v1120 = vsel %vm864, %v736, %v992
    %v1121 = vsel %vm865, %v737, %v993
    %v1122 = vsel %vm866, %v738, %v994
    %v1123 = vsel %vm867, %v739, %v995
    %v1124 = vsel %vm868, %v740, %v996
    %v1125 = vsel %vm869, %v741, %v997
    %v1126 = vsel %vm870, %v742, %v998
    %v1127 = vsel %vm871, %v743, %v999
    %v1128 = vsel %vm872, %v744, %v1000
    %v1129 = vsel %vm873, %v745, %v1001
    %v1130 = vsel %vm874, %v746, %v1002
    %v1131 = vsel %vm875, %v747, %v1003
    %v1132 = vsel %vm876, %v748, %v1004
    %v1133 = vsel %vm877, %v749, %v1005
    %v1134 = vld [vmem:[%s4] sm:$0x1]
    %v1136 = vlaneseq
    %v1137 = vshrl.u32 %v1136, 7
    %v1138 = vsub.s32 0, %v1137
    %v1139 = vrot.slane %v1134, %v1138
    %v1141 = vmul.f32 %v1006, %v1139
    %v1142 = vmul.f32 %v1007, %v1139
    %v1143 = vmul.f32 %v1008, %v1139
    %v1144 = vmul.f32 %v1009, %v1139
    %v1145 = vmul.f32 %v1010, %v1139
    %v1146 = vmul.f32 %v1011, %v1139
    %v1147 = vmul.f32 %v1012, %v1139
    %v1148 = vmul.f32 %v1013, %v1139
    %v1149 = vmul.f32 %v1014, %v1139
    %v1150 = vmul.f32 %v1015, %v1139
    %v1151 = vmul.f32 %v1016, %v1139
    %v1152 = vmul.f32 %v1017, %v1139
    %v1153 = vmul.f32 %v1018, %v1139
    %v1154 = vmul.f32 %v1019, %v1139
    %v1155 = vmul.f32 %v1020, %v1139
    %v1156 = vmul.f32 %v1021, %v1139
    %v1157 = vmul.f32 %v1022, %v1139
    %v1158 = vmul.f32 %v1023, %v1139
    %v1159 = vmul.f32 %v1024, %v1139
    %v1160 = vmul.f32 %v1025, %v1139
    %v1161 = vmul.f32 %v1026, %v1139
    %v1162 = vmul.f32 %v1027, %v1139
    %v1163 = vmul.f32 %v1028, %v1139
    %v1164 = vmul.f32 %v1029, %v1139
    %v1165 = vmul.f32 %v1030, %v1139
    %v1166 = vmul.f32 %v1031, %v1139
    %v1167 = vmul.f32 %v1032, %v1139
    %v1168 = vmul.f32 %v1033, %v1139
    %v1169 = vmul.f32 %v1034, %v1139
    %v1170 = vmul.f32 %v1035, %v1139
    %v1171 = vmul.f32 %v1036, %v1139
    %v1172 = vmul.f32 %v1037, %v1139
    %v1173 = vmul.f32 %v1038, %v1139
    %v1174 = vmul.f32 %v1039, %v1139
    %v1175 = vmul.f32 %v1040, %v1139
    %v1176 = vmul.f32 %v1041, %v1139
    %v1177 = vmul.f32 %v1042, %v1139
    %v1178 = vmul.f32 %v1043, %v1139
    %v1179 = vmul.f32 %v1044, %v1139
    %v1180 = vmul.f32 %v1045, %v1139
    %v1181 = vmul.f32 %v1046, %v1139
    %v1182 = vmul.f32 %v1047, %v1139
    %v1183 = vmul.f32 %v1048, %v1139
    %v1184 = vmul.f32 %v1049, %v1139
    %v1185 = vmul.f32 %v1050, %v1139
    %v1186 = vmul.f32 %v1051, %v1139
    %v1187 = vmul.f32 %v1052, %v1139
    %v1188 = vmul.f32 %v1053, %v1139
    %v1189 = vmul.f32 %v1054, %v1139
    %v1190 = vmul.f32 %v1055, %v1139
    %v1191 = vmul.f32 %v1056, %v1139
    %v1192 = vmul.f32 %v1057, %v1139
    %v1193 = vmul.f32 %v1058, %v1139
    %v1194 = vmul.f32 %v1059, %v1139
    %v1195 = vmul.f32 %v1060, %v1139
    %v1196 = vmul.f32 %v1061, %v1139
    %v1197 = vmul.f32 %v1062, %v1139
    %v1198 = vmul.f32 %v1063, %v1139
    %v1199 = vmul.f32 %v1064, %v1139
    %v1200 = vmul.f32 %v1065, %v1139
    %v1201 = vmul.f32 %v1066, %v1139
    %v1202 = vmul.f32 %v1067, %v1139
    %v1203 = vmul.f32 %v1068, %v1139
    %v1204 = vmul.f32 %v1069, %v1139
    %v1205 = vmul.f32 %v1070, %v1139
    %v1206 = vmul.f32 %v1071, %v1139
    %v1207 = vmul.f32 %v1072, %v1139
    %v1208 = vmul.f32 %v1073, %v1139
    %v1209 = vmul.f32 %v1074, %v1139
    %v1210 = vmul.f32 %v1075, %v1139
    %v1211 = vmul.f32 %v1076, %v1139
    %v1212 = vmul.f32 %v1077, %v1139
    %v1213 = vmul.f32 %v1078, %v1139
    %v1214 = vmul.f32 %v1079, %v1139
    %v1215 = vmul.f32 %v1080, %v1139
    %v1216 = vmul.f32 %v1081, %v1139
    %v1217 = vmul.f32 %v1082, %v1139
    %v1218 = vmul.f32 %v1083, %v1139
    %v1219 = vmul.f32 %v1084, %v1139
    %v1220 = vmul.f32 %v1085, %v1139
    %v1221 = vmul.f32 %v1086, %v1139
    %v1222 = vmul.f32 %v1087, %v1139
    %v1223 = vmul.f32 %v1088, %v1139
    %v1224 = vmul.f32 %v1089, %v1139
    %v1225 = vmul.f32 %v1090, %v1139
    %v1226 = vmul.f32 %v1091, %v1139
    %v1227 = vmul.f32 %v1092, %v1139
    %v1228 = vmul.f32 %v1093, %v1139
    %v1229 = vmul.f32 %v1094, %v1139
    %v1230 = vmul.f32 %v1095, %v1139
    %v1231 = vmul.f32 %v1096, %v1139
    %v1232 = vmul.f32 %v1097, %v1139
    %v1233 = vmul.f32 %v1098, %v1139
    %v1234 = vmul.f32 %v1099, %v1139
    %v1235 = vmul.f32 %v1100, %v1139
    %v1236 = vmul.f32 %v1101, %v1139
    %v1237 = vmul.f32 %v1102, %v1139
    %v1238 = vmul.f32 %v1103, %v1139
    %v1239 = vmul.f32 %v1104, %v1139
    %v1240 = vmul.f32 %v1105, %v1139
    %v1241 = vmul.f32 %v1106, %v1139
    %v1242 = vmul.f32 %v1107, %v1139
    %v1243 = vmul.f32 %v1108, %v1139
    %v1244 = vmul.f32 %v1109, %v1139
    %v1245 = vmul.f32 %v1110, %v1139
    %v1246 = vmul.f32 %v1111, %v1139
    %v1247 = vmul.f32 %v1112, %v1139
    %v1248 = vmul.f32 %v1113, %v1139
    %v1249 = vmul.f32 %v1114, %v1139
    %v1250 = vmul.f32 %v1115, %v1139
    %v1251 = vmul.f32 %v1116, %v1139
    %v1252 = vmul.f32 %v1117, %v1139
    %v1253 = vmul.f32 %v1118, %v1139
    %v1254 = vmul.f32 %v1119, %v1139
    %v1255 = vmul.f32 %v1120, %v1139
    %v1256 = vmul.f32 %v1121, %v1139
    %v1257 = vmul.f32 %v1122, %v1139
    %v1258 = vmul.f32 %v1123, %v1139
    %v1259 = vmul.f32 %v1124, %v1139
    %v1260 = vmul.f32 %v1125, %v1139
    %v1261 = vmul.f32 %v1126, %v1139
    %v1262 = vmul.f32 %v1127, %v1139
    %v1263 = vmul.f32 %v1128, %v1139
    %v1264 = vmul.f32 %v1129, %v1139
    %v1265 = vmul.f32 %v1130, %v1139
    %v1266 = vmul.f32 %v1131, %v1139
    %v1267 = vmul.f32 %v1132, %v1139
    %v1268 = vmul.f32 %v1133, %v1139
    %v1269 = vsel %vm100, %v1141, 0.0
    %1270 = vadd.xlane.f32.xlu0 %v1269
    %v1271 = vpop.xlane.xlu0 %1270
    %v1272 = vsel %vm100, %v1142, 0.0
    %1273 = vadd.xlane.f32.xlu0 %v1272
    %v1274 = vpop.xlane.xlu0 %1273
    %v1275 = vsel %vm100, %v1143, 0.0
    %1276 = vadd.xlane.f32.xlu0 %v1275
    %v1277 = vpop.xlane.xlu0 %1276
    %v1278 = vsel %vm100, %v1144, 0.0
    %1279 = vadd.xlane.f32.xlu0 %v1278
    %v1280 = vpop.xlane.xlu0 %1279
    %v1281 = vsel %vm100, %v1145, 0.0
    %1282 = vadd.xlane.f32.xlu0 %v1281
    %v1283 = vpop.xlane.xlu0 %1282
    %v1284 = vsel %vm100, %v1146, 0.0
    %1285 = vadd.xlane.f32.xlu0 %v1284
    %v1286 = vpop.xlane.xlu0 %1285
    %v1287 = vsel %vm100, %v1147, 0.0
    %1288 = vadd.xlane.f32.xlu0 %v1287
    %v1289 = vpop.xlane.xlu0 %1288
    %v1290 = vsel %vm100, %v1148, 0.0
    %1291 = vadd.xlane.f32.xlu0 %v1290
    %v1292 = vpop.xlane.xlu0 %1291
    %v1293 = vsel %vm100, %v1149, 0.0
    %1294 = vadd.xlane.f32.xlu0 %v1293
    %v1295 = vpop.xlane.xlu0 %1294
    %v1296 = vsel %vm100, %v1150, 0.0
    %1297 = vadd.xlane.f32.xlu0 %v1296
    %v1298 = vpop.xlane.xlu0 %1297
    %v1299 = vsel %vm100, %v1151, 0.0
    %1300 = vadd.xlane.f32.xlu0 %v1299
    %v1301 = vpop.xlane.xlu0 %1300
    %v1302 = vsel %vm100, %v1152, 0.0
    %1303 = vadd.xlane.f32.xlu0 %v1302
    %v1304 = vpop.xlane.xlu0 %1303
    %v1305 = vsel %vm100, %v1153, 0.0
    %1306 = vadd.xlane.f32.xlu0 %v1305
    %v1307 = vpop.xlane.xlu0 %1306
    %v1308 = vsel %vm100, %v1154, 0.0
    %1309 = vadd.xlane.f32.xlu0 %v1308
    %v1310 = vpop.xlane.xlu0 %1309
    %v1311 = vsel %vm100, %v1155, 0.0
    %1312 = vadd.xlane.f32.xlu0 %v1311
    %v1313 = vpop.xlane.xlu0 %1312
    %v1314 = vsel %vm100, %v1156, 0.0
    %1315 = vadd.xlane.f32.xlu0 %v1314
    %v1316 = vpop.xlane.xlu0 %1315
    %v1317 = vsel %vm100, %v1157, 0.0
    %1318 = vadd.xlane.f32.xlu0 %v1317
    %v1319 = vpop.xlane.xlu0 %1318
    %v1320 = vsel %vm100, %v1158, 0.0
    %1321 = vadd.xlane.f32.xlu0 %v1320
    %v1322 = vpop.xlane.xlu0 %1321
    %v1323 = vsel %vm100, %v1159, 0.0
    %1324 = vadd.xlane.f32.xlu0 %v1323
    %v1325 = vpop.xlane.xlu0 %1324
    %v1326 = vsel %vm100, %v1160, 0.0
    %1327 = vadd.xlane.f32.xlu0 %v1326
    %v1328 = vpop.xlane.xlu0 %1327
    %v1329 = vsel %vm100, %v1161, 0.0
    %1330 = vadd.xlane.f32.xlu0 %v1329
    %v1331 = vpop.xlane.xlu0 %1330
    %v1332 = vsel %vm100, %v1162, 0.0
    %1333 = vadd.xlane.f32.xlu0 %v1332
    %v1334 = vpop.xlane.xlu0 %1333
    %v1335 = vsel %vm100, %v1163, 0.0
    %1336 = vadd.xlane.f32.xlu0 %v1335
    %v1337 = vpop.xlane.xlu0 %1336
    %v1338 = vsel %vm100, %v1164, 0.0
    %1339 = vadd.xlane.f32.xlu0 %v1338
    %v1340 = vpop.xlane.xlu0 %1339
    %v1341 = vsel %vm100, %v1165, 0.0
    %1342 = vadd.xlane.f32.xlu0 %v1341
    %v1343 = vpop.xlane.xlu0 %1342
    %v1344 = vsel %vm100, %v1166, 0.0
    %1345 = vadd.xlane.f32.xlu0 %v1344
    %v1346 = vpop.xlane.xlu0 %1345
    %v1347 = vsel %vm100, %v1167, 0.0
    %1348 = vadd.xlane.f32.xlu0 %v1347
    %v1349 = vpop.xlane.xlu0 %1348
    %v1350 = vsel %vm100, %v1168, 0.0
    %1351 = vadd.xlane.f32.xlu0 %v1350
    %v1352 = vpop.xlane.xlu0 %1351
    %v1353 = vsel %vm100, %v1169, 0.0
    %1354 = vadd.xlane.f32.xlu0 %v1353
    %v1355 = vpop.xlane.xlu0 %1354
    %v1356 = vsel %vm100, %v1170, 0.0
    %1357 = vadd.xlane.f32.xlu0 %v1356
    %v1358 = vpop.xlane.xlu0 %1357
    %v1359 = vsel %vm100, %v1171, 0.0
    %1360 = vadd.xlane.f32.xlu0 %v1359
    %v1361 = vpop.xlane.xlu0 %1360
    %v1362 = vsel %vm100, %v1172, 0.0
    %1363 = vadd.xlane.f32.xlu0 %v1362
    %v1364 = vpop.xlane.xlu0 %1363
    %v1365 = vsel %vm100, %v1173, 0.0
    %1366 = vadd.xlane.f32.xlu0 %v1365
    %v1367 = vpop.xlane.xlu0 %1366
    %v1368 = vsel %vm100, %v1174, 0.0
    %1369 = vadd.xlane.f32.xlu0 %v1368
    %v1370 = vpop.xlane.xlu0 %1369
    %v1371 = vsel %vm100, %v1175, 0.0
    %1372 = vadd.xlane.f32.xlu0 %v1371
    %v1373 = vpop.xlane.xlu0 %1372
    %v1374 = vsel %vm100, %v1176, 0.0
    %1375 = vadd.xlane.f32.xlu0 %v1374
    %v1376 = vpop.xlane.xlu0 %1375
    %v1377 = vsel %vm100, %v1177, 0.0
    %1378 = vadd.xlane.f32.xlu0 %v1377
    %v1379 = vpop.xlane.xlu0 %1378
    %v1380 = vsel %vm100, %v1178, 0.0
    %1381 = vadd.xlane.f32.xlu0 %v1380
    %v1382 = vpop.xlane.xlu0 %1381
    %v1383 = vsel %vm100, %v1179, 0.0
    %1384 = vadd.xlane.f32.xlu0 %v1383
    %v1385 = vpop.xlane.xlu0 %1384
    %v1386 = vsel %vm100, %v1180, 0.0
    %1387 = vadd.xlane.f32.xlu0 %v1386
    %v1388 = vpop.xlane.xlu0 %1387
    %v1389 = vsel %vm100, %v1181, 0.0
    %1390 = vadd.xlane.f32.xlu0 %v1389
    %v1391 = vpop.xlane.xlu0 %1390
    %v1392 = vsel %vm100, %v1182, 0.0
    %1393 = vadd.xlane.f32.xlu0 %v1392
    %v1394 = vpop.xlane.xlu0 %1393
    %v1395 = vsel %vm100, %v1183, 0.0
    %1396 = vadd.xlane.f32.xlu0 %v1395
    %v1397 = vpop.xlane.xlu0 %1396
    %v1398 = vsel %vm100, %v1184, 0.0
    %1399 = vadd.xlane.f32.xlu0 %v1398
    %v1400 = vpop.xlane.xlu0 %1399
    %v1401 = vsel %vm100, %v1185, 0.0
    %1402 = vadd.xlane.f32.xlu0 %v1401
    %v1403 = vpop.xlane.xlu0 %1402
    %v1404 = vsel %vm100, %v1186, 0.0
    %1405 = vadd.xlane.f32.xlu0 %v1404
    %v1406 = vpop.xlane.xlu0 %1405
    %v1407 = vsel %vm100, %v1187, 0.0
    %1408 = vadd.xlane.f32.xlu0 %v1407
    %v1409 = vpop.xlane.xlu0 %1408
    %v1410 = vsel %vm100, %v1188, 0.0
    %1411 = vadd.xlane.f32.xlu0 %v1410
    %v1412 = vpop.xlane.xlu0 %1411
    %v1413 = vsel %vm100, %v1189, 0.0
    %1414 = vadd.xlane.f32.xlu0 %v1413
    %v1415 = vpop.xlane.xlu0 %1414
    %v1416 = vsel %vm100, %v1190, 0.0
    %1417 = vadd.xlane.f32.xlu0 %v1416
    %v1418 = vpop.xlane.xlu0 %1417
    %v1419 = vsel %vm100, %v1191, 0.0
    %1420 = vadd.xlane.f32.xlu0 %v1419
    %v1421 = vpop.xlane.xlu0 %1420
    %v1422 = vsel %vm100, %v1192, 0.0
    %1423 = vadd.xlane.f32.xlu0 %v1422
    %v1424 = vpop.xlane.xlu0 %1423
    %v1425 = vsel %vm100, %v1193, 0.0
    %1426 = vadd.xlane.f32.xlu0 %v1425
    %v1427 = vpop.xlane.xlu0 %1426
    %v1428 = vsel %vm100, %v1194, 0.0
    %1429 = vadd.xlane.f32.xlu0 %v1428
    %v1430 = vpop.xlane.xlu0 %1429
    %v1431 = vsel %vm100, %v1195, 0.0
    %1432 = vadd.xlane.f32.xlu0 %v1431
    %v1433 = vpop.xlane.xlu0 %1432
    %v1434 = vsel %vm100, %v1196, 0.0
    %1435 = vadd.xlane.f32.xlu0 %v1434
    %v1436 = vpop.xlane.xlu0 %1435
    %v1437 = vsel %vm100, %v1197, 0.0
    %1438 = vadd.xlane.f32.xlu0 %v1437
    %v1439 = vpop.xlane.xlu0 %1438
    %v1440 = vsel %vm100, %v1198, 0.0
    %1441 = vadd.xlane.f32.xlu0 %v1440
    %v1442 = vpop.xlane.xlu0 %1441
    %v1443 = vsel %vm100, %v1199, 0.0
    %1444 = vadd.xlane.f32.xlu0 %v1443
    %v1445 = vpop.xlane.xlu0 %1444
    %v1446 = vsel %vm100, %v1200, 0.0
    %1447 = vadd.xlane.f32.xlu0 %v1446
    %v1448 = vpop.xlane.xlu0 %1447
    %v1449 = vsel %vm100, %v1201, 0.0
    %1450 = vadd.xlane.f32.xlu0 %v1449
    %v1451 = vpop.xlane.xlu0 %1450
    %v1452 = vsel %vm100, %v1202, 0.0
    %1453 = vadd.xlane.f32.xlu0 %v1452
    %v1454 = vpop.xlane.xlu0 %1453
    %v1455 = vsel %vm100, %v1203, 0.0
    %1456 = vadd.xlane.f32.xlu0 %v1455
    %v1457 = vpop.xlane.xlu0 %1456
    %v1458 = vsel %vm100, %v1204, 0.0
    %1459 = vadd.xlane.f32.xlu0 %v1458
    %v1460 = vpop.xlane.xlu0 %1459
    %v1461 = vsel %vm100, %v1205, 0.0
    %1462 = vadd.xlane.f32.xlu0 %v1461
    %v1463 = vpop.xlane.xlu0 %1462
    %v1464 = vsel %vm100, %v1206, 0.0
    %1465 = vadd.xlane.f32.xlu0 %v1464
    %v1466 = vpop.xlane.xlu0 %1465
    %v1467 = vsel %vm100, %v1207, 0.0
    %1468 = vadd.xlane.f32.xlu0 %v1467
    %v1469 = vpop.xlane.xlu0 %1468
    %v1470 = vsel %vm100, %v1208, 0.0
    %1471 = vadd.xlane.f32.xlu0 %v1470
    %v1472 = vpop.xlane.xlu0 %1471
    %v1473 = vsel %vm100, %v1209, 0.0
    %1474 = vadd.xlane.f32.xlu0 %v1473
    %v1475 = vpop.xlane.xlu0 %1474
    %v1476 = vsel %vm100, %v1210, 0.0
    %1477 = vadd.xlane.f32.xlu0 %v1476
    %v1478 = vpop.xlane.xlu0 %1477
    %v1479 = vsel %vm100, %v1211, 0.0
    %1480 = vadd.xlane.f32.xlu0 %v1479
    %v1481 = vpop.xlane.xlu0 %1480
    %v1482 = vsel %vm100, %v1212, 0.0
    %1483 = vadd.xlane.f32.xlu0 %v1482
    %v1484 = vpop.xlane.xlu0 %1483
    %v1485 = vsel %vm100, %v1213, 0.0
    %1486 = vadd.xlane.f32.xlu0 %v1485
    %v1487 = vpop.xlane.xlu0 %1486
    %v1488 = vsel %vm100, %v1214, 0.0
    %1489 = vadd.xlane.f32.xlu0 %v1488
    %v1490 = vpop.xlane.xlu0 %1489
    %v1491 = vsel %vm100, %v1215, 0.0
    %1492 = vadd.xlane.f32.xlu0 %v1491
    %v1493 = vpop.xlane.xlu0 %1492
    %v1494 = vsel %vm100, %v1216, 0.0
    %1495 = vadd.xlane.f32.xlu0 %v1494
    %v1496 = vpop.xlane.xlu0 %1495
    %v1497 = vsel %vm100, %v1217, 0.0
    %1498 = vadd.xlane.f32.xlu0 %v1497
    %v1499 = vpop.xlane.xlu0 %1498
    %v1500 = vsel %vm100, %v1218, 0.0
    %1501 = vadd.xlane.f32.xlu0 %v1500
    %v1502 = vpop.xlane.xlu0 %1501
    %v1503 = vsel %vm100, %v1219, 0.0
    %1504 = vadd.xlane.f32.xlu0 %v1503
    %v1505 = vpop.xlane.xlu0 %1504
    %v1506 = vsel %vm100, %v1220, 0.0
    %1507 = vadd.xlane.f32.xlu0 %v1506
    %v1508 = vpop.xlane.xlu0 %1507
    %v1509 = vsel %vm100, %v1221, 0.0
    %1510 = vadd.xlane.f32.xlu0 %v1509
    %v1511 = vpop.xlane.xlu0 %1510
    %v1512 = vsel %vm100, %v1222, 0.0
    %1513 = vadd.xlane.f32.xlu0 %v1512
    %v1514 = vpop.xlane.xlu0 %1513
    %v1515 = vsel %vm100, %v1223, 0.0
    %1516 = vadd.xlane.f32.xlu0 %v1515
    %v1517 = vpop.xlane.xlu0 %1516
    %v1518 = vsel %vm100, %v1224, 0.0
    %1519 = vadd.xlane.f32.xlu0 %v1518
    %v1520 = vpop.xlane.xlu0 %1519
    %v1521 = vsel %vm100, %v1225, 0.0
    %1522 = vadd.xlane.f32.xlu0 %v1521
    %v1523 = vpop.xlane.xlu0 %1522
    %v1524 = vsel %vm100, %v1226, 0.0
    %1525 = vadd.xlane.f32.xlu0 %v1524
    %v1526 = vpop.xlane.xlu0 %1525
    %v1527 = vsel %vm100, %v1227, 0.0
    %1528 = vadd.xlane.f32.xlu0 %v1527
    %v1529 = vpop.xlane.xlu0 %1528
    %v1530 = vsel %vm100, %v1228, 0.0
    %1531 = vadd.xlane.f32.xlu0 %v1530
    %v1532 = vpop.xlane.xlu0 %1531
    %v1533 = vsel %vm100, %v1229, 0.0
    %1534 = vadd.xlane.f32.xlu0 %v1533
    %v1535 = vpop.xlane.xlu0 %1534
    %v1536 = vsel %vm100, %v1230, 0.0
    %1537 = vadd.xlane.f32.xlu0 %v1536
    %v1538 = vpop.xlane.xlu0 %1537
    %v1539 = vsel %vm100, %v1231, 0.0
    %1540 = vadd.xlane.f32.xlu0 %v1539
    %v1541 = vpop.xlane.xlu0 %1540
    %v1542 = vsel %vm100, %v1232, 0.0
    %1543 = vadd.xlane.f32.xlu0 %v1542
    %v1544 = vpop.xlane.xlu0 %1543
    %v1545 = vsel %vm100, %v1233, 0.0
    %1546 = vadd.xlane.f32.xlu0 %v1545
    %v1547 = vpop.xlane.xlu0 %1546
    %v1548 = vsel %vm100, %v1234, 0.0
    %1549 = vadd.xlane.f32.xlu0 %v1548
    %v1550 = vpop.xlane.xlu0 %1549
    %v1551 = vsel %vm100, %v1235, 0.0
    %1552 = vadd.xlane.f32.xlu0 %v1551
    %v1553 = vpop.xlane.xlu0 %1552
    %v1554 = vsel %vm100, %v1236, 0.0
    %1555 = vadd.xlane.f32.xlu0 %v1554
    %v1556 = vpop.xlane.xlu0 %1555
    %v1557 = vsel %vm100, %v1237, 0.0
    %1558 = vadd.xlane.f32.xlu0 %v1557
    %v1559 = vpop.xlane.xlu0 %1558
    %v1560 = vsel %vm100, %v1238, 0.0
    %1561 = vadd.xlane.f32.xlu0 %v1560
    %v1562 = vpop.xlane.xlu0 %1561
    %v1563 = vsel %vm100, %v1239, 0.0
    %1564 = vadd.xlane.f32.xlu0 %v1563
    %v1565 = vpop.xlane.xlu0 %1564
    %v1566 = vsel %vm100, %v1240, 0.0
    %1567 = vadd.xlane.f32.xlu0 %v1566
    %v1568 = vpop.xlane.xlu0 %1567
    %v1569 = vsel %vm100, %v1241, 0.0
    %1570 = vadd.xlane.f32.xlu0 %v1569
    %v1571 = vpop.xlane.xlu0 %1570
    %v1572 = vsel %vm100, %v1242, 0.0
    %1573 = vadd.xlane.f32.xlu0 %v1572
    %v1574 = vpop.xlane.xlu0 %1573
    %v1575 = vsel %vm100, %v1243, 0.0
    %1576 = vadd.xlane.f32.xlu0 %v1575
    %v1577 = vpop.xlane.xlu0 %1576
    %v1578 = vsel %vm100, %v1244, 0.0
    %1579 = vadd.xlane.f32.xlu0 %v1578
    %v1580 = vpop.xlane.xlu0 %1579
    %v1581 = vsel %vm100, %v1245, 0.0
    %1582 = vadd.xlane.f32.xlu0 %v1581
    %v1583 = vpop.xlane.xlu0 %1582
    %v1584 = vsel %vm100, %v1246, 0.0
    %1585 = vadd.xlane.f32.xlu0 %v1584
    %v1586 = vpop.xlane.xlu0 %1585
    %v1587 = vsel %vm100, %v1247, 0.0
    %1588 = vadd.xlane.f32.xlu0 %v1587
    %v1589 = vpop.xlane.xlu0 %1588
    %v1590 = vsel %vm100, %v1248, 0.0
    %1591 = vadd.xlane.f32.xlu0 %v1590
    %v1592 = vpop.xlane.xlu0 %1591
    %v1593 = vsel %vm100, %v1249, 0.0
    %1594 = vadd.xlane.f32.xlu0 %v1593
    %v1595 = vpop.xlane.xlu0 %1594
    %v1596 = vsel %vm100, %v1250, 0.0
    %1597 = vadd.xlane.f32.xlu0 %v1596
    %v1598 = vpop.xlane.xlu0 %1597
    %v1599 = vsel %vm100, %v1251, 0.0
    %1600 = vadd.xlane.f32.xlu0 %v1599
    %v1601 = vpop.xlane.xlu0 %1600
    %v1602 = vsel %vm100, %v1252, 0.0
    %1603 = vadd.xlane.f32.xlu0 %v1602
    %v1604 = vpop.xlane.xlu0 %1603
    %v1605 = vsel %vm100, %v1253, 0.0
    %1606 = vadd.xlane.f32.xlu0 %v1605
    %v1607 = vpop.xlane.xlu0 %1606
    %v1608 = vsel %vm100, %v1254, 0.0
    %1609 = vadd.xlane.f32.xlu0 %v1608
    %v1610 = vpop.xlane.xlu0 %1609
    %v1611 = vsel %vm100, %v1255, 0.0
    %1612 = vadd.xlane.f32.xlu0 %v1611
    %v1613 = vpop.xlane.xlu0 %1612
    %v1614 = vsel %vm100, %v1256, 0.0
    %1615 = vadd.xlane.f32.xlu0 %v1614
    %v1616 = vpop.xlane.xlu0 %1615
    %v1617 = vsel %vm100, %v1257, 0.0
    %1618 = vadd.xlane.f32.xlu0 %v1617
    %v1619 = vpop.xlane.xlu0 %1618
    %v1620 = vsel %vm100, %v1258, 0.0
    %1621 = vadd.xlane.f32.xlu0 %v1620
    %v1622 = vpop.xlane.xlu0 %1621
    %v1623 = vsel %vm100, %v1259, 0.0
    %1624 = vadd.xlane.f32.xlu0 %v1623
    %v1625 = vpop.xlane.xlu0 %1624
    %v1626 = vsel %vm100, %v1260, 0.0
    %1627 = vadd.xlane.f32.xlu0 %v1626
    %v1628 = vpop.xlane.xlu0 %1627
    %v1629 = vsel %vm100, %v1261, 0.0
    %1630 = vadd.xlane.f32.xlu0 %v1629
    %v1631 = vpop.xlane.xlu0 %1630
    %v1632 = vsel %vm100, %v1262, 0.0
    %1633 = vadd.xlane.f32.xlu0 %v1632
    %v1634 = vpop.xlane.xlu0 %1633
    %v1635 = vsel %vm100, %v1263, 0.0
    %1636 = vadd.xlane.f32.xlu0 %v1635
    %v1637 = vpop.xlane.xlu0 %1636
    %v1638 = vsel %vm100, %v1264, 0.0
    %1639 = vadd.xlane.f32.xlu0 %v1638
    %v1640 = vpop.xlane.xlu0 %1639
    %v1641 = vsel %vm100, %v1265, 0.0
    %1642 = vadd.xlane.f32.xlu0 %v1641
    %v1643 = vpop.xlane.xlu0 %1642
    %v1644 = vsel %vm100, %v1266, 0.0
    %1645 = vadd.xlane.f32.xlu0 %v1644
    %v1646 = vpop.xlane.xlu0 %1645
    %v1647 = vsel %vm100, %v1267, 0.0
    %1648 = vadd.xlane.f32.xlu0 %v1647
    %v1649 = vpop.xlane.xlu0 %1648
    %v1650 = vsel %vm100, %v1268, 0.0
    %1651 = vadd.xlane.f32.xlu0 %v1650
    %v1652 = vpop.xlane.xlu0 %1651
    %vm1653 = vcmp.gt.f32.partialorder %v81, 0.0
    %vm1654 = vcmp.gt.f32.partialorder %v82, 0.0
    %vm1655 = vcmp.gt.f32.partialorder %v83, 0.0
    %vm1656 = vcmp.gt.f32.partialorder %v84, 0.0
    %v1785 = vlaneseq
    %v1786 = vand.u32 %v1785, 127
    %v1787 = vlaneseq
    %v1788 = vshrl.u32 %v1787, 7
    %v1789 = vsub.s32 %v1786, %v1788
    %v1790 = vrot.slane %v1271, %v1789
    %v1791 = vadd.s32 %v1786, 4294967288
    %v1792 = vlaneseq
    %v1793 = vshrl.u32 %v1792, 7
    %v1794 = vsub.s32 %v1791, %v1793
    %v1795 = vrot.slane %v1274, %v1794
    %vm1796 = vcmask 130112
    %v1797 = vsel %vm1796, %v1795, %v1790
    %v1798 = vadd.s32 %v1786, 4294967280
    %v1799 = vlaneseq
    %v1800 = vshrl.u32 %v1799, 7
    %v1801 = vsub.s32 %v1798, %v1800
    %v1802 = vrot.slane %v1277, %v1801
    %vm1803 = vcmask 195712
    %v1804 = vsel %vm1803, %v1802, %v1797
    %v1805 = vadd.s32 %v1786, 4294967272
    %v1806 = vlaneseq
    %v1807 = vshrl.u32 %v1806, 7
    %v1808 = vsub.s32 %v1805, %v1807
    %v1809 = vrot.slane %v1280, %v1808
    %vm1810 = vcmask 261312
    %v1811 = vsel %vm1810, %v1809, %v1804
    %v1812 = vlaneseq
    %v1813 = vshrl.u32 %v1812, 7
    %v1814 = vsub.s32 %v1786, %v1813
    %v1815 = vrot.slane %v1283, %v1814
    %v1816 = vlaneseq
    %v1817 = vshrl.u32 %v1816, 7
    %v1818 = vsub.s32 %v1791, %v1817
    %v1819 = vrot.slane %v1286, %v1818
    %v1820 = vsel %vm1796, %v1819, %v1815
    %v1821 = vlaneseq
    %v1822 = vshrl.u32 %v1821, 7
    %v1823 = vsub.s32 %v1798, %v1822
    %v1824 = vrot.slane %v1289, %v1823
    %v1825 = vsel %vm1803, %v1824, %v1820
    %v1826 = vlaneseq
    %v1827 = vshrl.u32 %v1826, 7
    %v1828 = vsub.s32 %v1805, %v1827
    %v1829 = vrot.slane %v1292, %v1828
    %v1830 = vsel %vm1810, %v1829, %v1825
    %v1831 = vlaneseq
    %v1832 = vshrl.u32 %v1831, 7
    %v1833 = vsub.s32 %v1786, %v1832
    %v1834 = vrot.slane %v1295, %v1833
    %v1835 = vlaneseq
    %v1836 = vshrl.u32 %v1835, 7
    %v1837 = vsub.s32 %v1791, %v1836
    %v1838 = vrot.slane %v1298, %v1837
    %v1839 = vsel %vm1796, %v1838, %v1834
    %v1840 = vlaneseq
    %v1841 = vshrl.u32 %v1840, 7
    %v1842 = vsub.s32 %v1798, %v1841
    %v1843 = vrot.slane %v1301, %v1842
    %v1844 = vsel %vm1803, %v1843, %v1839
    %v1845 = vlaneseq
    %v1846 = vshrl.u32 %v1845, 7
    %v1847 = vsub.s32 %v1805, %v1846
    %v1848 = vrot.slane %v1304, %v1847
    %v1849 = vsel %vm1810, %v1848, %v1844
    %v1850 = vlaneseq
    %v1851 = vshrl.u32 %v1850, 7
    %v1852 = vsub.s32 %v1786, %v1851
    %v1853 = vrot.slane %v1307, %v1852
    %v1854 = vlaneseq
    %v1855 = vshrl.u32 %v1854, 7
    %v1856 = vsub.s32 %v1791, %v1855
    %v1857 = vrot.slane %v1310, %v1856
    %v1858 = vsel %vm1796, %v1857, %v1853
    %v1859 = vlaneseq
    %v1860 = vshrl.u32 %v1859, 7
    %v1861 = vsub.s32 %v1798, %v1860
    %v1862 = vrot.slane %v1313, %v1861
    %v1863 = vsel %vm1803, %v1862, %v1858
    %v1864 = vlaneseq
    %v1865 = vshrl.u32 %v1864, 7
    %v1866 = vsub.s32 %v1805, %v1865
    %v1867 = vrot.slane %v1316, %v1866
    %v1868 = vsel %vm1810, %v1867, %v1863
    %v1869 = vlaneseq
    %v1870 = vshrl.u32 %v1869, 7
    %v1871 = vsub.s32 %v1786, %v1870
    %v1872 = vrot.slane %v1319, %v1871
    %v1873 = vlaneseq
    %v1874 = vshrl.u32 %v1873, 7
    %v1875 = vsub.s32 %v1791, %v1874
    %v1876 = vrot.slane %v1322, %v1875
    %v1877 = vsel %vm1796, %v1876, %v1872
    %v1878 = vlaneseq
    %v1879 = vshrl.u32 %v1878, 7
    %v1880 = vsub.s32 %v1798, %v1879
    %v1881 = vrot.slane %v1325, %v1880
    %v1882 = vsel %vm1803, %v1881, %v1877
    %v1883 = vlaneseq
    %v1884 = vshrl.u32 %v1883, 7
    %v1885 = vsub.s32 %v1805, %v1884
    %v1886 = vrot.slane %v1328, %v1885
    %v1887 = vsel %vm1810, %v1886, %v1882
    %v1888 = vlaneseq
    %v1889 = vshrl.u32 %v1888, 7
    %v1890 = vsub.s32 %v1786, %v1889
    %v1891 = vrot.slane %v1331, %v1890
    %v1892 = vlaneseq
    %v1893 = vshrl.u32 %v1892, 7
    %v1894 = vsub.s32 %v1791, %v1893
    %v1895 = vrot.slane %v1334, %v1894
    %v1896 = vsel %vm1796, %v1895, %v1891
    %v1897 = vlaneseq
    %v1898 = vshrl.u32 %v1897, 7
    %v1899 = vsub.s32 %v1798, %v1898
    %v1900 = vrot.slane %v1337, %v1899
    %v1901 = vsel %vm1803, %v1900, %v1896
    %v1902 = vlaneseq
    %v1903 = vshrl.u32 %v1902, 7
    %v1904 = vsub.s32 %v1805, %v1903
    %v1905 = vrot.slane %v1340, %v1904
    %v1906 = vsel %vm1810, %v1905, %v1901
    %v1907 = vlaneseq
    %v1908 = vshrl.u32 %v1907, 7
    %v1909 = vsub.s32 %v1786, %v1908
    %v1910 = vrot.slane %v1343, %v1909
    %v1911 = vlaneseq
    %v1912 = vshrl.u32 %v1911, 7
    %v1913 = vsub.s32 %v1791, %v1912
    %v1914 = vrot.slane %v1346, %v1913
    %v1915 = vsel %vm1796, %v1914, %v1910
    %v1916 = vlaneseq
    %v1917 = vshrl.u32 %v1916, 7
    %v1918 = vsub.s32 %v1798, %v1917
    %v1919 = vrot.slane %v1349, %v1918
    %v1920 = vsel %vm1803, %v1919, %v1915
    %v1921 = vlaneseq
    %v1922 = vshrl.u32 %v1921, 7
    %v1923 = vsub.s32 %v1805, %v1922
    %v1924 = vrot.slane %v1352, %v1923
    %v1925 = vsel %vm1810, %v1924, %v1920
    %v1926 = vlaneseq
    %v1927 = vshrl.u32 %v1926, 7
    %v1928 = vsub.s32 %v1786, %v1927
    %v1929 = vrot.slane %v1355, %v1928
    %v1930 = vlaneseq
    %v1931 = vshrl.u32 %v1930, 7
    %v1932 = vsub.s32 %v1791, %v1931
    %v1933 = vrot.slane %v1358, %v1932
    %v1934 = vsel %vm1796, %v1933, %v1929
    %v1935 = vlaneseq
    %v1936 = vshrl.u32 %v1935, 7
    %v1937 = vsub.s32 %v1798, %v1936
    %v1938 = vrot.slane %v1361, %v1937
    %v1939 = vsel %vm1803, %v1938, %v1934
    %v1940 = vlaneseq
    %v1941 = vshrl.u32 %v1940, 7
    %v1942 = vsub.s32 %v1805, %v1941
    %v1943 = vrot.slane %v1364, %v1942
    %v1944 = vsel %vm1810, %v1943, %v1939
    %v1945 = vlaneseq
    %v1946 = vshrl.u32 %v1945, 7
    %v1947 = vsub.s32 %v1786, %v1946
    %v1948 = vrot.slane %v1367, %v1947
    %v1949 = vlaneseq
    %v1950 = vshrl.u32 %v1949, 7
    %v1951 = vsub.s32 %v1791, %v1950
    %v1952 = vrot.slane %v1370, %v1951
    %v1953 = vsel %vm1796, %v1952, %v1948
    %v1954 = vlaneseq
    %v1955 = vshrl.u32 %v1954, 7
    %v1956 = vsub.s32 %v1798, %v1955
    %v1957 = vrot.slane %v1373, %v1956
    %v1958 = vsel %vm1803, %v1957, %v1953
    %v1959 = vlaneseq
    %v1960 = vshrl.u32 %v1959, 7
    %v1961 = vsub.s32 %v1805, %v1960
    %v1962 = vrot.slane %v1376, %v1961
    %v1963 = vsel %vm1810, %v1962, %v1958
    %v1964 = vlaneseq
    %v1965 = vshrl.u32 %v1964, 7
    %v1966 = vsub.s32 %v1786, %v1965
    %v1967 = vrot.slane %v1379, %v1966
    %v1968 = vlaneseq
    %v1969 = vshrl.u32 %v1968, 7
    %v1970 = vsub.s32 %v1791, %v1969
    %v1971 = vrot.slane %v1382, %v1970
    %v1972 = vsel %vm1796, %v1971, %v1967
    %v1973 = vlaneseq
    %v1974 = vshrl.u32 %v1973, 7
    %v1975 = vsub.s32 %v1798, %v1974
    %v1976 = vrot.slane %v1385, %v1975
    %v1977 = vsel %vm1803, %v1976, %v1972
    %v1978 = vlaneseq
    %v1979 = vshrl.u32 %v1978, 7
    %v1980 = vsub.s32 %v1805, %v1979
    %v1981 = vrot.slane %v1388, %v1980
    %v1982 = vsel %vm1810, %v1981, %v1977
    %v1983 = vlaneseq
    %v1984 = vshrl.u32 %v1983, 7
    %v1985 = vsub.s32 %v1786, %v1984
    %v1986 = vrot.slane %v1391, %v1985
    %v1987 = vlaneseq
    %v1988 = vshrl.u32 %v1987, 7
    %v1989 = vsub.s32 %v1791, %v1988
    %v1990 = vrot.slane %v1394, %v1989
    %v1991 = vsel %vm1796, %v1990, %v1986
    %v1992 = vlaneseq
    %v1993 = vshrl.u32 %v1992, 7
    %v1994 = vsub.s32 %v1798, %v1993
    %v1995 = vrot.slane %v1397, %v1994
    %v1996 = vsel %vm1803, %v1995, %v1991
    %v1997 = vlaneseq
    %v1998 = vshrl.u32 %v1997, 7
    %v1999 = vsub.s32 %v1805, %v1998
    %v2000 = vrot.slane %v1400, %v1999
    %v2001 = vsel %vm1810, %v2000, %v1996
    %v2002 = vlaneseq
    %v2003 = vshrl.u32 %v2002, 7
    %v2004 = vsub.s32 %v1786, %v2003
    %v2005 = vrot.slane %v1403, %v2004
    %v2006 = vlaneseq
    %v2007 = vshrl.u32 %v2006, 7
    %v2008 = vsub.s32 %v1791, %v2007
    %v2009 = vrot.slane %v1406, %v2008
    %v2010 = vsel %vm1796, %v2009, %v2005
    %v2011 = vlaneseq
    %v2012 = vshrl.u32 %v2011, 7
    %v2013 = vsub.s32 %v1798, %v2012
    %v2014 = vrot.slane %v1409, %v2013
    %v2015 = vsel %vm1803, %v2014, %v2010
    %v2016 = vlaneseq
    %v2017 = vshrl.u32 %v2016, 7
    %v2018 = vsub.s32 %v1805, %v2017
    %v2019 = vrot.slane %v1412, %v2018
    %v2020 = vsel %vm1810, %v2019, %v2015
    %v2021 = vlaneseq
    %v2022 = vshrl.u32 %v2021, 7
    %v2023 = vsub.s32 %v1786, %v2022
    %v2024 = vrot.slane %v1415, %v2023
    %v2025 = vlaneseq
    %v2026 = vshrl.u32 %v2025, 7
    %v2027 = vsub.s32 %v1791, %v2026
    %v2028 = vrot.slane %v1418, %v2027
    %v2029 = vsel %vm1796, %v2028, %v2024
    %v2030 = vlaneseq
    %v2031 = vshrl.u32 %v2030, 7
    %v2032 = vsub.s32 %v1798, %v2031
    %v2033 = vrot.slane %v1421, %v2032
    %v2034 = vsel %vm1803, %v2033, %v2029
    %v2035 = vlaneseq
    %v2036 = vshrl.u32 %v2035, 7
    %v2037 = vsub.s32 %v1805, %v2036
    %v2038 = vrot.slane %v1424, %v2037
    %v2039 = vsel %vm1810, %v2038, %v2034
    %v2040 = vlaneseq
    %v2041 = vshrl.u32 %v2040, 7
    %v2042 = vsub.s32 %v1786, %v2041
    %v2043 = vrot.slane %v1427, %v2042
    %v2044 = vlaneseq
    %v2045 = vshrl.u32 %v2044, 7
    %v2046 = vsub.s32 %v1791, %v2045
    %v2047 = vrot.slane %v1430, %v2046
    %v2048 = vsel %vm1796, %v2047, %v2043
    %v2049 = vlaneseq
    %v2050 = vshrl.u32 %v2049, 7
    %v2051 = vsub.s32 %v1798, %v2050
    %v2052 = vrot.slane %v1433, %v2051
    %v2053 = vsel %vm1803, %v2052, %v2048
    %v2054 = vlaneseq
    %v2055 = vshrl.u32 %v2054, 7
    %v2056 = vsub.s32 %v1805, %v2055
    %v2057 = vrot.slane %v1436, %v2056
    %v2058 = vsel %vm1810, %v2057, %v2053
    %v2059 = vlaneseq
    %v2060 = vshrl.u32 %v2059, 7
    %v2061 = vsub.s32 %v1786, %v2060
    %v2062 = vrot.slane %v1439, %v2061
    %v2063 = vlaneseq
    %v2064 = vshrl.u32 %v2063, 7
    %v2065 = vsub.s32 %v1791, %v2064
    %v2066 = vrot.slane %v1442, %v2065
    %v2067 = vsel %vm1796, %v2066, %v2062
    %v2068 = vlaneseq
    %v2069 = vshrl.u32 %v2068, 7
    %v2070 = vsub.s32 %v1798, %v2069
    %v2071 = vrot.slane %v1445, %v2070
    %v2072 = vsel %vm1803, %v2071, %v2067
    %v2073 = vlaneseq
    %v2074 = vshrl.u32 %v2073, 7
    %v2075 = vsub.s32 %v1805, %v2074
    %v2076 = vrot.slane %v1448, %v2075
    %v2077 = vsel %vm1810, %v2076, %v2072
    %v2078 = vlaneseq
    %v2079 = vshrl.u32 %v2078, 7
    %v2080 = vsub.s32 %v1786, %v2079
    %v2081 = vrot.slane %v1451, %v2080
    %v2082 = vlaneseq
    %v2083 = vshrl.u32 %v2082, 7
    %v2084 = vsub.s32 %v1791, %v2083
    %v2085 = vrot.slane %v1454, %v2084
    %v2086 = vsel %vm1796, %v2085, %v2081
    %v2087 = vlaneseq
    %v2088 = vshrl.u32 %v2087, 7
    %v2089 = vsub.s32 %v1798, %v2088
    %v2090 = vrot.slane %v1457, %v2089
    %v2091 = vsel %vm1803, %v2090, %v2086
    %v2092 = vlaneseq
    %v2093 = vshrl.u32 %v2092, 7
    %v2094 = vsub.s32 %v1805, %v2093
    %v2095 = vrot.slane %v1460, %v2094
    %v2096 = vsel %vm1810, %v2095, %v2091
    %v2097 = vlaneseq
    %v2098 = vshrl.u32 %v2097, 7
    %v2099 = vsub.s32 %v1786, %v2098
    %v2100 = vrot.slane %v1463, %v2099
    %v2101 = vlaneseq
    %v2102 = vshrl.u32 %v2101, 7
    %v2103 = vsub.s32 %v1791, %v2102
    %v2104 = vrot.slane %v1466, %v2103
    %v2105 = vsel %vm1796, %v2104, %v2100
    %v2106 = vlaneseq
    %v2107 = vshrl.u32 %v2106, 7
    %v2108 = vsub.s32 %v1798, %v2107
    %v2109 = vrot.slane %v1469, %v2108
    %v2110 = vsel %vm1803, %v2109, %v2105
    %v2111 = vlaneseq
    %v2112 = vshrl.u32 %v2111, 7
    %v2113 = vsub.s32 %v1805, %v2112
    %v2114 = vrot.slane %v1472, %v2113
    %v2115 = vsel %vm1810, %v2114, %v2110
    %v2116 = vlaneseq
    %v2117 = vshrl.u32 %v2116, 7
    %v2118 = vsub.s32 %v1786, %v2117
    %v2119 = vrot.slane %v1475, %v2118
    %v2120 = vlaneseq
    %v2121 = vshrl.u32 %v2120, 7
    %v2122 = vsub.s32 %v1791, %v2121
    %v2123 = vrot.slane %v1478, %v2122
    %v2124 = vsel %vm1796, %v2123, %v2119
    %v2125 = vlaneseq
    %v2126 = vshrl.u32 %v2125, 7
    %v2127 = vsub.s32 %v1798, %v2126
    %v2128 = vrot.slane %v1481, %v2127
    %v2129 = vsel %vm1803, %v2128, %v2124
    %v2130 = vlaneseq
    %v2131 = vshrl.u32 %v2130, 7
    %v2132 = vsub.s32 %v1805, %v2131
    %v2133 = vrot.slane %v1484, %v2132
    %v2134 = vsel %vm1810, %v2133, %v2129
    %v2135 = vlaneseq
    %v2136 = vshrl.u32 %v2135, 7
    %v2137 = vsub.s32 %v1786, %v2136
    %v2138 = vrot.slane %v1487, %v2137
    %v2139 = vlaneseq
    %v2140 = vshrl.u32 %v2139, 7
    %v2141 = vsub.s32 %v1791, %v2140
    %v2142 = vrot.slane %v1490, %v2141
    %v2143 = vsel %vm1796, %v2142, %v2138
    %v2144 = vlaneseq
    %v2145 = vshrl.u32 %v2144, 7
    %v2146 = vsub.s32 %v1798, %v2145
    %v2147 = vrot.slane %v1493, %v2146
    %v2148 = vsel %vm1803, %v2147, %v2143
    %v2149 = vlaneseq
    %v2150 = vshrl.u32 %v2149, 7
    %v2151 = vsub.s32 %v1805, %v2150
    %v2152 = vrot.slane %v1496, %v2151
    %v2153 = vsel %vm1810, %v2152, %v2148
    %v2154 = vlaneseq
    %v2155 = vshrl.u32 %v2154, 7
    %v2156 = vsub.s32 %v1786, %v2155
    %v2157 = vrot.slane %v1499, %v2156
    %v2158 = vlaneseq
    %v2159 = vshrl.u32 %v2158, 7
    %v2160 = vsub.s32 %v1791, %v2159
    %v2161 = vrot.slane %v1502, %v2160
    %v2162 = vsel %vm1796, %v2161, %v2157
    %v2163 = vlaneseq
    %v2164 = vshrl.u32 %v2163, 7
    %v2165 = vsub.s32 %v1798, %v2164
    %v2166 = vrot.slane %v1505, %v2165
    %v2167 = vsel %vm1803, %v2166, %v2162
    %v2168 = vlaneseq
    %v2169 = vshrl.u32 %v2168, 7
    %v2170 = vsub.s32 %v1805, %v2169
    %v2171 = vrot.slane %v1508, %v2170
    %v2172 = vsel %vm1810, %v2171, %v2167
    %v2173 = vlaneseq
    %v2174 = vshrl.u32 %v2173, 7
    %v2175 = vsub.s32 %v1786, %v2174
    %v2176 = vrot.slane %v1511, %v2175
    %v2177 = vlaneseq
    %v2178 = vshrl.u32 %v2177, 7
    %v2179 = vsub.s32 %v1791, %v2178
    %v2180 = vrot.slane %v1514, %v2179
    %v2181 = vsel %vm1796, %v2180, %v2176
    %v2182 = vlaneseq
    %v2183 = vshrl.u32 %v2182, 7
    %v2184 = vsub.s32 %v1798, %v2183
    %v2185 = vrot.slane %v1517, %v2184
    %v2186 = vsel %vm1803, %v2185, %v2181
    %v2187 = vlaneseq
    %v2188 = vshrl.u32 %v2187, 7
    %v2189 = vsub.s32 %v1805, %v2188
    %v2190 = vrot.slane %v1520, %v2189
    %v2191 = vsel %vm1810, %v2190, %v2186
    %v2192 = vlaneseq
    %v2193 = vshrl.u32 %v2192, 7
    %v2194 = vsub.s32 %v1786, %v2193
    %v2195 = vrot.slane %v1523, %v2194
    %v2196 = vlaneseq
    %v2197 = vshrl.u32 %v2196, 7
    %v2198 = vsub.s32 %v1791, %v2197
    %v2199 = vrot.slane %v1526, %v2198
    %v2200 = vsel %vm1796, %v2199, %v2195
    %v2201 = vlaneseq
    %v2202 = vshrl.u32 %v2201, 7
    %v2203 = vsub.s32 %v1798, %v2202
    %v2204 = vrot.slane %v1529, %v2203
    %v2205 = vsel %vm1803, %v2204, %v2200
    %v2206 = vlaneseq
    %v2207 = vshrl.u32 %v2206, 7
    %v2208 = vsub.s32 %v1805, %v2207
    %v2209 = vrot.slane %v1532, %v2208
    %v2210 = vsel %vm1810, %v2209, %v2205
    %v2211 = vlaneseq
    %v2212 = vshrl.u32 %v2211, 7
    %v2213 = vsub.s32 %v1786, %v2212
    %v2214 = vrot.slane %v1535, %v2213
    %v2215 = vlaneseq
    %v2216 = vshrl.u32 %v2215, 7
    %v2217 = vsub.s32 %v1791, %v2216
    %v2218 = vrot.slane %v1538, %v2217
    %v2219 = vsel %vm1796, %v2218, %v2214
    %v2220 = vlaneseq
    %v2221 = vshrl.u32 %v2220, 7
    %v2222 = vsub.s32 %v1798, %v2221
    %v2223 = vrot.slane %v1541, %v2222
    %v2224 = vsel %vm1803, %v2223, %v2219
    %v2225 = vlaneseq
    %v2226 = vshrl.u32 %v2225, 7
    %v2227 = vsub.s32 %v1805, %v2226
    %v2228 = vrot.slane %v1544, %v2227
    %v2229 = vsel %vm1810, %v2228, %v2224
    %v2230 = vlaneseq
    %v2231 = vshrl.u32 %v2230, 7
    %v2232 = vsub.s32 %v1786, %v2231
    %v2233 = vrot.slane %v1547, %v2232
    %v2234 = vlaneseq
    %v2235 = vshrl.u32 %v2234, 7
    %v2236 = vsub.s32 %v1791, %v2235
    %v2237 = vrot.slane %v1550, %v2236
    %v2238 = vsel %vm1796, %v2237, %v2233
    %v2239 = vlaneseq
    %v2240 = vshrl.u32 %v2239, 7
    %v2241 = vsub.s32 %v1798, %v2240
    %v2242 = vrot.slane %v1553, %v2241
    %v2243 = vsel %vm1803, %v2242, %v2238
    %v2244 = vlaneseq
    %v2245 = vshrl.u32 %v2244, 7
    %v2246 = vsub.s32 %v1805, %v2245
    %v2247 = vrot.slane %v1556, %v2246
    %v2248 = vsel %vm1810, %v2247, %v2243
    %v2249 = vlaneseq
    %v2250 = vshrl.u32 %v2249, 7
    %v2251 = vsub.s32 %v1786, %v2250
    %v2252 = vrot.slane %v1559, %v2251
    %v2253 = vlaneseq
    %v2254 = vshrl.u32 %v2253, 7
    %v2255 = vsub.s32 %v1791, %v2254
    %v2256 = vrot.slane %v1562, %v2255
    %v2257 = vsel %vm1796, %v2256, %v2252
    %v2258 = vlaneseq
    %v2259 = vshrl.u32 %v2258, 7
    %v2260 = vsub.s32 %v1798, %v2259
    %v2261 = vrot.slane %v1565, %v2260
    %v2262 = vsel %vm1803, %v2261, %v2257
    %v2263 = vlaneseq
    %v2264 = vshrl.u32 %v2263, 7
    %v2265 = vsub.s32 %v1805, %v2264
    %v2266 = vrot.slane %v1568, %v2265
    %v2267 = vsel %vm1810, %v2266, %v2262
    %v2268 = vlaneseq
    %v2269 = vshrl.u32 %v2268, 7
    %v2270 = vsub.s32 %v1786, %v2269
    %v2271 = vrot.slane %v1571, %v2270
    %v2272 = vlaneseq
    %v2273 = vshrl.u32 %v2272, 7
    %v2274 = vsub.s32 %v1791, %v2273
    %v2275 = vrot.slane %v1574, %v2274
    %v2276 = vsel %vm1796, %v2275, %v2271
    %v2277 = vlaneseq
    %v2278 = vshrl.u32 %v2277, 7
    %v2279 = vsub.s32 %v1798, %v2278
    %v2280 = vrot.slane %v1577, %v2279
    %v2281 = vsel %vm1803, %v2280, %v2276
    %v2282 = vlaneseq
    %v2283 = vshrl.u32 %v2282, 7
    %v2284 = vsub.s32 %v1805, %v2283
    %v2285 = vrot.slane %v1580, %v2284
    %v2286 = vsel %vm1810, %v2285, %v2281
    %v2287 = vlaneseq
    %v2288 = vshrl.u32 %v2287, 7
    %v2289 = vsub.s32 %v1786, %v2288
    %v2290 = vrot.slane %v1583, %v2289
    %v2291 = vlaneseq
    %v2292 = vshrl.u32 %v2291, 7
    %v2293 = vsub.s32 %v1791, %v2292
    %v2294 = vrot.slane %v1586, %v2293
    %v2295 = vsel %vm1796, %v2294, %v2290
    %v2296 = vlaneseq
    %v2297 = vshrl.u32 %v2296, 7
    %v2298 = vsub.s32 %v1798, %v2297
    %v2299 = vrot.slane %v1589, %v2298
    %v2300 = vsel %vm1803, %v2299, %v2295
    %v2301 = vlaneseq
    %v2302 = vshrl.u32 %v2301, 7
    %v2303 = vsub.s32 %v1805, %v2302
    %v2304 = vrot.slane %v1592, %v2303
    %v2305 = vsel %vm1810, %v2304, %v2300
    %v2306 = vlaneseq
    %v2307 = vshrl.u32 %v2306, 7
    %v2308 = vsub.s32 %v1786, %v2307
    %v2309 = vrot.slane %v1595, %v2308
    %v2310 = vlaneseq
    %v2311 = vshrl.u32 %v2310, 7
    %v2312 = vsub.s32 %v1791, %v2311
    %v2313 = vrot.slane %v1598, %v2312
    %v2314 = vsel %vm1796, %v2313, %v2309
    %v2315 = vlaneseq
    %v2316 = vshrl.u32 %v2315, 7
    %v2317 = vsub.s32 %v1798, %v2316
    %v2318 = vrot.slane %v1601, %v2317
    %v2319 = vsel %vm1803, %v2318, %v2314
    %v2320 = vlaneseq
    %v2321 = vshrl.u32 %v2320, 7
    %v2322 = vsub.s32 %v1805, %v2321
    %v2323 = vrot.slane %v1604, %v2322
    %v2324 = vsel %vm1810, %v2323, %v2319
    %v2325 = vlaneseq
    %v2326 = vshrl.u32 %v2325, 7
    %v2327 = vsub.s32 %v1786, %v2326
    %v2328 = vrot.slane %v1607, %v2327
    %v2329 = vlaneseq
    %v2330 = vshrl.u32 %v2329, 7
    %v2331 = vsub.s32 %v1791, %v2330
    %v2332 = vrot.slane %v1610, %v2331
    %v2333 = vsel %vm1796, %v2332, %v2328
    %v2334 = vlaneseq
    %v2335 = vshrl.u32 %v2334, 7
    %v2336 = vsub.s32 %v1798, %v2335
    %v2337 = vrot.slane %v1613, %v2336
    %v2338 = vsel %vm1803, %v2337, %v2333
    %v2339 = vlaneseq
    %v2340 = vshrl.u32 %v2339, 7
    %v2341 = vsub.s32 %v1805, %v2340
    %v2342 = vrot.slane %v1616, %v2341
    %v2343 = vsel %vm1810, %v2342, %v2338
    %v2344 = vlaneseq
    %v2345 = vshrl.u32 %v2344, 7
    %v2346 = vsub.s32 %v1786, %v2345
    %v2347 = vrot.slane %v1619, %v2346
    %v2348 = vlaneseq
    %v2349 = vshrl.u32 %v2348, 7
    %v2350 = vsub.s32 %v1791, %v2349
    %v2351 = vrot.slane %v1622, %v2350
    %v2352 = vsel %vm1796, %v2351, %v2347
    %v2353 = vlaneseq
    %v2354 = vshrl.u32 %v2353, 7
    %v2355 = vsub.s32 %v1798, %v2354
    %v2356 = vrot.slane %v1625, %v2355
    %v2357 = vsel %vm1803, %v2356, %v2352
    %v2358 = vlaneseq
    %v2359 = vshrl.u32 %v2358, 7
    %v2360 = vsub.s32 %v1805, %v2359
    %v2361 = vrot.slane %v1628, %v2360
    %v2362 = vsel %vm1810, %v2361, %v2357
    %v2363 = vlaneseq
    %v2364 = vshrl.u32 %v2363, 7
    %v2365 = vsub.s32 %v1786, %v2364
    %v2366 = vrot.slane %v1631, %v2365
    %v2367 = vlaneseq
    %v2368 = vshrl.u32 %v2367, 7
    %v2369 = vsub.s32 %v1791, %v2368
    %v2370 = vrot.slane %v1634, %v2369
    %v2371 = vsel %vm1796, %v2370, %v2366
    %v2372 = vlaneseq
    %v2373 = vshrl.u32 %v2372, 7
    %v2374 = vsub.s32 %v1798, %v2373
    %v2375 = vrot.slane %v1637, %v2374
    %v2376 = vsel %vm1803, %v2375, %v2371
    %v2377 = vlaneseq
    %v2378 = vshrl.u32 %v2377, 7
    %v2379 = vsub.s32 %v1805, %v2378
    %v2380 = vrot.slane %v1640, %v2379
    %v2381 = vsel %vm1810, %v2380, %v2376
    %v2382 = vlaneseq
    %v2383 = vshrl.u32 %v2382, 7
    %v2384 = vsub.s32 %v1786, %v2383
    %v2385 = vrot.slane %v1643, %v2384
    %v2386 = vlaneseq
    %v2387 = vshrl.u32 %v2386, 7
    %v2388 = vsub.s32 %v1791, %v2387
    %v2389 = vrot.slane %v1646, %v2388
    %v2390 = vsel %vm1796, %v2389, %v2385
    %v2391 = vlaneseq
    %v2392 = vshrl.u32 %v2391, 7
    %v2393 = vsub.s32 %v1798, %v2392
    %v2394 = vrot.slane %v1649, %v2393
    %v2395 = vsel %vm1803, %v2394, %v2390
    %v2396 = vlaneseq
    %v2397 = vshrl.u32 %v2396, 7
    %v2398 = vsub.s32 %v1805, %v2397
    %v2399 = vrot.slane %v1652, %v2398
    %v2400 = vsel %vm1810, %v2399, %v2395
    %vm2401 = vcmask 1041409
    %v2402 = vsel %vm2401, %v1830, %v1811
    %vm2403 = vcmask 1042434
    %v2404 = vsel %vm2403, %v1849, %v2402
    %vm2405 = vcmask 1043459
    %v2406 = vsel %vm2405, %v1868, %v2404
    %vm2407 = vcmask 1044484
    %v2408 = vsel %vm2407, %v1887, %v2406
    %vm2409 = vcmask 1045509
    %v2410 = vsel %vm2409, %v1906, %v2408
    %vm2411 = vcmask 1046534
    %v2412 = vsel %vm2411, %v1925, %v2410
    %vm2413 = vcmask 1047559
    %v2414 = vsel %vm2413, %v1944, %v2412
    %v2415 = vsel %vm2401, %v1982, %v1963
    %v2416 = vsel %vm2403, %v2001, %v2415
    %v2417 = vsel %vm2405, %v2020, %v2416
    %v2418 = vsel %vm2407, %v2039, %v2417
    %v2419 = vsel %vm2409, %v2058, %v2418
    %v2420 = vsel %vm2411, %v2077, %v2419
    %v2421 = vsel %vm2413, %v2096, %v2420
    %v2422 = vsel %vm2401, %v2134, %v2115
    %v2423 = vsel %vm2403, %v2153, %v2422
    %v2424 = vsel %vm2405, %v2172, %v2423
    %v2425 = vsel %vm2407, %v2191, %v2424
    %v2426 = vsel %vm2409, %v2210, %v2425
    %v2427 = vsel %vm2411, %v2229, %v2426
    %v2428 = vsel %vm2413, %v2248, %v2427
    %v2429 = vsel %vm2401, %v2286, %v2267
    %v2430 = vsel %vm2403, %v2305, %v2429
    %v2431 = vsel %vm2405, %v2324, %v2430
    %v2432 = vsel %vm2407, %v2343, %v2431
    %v2433 = vsel %vm2409, %v2362, %v2432
    %v2434 = vsel %vm2411, %v2381, %v2433
    %v2435 = vsel %vm2413, %v2400, %v2434
    %v2440 = vsel %vm1653, %v2414, -1e+30
    %v2441 = vsel %vm1654, %v2421, -1e+30
    %v2442 = vsel %vm1655, %v2428, -1e+30
    %v2443 = vsel %vm1656, %v2435, -1e+30
    %vm2444 = vcmask 261120
    %v2445 = vsel %vm2444, %v2440, -inf
    %2446 = vmax.xlane.f32.xlu0 %v2445
    %v2447 = vpop.xlane.xlu0 %2446
    %v2448 = vsel %vm2444, %v2441, -inf
    %2449 = vmax.xlane.f32.xlu0 %v2448
    %v2450 = vpop.xlane.xlu0 %2449
    %v2451 = vsel %vm2444, %v2442, -inf
    %2452 = vmax.xlane.f32.xlu0 %v2451
    %v2453 = vpop.xlane.xlu0 %2452
    %v2454 = vsel %vm2444, %v2443, -inf
    %2455 = vmax.xlane.f32.xlu0 %v2454
    %v2456 = vpop.xlane.xlu0 %2455
    %v2457 = vsub.f32 %v2440, %v2447
    %v2458 = vsub.f32 %v2441, %v2450
    %v2459 = vsub.f32 %v2442, %v2453
    %v2460 = vsub.f32 %v2443, %v2456
    %v2461 = vmul.f32 %v2457, 1.442695
    %v2462 = vpow.pop %v2461
    %v2463 = vmul.f32 %v2458, 1.442695
    %v2464 = vpow.pop %v2463
    %v2465 = vmul.f32 %v2459, 1.442695
    %v2466 = vpow.pop %v2465
    %v2467 = vmul.f32 %v2460, 1.442695
    %v2468 = vpow.pop %v2467
    %v2469 = vsel %vm1653, %v2462, 0.0
    %v2470 = vsel %vm1654, %v2464, 0.0
    %v2471 = vsel %vm1655, %v2466, 0.0
    %v2472 = vsel %vm1656, %v2468, 0.0
    %v2473 = vsel %vm2444, %v2469, 0.0
    %2474 = vadd.xlane.f32.xlu0 %v2473
    %v2475 = vpop.xlane.xlu0 %2474
    %v2476 = vsel %vm2444, %v2470, 0.0
    %2477 = vadd.xlane.f32.xlu0 %v2476
    %v2478 = vpop.xlane.xlu0 %2477
    %v2479 = vsel %vm2444, %v2471, 0.0
    %2480 = vadd.xlane.f32.xlu0 %v2479
    %v2481 = vpop.xlane.xlu0 %2480
    %v2482 = vsel %vm2444, %v2472, 0.0
    %2483 = vadd.xlane.f32.xlu0 %v2482
    %v2484 = vpop.xlane.xlu0 %2483
    %v2485 = vrcp.pop %v2475
    %v2486 = vrcp.pop %v2478
    %v2487 = vrcp.pop %v2481
    %v2488 = vrcp.pop %v2484
    %v2489 = vmul.f32 %v2469, %v2485
    %v2490 = vmul.f32 %v2470, %v2486
    %v2491 = vmul.f32 %v2471, %v2487
    %v2492 = vmul.f32 %v2472, %v2488
    %v2493 = vld [vmem:[%s5] sm:$0x1]
    %v2495 = vlaneseq
    %v2496 = vshrl.u32 %v2495, 7
    %v2497 = vsub.s32 0, %v2496
    %v2498 = vrot.slane %v2493, %v2497
    %v2501 = vsel %vm2444, %v2489, 0
    %v2504 = vsel %vm2444, %v2490, 0
    %v2507 = vsel %vm2444, %v2491, 0
    %v2510 = vsel %vm2444, %v2492, 0
    %2512 = vmatprep.subr.mxu0 0.0
    %2513 = vmatpush1.msra.mxu0 %v180
    %2514 = vmatprep.subr.mxu0 0.0
    %2515 = vmatpush1.msra.mxu0 %v185
    %2516 = vmatprep.subr.mxu0 0.0
    %2517 = vmatpush1.msra.mxu0 %v190
    %2518 = vmatprep.subr.mxu0 0.0
    %2519 = vmatpush1.msra.mxu0 %v195
    %2520 = vmatprep.subr.mxu0 0.0
    %2521 = vmatpush1.msra.mxu0 0.0
    %2522 = vmatprep.subr.mxu0 0.0
    %2523 = vmatpush1.msra.mxu0 0.0
    %2524 = vmatprep.subr.mxu0 0.0
    %2525 = vmatpush1.msra.mxu0 0.0
    %2526 = vmatprep.subr.mxu0 0.0
    %2527 = vmatpush1.msra.mxu0 0.0
    %2528 = vmatprep.subr.mxu0 0.0
    %2529 = vmatpush1.msra.mxu0 0.0
    %2530 = vmatprep.subr.mxu0 0.0
    %2531 = vmatpush1.msra.mxu0 0.0
    %2532 = vmatprep.subr.mxu0 0.0
    %2533 = vmatpush1.msra.mxu0 0.0
    %2534 = vmatprep.subr.mxu0 0.0
    %2535 = vmatpush1.msra.mxu0 0.0
    %2536 = vmatprep.subr.mxu0 0.0
    %2537 = vmatpush1.msra.mxu0 0.0
    %2538 = vmatprep.subr.mxu0 0.0
    %2539 = vmatpush1.msra.mxu0 0.0
    %2540 = vmatprep.subr.mxu0 0.0
    %2541 = vmatpush1.msra.mxu0 0.0
    %2542 = vmatprep.subr.mxu0 0.0
    %2543 = vmatpush1.msra.mxu0 0.0
    %2544 = vmatprep.subr.mxu0 0.0
    %2545 = vmatpush1.msra.mxu0 0.0
    %2546 = vmatprep.subr.mxu0 0.0
    %2547 = vmatpush1.msra.mxu0 0.0
    %2548 = vmatprep.subr.mxu0 0.0
    %2549 = vmatpush1.msra.mxu0 0.0
    %2550 = vmatprep.subr.mxu0 0.0
    %2551 = vmatpush1.msra.mxu0 0.0
    %2552 = vmatprep.subr.mxu0 0.0
    %2553 = vmatpush1.msra.mxu0 0.0
    %2554 = vmatprep.subr.mxu0 0.0
    %2555 = vmatpush1.msra.mxu0 0.0
    %2556 = vmatprep.subr.mxu0 0.0
    %2557 = vmatpush1.msra.mxu0 0.0
    %2558 = vmatprep.subr.mxu0 0.0
    %2559 = vmatpush1.msra.mxu0 0.0
    %2560 = vmatprep.subr.mxu0 0.0
    %2561 = vmatpush1.msra.mxu0 0.0
    %2562 = vmatprep.subr.mxu0 0.0
    %2563 = vmatpush1.msra.mxu0 0.0
    %2564 = vmatprep.subr.mxu0 0.0
    %2565 = vmatpush1.msra.mxu0 0.0
    %2566 = vmatprep.subr.mxu0 0.0
    %2567 = vmatpush1.msra.mxu0 0.0
    %2568 = vmatprep.subr.mxu0 0.0
    %2569 = vmatpush1.msra.mxu0 0.0
    %2570 = vmatprep.subr.mxu0 0.0
    %2571 = vmatpush1.msra.mxu0 0.0
    %2572 = vmatprep.subr.mxu0 0.0
    %2573 = vmatpush1.msra.mxu0 0.0
    %2574 = vmatprep.subr.mxu0 0.0
    %2575 = vmatpush1.msra.mxu0 0.0
    %2576 = vmatprep.mubr.f32.mxu0 0.0
    %2577 = vmatmul.mubr.f32.gmra.mrb[0].mxu0 %v2501
    %v2578 = vpop.f32.mrb[0].mxu0
    %v2579 = vadd.f32 %v2498, %v2578
    %v2580 = vpop.f32.mrb[0].mxu0
    %2581 = vmatprep.mubr.f32.mxu0 0.0
    %2582 = vmatmul.mubr.f32.gmra.mrb[0].mxu0 %v2504
    %v2583 = vpop.f32.mrb[0].mxu0
    %v2584 = vadd.f32 %v2498, %v2583
    %v2585 = vpop.f32.mrb[0].mxu0
    %2586 = vmatprep.mubr.f32.mxu0 0.0
    %2587 = vmatmul.mubr.f32.gmra.mrb[0].mxu0 %v2507
    %v2588 = vpop.f32.mrb[0].mxu0
    %v2589 = vadd.f32 %v2498, %v2588
    %v2590 = vpop.f32.mrb[0].mxu0
    %2591 = vmatprep.mubr.f32.mxu0 0.0
    %2592 = vmatmul.mubr.f32.gmra.mrb[0].mxu0 %v2510
    %v2593 = vpop.f32.mrb[0].mxu0
    %v2594 = vadd.f32 %v2498, %v2593
    %v2595 = vpop.f32.mrb[0].mxu0
    %2596 = vdwg.mxu0
    %v2597 = vadd.f32 %v2579, %v77
    %v2598 = vadd.f32 %v2584, %v78
    %v2599 = vadd.f32 %v2589, %v79
    %v2600 = vadd.f32 %v2594, %v80
    %v2601 = vld [vmem:[%s6] sm:$0x1]
    %v2603 = vlaneseq
    %v2604 = vshrl.u32 %v2603, 7
    %v2605 = vsub.s32 0, %v2604
    %v2606 = vrot.slane %v2601, %v2605
    %v2608 = vmul.f32 %v2597, %v2606
    %v2609 = vmul.f32 %v2598, %v2606
    %v2610 = vmul.f32 %v2599, %v2606
    %v2611 = vmul.f32 %v2600, %v2606
    %v2612 = vld [vmem:[%s7] sm:$0x1]
    %v2614 = vlaneseq
    %v2615 = vshrl.u32 %v2614, 7
    %v2616 = vsub.s32 0, %v2615
    %v2617 = vrot.slane %v2612, %v2616
    %v2619 = vadd.f32 %v2608, %v2617
    %v2620 = vadd.f32 %v2609, %v2617
    %v2621 = vadd.f32 %v2610, %v2617
    %v2622 = vadd.f32 %v2611, %v2617
    %v2623 = vld [vmem:[%s8] sm:$0xff]
    %v2624 = vld [vmem:[%s8 + $0x8] sm:$0xff]
    %v2625 = vld [vmem:[%s8 + $0x10] sm:$0xff]
    %v2626 = vld [vmem:[%s8 + $0x18] sm:$0xff]
    %v2627 = vld [vmem:[%s8 + $0x20] sm:$0xff]
    %v2628 = vld [vmem:[%s8 + $0x28] sm:$0xff]
    %v2629 = vld [vmem:[%s8 + $0x30] sm:$0xff]
    %v2630 = vld [vmem:[%s8 + $0x38] sm:$0xff]
    %v2631 = vld [vmem:[%s8 + $0x40] sm:$0xff]
    %v2632 = vld [vmem:[%s8 + $0x48] sm:$0xff]
    %v2633 = vld [vmem:[%s8 + $0x50] sm:$0xff]
    %v2634 = vld [vmem:[%s8 + $0x58] sm:$0xff]
    %v2635 = vld [vmem:[%s8 + $0x60] sm:$0xff]
    %v2636 = vld [vmem:[%s8 + $0x68] sm:$0xff]
    %v2637 = vld [vmem:[%s8 + $0x70] sm:$0xff]
    %v2638 = vld [vmem:[%s8 + $0x78] sm:$0xff]
    %v2639 = vld [vmem:[%s9] sm:$0x3]
    %v2641 = vlaneseq
    %v2642 = vshrl.u32 %v2641, 7
    %v2643 = vsub.s32 0, %v2642
    %v2644 = vrot.slane %v2639, %v2643
    %v2645 = vlaneseq
    %v2646 = vshrl.u32 %v2645, 7
    %v2647 = vsub.s32 1, %v2646
    %v2648 = vrot.slane %v2639, %v2647
    %2651 = vmatprep.subr.mxu0 %v2624
    %2652 = vmatpush1.msra.mxu0 %v2623
    %2653 = vmatprep.subr.mxu0 %v2626
    %2654 = vmatpush1.msra.mxu0 %v2625
    %2655 = vmatprep.subr.mxu0 %v2628
    %2656 = vmatpush1.msra.mxu0 %v2627
    %2657 = vmatprep.subr.mxu0 %v2630
    %2658 = vmatpush1.msra.mxu0 %v2629
    %2659 = vmatprep.subr.mxu0 %v2632
    %2660 = vmatpush1.msra.mxu0 %v2631
    %2661 = vmatprep.subr.mxu0 %v2634
    %2662 = vmatpush1.msra.mxu0 %v2633
    %2663 = vmatprep.subr.mxu0 %v2636
    %2664 = vmatpush1.msra.mxu0 %v2635
    %2665 = vmatprep.subr.mxu0 %v2638
    %2666 = vmatpush1.msra.mxu0 %v2637
    %2667 = vmatprep.subr.mxu0 0.0
    %2668 = vmatpush1.msra.mxu0 0.0
    %2669 = vmatprep.subr.mxu0 0.0
    %2670 = vmatpush1.msra.mxu0 0.0
    %2671 = vmatprep.subr.mxu0 0.0
    %2672 = vmatpush1.msra.mxu0 0.0
    %2673 = vmatprep.subr.mxu0 0.0
    %2674 = vmatpush1.msra.mxu0 0.0
    %2675 = vmatprep.subr.mxu0 0.0
    %2676 = vmatpush1.msra.mxu0 0.0
    %2677 = vmatprep.subr.mxu0 0.0
    %2678 = vmatpush1.msra.mxu0 0.0
    %2679 = vmatprep.subr.mxu0 0.0
    %2680 = vmatpush1.msra.mxu0 0.0
    %2681 = vmatprep.subr.mxu0 0.0
    %2682 = vmatpush1.msra.mxu0 0.0
    %2683 = vmatprep.subr.mxu0 0.0
    %2684 = vmatpush1.msra.mxu0 0.0
    %2685 = vmatprep.subr.mxu0 0.0
    %2686 = vmatpush1.msra.mxu0 0.0
    %2687 = vmatprep.subr.mxu0 0.0
    %2688 = vmatpush1.msra.mxu0 0.0
    %2689 = vmatprep.subr.mxu0 0.0
    %2690 = vmatpush1.msra.mxu0 0.0
    %2691 = vmatprep.subr.mxu0 0.0
    %2692 = vmatpush1.msra.mxu0 0.0
    %2693 = vmatprep.subr.mxu0 0.0
    %2694 = vmatpush1.msra.mxu0 0.0
    %2695 = vmatprep.subr.mxu0 0.0
    %2696 = vmatpush1.msra.mxu0 0.0
    %2697 = vmatprep.subr.mxu0 0.0
    %2698 = vmatpush1.msra.mxu0 0.0
    %2699 = vmatprep.subr.mxu0 0.0
    %2700 = vmatpush1.msra.mxu0 0.0
    %2701 = vmatprep.subr.mxu0 0.0
    %2702 = vmatpush1.msra.mxu0 0.0
    %2703 = vmatprep.subr.mxu0 0.0
    %2704 = vmatpush1.msra.mxu0 0.0
    %2705 = vmatprep.subr.mxu0 0.0
    %2706 = vmatpush1.msra.mxu0 0.0
    %2707 = vmatprep.subr.mxu0 0.0
    %2708 = vmatpush1.msra.mxu0 0.0
    %2709 = vmatprep.subr.mxu0 0.0
    %2710 = vmatpush1.msra.mxu0 0.0
    %2711 = vmatprep.subr.mxu0 0.0
    %2712 = vmatpush1.msra.mxu0 0.0
    %2713 = vmatprep.subr.mxu0 0.0
    %2714 = vmatpush1.msra.mxu0 0.0
    %2715 = vmatprep.mubr.f32.mxu0 0.0
    %2716 = vmatmul.mubr.f32.gmra.mrb[0].mxu0 %v102
    %v2717 = vpop.f32.mrb[0].mxu0
    %v2718 = vadd.f32 %v2644, %v2717
    %v2719 = vpop.f32.mrb[0].mxu0
    %v2720 = vadd.f32 %v2648, %v2719
    %2721 = vmatprep.mubr.f32.mxu0 0.0
    %2722 = vmatmul.mubr.f32.gmra.mrb[0].mxu0 %v105
    %v2723 = vpop.f32.mrb[0].mxu0
    %v2724 = vadd.f32 %v2644, %v2723
    %v2725 = vpop.f32.mrb[0].mxu0
    %v2726 = vadd.f32 %v2648, %v2725
    %2727 = vmatprep.mubr.f32.mxu0 0.0
    %2728 = vmatmul.mubr.f32.gmra.mrb[0].mxu0 %v108
    %v2729 = vpop.f32.mrb[0].mxu0
    %v2730 = vadd.f32 %v2644, %v2729
    %v2731 = vpop.f32.mrb[0].mxu0
    %v2732 = vadd.f32 %v2648, %v2731
    %2733 = vmatprep.mubr.f32.mxu0 0.0
    %2734 = vmatmul.mubr.f32.gmra.mrb[0].mxu0 %v111
    %v2735 = vpop.f32.mrb[0].mxu0
    %v2736 = vadd.f32 %v2644, %v2735
    %v2737 = vpop.f32.mrb[0].mxu0
    %v2738 = vadd.f32 %v2648, %v2737
    %2739 = vdwg.mxu0
    %v2740 = vmul.f32 %v2718, 0.25
    %v2741 = vmul.f32 %v2724, 0.25
    %v2742 = vmul.f32 %v2730, 0.25
    %v2743 = vmul.f32 %v2736, 0.25
    %2748 = vrot.lane.b32.xlu0 %v2718, 64
    %v2749 = vpop.permute.xlu0 %2748
    %2750 = vrot.lane.b32.xlu0 %v2724, 64
    %v2751 = vpop.permute.xlu0 %2750
    %2752 = vrot.lane.b32.xlu0 %v2730, 64
    %v2753 = vpop.permute.xlu0 %2752
    %2754 = vrot.lane.b32.xlu0 %v2736, 64
    %v2755 = vpop.permute.xlu0 %2754
    %vm2756 = vcmask 130048
    %v2758 = vsel %vm2756, %v2740, 0
    %v2761 = vsel %vm2756, %v2741, 0
    %v2764 = vsel %vm2756, %v2742, 0
    %v2767 = vsel %vm2756, %v2743, 0
    %v2769 = vsel %vm2756, %v2749, 0
    %v2771 = vsel %vm2756, %v2751, 0
    %v2773 = vsel %vm2756, %v2753, 0
    %v2775 = vsel %vm2756, %v2755, 0
    %2777 = vmatprep.subr.mxu0 0.0
    %2778 = vmatpush1.xpose.msra.mxu0 %v2769
    %2779 = vmatprep.subr.mxu0 0.0
    %2780 = vmatpush1.xpose.msra.mxu0 %v2771
    %2781 = vmatprep.subr.mxu0 0.0
    %2782 = vmatpush1.xpose.msra.mxu0 %v2773
    %2783 = vmatprep.subr.mxu0 0.0
    %2784 = vmatpush1.xpose.msra.mxu0 %v2775
    %2785 = vmatprep.subr.mxu0 0.0
    %2786 = vmatpush1.xpose.msra.mxu0 0.0
    %2787 = vmatprep.subr.mxu0 0.0
    %2788 = vmatpush1.xpose.msra.mxu0 0.0
    %2789 = vmatprep.subr.mxu0 0.0
    %2790 = vmatpush1.xpose.msra.mxu0 0.0
    %2791 = vmatprep.subr.mxu0 0.0
    %2792 = vmatpush1.xpose.msra.mxu0 0.0
    %2793 = vmatprep.subr.mxu0 0.0
    %2794 = vmatpush1.xpose.msra.mxu0 0.0
    %2795 = vmatprep.subr.mxu0 0.0
    %2796 = vmatpush1.xpose.msra.mxu0 0.0
    %2797 = vmatprep.subr.mxu0 0.0
    %2798 = vmatpush1.xpose.msra.mxu0 0.0
    %2799 = vmatprep.subr.mxu0 0.0
    %2800 = vmatpush1.xpose.msra.mxu0 0.0
    %2801 = vmatprep.subr.mxu0 0.0
    %2802 = vmatpush1.xpose.msra.mxu0 0.0
    %2803 = vmatprep.subr.mxu0 0.0
    %2804 = vmatpush1.xpose.msra.mxu0 0.0
    %2805 = vmatprep.subr.mxu0 0.0
    %2806 = vmatpush1.xpose.msra.mxu0 0.0
    %2807 = vmatprep.subr.mxu0 0.0
    %2808 = vmatpush1.xpose.msra.mxu0 0.0
    %2809 = vmatprep.subr.mxu0 0.0
    %2810 = vmatpush1.xpose.msra.mxu0 0.0
    %2811 = vmatprep.subr.mxu0 0.0
    %2812 = vmatpush1.xpose.msra.mxu0 0.0
    %2813 = vmatprep.subr.mxu0 0.0
    %2814 = vmatpush1.xpose.msra.mxu0 0.0
    %2815 = vmatprep.subr.mxu0 0.0
    %2816 = vmatpush1.xpose.msra.mxu0 0.0
    %2817 = vmatprep.subr.mxu0 0.0
    %2818 = vmatpush1.xpose.msra.mxu0 0.0
    %2819 = vmatprep.subr.mxu0 0.0
    %2820 = vmatpush1.xpose.msra.mxu0 0.0
    %2821 = vmatprep.subr.mxu0 0.0
    %2822 = vmatpush1.xpose.msra.mxu0 0.0
    %2823 = vmatprep.subr.mxu0 0.0
    %2824 = vmatpush1.xpose.msra.mxu0 0.0
    %2825 = vmatprep.subr.mxu0 0.0
    %2826 = vmatpush1.xpose.msra.mxu0 0.0
    %2827 = vmatprep.subr.mxu0 0.0
    %2828 = vmatpush1.xpose.msra.mxu0 0.0
    %2829 = vmatprep.subr.mxu0 0.0
    %2830 = vmatpush1.xpose.msra.mxu0 0.0
    %2831 = vmatprep.subr.mxu0 0.0
    %2832 = vmatpush1.xpose.msra.mxu0 0.0
    %2833 = vmatprep.subr.mxu0 0.0
    %2834 = vmatpush1.xpose.msra.mxu0 0.0
    %2835 = vmatprep.subr.mxu0 0.0
    %2836 = vmatpush1.xpose.msra.mxu0 0.0
    %2837 = vmatprep.subr.mxu0 0.0
    %2838 = vmatpush1.xpose.msra.mxu0 0.0
    %2839 = vmatprep.subr.mxu0 0.0
    %2840 = vmatpush1.xpose.msra.mxu0 0.0
    %2841 = vmatprep.mubr.f32.mxu0 0.0
    %2842 = vmatmul.mubr.f32.gmra.mrb[0].mxu0 %v2758
    %v2843 = vpop.f32.mrb[0].mxu0
    %v2844 = vadd.f32 0.0, %v2843
    %v2845 = vpop.f32.mrb[0].mxu0
    %2846 = vmatprep.mubr.f32.mxu0 0.0
    %2847 = vmatmul.mubr.f32.gmra.mrb[0].mxu0 %v2761
    %v2848 = vpop.f32.mrb[0].mxu0
    %v2849 = vadd.f32 0.0, %v2848
    %v2850 = vpop.f32.mrb[0].mxu0
    %2851 = vmatprep.mubr.f32.mxu0 0.0
    %2852 = vmatmul.mubr.f32.gmra.mrb[0].mxu0 %v2764
    %v2853 = vpop.f32.mrb[0].mxu0
    %v2854 = vadd.f32 0.0, %v2853
    %v2855 = vpop.f32.mrb[0].mxu0
    %2856 = vmatprep.mubr.f32.mxu0 0.0
    %2857 = vmatmul.mubr.f32.gmra.mrb[0].mxu0 %v2767
    %v2858 = vpop.f32.mrb[0].mxu0
    %v2859 = vadd.f32 0.0, %v2858
    %v2860 = vpop.f32.mrb[0].mxu0
    %2861 = vdwg.mxu0
    %v2862 = vsel %vm2444, %v2844, -inf
    %2863 = vmax.xlane.f32.xlu0 %v2862
    %v2864 = vpop.xlane.xlu0 %2863
    %v2865 = vsel %vm2444, %v2849, -inf
    %2866 = vmax.xlane.f32.xlu0 %v2865
    %v2867 = vpop.xlane.xlu0 %2866
    %v2868 = vsel %vm2444, %v2854, -inf
    %2869 = vmax.xlane.f32.xlu0 %v2868
    %v2870 = vpop.xlane.xlu0 %2869
    %v2871 = vsel %vm2444, %v2859, -inf
    %2872 = vmax.xlane.f32.xlu0 %v2871
    %v2873 = vpop.xlane.xlu0 %2872
    %v2874 = vsub.f32 %v2844, %v2864
    %v2875 = vsub.f32 %v2849, %v2867
    %v2876 = vsub.f32 %v2854, %v2870
    %v2877 = vsub.f32 %v2859, %v2873
    %v2878 = vmul.f32 %v2874, 1.442695
    %v2879 = vpow.pop %v2878
    %v2880 = vmul.f32 %v2875, 1.442695
    %v2881 = vpow.pop %v2880
    %v2882 = vmul.f32 %v2876, 1.442695
    %v2883 = vpow.pop %v2882
    %v2884 = vmul.f32 %v2877, 1.442695
    %v2885 = vpow.pop %v2884
    %v2886 = vsel %vm2444, %v2879, 0.0
    %2887 = vadd.xlane.f32.xlu0 %v2886
    %v2888 = vpop.xlane.xlu0 %2887
    %v2889 = vsel %vm2444, %v2881, 0.0
    %2890 = vadd.xlane.f32.xlu0 %v2889
    %v2891 = vpop.xlane.xlu0 %2890
    %v2892 = vsel %vm2444, %v2883, 0.0
    %2893 = vadd.xlane.f32.xlu0 %v2892
    %v2894 = vpop.xlane.xlu0 %2893
    %v2895 = vsel %vm2444, %v2885, 0.0
    %2896 = vadd.xlane.f32.xlu0 %v2895
    %v2897 = vpop.xlane.xlu0 %2896
    %v2898 = vrcp.pop %v2888
    %v2899 = vrcp.pop %v2891
    %v2900 = vrcp.pop %v2894
    %v2901 = vrcp.pop %v2897
    %v2902 = vmul.f32 %v2879, %v2898
    %v2903 = vmul.f32 %v2881, %v2899
    %v2904 = vmul.f32 %v2883, %v2900
    %v2905 = vmul.f32 %v2885, %v2901
    %v2907 = vsel %vm2444, %v2902, 0
    %v2910 = vsel %vm2444, %v2903, 0
    %v2913 = vsel %vm2444, %v2904, 0
    %v2916 = vsel %vm2444, %v2905, 0
    %2918 = vmatprep.subr.mxu0 0.0
    %2919 = vmatpush1.msra.mxu0 %v2720
    %2920 = vmatprep.subr.mxu0 0.0
    %2921 = vmatpush1.msra.mxu0 %v2726
    %2922 = vmatprep.subr.mxu0 0.0
    %2923 = vmatpush1.msra.mxu0 %v2732
    %2924 = vmatprep.subr.mxu0 0.0
    %2925 = vmatpush1.msra.mxu0 %v2738
    %2926 = vmatprep.subr.mxu0 0.0
    %2927 = vmatpush1.msra.mxu0 0.0
    %2928 = vmatprep.subr.mxu0 0.0
    %2929 = vmatpush1.msra.mxu0 0.0
    %2930 = vmatprep.subr.mxu0 0.0
    %2931 = vmatpush1.msra.mxu0 0.0
    %2932 = vmatprep.subr.mxu0 0.0
    %2933 = vmatpush1.msra.mxu0 0.0
    %2934 = vmatprep.subr.mxu0 0.0
    %2935 = vmatpush1.msra.mxu0 0.0
    %2936 = vmatprep.subr.mxu0 0.0
    %2937 = vmatpush1.msra.mxu0 0.0
    %2938 = vmatprep.subr.mxu0 0.0
    %2939 = vmatpush1.msra.mxu0 0.0
    %2940 = vmatprep.subr.mxu0 0.0
    %2941 = vmatpush1.msra.mxu0 0.0
    %2942 = vmatprep.subr.mxu0 0.0
    %2943 = vmatpush1.msra.mxu0 0.0
    %2944 = vmatprep.subr.mxu0 0.0
    %2945 = vmatpush1.msra.mxu0 0.0
    %2946 = vmatprep.subr.mxu0 0.0
    %2947 = vmatpush1.msra.mxu0 0.0
    %2948 = vmatprep.subr.mxu0 0.0
    %2949 = vmatpush1.msra.mxu0 0.0
    %2950 = vmatprep.subr.mxu0 0.0
    %2951 = vmatpush1.msra.mxu0 0.0
    %2952 = vmatprep.subr.mxu0 0.0
    %2953 = vmatpush1.msra.mxu0 0.0
    %2954 = vmatprep.subr.mxu0 0.0
    %2955 = vmatpush1.msra.mxu0 0.0
    %2956 = vmatprep.subr.mxu0 0.0
    %2957 = vmatpush1.msra.mxu0 0.0
    %2958 = vmatprep.subr.mxu0 0.0
    %2959 = vmatpush1.msra.mxu0 0.0
    %2960 = vmatprep.subr.mxu0 0.0
    %2961 = vmatpush1.msra.mxu0 0.0
    %2962 = vmatprep.subr.mxu0 0.0
    %2963 = vmatpush1.msra.mxu0 0.0
    %2964 = vmatprep.subr.mxu0 0.0
    %2965 = vmatpush1.msra.mxu0 0.0
    %2966 = vmatprep.subr.mxu0 0.0
    %2967 = vmatpush1.msra.mxu0 0.0
    %2968 = vmatprep.subr.mxu0 0.0
    %2969 = vmatpush1.msra.mxu0 0.0
    %2970 = vmatprep.subr.mxu0 0.0
    %2971 = vmatpush1.msra.mxu0 0.0
    %2972 = vmatprep.subr.mxu0 0.0
    %2973 = vmatpush1.msra.mxu0 0.0
    %2974 = vmatprep.subr.mxu0 0.0
    %2975 = vmatpush1.msra.mxu0 0.0
    %2976 = vmatprep.subr.mxu0 0.0
    %2977 = vmatpush1.msra.mxu0 0.0
    %2978 = vmatprep.subr.mxu0 0.0
    %2979 = vmatpush1.msra.mxu0 0.0
    %2980 = vmatprep.subr.mxu0 0.0
    %2981 = vmatpush1.msra.mxu0 0.0
    %2982 = vmatprep.mubr.f32.mxu0 0.0
    %2983 = vmatmul.mubr.f32.gmra.mrb[0].mxu0 %v2907
    %v2984 = vpop.f32.mrb[0].mxu0
    %v2985 = vadd.f32 0.0, %v2984
    %v2986 = vpop.f32.mrb[0].mxu0
    %2987 = vmatprep.mubr.f32.mxu0 0.0
    %2988 = vmatmul.mubr.f32.gmra.mrb[0].mxu0 %v2910
    %v2989 = vpop.f32.mrb[0].mxu0
    %v2990 = vadd.f32 0.0, %v2989
    %v2991 = vpop.f32.mrb[0].mxu0
    %2992 = vmatprep.mubr.f32.mxu0 0.0
    %2993 = vmatmul.mubr.f32.gmra.mrb[0].mxu0 %v2913
    %v2994 = vpop.f32.mrb[0].mxu0
    %v2995 = vadd.f32 0.0, %v2994
    %v2996 = vpop.f32.mrb[0].mxu0
    %2997 = vmatprep.mubr.f32.mxu0 0.0
    %2998 = vmatmul.mubr.f32.gmra.mrb[0].mxu0 %v2916
    %v2999 = vpop.f32.mrb[0].mxu0
    %v3000 = vadd.f32 0.0, %v2999
    %v3001 = vpop.f32.mrb[0].mxu0
    %3002 = vdwg.mxu0
    %v3003 = vld [vmem:[%s10] sm:$0xff]
    %v3004 = vld [vmem:[%s10 + $0x8] sm:$0xff]
    %3005 = vrot.lane.b32.xlu0 %v2740, 112
    %v3006 = vpop.permute.xlu0 %3005
    %3007 = vrot.lane.b32.xlu0 %v2741, 112
    %v3008 = vpop.permute.xlu0 %3007
    %3009 = vrot.lane.b32.xlu0 %v2742, 112
    %v3010 = vpop.permute.xlu0 %3009
    %3011 = vrot.lane.b32.xlu0 %v2743, 112
    %v3012 = vpop.permute.xlu0 %3011
    %3013 = vrot.lane.b32.xlu0 %v2718, 48
    %v3014 = vpop.permute.xlu0 %3013
    %3015 = vrot.lane.b32.xlu0 %v2724, 48
    %v3016 = vpop.permute.xlu0 %3015
    %3017 = vrot.lane.b32.xlu0 %v2730, 48
    %v3018 = vpop.permute.xlu0 %3017
    %3019 = vrot.lane.b32.xlu0 %v2736, 48
    %v3020 = vpop.permute.xlu0 %3019
    %v3021 = vsel %vm2756, %v3006, 0
    %v3023 = vsel %vm2756, %v3008, 0
    %v3025 = vsel %vm2756, %v3010, 0
    %v3027 = vsel %vm2756, %v3012, 0
    %v3029 = vsel %vm2756, %v3014, 0
    %v3031 = vsel %vm2756, %v3016, 0
    %v3033 = vsel %vm2756, %v3018, 0
    %v3035 = vsel %vm2756, %v3020, 0
    %3037 = vmatprep.subr.mxu0 0.0
    %3038 = vmatpush1.xpose.msra.mxu0 %v3029
    %3039 = vmatprep.subr.mxu0 0.0
    %3040 = vmatpush1.xpose.msra.mxu0 %v3031
    %3041 = vmatprep.subr.mxu0 0.0
    %3042 = vmatpush1.xpose.msra.mxu0 %v3033
    %3043 = vmatprep.subr.mxu0 0.0
    %3044 = vmatpush1.xpose.msra.mxu0 %v3035
    %3045 = vmatprep.subr.mxu0 0.0
    %3046 = vmatpush1.xpose.msra.mxu0 0.0
    %3047 = vmatprep.subr.mxu0 0.0
    %3048 = vmatpush1.xpose.msra.mxu0 0.0
    %3049 = vmatprep.subr.mxu0 0.0
    %3050 = vmatpush1.xpose.msra.mxu0 0.0
    %3051 = vmatprep.subr.mxu0 0.0
    %3052 = vmatpush1.xpose.msra.mxu0 0.0
    %3053 = vmatprep.subr.mxu0 0.0
    %3054 = vmatpush1.xpose.msra.mxu0 0.0
    %3055 = vmatprep.subr.mxu0 0.0
    %3056 = vmatpush1.xpose.msra.mxu0 0.0
    %3057 = vmatprep.subr.mxu0 0.0
    %3058 = vmatpush1.xpose.msra.mxu0 0.0
    %3059 = vmatprep.subr.mxu0 0.0
    %3060 = vmatpush1.xpose.msra.mxu0 0.0
    %3061 = vmatprep.subr.mxu0 0.0
    %3062 = vmatpush1.xpose.msra.mxu0 0.0
    %3063 = vmatprep.subr.mxu0 0.0
    %3064 = vmatpush1.xpose.msra.mxu0 0.0
    %3065 = vmatprep.subr.mxu0 0.0
    %3066 = vmatpush1.xpose.msra.mxu0 0.0
    %3067 = vmatprep.subr.mxu0 0.0
    %3068 = vmatpush1.xpose.msra.mxu0 0.0
    %3069 = vmatprep.subr.mxu0 0.0
    %3070 = vmatpush1.xpose.msra.mxu0 0.0
    %3071 = vmatprep.subr.mxu0 0.0
    %3072 = vmatpush1.xpose.msra.mxu0 0.0
    %3073 = vmatprep.subr.mxu0 0.0
    %3074 = vmatpush1.xpose.msra.mxu0 0.0
    %3075 = vmatprep.subr.mxu0 0.0
    %3076 = vmatpush1.xpose.msra.mxu0 0.0
    %3077 = vmatprep.subr.mxu0 0.0
    %3078 = vmatpush1.xpose.msra.mxu0 0.0
    %3079 = vmatprep.subr.mxu0 0.0
    %3080 = vmatpush1.xpose.msra.mxu0 0.0
    %3081 = vmatprep.subr.mxu0 0.0
    %3082 = vmatpush1.xpose.msra.mxu0 0.0
    %3083 = vmatprep.subr.mxu0 0.0
    %3084 = vmatpush1.xpose.msra.mxu0 0.0
    %3085 = vmatprep.subr.mxu0 0.0
    %3086 = vmatpush1.xpose.msra.mxu0 0.0
    %3087 = vmatprep.subr.mxu0 0.0
    %3088 = vmatpush1.xpose.msra.mxu0 0.0
    %3089 = vmatprep.subr.mxu0 0.0
    %3090 = vmatpush1.xpose.msra.mxu0 0.0
    %3091 = vmatprep.subr.mxu0 0.0
    %3092 = vmatpush1.xpose.msra.mxu0 0.0
    %3093 = vmatprep.subr.mxu0 0.0
    %3094 = vmatpush1.xpose.msra.mxu0 0.0
    %3095 = vmatprep.subr.mxu0 0.0
    %3096 = vmatpush1.xpose.msra.mxu0 0.0
    %3097 = vmatprep.subr.mxu0 0.0
    %3098 = vmatpush1.xpose.msra.mxu0 0.0
    %3099 = vmatprep.subr.mxu0 0.0
    %3100 = vmatpush1.xpose.msra.mxu0 0.0
    %3101 = vmatprep.mubr.f32.mxu0 0.0
    %3102 = vmatmul.mubr.f32.gmra.mrb[0].mxu0 %v3021
    %v3103 = vpop.f32.mrb[0].mxu0
    %v3104 = vadd.f32 0.0, %v3103
    %v3105 = vpop.f32.mrb[0].mxu0
    %3106 = vmatprep.mubr.f32.mxu0 0.0
    %3107 = vmatmul.mubr.f32.gmra.mrb[0].mxu0 %v3023
    %v3108 = vpop.f32.mrb[0].mxu0
    %v3109 = vadd.f32 0.0, %v3108
    %v3110 = vpop.f32.mrb[0].mxu0
    %3111 = vmatprep.mubr.f32.mxu0 0.0
    %3112 = vmatmul.mubr.f32.gmra.mrb[0].mxu0 %v3025
    %v3113 = vpop.f32.mrb[0].mxu0
    %v3114 = vadd.f32 0.0, %v3113
    %v3115 = vpop.f32.mrb[0].mxu0
    %3116 = vmatprep.mubr.f32.mxu0 0.0
    %3117 = vmatmul.mubr.f32.gmra.mrb[0].mxu0 %v3027
    %v3118 = vpop.f32.mrb[0].mxu0
    %v3119 = vadd.f32 0.0, %v3118
    %v3120 = vpop.f32.mrb[0].mxu0
    %3121 = vdwg.mxu0
    %v3122 = vsel %vm2444, %v3104, -inf
    %3123 = vmax.xlane.f32.xlu0 %v3122
    %v3124 = vpop.xlane.xlu0 %3123
    %v3125 = vsel %vm2444, %v3109, -inf
    %3126 = vmax.xlane.f32.xlu0 %v3125
    %v3127 = vpop.xlane.xlu0 %3126
    %v3128 = vsel %vm2444, %v3114, -inf
    %3129 = vmax.xlane.f32.xlu0 %v3128
    %v3130 = vpop.xlane.xlu0 %3129
    %v3131 = vsel %vm2444, %v3119, -inf
    %3132 = vmax.xlane.f32.xlu0 %v3131
    %v3133 = vpop.xlane.xlu0 %3132
    %v3134 = vsub.f32 %v3104, %v3124
    %v3135 = vsub.f32 %v3109, %v3127
    %v3136 = vsub.f32 %v3114, %v3130
    %v3137 = vsub.f32 %v3119, %v3133
    %v3138 = vmul.f32 %v3134, 1.442695
    %v3139 = vpow.pop %v3138
    %v3140 = vmul.f32 %v3135, 1.442695
    %v3141 = vpow.pop %v3140
    %v3142 = vmul.f32 %v3136, 1.442695
    %v3143 = vpow.pop %v3142
    %v3144 = vmul.f32 %v3137, 1.442695
    %v3145 = vpow.pop %v3144
    %v3146 = vsel %vm2444, %v3139, 0.0
    %3147 = vadd.xlane.f32.xlu0 %v3146
    %v3148 = vpop.xlane.xlu0 %3147
    %v3149 = vsel %vm2444, %v3141, 0.0
    %3150 = vadd.xlane.f32.xlu0 %v3149
    %v3151 = vpop.xlane.xlu0 %3150
    %v3152 = vsel %vm2444, %v3143, 0.0
    %3153 = vadd.xlane.f32.xlu0 %v3152
    %v3154 = vpop.xlane.xlu0 %3153
    %v3155 = vsel %vm2444, %v3145, 0.0
    %3156 = vadd.xlane.f32.xlu0 %v3155
    %v3157 = vpop.xlane.xlu0 %3156
    %v3158 = vrcp.pop %v3148
    %v3159 = vrcp.pop %v3151
    %v3160 = vrcp.pop %v3154
    %v3161 = vrcp.pop %v3157
    %v3162 = vmul.f32 %v3139, %v3158
    %v3163 = vmul.f32 %v3141, %v3159
    %v3164 = vmul.f32 %v3143, %v3160
    %v3165 = vmul.f32 %v3145, %v3161
    %3170 = vrot.lane.b32.xlu0 %v2720, 112
    %v3171 = vpop.permute.xlu0 %3170
    %3172 = vrot.lane.b32.xlu0 %v2726, 112
    %v3173 = vpop.permute.xlu0 %3172
    %3174 = vrot.lane.b32.xlu0 %v2732, 112
    %v3175 = vpop.permute.xlu0 %3174
    %3176 = vrot.lane.b32.xlu0 %v2738, 112
    %v3177 = vpop.permute.xlu0 %3176
    %v3183 = vsel %vm2444, %v3162, 0
    %v3186 = vsel %vm2444, %v3163, 0
    %v3189 = vsel %vm2444, %v3164, 0
    %v3192 = vsel %vm2444, %v3165, 0
    %3194 = vmatprep.subr.mxu0 0.0
    %3195 = vmatpush1.msra.mxu0 %v3171
    %3196 = vmatprep.subr.mxu0 0.0
    %3197 = vmatpush1.msra.mxu0 %v3173
    %3198 = vmatprep.subr.mxu0 0.0
    %3199 = vmatpush1.msra.mxu0 %v3175
    %3200 = vmatprep.subr.mxu0 0.0
    %3201 = vmatpush1.msra.mxu0 %v3177
    %3202 = vmatprep.subr.mxu0 0.0
    %3203 = vmatpush1.msra.mxu0 0.0
    %3204 = vmatprep.subr.mxu0 0.0
    %3205 = vmatpush1.msra.mxu0 0.0
    %3206 = vmatprep.subr.mxu0 0.0
    %3207 = vmatpush1.msra.mxu0 0.0
    %3208 = vmatprep.subr.mxu0 0.0
    %3209 = vmatpush1.msra.mxu0 0.0
    %3210 = vmatprep.subr.mxu0 0.0
    %3211 = vmatpush1.msra.mxu0 0.0
    %3212 = vmatprep.subr.mxu0 0.0
    %3213 = vmatpush1.msra.mxu0 0.0
    %3214 = vmatprep.subr.mxu0 0.0
    %3215 = vmatpush1.msra.mxu0 0.0
    %3216 = vmatprep.subr.mxu0 0.0
    %3217 = vmatpush1.msra.mxu0 0.0
    %3218 = vmatprep.subr.mxu0 0.0
    %3219 = vmatpush1.msra.mxu0 0.0
    %3220 = vmatprep.subr.mxu0 0.0
    %3221 = vmatpush1.msra.mxu0 0.0
    %3222 = vmatprep.subr.mxu0 0.0
    %3223 = vmatpush1.msra.mxu0 0.0
    %3224 = vmatprep.subr.mxu0 0.0
    %3225 = vmatpush1.msra.mxu0 0.0
    %3226 = vmatprep.subr.mxu0 0.0
    %3227 = vmatpush1.msra.mxu0 0.0
    %3228 = vmatprep.subr.mxu0 0.0
    %3229 = vmatpush1.msra.mxu0 0.0
    %3230 = vmatprep.subr.mxu0 0.0
    %3231 = vmatpush1.msra.mxu0 0.0
    %3232 = vmatprep.subr.mxu0 0.0
    %3233 = vmatpush1.msra.mxu0 0.0
    %3234 = vmatprep.subr.mxu0 0.0
    %3235 = vmatpush1.msra.mxu0 0.0
    %3236 = vmatprep.subr.mxu0 0.0
    %3237 = vmatpush1.msra.mxu0 0.0
    %3238 = vmatprep.subr.mxu0 0.0
    %3239 = vmatpush1.msra.mxu0 0.0
    %3240 = vmatprep.subr.mxu0 0.0
    %3241 = vmatpush1.msra.mxu0 0.0
    %3242 = vmatprep.subr.mxu0 0.0
    %3243 = vmatpush1.msra.mxu0 0.0
    %3244 = vmatprep.subr.mxu0 0.0
    %3245 = vmatpush1.msra.mxu0 0.0
    %3246 = vmatprep.subr.mxu0 0.0
    %3247 = vmatpush1.msra.mxu0 0.0
    %3248 = vmatprep.subr.mxu0 0.0
    %3249 = vmatpush1.msra.mxu0 0.0
    %3250 = vmatprep.subr.mxu0 0.0
    %3251 = vmatpush1.msra.mxu0 0.0
    %3252 = vmatprep.subr.mxu0 0.0
    %3253 = vmatpush1.msra.mxu0 0.0
    %3254 = vmatprep.subr.mxu0 0.0
    %3255 = vmatpush1.msra.mxu0 0.0
    %3256 = vmatprep.subr.mxu0 0.0
    %3257 = vmatpush1.msra.mxu0 0.0
    %3258 = vmatprep.mubr.f32.mxu0 0.0
    %3259 = vmatmul.mubr.f32.gmra.mrb[0].mxu0 %v3183
    %v3260 = vpop.f32.mrb[0].mxu0
    %v3261 = vadd.f32 0.0, %v3260
    %v3262 = vpop.f32.mrb[0].mxu0
    %3263 = vmatprep.mubr.f32.mxu0 0.0
    %3264 = vmatmul.mubr.f32.gmra.mrb[0].mxu0 %v3186
    %v3265 = vpop.f32.mrb[0].mxu0
    %v3266 = vadd.f32 0.0, %v3265
    %v3267 = vpop.f32.mrb[0].mxu0
    %3268 = vmatprep.mubr.f32.mxu0 0.0
    %3269 = vmatmul.mubr.f32.gmra.mrb[0].mxu0 %v3189
    %v3270 = vpop.f32.mrb[0].mxu0
    %v3271 = vadd.f32 0.0, %v3270
    %v3272 = vpop.f32.mrb[0].mxu0
    %3273 = vmatprep.mubr.f32.mxu0 0.0
    %3274 = vmatmul.mubr.f32.gmra.mrb[0].mxu0 %v3192
    %v3275 = vpop.f32.mrb[0].mxu0
    %v3276 = vadd.f32 0.0, %v3275
    %v3277 = vpop.f32.mrb[0].mxu0
    %3278 = vdwg.mxu0
    %v3279 = vld [vmem:[%s10 + $0x10] sm:$0xff]
    %v3280 = vld [vmem:[%s10 + $0x18] sm:$0xff]
    %v3282 = vsel %vm2756, %v3261, 0
    %v3285 = vsel %vm2756, %v3266, 0
    %v3288 = vsel %vm2756, %v3271, 0
    %v3291 = vsel %vm2756, %v3276, 0
    %3293 = vmatprep.subr.mxu0 0.0
    %3294 = vmatpush1.msra.mxu0 %v3279
    %3295 = vmatprep.subr.mxu0 0.0
    %3296 = vmatpush1.msra.mxu0 %v3280
    %3297 = vmatprep.subr.mxu0 0.0
    %3298 = vmatpush1.msra.mxu0 0.0
    %3299 = vmatprep.subr.mxu0 0.0
    %3300 = vmatpush1.msra.mxu0 0.0
    %3301 = vmatprep.subr.mxu0 0.0
    %3302 = vmatpush1.msra.mxu0 0.0
    %3303 = vmatprep.subr.mxu0 0.0
    %3304 = vmatpush1.msra.mxu0 0.0
    %3305 = vmatprep.subr.mxu0 0.0
    %3306 = vmatpush1.msra.mxu0 0.0
    %3307 = vmatprep.subr.mxu0 0.0
    %3308 = vmatpush1.msra.mxu0 0.0
    %3309 = vmatprep.subr.mxu0 0.0
    %3310 = vmatpush1.msra.mxu0 0.0
    %3311 = vmatprep.subr.mxu0 0.0
    %3312 = vmatpush1.msra.mxu0 0.0
    %3313 = vmatprep.subr.mxu0 0.0
    %3314 = vmatpush1.msra.mxu0 0.0
    %3315 = vmatprep.subr.mxu0 0.0
    %3316 = vmatpush1.msra.mxu0 0.0
    %3317 = vmatprep.subr.mxu0 0.0
    %3318 = vmatpush1.msra.mxu0 0.0
    %3319 = vmatprep.subr.mxu0 0.0
    %3320 = vmatpush1.msra.mxu0 0.0
    %3321 = vmatprep.subr.mxu0 0.0
    %3322 = vmatpush1.msra.mxu0 0.0
    %3323 = vmatprep.subr.mxu0 0.0
    %3324 = vmatpush1.msra.mxu0 0.0
    %3325 = vmatprep.subr.mxu0 0.0
    %3326 = vmatpush1.msra.mxu0 0.0
    %3327 = vmatprep.subr.mxu0 0.0
    %3328 = vmatpush1.msra.mxu0 0.0
    %3329 = vmatprep.subr.mxu0 0.0
    %3330 = vmatpush1.msra.mxu0 0.0
    %3331 = vmatprep.subr.mxu0 0.0
    %3332 = vmatpush1.msra.mxu0 0.0
    %3333 = vmatprep.subr.mxu0 0.0
    %3334 = vmatpush1.msra.mxu0 0.0
    %3335 = vmatprep.subr.mxu0 0.0
    %3336 = vmatpush1.msra.mxu0 0.0
    %3337 = vmatprep.subr.mxu0 0.0
    %3338 = vmatpush1.msra.mxu0 0.0
    %3339 = vmatprep.subr.mxu0 0.0
    %3340 = vmatpush1.msra.mxu0 0.0
    %3341 = vmatprep.subr.mxu0 0.0
    %3342 = vmatpush1.msra.mxu0 0.0
    %3343 = vmatprep.subr.mxu0 0.0
    %3344 = vmatpush1.msra.mxu0 0.0
    %3345 = vmatprep.subr.mxu0 0.0
    %3346 = vmatpush1.msra.mxu0 0.0
    %3347 = vmatprep.subr.mxu0 0.0
    %3348 = vmatpush1.msra.mxu0 0.0
    %3349 = vmatprep.subr.mxu0 0.0
    %3350 = vmatpush1.msra.mxu0 0.0
    %3351 = vmatprep.subr.mxu0 0.0
    %3352 = vmatpush1.msra.mxu0 0.0
    %3353 = vmatprep.subr.mxu0 0.0
    %3354 = vmatpush1.msra.mxu0 0.0
    %3355 = vmatprep.subr.mxu0 0.0
    %3356 = vmatpush1.msra.mxu0 0.0
    %3357 = vmatprep.mubr.f32.mxu0 0.0
    %3358 = vmatmul.mubr.f32.gmra.mrb[0].mxu0 %v3282
    %v3359 = vpop.f32.mrb[0].mxu0
    %v3360 = vadd.f32 0.0, %v3359
    %v3361 = vpop.f32.mrb[0].mxu0
    %3362 = vmatprep.mubr.f32.mxu0 0.0
    %3363 = vmatmul.mubr.f32.gmra.mrb[0].mxu0 %v3285
    %v3364 = vpop.f32.mrb[0].mxu0
    %v3365 = vadd.f32 0.0, %v3364
    %v3366 = vpop.f32.mrb[0].mxu0
    %3367 = vmatprep.mubr.f32.mxu0 0.0
    %3368 = vmatmul.mubr.f32.gmra.mrb[0].mxu0 %v3288
    %v3369 = vpop.f32.mrb[0].mxu0
    %v3370 = vadd.f32 0.0, %v3369
    %v3371 = vpop.f32.mrb[0].mxu0
    %3372 = vmatprep.mubr.f32.mxu0 0.0
    %3373 = vmatmul.mubr.f32.gmra.mrb[0].mxu0 %v3291
    %v3374 = vpop.f32.mrb[0].mxu0
    %v3375 = vadd.f32 0.0, %v3374
    %v3376 = vpop.f32.mrb[0].mxu0
    %3377 = vdwg.mxu0
    %v3379 = vsel %vm2756, %v2985, 0
    %v3382 = vsel %vm2756, %v2990, 0
    %v3385 = vsel %vm2756, %v2995, 0
    %v3388 = vsel %vm2756, %v3000, 0
    %3390 = vmatprep.subr.mxu0 0.0
    %3391 = vmatpush1.msra.mxu0 %v3003
    %3392 = vmatprep.subr.mxu0 0.0
    %3393 = vmatpush1.msra.mxu0 %v3004
    %3394 = vmatprep.subr.mxu0 0.0
    %3395 = vmatpush1.msra.mxu0 0.0
    %3396 = vmatprep.subr.mxu0 0.0
    %3397 = vmatpush1.msra.mxu0 0.0
    %3398 = vmatprep.subr.mxu0 0.0
    %3399 = vmatpush1.msra.mxu0 0.0
    %3400 = vmatprep.subr.mxu0 0.0
    %3401 = vmatpush1.msra.mxu0 0.0
    %3402 = vmatprep.subr.mxu0 0.0
    %3403 = vmatpush1.msra.mxu0 0.0
    %3404 = vmatprep.subr.mxu0 0.0
    %3405 = vmatpush1.msra.mxu0 0.0
    %3406 = vmatprep.subr.mxu0 0.0
    %3407 = vmatpush1.msra.mxu0 0.0
    %3408 = vmatprep.subr.mxu0 0.0
    %3409 = vmatpush1.msra.mxu0 0.0
    %3410 = vmatprep.subr.mxu0 0.0
    %3411 = vmatpush1.msra.mxu0 0.0
    %3412 = vmatprep.subr.mxu0 0.0
    %3413 = vmatpush1.msra.mxu0 0.0
    %3414 = vmatprep.subr.mxu0 0.0
    %3415 = vmatpush1.msra.mxu0 0.0
    %3416 = vmatprep.subr.mxu0 0.0
    %3417 = vmatpush1.msra.mxu0 0.0
    %3418 = vmatprep.subr.mxu0 0.0
    %3419 = vmatpush1.msra.mxu0 0.0
    %3420 = vmatprep.subr.mxu0 0.0
    %3421 = vmatpush1.msra.mxu0 0.0
    %3422 = vmatprep.subr.mxu0 0.0
    %3423 = vmatpush1.msra.mxu0 0.0
    %3424 = vmatprep.subr.mxu0 0.0
    %3425 = vmatpush1.msra.mxu0 0.0
    %3426 = vmatprep.subr.mxu0 0.0
    %3427 = vmatpush1.msra.mxu0 0.0
    %3428 = vmatprep.subr.mxu0 0.0
    %3429 = vmatpush1.msra.mxu0 0.0
    %3430 = vmatprep.subr.mxu0 0.0
    %3431 = vmatpush1.msra.mxu0 0.0
    %3432 = vmatprep.subr.mxu0 0.0
    %3433 = vmatpush1.msra.mxu0 0.0
    %3434 = vmatprep.subr.mxu0 0.0
    %3435 = vmatpush1.msra.mxu0 0.0
    %3436 = vmatprep.subr.mxu0 0.0
    %3437 = vmatpush1.msra.mxu0 0.0
    %3438 = vmatprep.subr.mxu0 0.0
    %3439 = vmatpush1.msra.mxu0 0.0
    %3440 = vmatprep.subr.mxu0 0.0
    %3441 = vmatpush1.msra.mxu0 0.0
    %3442 = vmatprep.subr.mxu0 0.0
    %3443 = vmatpush1.msra.mxu0 0.0
    %3444 = vmatprep.subr.mxu0 0.0
    %3445 = vmatpush1.msra.mxu0 0.0
    %3446 = vmatprep.subr.mxu0 0.0
    %3447 = vmatpush1.msra.mxu0 0.0
    %3448 = vmatprep.subr.mxu0 0.0
    %3449 = vmatpush1.msra.mxu0 0.0
    %3450 = vmatprep.subr.mxu0 0.0
    %3451 = vmatpush1.msra.mxu0 0.0
    %3452 = vmatprep.subr.mxu0 0.0
    %3453 = vmatpush1.msra.mxu0 0.0
    %3454 = vmatprep.mubr.f32.mxu0 0.0
    %3455 = vmatmul.mubr.f32.gmra.mrb[0].mxu0 %v3379
    %v3456 = vpop.f32.mrb[0].mxu0
    %v3457 = vadd.f32 %v3360, %v3456
    %v3458 = vpop.f32.mrb[0].mxu0
    %3459 = vmatprep.mubr.f32.mxu0 0.0
    %3460 = vmatmul.mubr.f32.gmra.mrb[0].mxu0 %v3382
    %v3461 = vpop.f32.mrb[0].mxu0
    %v3462 = vadd.f32 %v3365, %v3461
    %v3463 = vpop.f32.mrb[0].mxu0
    %3464 = vmatprep.mubr.f32.mxu0 0.0
    %3465 = vmatmul.mubr.f32.gmra.mrb[0].mxu0 %v3385
    %v3466 = vpop.f32.mrb[0].mxu0
    %v3467 = vadd.f32 %v3370, %v3466
    %v3468 = vpop.f32.mrb[0].mxu0
    %3469 = vmatprep.mubr.f32.mxu0 0.0
    %3470 = vmatmul.mubr.f32.gmra.mrb[0].mxu0 %v3388
    %v3471 = vpop.f32.mrb[0].mxu0
    %v3472 = vadd.f32 %v3375, %v3471
    %v3473 = vpop.f32.mrb[0].mxu0
    %3474 = vdwg.mxu0
    %3475 = vrot.lane.b32.xlu0 %v2740, 96
    %v3476 = vpop.permute.xlu0 %3475
    %3477 = vrot.lane.b32.xlu0 %v2741, 96
    %v3478 = vpop.permute.xlu0 %3477
    %3479 = vrot.lane.b32.xlu0 %v2742, 96
    %v3480 = vpop.permute.xlu0 %3479
    %3481 = vrot.lane.b32.xlu0 %v2743, 96
    %v3482 = vpop.permute.xlu0 %3481
    %3483 = vrot.lane.b32.xlu0 %v2718, 32
    %v3484 = vpop.permute.xlu0 %3483
    %3485 = vrot.lane.b32.xlu0 %v2724, 32
    %v3486 = vpop.permute.xlu0 %3485
    %3487 = vrot.lane.b32.xlu0 %v2730, 32
    %v3488 = vpop.permute.xlu0 %3487
    %3489 = vrot.lane.b32.xlu0 %v2736, 32
    %v3490 = vpop.permute.xlu0 %3489
    %v3491 = vsel %vm2756, %v3476, 0
    %v3493 = vsel %vm2756, %v3478, 0
    %v3495 = vsel %vm2756, %v3480, 0
    %v3497 = vsel %vm2756, %v3482, 0
    %v3499 = vsel %vm2756, %v3484, 0
    %v3501 = vsel %vm2756, %v3486, 0
    %v3503 = vsel %vm2756, %v3488, 0
    %v3505 = vsel %vm2756, %v3490, 0
    %3507 = vmatprep.subr.mxu0 0.0
    %3508 = vmatpush1.xpose.msra.mxu0 %v3499
    %3509 = vmatprep.subr.mxu0 0.0
    %3510 = vmatpush1.xpose.msra.mxu0 %v3501
    %3511 = vmatprep.subr.mxu0 0.0
    %3512 = vmatpush1.xpose.msra.mxu0 %v3503
    %3513 = vmatprep.subr.mxu0 0.0
    %3514 = vmatpush1.xpose.msra.mxu0 %v3505
    %3515 = vmatprep.subr.mxu0 0.0
    %3516 = vmatpush1.xpose.msra.mxu0 0.0
    %3517 = vmatprep.subr.mxu0 0.0
    %3518 = vmatpush1.xpose.msra.mxu0 0.0
    %3519 = vmatprep.subr.mxu0 0.0
    %3520 = vmatpush1.xpose.msra.mxu0 0.0
    %3521 = vmatprep.subr.mxu0 0.0
    %3522 = vmatpush1.xpose.msra.mxu0 0.0
    %3523 = vmatprep.subr.mxu0 0.0
    %3524 = vmatpush1.xpose.msra.mxu0 0.0
    %3525 = vmatprep.subr.mxu0 0.0
    %3526 = vmatpush1.xpose.msra.mxu0 0.0
    %3527 = vmatprep.subr.mxu0 0.0
    %3528 = vmatpush1.xpose.msra.mxu0 0.0
    %3529 = vmatprep.subr.mxu0 0.0
    %3530 = vmatpush1.xpose.msra.mxu0 0.0
    %3531 = vmatprep.subr.mxu0 0.0
    %3532 = vmatpush1.xpose.msra.mxu0 0.0
    %3533 = vmatprep.subr.mxu0 0.0
    %3534 = vmatpush1.xpose.msra.mxu0 0.0
    %3535 = vmatprep.subr.mxu0 0.0
    %3536 = vmatpush1.xpose.msra.mxu0 0.0
    %3537 = vmatprep.subr.mxu0 0.0
    %3538 = vmatpush1.xpose.msra.mxu0 0.0
    %3539 = vmatprep.subr.mxu0 0.0
    %3540 = vmatpush1.xpose.msra.mxu0 0.0
    %3541 = vmatprep.subr.mxu0 0.0
    %3542 = vmatpush1.xpose.msra.mxu0 0.0
    %3543 = vmatprep.subr.mxu0 0.0
    %3544 = vmatpush1.xpose.msra.mxu0 0.0
    %3545 = vmatprep.subr.mxu0 0.0
    %3546 = vmatpush1.xpose.msra.mxu0 0.0
    %3547 = vmatprep.subr.mxu0 0.0
    %3548 = vmatpush1.xpose.msra.mxu0 0.0
    %3549 = vmatprep.subr.mxu0 0.0
    %3550 = vmatpush1.xpose.msra.mxu0 0.0
    %3551 = vmatprep.subr.mxu0 0.0
    %3552 = vmatpush1.xpose.msra.mxu0 0.0
    %3553 = vmatprep.subr.mxu0 0.0
    %3554 = vmatpush1.xpose.msra.mxu0 0.0
    %3555 = vmatprep.subr.mxu0 0.0
    %3556 = vmatpush1.xpose.msra.mxu0 0.0
    %3557 = vmatprep.subr.mxu0 0.0
    %3558 = vmatpush1.xpose.msra.mxu0 0.0
    %3559 = vmatprep.subr.mxu0 0.0
    %3560 = vmatpush1.xpose.msra.mxu0 0.0
    %3561 = vmatprep.subr.mxu0 0.0
    %3562 = vmatpush1.xpose.msra.mxu0 0.0
    %3563 = vmatprep.subr.mxu0 0.0
    %3564 = vmatpush1.xpose.msra.mxu0 0.0
    %3565 = vmatprep.subr.mxu0 0.0
    %3566 = vmatpush1.xpose.msra.mxu0 0.0
    %3567 = vmatprep.subr.mxu0 0.0
    %3568 = vmatpush1.xpose.msra.mxu0 0.0
    %3569 = vmatprep.subr.mxu0 0.0
    %3570 = vmatpush1.xpose.msra.mxu0 0.0
    %3571 = vmatprep.mubr.f32.mxu0 0.0
    %3572 = vmatmul.mubr.f32.gmra.mrb[0].mxu0 %v3491
    %v3573 = vpop.f32.mrb[0].mxu0
    %v3574 = vadd.f32 0.0, %v3573
    %v3575 = vpop.f32.mrb[0].mxu0
    %3576 = vmatprep.mubr.f32.mxu0 0.0
    %3577 = vmatmul.mubr.f32.gmra.mrb[0].mxu0 %v3493
    %v3578 = vpop.f32.mrb[0].mxu0
    %v3579 = vadd.f32 0.0, %v3578
    %v3580 = vpop.f32.mrb[0].mxu0
    %3581 = vmatprep.mubr.f32.mxu0 0.0
    %3582 = vmatmul.mubr.f32.gmra.mrb[0].mxu0 %v3495
    %v3583 = vpop.f32.mrb[0].mxu0
    %v3584 = vadd.f32 0.0, %v3583
    %v3585 = vpop.f32.mrb[0].mxu0
    %3586 = vmatprep.mubr.f32.mxu0 0.0
    %3587 = vmatmul.mubr.f32.gmra.mrb[0].mxu0 %v3497
    %v3588 = vpop.f32.mrb[0].mxu0
    %v3589 = vadd.f32 0.0, %v3588
    %v3590 = vpop.f32.mrb[0].mxu0
    %3591 = vdwg.mxu0
    %v3592 = vsel %vm2444, %v3574, -inf
    %3593 = vmax.xlane.f32.xlu0 %v3592
    %v3594 = vpop.xlane.xlu0 %3593
    %v3595 = vsel %vm2444, %v3579, -inf
    %3596 = vmax.xlane.f32.xlu0 %v3595
    %v3597 = vpop.xlane.xlu0 %3596
    %v3598 = vsel %vm2444, %v3584, -inf
    %3599 = vmax.xlane.f32.xlu0 %v3598
    %v3600 = vpop.xlane.xlu0 %3599
    %v3601 = vsel %vm2444, %v3589, -inf
    %3602 = vmax.xlane.f32.xlu0 %v3601
    %v3603 = vpop.xlane.xlu0 %3602
    %v3604 = vsub.f32 %v3574, %v3594
    %v3605 = vsub.f32 %v3579, %v3597
    %v3606 = vsub.f32 %v3584, %v3600
    %v3607 = vsub.f32 %v3589, %v3603
    %v3608 = vmul.f32 %v3604, 1.442695
    %v3609 = vpow.pop %v3608
    %v3610 = vmul.f32 %v3605, 1.442695
    %v3611 = vpow.pop %v3610
    %v3612 = vmul.f32 %v3606, 1.442695
    %v3613 = vpow.pop %v3612
    %v3614 = vmul.f32 %v3607, 1.442695
    %v3615 = vpow.pop %v3614
    %v3616 = vsel %vm2444, %v3609, 0.0
    %3617 = vadd.xlane.f32.xlu0 %v3616
    %v3618 = vpop.xlane.xlu0 %3617
    %v3619 = vsel %vm2444, %v3611, 0.0
    %3620 = vadd.xlane.f32.xlu0 %v3619
    %v3621 = vpop.xlane.xlu0 %3620
    %v3622 = vsel %vm2444, %v3613, 0.0
    %3623 = vadd.xlane.f32.xlu0 %v3622
    %v3624 = vpop.xlane.xlu0 %3623
    %v3625 = vsel %vm2444, %v3615, 0.0
    %3626 = vadd.xlane.f32.xlu0 %v3625
    %v3627 = vpop.xlane.xlu0 %3626
    %v3628 = vrcp.pop %v3618
    %v3629 = vrcp.pop %v3621
    %v3630 = vrcp.pop %v3624
    %v3631 = vrcp.pop %v3627
    %v3632 = vmul.f32 %v3609, %v3628
    %v3633 = vmul.f32 %v3611, %v3629
    %v3634 = vmul.f32 %v3613, %v3630
    %v3635 = vmul.f32 %v3615, %v3631
    %3636 = vrot.lane.b32.xlu0 %v2720, 96
    %v3637 = vpop.permute.xlu0 %3636
    %3638 = vrot.lane.b32.xlu0 %v2726, 96
    %v3639 = vpop.permute.xlu0 %3638
    %3640 = vrot.lane.b32.xlu0 %v2732, 96
    %v3641 = vpop.permute.xlu0 %3640
    %3642 = vrot.lane.b32.xlu0 %v2738, 96
    %v3643 = vpop.permute.xlu0 %3642
    %v3649 = vsel %vm2444, %v3632, 0
    %v3652 = vsel %vm2444, %v3633, 0
    %v3655 = vsel %vm2444, %v3634, 0
    %v3658 = vsel %vm2444, %v3635, 0
    %3660 = vmatprep.subr.mxu0 0.0
    %3661 = vmatpush1.msra.mxu0 %v3637
    %3662 = vmatprep.subr.mxu0 0.0
    %3663 = vmatpush1.msra.mxu0 %v3639
    %3664 = vmatprep.subr.mxu0 0.0
    %3665 = vmatpush1.msra.mxu0 %v3641
    %3666 = vmatprep.subr.mxu0 0.0
    %3667 = vmatpush1.msra.mxu0 %v3643
    %3668 = vmatprep.subr.mxu0 0.0
    %3669 = vmatpush1.msra.mxu0 0.0
    %3670 = vmatprep.subr.mxu0 0.0
    %3671 = vmatpush1.msra.mxu0 0.0
    %3672 = vmatprep.subr.mxu0 0.0
    %3673 = vmatpush1.msra.mxu0 0.0
    %3674 = vmatprep.subr.mxu0 0.0
    %3675 = vmatpush1.msra.mxu0 0.0
    %3676 = vmatprep.subr.mxu0 0.0
    %3677 = vmatpush1.msra.mxu0 0.0
    %3678 = vmatprep.subr.mxu0 0.0
    %3679 = vmatpush1.msra.mxu0 0.0
    %3680 = vmatprep.subr.mxu0 0.0
    %3681 = vmatpush1.msra.mxu0 0.0
    %3682 = vmatprep.subr.mxu0 0.0
    %3683 = vmatpush1.msra.mxu0 0.0
    %3684 = vmatprep.subr.mxu0 0.0
    %3685 = vmatpush1.msra.mxu0 0.0
    %3686 = vmatprep.subr.mxu0 0.0
    %3687 = vmatpush1.msra.mxu0 0.0
    %3688 = vmatprep.subr.mxu0 0.0
    %3689 = vmatpush1.msra.mxu0 0.0
    %3690 = vmatprep.subr.mxu0 0.0
    %3691 = vmatpush1.msra.mxu0 0.0
    %3692 = vmatprep.subr.mxu0 0.0
    %3693 = vmatpush1.msra.mxu0 0.0
    %3694 = vmatprep.subr.mxu0 0.0
    %3695 = vmatpush1.msra.mxu0 0.0
    %3696 = vmatprep.subr.mxu0 0.0
    %3697 = vmatpush1.msra.mxu0 0.0
    %3698 = vmatprep.subr.mxu0 0.0
    %3699 = vmatpush1.msra.mxu0 0.0
    %3700 = vmatprep.subr.mxu0 0.0
    %3701 = vmatpush1.msra.mxu0 0.0
    %3702 = vmatprep.subr.mxu0 0.0
    %3703 = vmatpush1.msra.mxu0 0.0
    %3704 = vmatprep.subr.mxu0 0.0
    %3705 = vmatpush1.msra.mxu0 0.0
    %3706 = vmatprep.subr.mxu0 0.0
    %3707 = vmatpush1.msra.mxu0 0.0
    %3708 = vmatprep.subr.mxu0 0.0
    %3709 = vmatpush1.msra.mxu0 0.0
    %3710 = vmatprep.subr.mxu0 0.0
    %3711 = vmatpush1.msra.mxu0 0.0
    %3712 = vmatprep.subr.mxu0 0.0
    %3713 = vmatpush1.msra.mxu0 0.0
    %3714 = vmatprep.subr.mxu0 0.0
    %3715 = vmatpush1.msra.mxu0 0.0
    %3716 = vmatprep.subr.mxu0 0.0
    %3717 = vmatpush1.msra.mxu0 0.0
    %3718 = vmatprep.subr.mxu0 0.0
    %3719 = vmatpush1.msra.mxu0 0.0
    %3720 = vmatprep.subr.mxu0 0.0
    %3721 = vmatpush1.msra.mxu0 0.0
    %3722 = vmatprep.subr.mxu0 0.0
    %3723 = vmatpush1.msra.mxu0 0.0
    %3724 = vmatprep.mubr.f32.mxu0 0.0
    %3725 = vmatmul.mubr.f32.gmra.mrb[0].mxu0 %v3649
    %v3726 = vpop.f32.mrb[0].mxu0
    %v3727 = vadd.f32 0.0, %v3726
    %v3728 = vpop.f32.mrb[0].mxu0
    %3729 = vmatprep.mubr.f32.mxu0 0.0
    %3730 = vmatmul.mubr.f32.gmra.mrb[0].mxu0 %v3652
    %v3731 = vpop.f32.mrb[0].mxu0
    %v3732 = vadd.f32 0.0, %v3731
    %v3733 = vpop.f32.mrb[0].mxu0
    %3734 = vmatprep.mubr.f32.mxu0 0.0
    %3735 = vmatmul.mubr.f32.gmra.mrb[0].mxu0 %v3655
    %v3736 = vpop.f32.mrb[0].mxu0
    %v3737 = vadd.f32 0.0, %v3736
    %v3738 = vpop.f32.mrb[0].mxu0
    %3739 = vmatprep.mubr.f32.mxu0 0.0
    %3740 = vmatmul.mubr.f32.gmra.mrb[0].mxu0 %v3658
    %v3741 = vpop.f32.mrb[0].mxu0
    %v3742 = vadd.f32 0.0, %v3741
    %v3743 = vpop.f32.mrb[0].mxu0
    %3744 = vdwg.mxu0
    %v3745 = vld [vmem:[%s10 + $0x20] sm:$0xff]
    %v3746 = vld [vmem:[%s10 + $0x28] sm:$0xff]
    %v3748 = vsel %vm2756, %v3727, 0
    %v3751 = vsel %vm2756, %v3732, 0
    %v3754 = vsel %vm2756, %v3737, 0
    %v3757 = vsel %vm2756, %v3742, 0
    %3759 = vmatprep.subr.mxu0 0.0
    %3760 = vmatpush1.msra.mxu0 %v3745
    %3761 = vmatprep.subr.mxu0 0.0
    %3762 = vmatpush1.msra.mxu0 %v3746
    %3763 = vmatprep.subr.mxu0 0.0
    %3764 = vmatpush1.msra.mxu0 0.0
    %3765 = vmatprep.subr.mxu0 0.0
    %3766 = vmatpush1.msra.mxu0 0.0
    %3767 = vmatprep.subr.mxu0 0.0
    %3768 = vmatpush1.msra.mxu0 0.0
    %3769 = vmatprep.subr.mxu0 0.0
    %3770 = vmatpush1.msra.mxu0 0.0
    %3771 = vmatprep.subr.mxu0 0.0
    %3772 = vmatpush1.msra.mxu0 0.0
    %3773 = vmatprep.subr.mxu0 0.0
    %3774 = vmatpush1.msra.mxu0 0.0
    %3775 = vmatprep.subr.mxu0 0.0
    %3776 = vmatpush1.msra.mxu0 0.0
    %3777 = vmatprep.subr.mxu0 0.0
    %3778 = vmatpush1.msra.mxu0 0.0
    %3779 = vmatprep.subr.mxu0 0.0
    %3780 = vmatpush1.msra.mxu0 0.0
    %3781 = vmatprep.subr.mxu0 0.0
    %3782 = vmatpush1.msra.mxu0 0.0
    %3783 = vmatprep.subr.mxu0 0.0
    %3784 = vmatpush1.msra.mxu0 0.0
    %3785 = vmatprep.subr.mxu0 0.0
    %3786 = vmatpush1.msra.mxu0 0.0
    %3787 = vmatprep.subr.mxu0 0.0
    %3788 = vmatpush1.msra.mxu0 0.0
    %3789 = vmatprep.subr.mxu0 0.0
    %3790 = vmatpush1.msra.mxu0 0.0
    %3791 = vmatprep.subr.mxu0 0.0
    %3792 = vmatpush1.msra.mxu0 0.0
    %3793 = vmatprep.subr.mxu0 0.0
    %3794 = vmatpush1.msra.mxu0 0.0
    %3795 = vmatprep.subr.mxu0 0.0
    %3796 = vmatpush1.msra.mxu0 0.0
    %3797 = vmatprep.subr.mxu0 0.0
    %3798 = vmatpush1.msra.mxu0 0.0
    %3799 = vmatprep.subr.mxu0 0.0
    %3800 = vmatpush1.msra.mxu0 0.0
    %3801 = vmatprep.subr.mxu0 0.0
    %3802 = vmatpush1.msra.mxu0 0.0
    %3803 = vmatprep.subr.mxu0 0.0
    %3804 = vmatpush1.msra.mxu0 0.0
    %3805 = vmatprep.subr.mxu0 0.0
    %3806 = vmatpush1.msra.mxu0 0.0
    %3807 = vmatprep.subr.mxu0 0.0
    %3808 = vmatpush1.msra.mxu0 0.0
    %3809 = vmatprep.subr.mxu0 0.0
    %3810 = vmatpush1.msra.mxu0 0.0
    %3811 = vmatprep.subr.mxu0 0.0
    %3812 = vmatpush1.msra.mxu0 0.0
    %3813 = vmatprep.subr.mxu0 0.0
    %3814 = vmatpush1.msra.mxu0 0.0
    %3815 = vmatprep.subr.mxu0 0.0
    %3816 = vmatpush1.msra.mxu0 0.0
    %3817 = vmatprep.subr.mxu0 0.0
    %3818 = vmatpush1.msra.mxu0 0.0
    %3819 = vmatprep.subr.mxu0 0.0
    %3820 = vmatpush1.msra.mxu0 0.0
    %3821 = vmatprep.subr.mxu0 0.0
    %3822 = vmatpush1.msra.mxu0 0.0
    %3823 = vmatprep.mubr.f32.mxu0 0.0
    %3824 = vmatmul.mubr.f32.gmra.mrb[0].mxu0 %v3748
    %v3825 = vpop.f32.mrb[0].mxu0
    %v3826 = vadd.f32 0.0, %v3825
    %v3827 = vpop.f32.mrb[0].mxu0
    %3828 = vmatprep.mubr.f32.mxu0 0.0
    %3829 = vmatmul.mubr.f32.gmra.mrb[0].mxu0 %v3751
    %v3830 = vpop.f32.mrb[0].mxu0
    %v3831 = vadd.f32 0.0, %v3830
    %v3832 = vpop.f32.mrb[0].mxu0
    %3833 = vmatprep.mubr.f32.mxu0 0.0
    %3834 = vmatmul.mubr.f32.gmra.mrb[0].mxu0 %v3754
    %v3835 = vpop.f32.mrb[0].mxu0
    %v3836 = vadd.f32 0.0, %v3835
    %v3837 = vpop.f32.mrb[0].mxu0
    %3838 = vmatprep.mubr.f32.mxu0 0.0
    %3839 = vmatmul.mubr.f32.gmra.mrb[0].mxu0 %v3757
    %v3840 = vpop.f32.mrb[0].mxu0
    %v3841 = vadd.f32 0.0, %v3840
    %v3842 = vpop.f32.mrb[0].mxu0
    %3843 = vdwg.mxu0
    %v3844 = vadd.f32 %v3457, %v3826
    %v3845 = vadd.f32 %v3462, %v3831
    %v3846 = vadd.f32 %v3467, %v3836
    %v3847 = vadd.f32 %v3472, %v3841
    %3848 = vrot.lane.b32.xlu0 %v2740, 80
    %v3849 = vpop.permute.xlu0 %3848
    %3850 = vrot.lane.b32.xlu0 %v2741, 80
    %v3851 = vpop.permute.xlu0 %3850
    %3852 = vrot.lane.b32.xlu0 %v2742, 80
    %v3853 = vpop.permute.xlu0 %3852
    %3854 = vrot.lane.b32.xlu0 %v2743, 80
    %v3855 = vpop.permute.xlu0 %3854
    %3856 = vrot.lane.b32.xlu0 %v2718, 16
    %v3857 = vpop.permute.xlu0 %3856
    %3858 = vrot.lane.b32.xlu0 %v2724, 16
    %v3859 = vpop.permute.xlu0 %3858
    %3860 = vrot.lane.b32.xlu0 %v2730, 16
    %v3861 = vpop.permute.xlu0 %3860
    %3862 = vrot.lane.b32.xlu0 %v2736, 16
    %v3863 = vpop.permute.xlu0 %3862
    %v3864 = vsel %vm2756, %v3849, 0
    %v3866 = vsel %vm2756, %v3851, 0
    %v3868 = vsel %vm2756, %v3853, 0
    %v3870 = vsel %vm2756, %v3855, 0
    %v3872 = vsel %vm2756, %v3857, 0
    %v3874 = vsel %vm2756, %v3859, 0
    %v3876 = vsel %vm2756, %v3861, 0
    %v3878 = vsel %vm2756, %v3863, 0
    %3880 = vmatprep.subr.mxu0 0.0
    %3881 = vmatpush1.xpose.msra.mxu0 %v3872
    %3882 = vmatprep.subr.mxu0 0.0
    %3883 = vmatpush1.xpose.msra.mxu0 %v3874
    %3884 = vmatprep.subr.mxu0 0.0
    %3885 = vmatpush1.xpose.msra.mxu0 %v3876
    %3886 = vmatprep.subr.mxu0 0.0
    %3887 = vmatpush1.xpose.msra.mxu0 %v3878
    %3888 = vmatprep.subr.mxu0 0.0
    %3889 = vmatpush1.xpose.msra.mxu0 0.0
    %3890 = vmatprep.subr.mxu0 0.0
    %3891 = vmatpush1.xpose.msra.mxu0 0.0
    %3892 = vmatprep.subr.mxu0 0.0
    %3893 = vmatpush1.xpose.msra.mxu0 0.0
    %3894 = vmatprep.subr.mxu0 0.0
    %3895 = vmatpush1.xpose.msra.mxu0 0.0
    %3896 = vmatprep.subr.mxu0 0.0
    %3897 = vmatpush1.xpose.msra.mxu0 0.0
    %3898 = vmatprep.subr.mxu0 0.0
    %3899 = vmatpush1.xpose.msra.mxu0 0.0
    %3900 = vmatprep.subr.mxu0 0.0
    %3901 = vmatpush1.xpose.msra.mxu0 0.0
    %3902 = vmatprep.subr.mxu0 0.0
    %3903 = vmatpush1.xpose.msra.mxu0 0.0
    %3904 = vmatprep.subr.mxu0 0.0
    %3905 = vmatpush1.xpose.msra.mxu0 0.0
    %3906 = vmatprep.subr.mxu0 0.0
    %3907 = vmatpush1.xpose.msra.mxu0 0.0
    %3908 = vmatprep.subr.mxu0 0.0
    %3909 = vmatpush1.xpose.msra.mxu0 0.0
    %3910 = vmatprep.subr.mxu0 0.0
    %3911 = vmatpush1.xpose.msra.mxu0 0.0
    %3912 = vmatprep.subr.mxu0 0.0
    %3913 = vmatpush1.xpose.msra.mxu0 0.0
    %3914 = vmatprep.subr.mxu0 0.0
    %3915 = vmatpush1.xpose.msra.mxu0 0.0
    %3916 = vmatprep.subr.mxu0 0.0
    %3917 = vmatpush1.xpose.msra.mxu0 0.0
    %3918 = vmatprep.subr.mxu0 0.0
    %3919 = vmatpush1.xpose.msra.mxu0 0.0
    %3920 = vmatprep.subr.mxu0 0.0
    %3921 = vmatpush1.xpose.msra.mxu0 0.0
    %3922 = vmatprep.subr.mxu0 0.0
    %3923 = vmatpush1.xpose.msra.mxu0 0.0
    %3924 = vmatprep.subr.mxu0 0.0
    %3925 = vmatpush1.xpose.msra.mxu0 0.0
    %3926 = vmatprep.subr.mxu0 0.0
    %3927 = vmatpush1.xpose.msra.mxu0 0.0
    %3928 = vmatprep.subr.mxu0 0.0
    %3929 = vmatpush1.xpose.msra.mxu0 0.0
    %3930 = vmatprep.subr.mxu0 0.0
    %3931 = vmatpush1.xpose.msra.mxu0 0.0
    %3932 = vmatprep.subr.mxu0 0.0
    %3933 = vmatpush1.xpose.msra.mxu0 0.0
    %3934 = vmatprep.subr.mxu0 0.0
    %3935 = vmatpush1.xpose.msra.mxu0 0.0
    %3936 = vmatprep.subr.mxu0 0.0
    %3937 = vmatpush1.xpose.msra.mxu0 0.0
    %3938 = vmatprep.subr.mxu0 0.0
    %3939 = vmatpush1.xpose.msra.mxu0 0.0
    %3940 = vmatprep.subr.mxu0 0.0
    %3941 = vmatpush1.xpose.msra.mxu0 0.0
    %3942 = vmatprep.subr.mxu0 0.0
    %3943 = vmatpush1.xpose.msra.mxu0 0.0
    %3944 = vmatprep.mubr.f32.mxu0 0.0
    %3945 = vmatmul.mubr.f32.gmra.mrb[0].mxu0 %v3864
    %v3946 = vpop.f32.mrb[0].mxu0
    %v3947 = vadd.f32 0.0, %v3946
    %v3948 = vpop.f32.mrb[0].mxu0
    %3949 = vmatprep.mubr.f32.mxu0 0.0
    %3950 = vmatmul.mubr.f32.gmra.mrb[0].mxu0 %v3866
    %v3951 = vpop.f32.mrb[0].mxu0
    %v3952 = vadd.f32 0.0, %v3951
    %v3953 = vpop.f32.mrb[0].mxu0
    %3954 = vmatprep.mubr.f32.mxu0 0.0
    %3955 = vmatmul.mubr.f32.gmra.mrb[0].mxu0 %v3868
    %v3956 = vpop.f32.mrb[0].mxu0
    %v3957 = vadd.f32 0.0, %v3956
    %v3958 = vpop.f32.mrb[0].mxu0
    %3959 = vmatprep.mubr.f32.mxu0 0.0
    %3960 = vmatmul.mubr.f32.gmra.mrb[0].mxu0 %v3870
    %v3961 = vpop.f32.mrb[0].mxu0
    %v3962 = vadd.f32 0.0, %v3961
    %v3963 = vpop.f32.mrb[0].mxu0
    %3964 = vdwg.mxu0
    %v3965 = vsel %vm2444, %v3947, -inf
    %3966 = vmax.xlane.f32.xlu0 %v3965
    %v3967 = vpop.xlane.xlu0 %3966
    %v3968 = vsel %vm2444, %v3952, -inf
    %3969 = vmax.xlane.f32.xlu0 %v3968
    %v3970 = vpop.xlane.xlu0 %3969
    %v3971 = vsel %vm2444, %v3957, -inf
    %3972 = vmax.xlane.f32.xlu0 %v3971
    %v3973 = vpop.xlane.xlu0 %3972
    %v3974 = vsel %vm2444, %v3962, -inf
    %3975 = vmax.xlane.f32.xlu0 %v3974
    %v3976 = vpop.xlane.xlu0 %3975
    %v3977 = vsub.f32 %v3947, %v3967
    %v3978 = vsub.f32 %v3952, %v3970
    %v3979 = vsub.f32 %v3957, %v3973
    %v3980 = vsub.f32 %v3962, %v3976
    %v3981 = vmul.f32 %v3977, 1.442695
    %v3982 = vpow.pop %v3981
    %v3983 = vmul.f32 %v3978, 1.442695
    %v3984 = vpow.pop %v3983
    %v3985 = vmul.f32 %v3979, 1.442695
    %v3986 = vpow.pop %v3985
    %v3987 = vmul.f32 %v3980, 1.442695
    %v3988 = vpow.pop %v3987
    %v3989 = vsel %vm2444, %v3982, 0.0
    %3990 = vadd.xlane.f32.xlu0 %v3989
    %v3991 = vpop.xlane.xlu0 %3990
    %v3992 = vsel %vm2444, %v3984, 0.0
    %3993 = vadd.xlane.f32.xlu0 %v3992
    %v3994 = vpop.xlane.xlu0 %3993
    %v3995 = vsel %vm2444, %v3986, 0.0
    %3996 = vadd.xlane.f32.xlu0 %v3995
    %v3997 = vpop.xlane.xlu0 %3996
    %v3998 = vsel %vm2444, %v3988, 0.0
    %3999 = vadd.xlane.f32.xlu0 %v3998
    %v4000 = vpop.xlane.xlu0 %3999
    %v4001 = vrcp.pop %v3991
    %v4002 = vrcp.pop %v3994
    %v4003 = vrcp.pop %v3997
    %v4004 = vrcp.pop %v4000
    %v4005 = vmul.f32 %v3982, %v4001
    %v4006 = vmul.f32 %v3984, %v4002
    %v4007 = vmul.f32 %v3986, %v4003
    %v4008 = vmul.f32 %v3988, %v4004
    %4009 = vrot.lane.b32.xlu0 %v2720, 80
    %v4010 = vpop.permute.xlu0 %4009
    %4011 = vrot.lane.b32.xlu0 %v2726, 80
    %v4012 = vpop.permute.xlu0 %4011
    %4013 = vrot.lane.b32.xlu0 %v2732, 80
    %v4014 = vpop.permute.xlu0 %4013
    %4015 = vrot.lane.b32.xlu0 %v2738, 80
    %v4016 = vpop.permute.xlu0 %4015
    %v4022 = vsel %vm2444, %v4005, 0
    %v4025 = vsel %vm2444, %v4006, 0
    %v4028 = vsel %vm2444, %v4007, 0
    %v4031 = vsel %vm2444, %v4008, 0
    %4033 = vmatprep.subr.mxu0 0.0
    %4034 = vmatpush1.msra.mxu0 %v4010
    %4035 = vmatprep.subr.mxu0 0.0
    %4036 = vmatpush1.msra.mxu0 %v4012
    %4037 = vmatprep.subr.mxu0 0.0
    %4038 = vmatpush1.msra.mxu0 %v4014
    %4039 = vmatprep.subr.mxu0 0.0
    %4040 = vmatpush1.msra.mxu0 %v4016
    %4041 = vmatprep.subr.mxu0 0.0
    %4042 = vmatpush1.msra.mxu0 0.0
    %4043 = vmatprep.subr.mxu0 0.0
    %4044 = vmatpush1.msra.mxu0 0.0
    %4045 = vmatprep.subr.mxu0 0.0
    %4046 = vmatpush1.msra.mxu0 0.0
    %4047 = vmatprep.subr.mxu0 0.0
    %4048 = vmatpush1.msra.mxu0 0.0
    %4049 = vmatprep.subr.mxu0 0.0
    %4050 = vmatpush1.msra.mxu0 0.0
    %4051 = vmatprep.subr.mxu0 0.0
    %4052 = vmatpush1.msra.mxu0 0.0
    %4053 = vmatprep.subr.mxu0 0.0
    %4054 = vmatpush1.msra.mxu0 0.0
    %4055 = vmatprep.subr.mxu0 0.0
    %4056 = vmatpush1.msra.mxu0 0.0
    %4057 = vmatprep.subr.mxu0 0.0
    %4058 = vmatpush1.msra.mxu0 0.0
    %4059 = vmatprep.subr.mxu0 0.0
    %4060 = vmatpush1.msra.mxu0 0.0
    %4061 = vmatprep.subr.mxu0 0.0
    %4062 = vmatpush1.msra.mxu0 0.0
    %4063 = vmatprep.subr.mxu0 0.0
    %4064 = vmatpush1.msra.mxu0 0.0
    %4065 = vmatprep.subr.mxu0 0.0
    %4066 = vmatpush1.msra.mxu0 0.0
    %4067 = vmatprep.subr.mxu0 0.0
    %4068 = vmatpush1.msra.mxu0 0.0
    %4069 = vmatprep.subr.mxu0 0.0
    %4070 = vmatpush1.msra.mxu0 0.0
    %4071 = vmatprep.subr.mxu0 0.0
    %4072 = vmatpush1.msra.mxu0 0.0
    %4073 = vmatprep.subr.mxu0 0.0
    %4074 = vmatpush1.msra.mxu0 0.0
    %4075 = vmatprep.subr.mxu0 0.0
    %4076 = vmatpush1.msra.mxu0 0.0
    %4077 = vmatprep.subr.mxu0 0.0
    %4078 = vmatpush1.msra.mxu0 0.0
    %4079 = vmatprep.subr.mxu0 0.0
    %4080 = vmatpush1.msra.mxu0 0.0
    %4081 = vmatprep.subr.mxu0 0.0
    %4082 = vmatpush1.msra.mxu0 0.0
    %4083 = vmatprep.subr.mxu0 0.0
    %4084 = vmatpush1.msra.mxu0 0.0
    %4085 = vmatprep.subr.mxu0 0.0
    %4086 = vmatpush1.msra.mxu0 0.0
    %4087 = vmatprep.subr.mxu0 0.0
    %4088 = vmatpush1.msra.mxu0 0.0
    %4089 = vmatprep.subr.mxu0 0.0
    %4090 = vmatpush1.msra.mxu0 0.0
    %4091 = vmatprep.subr.mxu0 0.0
    %4092 = vmatpush1.msra.mxu0 0.0
    %4093 = vmatprep.subr.mxu0 0.0
    %4094 = vmatpush1.msra.mxu0 0.0
    %4095 = vmatprep.subr.mxu0 0.0
    %4096 = vmatpush1.msra.mxu0 0.0
    %4097 = vmatprep.mubr.f32.mxu0 0.0
    %4098 = vmatmul.mubr.f32.gmra.mrb[0].mxu0 %v4022
    %v4099 = vpop.f32.mrb[0].mxu0
    %v4100 = vadd.f32 0.0, %v4099
    %v4101 = vpop.f32.mrb[0].mxu0
    %4102 = vmatprep.mubr.f32.mxu0 0.0
    %4103 = vmatmul.mubr.f32.gmra.mrb[0].mxu0 %v4025
    %v4104 = vpop.f32.mrb[0].mxu0
    %v4105 = vadd.f32 0.0, %v4104
    %v4106 = vpop.f32.mrb[0].mxu0
    %4107 = vmatprep.mubr.f32.mxu0 0.0
    %4108 = vmatmul.mubr.f32.gmra.mrb[0].mxu0 %v4028
    %v4109 = vpop.f32.mrb[0].mxu0
    %v4110 = vadd.f32 0.0, %v4109
    %v4111 = vpop.f32.mrb[0].mxu0
    %4112 = vmatprep.mubr.f32.mxu0 0.0
    %4113 = vmatmul.mubr.f32.gmra.mrb[0].mxu0 %v4031
    %v4114 = vpop.f32.mrb[0].mxu0
    %v4115 = vadd.f32 0.0, %v4114
    %v4116 = vpop.f32.mrb[0].mxu0
    %4117 = vdwg.mxu0
    %v4118 = vld [vmem:[%s10 + $0x30] sm:$0xff]
    %v4119 = vld [vmem:[%s10 + $0x38] sm:$0xff]
    %v4121 = vsel %vm2756, %v4100, 0
    %v4124 = vsel %vm2756, %v4105, 0
    %v4127 = vsel %vm2756, %v4110, 0
    %v4130 = vsel %vm2756, %v4115, 0
    %4132 = vmatprep.subr.mxu0 0.0
    %4133 = vmatpush1.msra.mxu0 %v4118
    %4134 = vmatprep.subr.mxu0 0.0
    %4135 = vmatpush1.msra.mxu0 %v4119
    %4136 = vmatprep.subr.mxu0 0.0
    %4137 = vmatpush1.msra.mxu0 0.0
    %4138 = vmatprep.subr.mxu0 0.0
    %4139 = vmatpush1.msra.mxu0 0.0
    %4140 = vmatprep.subr.mxu0 0.0
    %4141 = vmatpush1.msra.mxu0 0.0
    %4142 = vmatprep.subr.mxu0 0.0
    %4143 = vmatpush1.msra.mxu0 0.0
    %4144 = vmatprep.subr.mxu0 0.0
    %4145 = vmatpush1.msra.mxu0 0.0
    %4146 = vmatprep.subr.mxu0 0.0
    %4147 = vmatpush1.msra.mxu0 0.0
    %4148 = vmatprep.subr.mxu0 0.0
    %4149 = vmatpush1.msra.mxu0 0.0
    %4150 = vmatprep.subr.mxu0 0.0
    %4151 = vmatpush1.msra.mxu0 0.0
    %4152 = vmatprep.subr.mxu0 0.0
    %4153 = vmatpush1.msra.mxu0 0.0
    %4154 = vmatprep.subr.mxu0 0.0
    %4155 = vmatpush1.msra.mxu0 0.0
    %4156 = vmatprep.subr.mxu0 0.0
    %4157 = vmatpush1.msra.mxu0 0.0
    %4158 = vmatprep.subr.mxu0 0.0
    %4159 = vmatpush1.msra.mxu0 0.0
    %4160 = vmatprep.subr.mxu0 0.0
    %4161 = vmatpush1.msra.mxu0 0.0
    %4162 = vmatprep.subr.mxu0 0.0
    %4163 = vmatpush1.msra.mxu0 0.0
    %4164 = vmatprep.subr.mxu0 0.0
    %4165 = vmatpush1.msra.mxu0 0.0
    %4166 = vmatprep.subr.mxu0 0.0
    %4167 = vmatpush1.msra.mxu0 0.0
    %4168 = vmatprep.subr.mxu0 0.0
    %4169 = vmatpush1.msra.mxu0 0.0
    %4170 = vmatprep.subr.mxu0 0.0
    %4171 = vmatpush1.msra.mxu0 0.0
    %4172 = vmatprep.subr.mxu0 0.0
    %4173 = vmatpush1.msra.mxu0 0.0
    %4174 = vmatprep.subr.mxu0 0.0
    %4175 = vmatpush1.msra.mxu0 0.0
    %4176 = vmatprep.subr.mxu0 0.0
    %4177 = vmatpush1.msra.mxu0 0.0
    %4178 = vmatprep.subr.mxu0 0.0
    %4179 = vmatpush1.msra.mxu0 0.0
    %4180 = vmatprep.subr.mxu0 0.0
    %4181 = vmatpush1.msra.mxu0 0.0
    %4182 = vmatprep.subr.mxu0 0.0
    %4183 = vmatpush1.msra.mxu0 0.0
    %4184 = vmatprep.subr.mxu0 0.0
    %4185 = vmatpush1.msra.mxu0 0.0
    %4186 = vmatprep.subr.mxu0 0.0
    %4187 = vmatpush1.msra.mxu0 0.0
    %4188 = vmatprep.subr.mxu0 0.0
    %4189 = vmatpush1.msra.mxu0 0.0
    %4190 = vmatprep.subr.mxu0 0.0
    %4191 = vmatpush1.msra.mxu0 0.0
    %4192 = vmatprep.subr.mxu0 0.0
    %4193 = vmatpush1.msra.mxu0 0.0
    %4194 = vmatprep.subr.mxu0 0.0
    %4195 = vmatpush1.msra.mxu0 0.0
    %4196 = vmatprep.mubr.f32.mxu0 0.0
    %4197 = vmatmul.mubr.f32.gmra.mrb[0].mxu0 %v4121
    %v4198 = vpop.f32.mrb[0].mxu0
    %v4199 = vadd.f32 0.0, %v4198
    %v4200 = vpop.f32.mrb[0].mxu0
    %4201 = vmatprep.mubr.f32.mxu0 0.0
    %4202 = vmatmul.mubr.f32.gmra.mrb[0].mxu0 %v4124
    %v4203 = vpop.f32.mrb[0].mxu0
    %v4204 = vadd.f32 0.0, %v4203
    %v4205 = vpop.f32.mrb[0].mxu0
    %4206 = vmatprep.mubr.f32.mxu0 0.0
    %4207 = vmatmul.mubr.f32.gmra.mrb[0].mxu0 %v4127
    %v4208 = vpop.f32.mrb[0].mxu0
    %v4209 = vadd.f32 0.0, %v4208
    %v4210 = vpop.f32.mrb[0].mxu0
    %4211 = vmatprep.mubr.f32.mxu0 0.0
    %4212 = vmatmul.mubr.f32.gmra.mrb[0].mxu0 %v4130
    %v4213 = vpop.f32.mrb[0].mxu0
    %v4214 = vadd.f32 0.0, %v4213
    %v4215 = vpop.f32.mrb[0].mxu0
    %4216 = vdwg.mxu0
    %v4217 = vadd.f32 %v3844, %v4199
    %v4218 = vadd.f32 %v3845, %v4204
    %v4219 = vadd.f32 %v3846, %v4209
    %v4220 = vadd.f32 %v3847, %v4214
    %v4221 = vld [vmem:[%s11] sm:$0x1]
    %v4223 = vlaneseq
    %v4224 = vshrl.u32 %v4223, 7
    %v4225 = vsub.s32 0, %v4224
    %v4226 = vrot.slane %v4221, %v4225
    %v4228 = vadd.f32 %v4217, %v4226
    %v4229 = vadd.f32 %v4218, %v4226
    %v4230 = vadd.f32 %v4219, %v4226
    %v4231 = vadd.f32 %v4220, %v4226
    %v4232 = vadd.f32 %v4228, %v77
    %v4233 = vadd.f32 %v4229, %v78
    %v4234 = vadd.f32 %v4230, %v79
    %v4235 = vadd.f32 %v4231, %v80
    %v4236 = vld [vmem:[%s12] sm:$0x1]
    %v4238 = vlaneseq
    %v4239 = vshrl.u32 %v4238, 7
    %v4240 = vsub.s32 0, %v4239
    %v4241 = vrot.slane %v4236, %v4240
    %v4243 = vmul.f32 %v4232, %v4241
    %v4244 = vmul.f32 %v4233, %v4241
    %v4245 = vmul.f32 %v4234, %v4241
    %v4246 = vmul.f32 %v4235, %v4241
    %v4247 = vld [vmem:[%s13] sm:$0x1]
    %v4249 = vlaneseq
    %v4250 = vshrl.u32 %v4249, 7
    %v4251 = vsub.s32 0, %v4250
    %v4252 = vrot.slane %v4247, %v4251
    %v4254 = vadd.f32 %v4243, %v4252
    %v4255 = vadd.f32 %v4244, %v4252
    %v4256 = vadd.f32 %v4245, %v4252
    %v4257 = vadd.f32 %v4246, %v4252
    %v4258 = vadd.f32 %v2619, %v4254
    %v4259 = vadd.f32 %v2620, %v4255
    %v4260 = vadd.f32 %v2621, %v4256
    %v4261 = vadd.f32 %v2622, %v4257
    %v4262 = vld [vmem:[%s14] sm:$0xff]
    %v4263 = vld [vmem:[%s14 + $0x8] sm:$0xff]
    %v4264 = vld [vmem:[%s14 + $0x10] sm:$0xff]
    %v4265 = vld [vmem:[%s14 + $0x18] sm:$0xff]
    %v4266 = vld [vmem:[%s14 + $0x20] sm:$0xff]
    %v4267 = vld [vmem:[%s14 + $0x28] sm:$0xff]
    %v4268 = vld [vmem:[%s14 + $0x30] sm:$0xff]
    %v4269 = vld [vmem:[%s14 + $0x38] sm:$0xff]
    %v4270 = vld [vmem:[%s15] sm:$0x1]
    %v4272 = vlaneseq
    %v4273 = vshrl.u32 %v4272, 7
    %v4274 = vsub.s32 0, %v4273
    %v4275 = vrot.slane %v4270, %v4274
    %v4278 = vsel %vm100, %v4258, 0
    %v4281 = vsel %vm100, %v4259, 0
    %v4284 = vsel %vm100, %v4260, 0
    %v4287 = vsel %vm100, %v4261, 0
    %4289 = vmatprep.subr.mxu0 0.0
    %4290 = vmatpush1.msra.mxu0 %v4262
    %4291 = vmatprep.subr.mxu0 0.0
    %4292 = vmatpush1.msra.mxu0 %v4263
    %4293 = vmatprep.subr.mxu0 0.0
    %4294 = vmatpush1.msra.mxu0 %v4264
    %4295 = vmatprep.subr.mxu0 0.0
    %4296 = vmatpush1.msra.mxu0 %v4265
    %4297 = vmatprep.subr.mxu0 0.0
    %4298 = vmatpush1.msra.mxu0 %v4266
    %4299 = vmatprep.subr.mxu0 0.0
    %4300 = vmatpush1.msra.mxu0 %v4267
    %4301 = vmatprep.subr.mxu0 0.0
    %4302 = vmatpush1.msra.mxu0 %v4268
    %4303 = vmatprep.subr.mxu0 0.0
    %4304 = vmatpush1.msra.mxu0 %v4269
    %4305 = vmatprep.subr.mxu0 0.0
    %4306 = vmatpush1.msra.mxu0 0.0
    %4307 = vmatprep.subr.mxu0 0.0
    %4308 = vmatpush1.msra.mxu0 0.0
    %4309 = vmatprep.subr.mxu0 0.0
    %4310 = vmatpush1.msra.mxu0 0.0
    %4311 = vmatprep.subr.mxu0 0.0
    %4312 = vmatpush1.msra.mxu0 0.0
    %4313 = vmatprep.subr.mxu0 0.0
    %4314 = vmatpush1.msra.mxu0 0.0
    %4315 = vmatprep.subr.mxu0 0.0
    %4316 = vmatpush1.msra.mxu0 0.0
    %4317 = vmatprep.subr.mxu0 0.0
    %4318 = vmatpush1.msra.mxu0 0.0
    %4319 = vmatprep.subr.mxu0 0.0
    %4320 = vmatpush1.msra.mxu0 0.0
    %4321 = vmatprep.subr.mxu0 0.0
    %4322 = vmatpush1.msra.mxu0 0.0
    %4323 = vmatprep.subr.mxu0 0.0
    %4324 = vmatpush1.msra.mxu0 0.0
    %4325 = vmatprep.subr.mxu0 0.0
    %4326 = vmatpush1.msra.mxu0 0.0
    %4327 = vmatprep.subr.mxu0 0.0
    %4328 = vmatpush1.msra.mxu0 0.0
    %4329 = vmatprep.subr.mxu0 0.0
    %4330 = vmatpush1.msra.mxu0 0.0
    %4331 = vmatprep.subr.mxu0 0.0
    %4332 = vmatpush1.msra.mxu0 0.0
    %4333 = vmatprep.subr.mxu0 0.0
    %4334 = vmatpush1.msra.mxu0 0.0
    %4335 = vmatprep.subr.mxu0 0.0
    %4336 = vmatpush1.msra.mxu0 0.0
    %4337 = vmatprep.subr.mxu0 0.0
    %4338 = vmatpush1.msra.mxu0 0.0
    %4339 = vmatprep.subr.mxu0 0.0
    %4340 = vmatpush1.msra.mxu0 0.0
    %4341 = vmatprep.subr.mxu0 0.0
    %4342 = vmatpush1.msra.mxu0 0.0
    %4343 = vmatprep.subr.mxu0 0.0
    %4344 = vmatpush1.msra.mxu0 0.0
    %4345 = vmatprep.subr.mxu0 0.0
    %4346 = vmatpush1.msra.mxu0 0.0
    %4347 = vmatprep.subr.mxu0 0.0
    %4348 = vmatpush1.msra.mxu0 0.0
    %4349 = vmatprep.subr.mxu0 0.0
    %4350 = vmatpush1.msra.mxu0 0.0
    %4351 = vmatprep.subr.mxu0 0.0
    %4352 = vmatpush1.msra.mxu0 0.0
    %4353 = vmatprep.mubr.f32.mxu0 0.0
    %4354 = vmatmul.mubr.f32.gmra.mrb[0].mxu0 %v4278
    %v4355 = vpop.f32.mrb[0].mxu0
    %v4356 = vadd.f32 %v4275, %v4355
    %v4357 = vpop.f32.mrb[0].mxu0
    %4358 = vmatprep.mubr.f32.mxu0 0.0
    %4359 = vmatmul.mubr.f32.gmra.mrb[0].mxu0 %v4281
    %v4360 = vpop.f32.mrb[0].mxu0
    %v4361 = vadd.f32 %v4275, %v4360
    %v4362 = vpop.f32.mrb[0].mxu0
    %4363 = vmatprep.mubr.f32.mxu0 0.0
    %4364 = vmatmul.mubr.f32.gmra.mrb[0].mxu0 %v4284
    %v4365 = vpop.f32.mrb[0].mxu0
    %v4366 = vadd.f32 %v4275, %v4365
    %v4367 = vpop.f32.mrb[0].mxu0
    %4368 = vmatprep.mubr.f32.mxu0 0.0
    %4369 = vmatmul.mubr.f32.gmra.mrb[0].mxu0 %v4287
    %v4370 = vpop.f32.mrb[0].mxu0
    %v4371 = vadd.f32 %v4275, %v4370
    %v4372 = vpop.f32.mrb[0].mxu0
    %4373 = vdwg.mxu0
    %v4374 = vmax.f32 %v4356, 0.0
    %v4375 = vmax.f32 %v4361, 0.0
    %v4376 = vmax.f32 %v4366, 0.0
    %v4377 = vmax.f32 %v4371, 0.0
    %v4378 = vld [vmem:[%s16] sm:$0xff]
    %v4379 = vld [vmem:[%s16 + $0x8] sm:$0xff]
    %v4380 = vld [vmem:[%s16 + $0x10] sm:$0xff]
    %v4381 = vld [vmem:[%s16 + $0x18] sm:$0xff]
    %v4382 = vld [vmem:[%s16 + $0x20] sm:$0xff]
    %v4383 = vld [vmem:[%s16 + $0x28] sm:$0xff]
    %v4384 = vld [vmem:[%s16 + $0x30] sm:$0xff]
    %v4385 = vld [vmem:[%s16 + $0x38] sm:$0xff]
    %v4386 = vld [vmem:[%s16 + $0x40] sm:$0xff]
    %v4387 = vld [vmem:[%s16 + $0x48] sm:$0xff]
    %v4388 = vld [vmem:[%s16 + $0x50] sm:$0xff]
    %v4389 = vld [vmem:[%s16 + $0x58] sm:$0xff]
    %v4390 = vld [vmem:[%s16 + $0x60] sm:$0xff]
    %v4391 = vld [vmem:[%s16 + $0x68] sm:$0xff]
    %v4392 = vld [vmem:[%s16 + $0x70] sm:$0xff]
    %v4393 = vld [vmem:[%s16 + $0x78] sm:$0xff]
    %v4394 = vld [vmem:[%s17] sm:$0x1]
    %v4396 = vlaneseq
    %v4397 = vshrl.u32 %v4396, 7
    %v4398 = vsub.s32 0, %v4397
    %v4399 = vrot.slane %v4394, %v4398
    %4401 = vmatprep.subr.mxu0 0.0
    %4402 = vmatpush1.msra.mxu0 %v4378
    %4403 = vmatprep.subr.mxu0 0.0
    %4404 = vmatpush1.msra.mxu0 %v4379
    %4405 = vmatprep.subr.mxu0 0.0
    %4406 = vmatpush1.msra.mxu0 %v4380
    %4407 = vmatprep.subr.mxu0 0.0
    %4408 = vmatpush1.msra.mxu0 %v4381
    %4409 = vmatprep.subr.mxu0 0.0
    %4410 = vmatpush1.msra.mxu0 %v4382
    %4411 = vmatprep.subr.mxu0 0.0
    %4412 = vmatpush1.msra.mxu0 %v4383
    %4413 = vmatprep.subr.mxu0 0.0
    %4414 = vmatpush1.msra.mxu0 %v4384
    %4415 = vmatprep.subr.mxu0 0.0
    %4416 = vmatpush1.msra.mxu0 %v4385
    %4417 = vmatprep.subr.mxu0 0.0
    %4418 = vmatpush1.msra.mxu0 %v4386
    %4419 = vmatprep.subr.mxu0 0.0
    %4420 = vmatpush1.msra.mxu0 %v4387
    %4421 = vmatprep.subr.mxu0 0.0
    %4422 = vmatpush1.msra.mxu0 %v4388
    %4423 = vmatprep.subr.mxu0 0.0
    %4424 = vmatpush1.msra.mxu0 %v4389
    %4425 = vmatprep.subr.mxu0 0.0
    %4426 = vmatpush1.msra.mxu0 %v4390
    %4427 = vmatprep.subr.mxu0 0.0
    %4428 = vmatpush1.msra.mxu0 %v4391
    %4429 = vmatprep.subr.mxu0 0.0
    %4430 = vmatpush1.msra.mxu0 %v4392
    %4431 = vmatprep.subr.mxu0 0.0
    %4432 = vmatpush1.msra.mxu0 %v4393
    %4433 = vmatprep.subr.mxu0 0.0
    %4434 = vmatpush1.msra.mxu0 0.0
    %4435 = vmatprep.subr.mxu0 0.0
    %4436 = vmatpush1.msra.mxu0 0.0
    %4437 = vmatprep.subr.mxu0 0.0
    %4438 = vmatpush1.msra.mxu0 0.0
    %4439 = vmatprep.subr.mxu0 0.0
    %4440 = vmatpush1.msra.mxu0 0.0
    %4441 = vmatprep.subr.mxu0 0.0
    %4442 = vmatpush1.msra.mxu0 0.0
    %4443 = vmatprep.subr.mxu0 0.0
    %4444 = vmatpush1.msra.mxu0 0.0
    %4445 = vmatprep.subr.mxu0 0.0
    %4446 = vmatpush1.msra.mxu0 0.0
    %4447 = vmatprep.subr.mxu0 0.0
    %4448 = vmatpush1.msra.mxu0 0.0
    %4449 = vmatprep.subr.mxu0 0.0
    %4450 = vmatpush1.msra.mxu0 0.0
    %4451 = vmatprep.subr.mxu0 0.0
    %4452 = vmatpush1.msra.mxu0 0.0
    %4453 = vmatprep.subr.mxu0 0.0
    %4454 = vmatpush1.msra.mxu0 0.0
    %4455 = vmatprep.subr.mxu0 0.0
    %4456 = vmatpush1.msra.mxu0 0.0
    %4457 = vmatprep.subr.mxu0 0.0
    %4458 = vmatpush1.msra.mxu0 0.0
    %4459 = vmatprep.subr.mxu0 0.0
    %4460 = vmatpush1.msra.mxu0 0.0
    %4461 = vmatprep.subr.mxu0 0.0
    %4462 = vmatpush1.msra.mxu0 0.0
    %4463 = vmatprep.subr.mxu0 0.0
    %4464 = vmatpush1.msra.mxu0 0.0
    %4465 = vmatprep.mubr.f32.mxu0 0.0
    %4466 = vmatmul.mubr.f32.gmra.mrb[0].mxu0 %v4374
    %v4467 = vpop.f32.mrb[0].mxu0
    %v4468 = vadd.f32 %v4399, %v4467
    %v4469 = vpop.f32.mrb[0].mxu0
    %4470 = vmatprep.mubr.f32.mxu0 0.0
    %4471 = vmatmul.mubr.f32.gmra.mrb[0].mxu0 %v4375
    %v4472 = vpop.f32.mrb[0].mxu0
    %v4473 = vadd.f32 %v4399, %v4472
    %v4474 = vpop.f32.mrb[0].mxu0
    %4475 = vmatprep.mubr.f32.mxu0 0.0
    %4476 = vmatmul.mubr.f32.gmra.mrb[0].mxu0 %v4376
    %v4477 = vpop.f32.mrb[0].mxu0
    %v4478 = vadd.f32 %v4399, %v4477
    %v4479 = vpop.f32.mrb[0].mxu0
    %4480 = vmatprep.mubr.f32.mxu0 0.0
    %4481 = vmatmul.mubr.f32.gmra.mrb[0].mxu0 %v4377
    %v4482 = vpop.f32.mrb[0].mxu0
    %v4483 = vadd.f32 %v4399, %v4482
    %v4484 = vpop.f32.mrb[0].mxu0
    %4485 = vdwg.mxu0
    %v4486 = vadd.f32 %v4258, %v4468
    %v4487 = vadd.f32 %v4259, %v4473
    %v4488 = vadd.f32 %v4260, %v4478
    %v4489 = vadd.f32 %v4261, %v4483
    %v4490 = vld [vmem:[%s18] sm:$0x1]
    %v4492 = vlaneseq
    %v4493 = vshrl.u32 %v4492, 7
    %v4494 = vsub.s32 0, %v4493
    %v4495 = vrot.slane %v4490, %v4494
    %v4497 = vmul.f32 %v4486, %v4495
    %v4498 = vmul.f32 %v4487, %v4495
    %v4499 = vmul.f32 %v4488, %v4495
    %v4500 = vmul.f32 %v4489, %v4495
    %v4501 = vld [vmem:[#allocation2] sm:$0x1]
    %v4503 = vlaneseq
    %v4504 = vshrl.u32 %v4503, 7
    %v4505 = vsub.s32 0, %v4504
    %v4506 = vrot.slane %v4501, %v4505
    %v4508 = vadd.f32 %v4497, %v4506
    %v4509 = vadd.f32 %v4498, %v4506
    %v4510 = vadd.f32 %v4499, %v4506
    %v4511 = vadd.f32 %v4500, %v4506
    %v4512 = vmax.f32 %v4508, 0.0
    %v4513 = vmax.f32 %v4509, 0.0
    %v4514 = vmax.f32 %v4510, 0.0
    %v4515 = vmax.f32 %v4511, 0.0
    %4516 = vst.msk [vmem:[%s20] sm:$0xff] %vm100, %v4512
    %4517 = vst.msk [vmem:[%s20 + $0x8] sm:$0xff] %vm100, %v4513
    %4518 = vst.msk [vmem:[%s20 + $0x10] sm:$0xff] %vm100, %v4514
    %4519 = vst.msk [vmem:[%s20 + $0x18] sm:$0xff] %vm100, %v4515
    // Predicated region
    $region86: #{gps_conv_net_forward.7} parent=1 // pred_check
      _
    $region87: #{gps_conv_net_forward.7} parent=1 // pred_check_branch
      %4521 = sbr.rel (0) target = $region89
    $region88: #{gps_conv_net_forward.7} parent=1 // pred_region
      _
    $region89: #{gps_conv_net_forward.7} parent=1 // pred_fallthru
      _
    // Predicated region
    $region90: #{gps_conv_net_forward.7} parent=1 // pred_check
      _
    $region91: #{gps_conv_net_forward.7} parent=1 // pred_check_branch
      %4523 = sbr.rel (0) target = $region93
    $region92: #{gps_conv_net_forward.7} parent=1 // pred_region
      _
    $region93: #{gps_conv_net_forward.7} parent=1 // pred_fallthru
      _
    %4524 = vsyncpa [#allocation3], 1

</llo_original>
